<compile_context>
chip_gen: v5e
topology: v5e:2x2
jax: 0.10.0
libtpu: 0.0.40
codegen_flags: <defaults>
</compile_context>

<pallas_src>
import math
import functools

import jax
import jax.numpy as jnp
from jax.experimental import pallas as pl
from jax.experimental.pallas import tpu as pltpu

# ----------------------------- config ---------------------------------------
HIDDEN = 128
NUM_HEADS = 16
NUM_KV_HEADS = 4
HEAD_DIM = HIDDEN // NUM_HEADS          # 8
NUM_GROUPS = NUM_HEADS // NUM_KV_HEADS  # 4
MAX_POS = 256
ROPE_THETA = 10000.0
ATTENTION_BIAS = False
USE_QK_NORM = True
EPS = 1e-6
SCALE = 1.0 / math.sqrt(HEAD_DIM)

B = 2
S = 10


# ------------------------- fused Pallas kernel ------------------------------
def _fused_attn_kernel(x_ref, wq_ref, wk_ref, wv_ref, wo_ref,
                       cos_ref, sin_ref, mask_ref,
                       out_ref, w_ref, *, scale, eps, use_qk_norm):
    # x_ref   : (1, S, E)            hidden states for this batch element
    # wq_ref  : (H, D, E)            per-head q weight, rows de-interleaved [even|odd]
    # wk_ref  : (H, D, E)            per-head k weight (kv heads pre-repeated), de-interleaved
    # wv_ref  : (H, D, E)            per-head v weight (kv heads pre-repeated), original order
    # wo_ref  : (H, E, D)            per-head slice of o_proj weight (original order)
    # cos_ref : (1, S, D//2), sin_ref: (1, S, D//2)
    # mask_ref: (1, 1, S, S)         additive mask
    # out_ref : (1, S, E)            final (lane-dense) output
    # w_ref   : (1, H, S, S)         attention weights
    x = x_ref[0]                                   # (S, E)
    H, D, E = wq_ref.shape
    Sq = x.shape[0]
    dh = D // 2

    # heads on the leading (batch) axis; one MXU pass per head, contraction over E=128
    xb = jnp.broadcast_to(x[None], (H, Sq, E))     # (H, S, E)
    q = jnp.einsum('hse,hde->hsd', xb, wq_ref[...],
                   preferred_element_type=jnp.float32)     # (H, S, D), D = [even|odd]
    k = jnp.einsum('hse,hde->hsd', xb, wk_ref[...],
                   preferred_element_type=jnp.float32)     # (H, S, D), D = [even|odd]
    v = jnp.einsum('hse,hde->hsd', xb, wv_ref[...],
                   preferred_element_type=jnp.float32)     # (H, S, D), original order

    cos = cos_ref[0]                               # (S, D//2) — broadcasts over H
    sin = sin_ref[0]

    qe, qo = q[..., :dh], q[..., dh:]
    ke, ko = k[..., :dh], k[..., dh:]

    # RoPE: complex multiply on (even, odd) pairs
    qre = qe * cos - qo * sin
    qro = qe * sin + qo * cos
    kre = ke * cos - ko * sin
    kro = ke * sin + ko * cos
    qr = jnp.concatenate([qre, qro], axis=-1)      # (H, S, D)
    kr = jnp.concatenate([kre, kro], axis=-1)      # (H, S, D)

    if use_qk_norm:
        q_inv = jax.lax.rsqrt(jnp.mean(qr * qr, axis=-1, keepdims=True) + eps)
        k_inv = jax.lax.rsqrt(jnp.mean(kr * kr, axis=-1, keepdims=True) + eps)
        qr = qr * (q_inv * scale)                  # fold softmax scale into Q
        kr = kr * k_inv
    else:
        qr = qr * scale

    # scores: one (S, D) x (S, D)^T dot per head, batched over all 16 heads
    s = jnp.einsum('hqd,hkd->hqk', qr, kr,
                   preferred_element_type=jnp.float32)     # (H, S, S)
    s = s + mask_ref[0]                                    # (1, S, S) broadcast over H

    # numerically stable softmax; reciprocal instead of divide
    m = jnp.max(s, axis=-1, keepdims=True)
    p = jnp.exp(s - m)
    p = p * pl.reciprocal(jnp.sum(p, axis=-1, keepdims=True))

    w_ref[0] = p                                            # attention weights output

    # P @ V, batched over heads
    o = jnp.einsum('hqk,hkd->hqd', p, v,
                   preferred_element_type=jnp.float32)      # (H, S, D)

    # output projection folded per head; sum over heads gives lane-dense (S, E)
    out = jnp.einsum('hqd,hed->hqe', o, wo_ref[...],
                     preferred_element_type=jnp.float32)    # (H, S, E)
    out_ref[0] = jnp.sum(out, axis=0)                       # (S, E) full-width store


# --------------------------- wrapper -----------------------------------------
_DEINTERLEAVE = jnp.array([0, 2, 4, 6, 1, 3, 5, 7], dtype=jnp.int32)  # [even|odd] within head_dim


def _prepare_weights(params):
    # q/k weights: split per head and fold the even/odd de-interleave into rows (free).
    wq = params["wq"].reshape(NUM_HEADS, HEAD_DIM, HIDDEN)[:, _DEINTERLEAVE, :]       # (16, 8, 128)
    wk = params["wk"].reshape(NUM_KV_HEADS, HEAD_DIM, HIDDEN)[:, _DEINTERLEAVE, :]    # (4, 8, 128)
    wv = params["wv"].reshape(NUM_KV_HEADS, HEAD_DIM, HIDDEN)                          # (4, 8, 128)
    # Repeat KV-head weights so each of the 16 query heads gets its own slice
    # (tiny; keeps the kernel a single batched einsum, no in-kernel repeat_kv).
    wk = jnp.repeat(wk, NUM_GROUPS, axis=0)                                            # (16, 8, 128)
    wv = jnp.repeat(wv, NUM_GROUPS, axis=0)                                            # (16, 8, 128)
    # o_proj weight, sliced per head along its input dim: wo3[h, o, d] = wo[o, h*D + d]
    wo3 = params["wo"].reshape(HIDDEN, NUM_HEADS, HEAD_DIM).transpose(1, 0, 2)         # (16, 128, 8)
    return wq, wk, wv, wo3


def rope_cos_sin(position_ids):
    inv_freq = 1.0 / (ROPE_THETA ** (jnp.arange(0, HEAD_DIM, 2, dtype=jnp.float32) / HEAD_DIM))
    t = jnp.arange(MAX_POS, dtype=jnp.float32)
    freqs = jnp.outer(t, inv_freq)                 # (MAX_POS, HEAD_DIM//2)
    cos = jnp.cos(freqs)[position_ids]             # (B, S, HEAD_DIM//2)
    sin = jnp.sin(freqs)[position_ids]
    return cos, sin


def llama4_attention_forward(params, hidden_states, attention_mask, position_ids):
    b, s, _ = hidden_states.shape
    wq3, wk3, wv3, wo3 = _prepare_weights(params)
    cos, sin = rope_cos_sin(position_ids)

    kernel = functools.partial(_fused_attn_kernel, scale=SCALE, eps=EPS,
                               use_qk_norm=USE_QK_NORM)

    final_out, attn_weights = pl.pallas_call(
        kernel,
        grid=(b,),
        in_specs=[
            pl.BlockSpec((1, s, HIDDEN), lambda bi: (bi, 0, 0)),                       # x
            pl.BlockSpec((NUM_HEADS, HEAD_DIM, HIDDEN), lambda bi: (0, 0, 0)),         # wq (resident)
            pl.BlockSpec((NUM_HEADS, HEAD_DIM, HIDDEN), lambda bi: (0, 0, 0)),         # wk (resident)
            pl.BlockSpec((NUM_HEADS, HEAD_DIM, HIDDEN), lambda bi: (0, 0, 0)),         # wv (resident)
            pl.BlockSpec((NUM_HEADS, HIDDEN, HEAD_DIM), lambda bi: (0, 0, 0)),         # wo (resident)
            pl.BlockSpec((1, s, HEAD_DIM // 2), lambda bi: (bi, 0, 0)),                # cos
            pl.BlockSpec((1, s, HEAD_DIM // 2), lambda bi: (bi, 0, 0)),                # sin
            pl.BlockSpec((1, 1, s, s), lambda bi: (bi, 0, 0, 0)),                      # mask
        ],
        out_specs=(
            pl.BlockSpec((1, s, HIDDEN), lambda bi: (bi, 0, 0)),                       # final output (lane-dense)
            pl.BlockSpec((1, NUM_HEADS, s, s), lambda bi: (bi, 0, 0, 0)),              # attn weights
        ),
        out_shape=(
            jax.ShapeDtypeStruct((b, s, HIDDEN), jnp.float32),
            jax.ShapeDtypeStruct((b, NUM_HEADS, s, s), jnp.float32),
        ),
        compiler_params=pltpu.CompilerParams(
            dimension_semantics=("parallel",)),   # 2 independent steps -> both v7x TCs usable
    )(hidden_states, wq3, wk3, wv3, wo3, cos, sin, attention_mask)

    return final_out, attn_weights


# ------------------------ pure-JAX reference (checks) -------------------------
def _l2norm(x):
    return x * jax.lax.rsqrt(jnp.mean(x * x, axis=-1, keepdims=True) + EPS)


def reference_forward(params, hidden_states, attention_mask, position_ids):
    b, s, _ = hidden_states.shape
    q = (hidden_states @ params["wq"].T).reshape(b, s, NUM_HEADS, HEAD_DIM).transpose(0, 2, 1, 3)
    k = (hidden_states @ params["wk"].T).reshape(b, s, NUM_KV_HEADS, HEAD_DIM).transpose(0, 2, 1, 3)
    v = (hidden_states @ params["wv"].T).reshape(b, s, NUM_KV_HEADS, HEAD_DIM).transpose(0, 2, 1, 3)

    cos, sin = rope_cos_sin(position_ids)
    fc = jax.lax.complex(cos, sin)[:, None, :, :]   # (B,1,S,HEAD_DIM//2)

    def rope(x):
        xc = jax.lax.complex(x[..., 0::2], x[..., 1::2]) * fc
        return jnp.stack([jnp.real(xc), jnp.imag(xc)], axis=-1).reshape(x.shape)

    q, k = rope(q), rope(k)
    if USE_QK_NORM:
        q, k = _l2norm(q), _l2norm(k)

    k = jnp.repeat(k, NUM_GROUPS, axis=1)
    v = jnp.repeat(v, NUM_GROUPS, axis=1)

    w = jnp.einsum("bhqd,bhkd->bhqk", q, k) * SCALE + attention_mask
    w = jax.nn.softmax(w, axis=-1)
    o = jnp.einsum("bhqk,bhkd->bhqd", w, v)
    o = o.transpose(0, 2, 1, 3).reshape(b, s, HIDDEN)
    return o @ params["wo"].T, w


# --------------------------------- main --------------------------------------
if __name__ == "__main__":
    key = jax.random.PRNGKey(0)
    kq, kk, kv, ko, kx = jax.random.split(key, 5)

    def init_linear(k, out_dim, in_dim):
        bound = 1.0 / math.sqrt(in_dim)
        return jax.random.uniform(k, (out_dim, in_dim), jnp.float32, -bound, bound)

    params = {
        "wq": init_linear(kq, NUM_HEADS * HEAD_DIM, HIDDEN),
        "wk": init_linear(kk, NUM_KV_HEADS * HEAD_DIM, HIDDEN),
        "wv": init_linear(kv, NUM_KV_HEADS * HEAD_DIM, HIDDEN),
        "wo": init_linear(ko, HIDDEN, NUM_HEADS * HEAD_DIM),
    }

    hidden_states = jax.random.normal(kx, (B, S, HIDDEN), dtype=jnp.float32)
    position_ids = jnp.tile(jnp.arange(S, dtype=jnp.int32)[None, :], (B, 1))

    # additive causal mask, expanded to (B, 1, S, S)
    row = jnp.arange(S)[:, None]
    col = jnp.arange(S)[None, :]
    causal = jnp.where(col <= row, 0.0, -1e9).astype(jnp.float32)
    attention_mask = jnp.broadcast_to(causal, (B, 1, S, S))

    final_out, attn_weights = llama4_attention_forward(
        params, hidden_states, attention_mask, position_ids)
    final_out = jax.block_until_ready(final_out)
    attn_weights = jax.block_until_ready(attn_weights)

    ref_out, ref_w = reference_forward(params, hidden_states, attention_mask, position_ids)
    assert jnp.allclose(final_out, ref_out, atol=1e-4, rtol=1e-4), "output mismatch"
    assert jnp.allclose(attn_weights, ref_w, atol=1e-4, rtol=1e-4), "attn_weights mismatch"

    print("KERNEL_OK")
</pallas_src>

<mosaic_0001>
module attributes {stable_mosaic.version = 11 : i64} {
  func.func @_fused_attn_kernel(%arg0: i32, %arg1: memref<1x10x128xf32, #tpu.memory_space<vmem>>, %arg2: memref<16x8x128xf32, #tpu.memory_space<vmem>>, %arg3: memref<16x8x128xf32, #tpu.memory_space<vmem>>, %arg4: memref<16x8x128xf32, #tpu.memory_space<vmem>>, %arg5: memref<16x128x8xf32, #tpu.memory_space<vmem>>, %arg6: memref<1x10x4xf32, #tpu.memory_space<vmem>>, %arg7: memref<1x10x4xf32, #tpu.memory_space<vmem>>, %arg8: memref<1x1x10x10xf32, #tpu.memory_space<vmem>>, %arg9: memref<1x10x128xf32, #tpu.memory_space<vmem>>, %arg10: memref<1x16x10x10xf32, #tpu.memory_space<vmem>>) attributes {dimension_semantics = [#tpu.dimension_semantics<parallel>], iteration_bounds = array<i64: 2>, scalar_prefetch = 0 : i64, scratch_operands = 0 : i64, tpu.core_type = #tpu.core_type<tc>, window_params = [{transform_indices = @transform_0, window_bounds = array<i64: 1, 10, 128>}, {pipeline_mode = #tpu.pipeline_mode<synchronous>, transform_indices = @transform_1, window_bounds = array<i64: 16, 8, 128>}, {pipeline_mode = #tpu.pipeline_mode<synchronous>, transform_indices = @transform_2, window_bounds = array<i64: 16, 8, 128>}, {pipeline_mode = #tpu.pipeline_mode<synchronous>, transform_indices = @transform_3, window_bounds = array<i64: 16, 8, 128>}, {pipeline_mode = #tpu.pipeline_mode<synchronous>, transform_indices = @transform_4, window_bounds = array<i64: 16, 128, 8>}, {transform_indices = @transform_5, window_bounds = array<i64: 1, 10, 4>}, {transform_indices = @transform_6, window_bounds = array<i64: 1, 10, 4>}, {transform_indices = @transform_7, window_bounds = array<i64: 1, 1, 10, 10>}, {transform_indices = @transform_8, window_bounds = array<i64: 1, 10, 128>}, {transform_indices = @transform_9, window_bounds = array<i64: 1, 16, 10, 10>}]} {
    %c0 = arith.constant 0 : index
    %c0_0 = arith.constant 0 : index
    %c0_1 = arith.constant 0 : index
    %0 = vector.load %arg1[%c0, %c0_0, %c0_1] : memref<1x10x128xf32, #tpu.memory_space<vmem>>, vector<1x10x128xf32>
    %1 = vector.shape_cast %0 : vector<1x10x128xf32> to vector<10x128xf32>
    %2 = vector.shape_cast %1 : vector<10x128xf32> to vector<1x10x128xf32>
    %3 = vector.shape_cast %2 : vector<1x10x128xf32> to vector<1x10x128xf32>
    %4 = vector.broadcast %3 : vector<1x10x128xf32> to vector<16x10x128xf32>
    %c0_2 = arith.constant 0 : index
    %c0_3 = arith.constant 0 : index
    %c0_4 = arith.constant 0 : index
    %5 = vector.load %arg2[%c0_2, %c0_3, %c0_4] : memref<16x8x128xf32, #tpu.memory_space<vmem>>, vector<16x8x128xf32>
    "tpu.trace_start"() <{level = 10 : i32, message = "hse,hde->hsd"}> : () -> ()
    %cst = arith.constant dense<0.000000e+00> : vector<16x10x8xf32>
    %6 = tpu.matmul %4, %5, %cst {dimension_numbers = #tpu.dot_dimension_numbers<[2], [2], [1], [1], [0, 0, 0, 1, 1, 1], [0], [0]>} : vector<16x10x128xf32>, vector<16x8x128xf32>, vector<16x10x8xf32> -> vector<16x10x8xf32>
    "tpu.trace_stop"() : () -> ()
    %c0_5 = arith.constant 0 : index
    %c0_6 = arith.constant 0 : index
    %c0_7 = arith.constant 0 : index
    %7 = vector.load %arg3[%c0_5, %c0_6, %c0_7] : memref<16x8x128xf32, #tpu.memory_space<vmem>>, vector<16x8x128xf32>
    "tpu.trace_start"() <{level = 10 : i32, message = "hse,hde->hsd"}> : () -> ()
    %cst_8 = arith.constant dense<0.000000e+00> : vector<16x10x8xf32>
    %8 = tpu.matmul %4, %7, %cst_8 {dimension_numbers = #tpu.dot_dimension_numbers<[2], [2], [1], [1], [0, 0, 0, 1, 1, 1], [0], [0]>} : vector<16x10x128xf32>, vector<16x8x128xf32>, vector<16x10x8xf32> -> vector<16x10x8xf32>
    "tpu.trace_stop"() : () -> ()
    %c0_9 = arith.constant 0 : index
    %c0_10 = arith.constant 0 : index
    %c0_11 = arith.constant 0 : index
    %9 = vector.load %arg4[%c0_9, %c0_10, %c0_11] : memref<16x8x128xf32, #tpu.memory_space<vmem>>, vector<16x8x128xf32>
    "tpu.trace_start"() <{level = 10 : i32, message = "hse,hde->hsd"}> : () -> ()
    %cst_12 = arith.constant dense<0.000000e+00> : vector<16x10x8xf32>
    %10 = tpu.matmul %4, %9, %cst_12 {dimension_numbers = #tpu.dot_dimension_numbers<[2], [2], [1], [1], [0, 0, 0, 1, 1, 1], [0], [0]>} : vector<16x10x128xf32>, vector<16x8x128xf32>, vector<16x10x8xf32> -> vector<16x10x8xf32>
    "tpu.trace_stop"() : () -> ()
    %c0_13 = arith.constant 0 : index
    %c0_14 = arith.constant 0 : index
    %c0_15 = arith.constant 0 : index
    %11 = vector.load %arg6[%c0_13, %c0_14, %c0_15] : memref<1x10x4xf32, #tpu.memory_space<vmem>>, vector<1x10x4xf32>
    %12 = vector.shape_cast %11 : vector<1x10x4xf32> to vector<10x4xf32>
    %c0_16 = arith.constant 0 : index
    %c0_17 = arith.constant 0 : index
    %c0_18 = arith.constant 0 : index
    %13 = vector.load %arg7[%c0_16, %c0_17, %c0_18] : memref<1x10x4xf32, #tpu.memory_space<vmem>>, vector<1x10x4xf32>
    %14 = vector.shape_cast %13 : vector<1x10x4xf32> to vector<10x4xf32>
    %15 = vector.extract_strided_slice %6 {offsets = [0, 0, 0], sizes = [16, 10, 4], strides = [1, 1, 1]} : vector<16x10x8xf32> to vector<16x10x4xf32>
    %16 = vector.extract_strided_slice %6 {offsets = [0, 0, 4], sizes = [16, 10, 4], strides = [1, 1, 1]} : vector<16x10x8xf32> to vector<16x10x4xf32>
    %17 = vector.extract_strided_slice %8 {offsets = [0, 0, 0], sizes = [16, 10, 4], strides = [1, 1, 1]} : vector<16x10x8xf32> to vector<16x10x4xf32>
    %18 = vector.extract_strided_slice %8 {offsets = [0, 0, 4], sizes = [16, 10, 4], strides = [1, 1, 1]} : vector<16x10x8xf32> to vector<16x10x4xf32>
    %19 = vector.shape_cast %12 : vector<10x4xf32> to vector<1x10x4xf32>
    %20 = vector.broadcast %19 : vector<1x10x4xf32> to vector<16x10x4xf32>
    %21 = arith.mulf %15, %20 : vector<16x10x4xf32>
    %22 = vector.shape_cast %14 : vector<10x4xf32> to vector<1x10x4xf32>
    %23 = vector.broadcast %22 : vector<1x10x4xf32> to vector<16x10x4xf32>
    %24 = arith.mulf %16, %23 : vector<16x10x4xf32>
    %25 = arith.subf %21, %24 : vector<16x10x4xf32>
    %26 = vector.shape_cast %14 : vector<10x4xf32> to vector<1x10x4xf32>
    %27 = vector.broadcast %26 : vector<1x10x4xf32> to vector<16x10x4xf32>
    %28 = arith.mulf %15, %27 : vector<16x10x4xf32>
    %29 = vector.shape_cast %12 : vector<10x4xf32> to vector<1x10x4xf32>
    %30 = vector.broadcast %29 : vector<1x10x4xf32> to vector<16x10x4xf32>
    %31 = arith.mulf %16, %30 : vector<16x10x4xf32>
    %32 = arith.addf %28, %31 : vector<16x10x4xf32>
    %33 = vector.shape_cast %12 : vector<10x4xf32> to vector<1x10x4xf32>
    %34 = vector.broadcast %33 : vector<1x10x4xf32> to vector<16x10x4xf32>
    %35 = arith.mulf %17, %34 : vector<16x10x4xf32>
    %36 = vector.shape_cast %14 : vector<10x4xf32> to vector<1x10x4xf32>
    %37 = vector.broadcast %36 : vector<1x10x4xf32> to vector<16x10x4xf32>
    %38 = arith.mulf %18, %37 : vector<16x10x4xf32>
    %39 = arith.subf %35, %38 : vector<16x10x4xf32>
    %40 = vector.shape_cast %14 : vector<10x4xf32> to vector<1x10x4xf32>
    %41 = vector.broadcast %40 : vector<1x10x4xf32> to vector<16x10x4xf32>
    %42 = arith.mulf %17, %41 : vector<16x10x4xf32>
    %43 = vector.shape_cast %12 : vector<10x4xf32> to vector<1x10x4xf32>
    %44 = vector.broadcast %43 : vector<1x10x4xf32> to vector<16x10x4xf32>
    %45 = arith.mulf %18, %44 : vector<16x10x4xf32>
    %46 = arith.addf %42, %45 : vector<16x10x4xf32>
    %47 = tpu.concatenate %25, %32 in 2 : vector<16x10x4xf32>, vector<16x10x4xf32> -> vector<16x10x8xf32>
    %48 = tpu.concatenate %39, %46 in 2 : vector<16x10x4xf32>, vector<16x10x4xf32> -> vector<16x10x8xf32>
    %49 = arith.mulf %47, %47 : vector<16x10x8xf32>
    %cst_19 = arith.constant dense<0.000000e+00> : vector<16x10xf32>
    %50 = vector.multi_reduction <add>, %49, %cst_19 [2] : vector<16x10x8xf32> to vector<16x10xf32>
    %51 = vector.shape_cast %50 : vector<16x10xf32> to vector<16x10x1xf32>
    %cst_20 = arith.constant 8.000000e+00 : f32
    %52 = vector.broadcast %cst_20 : f32 to vector<16x10x1xf32>
    %53 = arith.divf %51, %52 : vector<16x10x1xf32>
    %cst_21 = arith.constant 9.99999997E-7 : f32
    %54 = vector.broadcast %cst_21 : f32 to vector<16x10x1xf32>
    %55 = arith.addf %53, %54 : vector<16x10x1xf32>
    %56 = math.rsqrt %55 : vector<16x10x1xf32>
    %57 = arith.mulf %48, %48 : vector<16x10x8xf32>
    %cst_22 = arith.constant dense<0.000000e+00> : vector<16x10xf32>
    %58 = vector.multi_reduction <add>, %57, %cst_22 [2] : vector<16x10x8xf32> to vector<16x10xf32>
    %59 = vector.shape_cast %58 : vector<16x10xf32> to vector<16x10x1xf32>
    %cst_23 = arith.constant 8.000000e+00 : f32
    %60 = vector.broadcast %cst_23 : f32 to vector<16x10x1xf32>
    %61 = arith.divf %59, %60 : vector<16x10x1xf32>
    %cst_24 = arith.constant 9.99999997E-7 : f32
    %62 = vector.broadcast %cst_24 : f32 to vector<16x10x1xf32>
    %63 = arith.addf %61, %62 : vector<16x10x1xf32>
    %64 = math.rsqrt %63 : vector<16x10x1xf32>
    %cst_25 = arith.constant 0.353553385 : f32
    %65 = vector.broadcast %cst_25 : f32 to vector<16x10x1xf32>
    %66 = arith.mulf %56, %65 : vector<16x10x1xf32>
    %67 = vector.broadcast %66 : vector<16x10x1xf32> to vector<16x10x8xf32>
    %68 = arith.mulf %47, %67 : vector<16x10x8xf32>
    %69 = vector.broadcast %64 : vector<16x10x1xf32> to vector<16x10x8xf32>
    %70 = arith.mulf %48, %69 : vector<16x10x8xf32>
    "tpu.trace_start"() <{level = 10 : i32, message = "hqd,hkd->hqk"}> : () -> ()
    %cst_26 = arith.constant dense<0.000000e+00> : vector<16x10x10xf32>
    %71 = tpu.matmul %68, %70, %cst_26 {dimension_numbers = #tpu.dot_dimension_numbers<[2], [2], [1], [1], [0, 0, 0, 1, 1, 1], [0], [0]>} : vector<16x10x8xf32>, vector<16x10x8xf32>, vector<16x10x10xf32> -> vector<16x10x10xf32>
    "tpu.trace_stop"() : () -> ()
    %c0_27 = arith.constant 0 : index
    %c0_28 = arith.constant 0 : index
    %c0_29 = arith.constant 0 : index
    %c0_30 = arith.constant 0 : index
    %72 = vector.load %arg8[%c0_27, %c0_28, %c0_29, %c0_30] : memref<1x1x10x10xf32, #tpu.memory_space<vmem>>, vector<1x1x10x10xf32>
    %73 = vector.shape_cast %72 : vector<1x1x10x10xf32> to vector<1x10x10xf32>
    %74 = vector.broadcast %73 : vector<1x10x10xf32> to vector<16x10x10xf32>
    %75 = arith.addf %71, %74 : vector<16x10x10xf32>
    %cst_31 = arith.constant dense<0xFF800000> : vector<16x10xf32>
    %76 = vector.multi_reduction <maximumf>, %75, %cst_31 [2] : vector<16x10x10xf32> to vector<16x10xf32>
    %77 = vector.shape_cast %76 : vector<16x10xf32> to vector<16x10x1xf32>
    %78 = vector.broadcast %77 : vector<16x10x1xf32> to vector<16x10x10xf32>
    %79 = arith.subf %75, %78 : vector<16x10x10xf32>
    %80 = math.exp %79 : vector<16x10x10xf32>
    %cst_32 = arith.constant dense<0.000000e+00> : vector<16x10xf32>
    %81 = vector.multi_reduction <add>, %80, %cst_32 [2] : vector<16x10x10xf32> to vector<16x10xf32>
    %82 = vector.shape_cast %81 : vector<16x10xf32> to vector<16x10x1xf32>
    %83 = tpu.reciprocal %82 : vector<16x10x1xf32> -> vector<16x10x1xf32>
    %84 = vector.broadcast %83 : vector<16x10x1xf32> to vector<16x10x10xf32>
    %85 = arith.mulf %80, %84 : vector<16x10x10xf32>
    %c0_33 = arith.constant 0 : index
    %c0_34 = arith.constant 0 : index
    %c0_35 = arith.constant 0 : index
    %c0_36 = arith.constant 0 : index
    %86 = vector.load %arg10[%c0_33, %c0_34, %c0_35, %c0_36] : memref<1x16x10x10xf32, #tpu.memory_space<vmem>>, vector<1x16x10x10xf32>
    %87 = vector.shape_cast %86 : vector<1x16x10x10xf32> to vector<16x10x10xf32>
    %88 = vector.shape_cast %85 : vector<16x10x10xf32> to vector<1x16x10x10xf32>
    tpu.vector_store %arg10[%c0_33, %c0_34, %c0_35, %c0_36], %88 {strides = array<i32>} : memref<1x16x10x10xf32, #tpu.memory_space<vmem>>, vector<1x16x10x10xf32>,
    "tpu.trace_start"() <{level = 10 : i32, message = "hqk,hkd->hqd"}> : () -> ()
    %cst_37 = arith.constant dense<0.000000e+00> : vector<16x10x8xf32>
    %89 = tpu.matmul %85, %10, %cst_37 {dimension_numbers = #tpu.dot_dimension_numbers<[2], [1], [1], [2], [0, 0, 0, 1, 1, 2], [0], [0]>} : vector<16x10x10xf32>, vector<16x10x8xf32>, vector<16x10x8xf32> -> vector<16x10x8xf32>
    "tpu.trace_stop"() : () -> ()
    %c0_38 = arith.constant 0 : index
    %c0_39 = arith.constant 0 : index
    %c0_40 = arith.constant 0 : index
    %90 = vector.load %arg5[%c0_38, %c0_39, %c0_40] : memref<16x128x8xf32, #tpu.memory_space<vmem>>, vector<16x128x8xf32>
    "tpu.trace_start"() <{level = 10 : i32, message = "hqd,hed->hqe"}> : () -> ()
    %cst_41 = arith.constant dense<0.000000e+00> : vector<16x10x128xf32>
    %91 = tpu.matmul %89, %90, %cst_41 {dimension_numbers = #tpu.dot_dimension_numbers<[2], [2], [1], [1], [0, 0, 0, 1, 1, 1], [0], [0]>} : vector<16x10x8xf32>, vector<16x128x8xf32>, vector<16x10x128xf32> -> vector<16x10x128xf32>
    "tpu.trace_stop"() : () -> ()
    %cst_42 = arith.constant dense<0.000000e+00> : vector<10x128xf32>
    %92 = vector.multi_reduction <add>, %91, %cst_42 [0] : vector<16x10x128xf32> to vector<10x128xf32>
    %c0_43 = arith.constant 0 : index
    %c0_44 = arith.constant 0 : index
    %c0_45 = arith.constant 0 : index
    %93 = vector.load %arg9[%c0_43, %c0_44, %c0_45] : memref<1x10x128xf32, #tpu.memory_space<vmem>>, vector<1x10x128xf32>
    %94 = vector.shape_cast %93 : vector<1x10x128xf32> to vector<10x128xf32>
    %95 = vector.shape_cast %92 : vector<10x128xf32> to vector<1x10x128xf32>
    tpu.vector_store %arg9[%c0_43, %c0_44, %c0_45], %95 {strides = array<i32>} : memref<1x10x128xf32, #tpu.memory_space<vmem>>, vector<1x10x128xf32>,
    return
  }
  func.func @transform_0(%arg0: i32) -> (i32, i32, i32) {
    %c0_i32 = arith.constant 0 : i32
    %c0_i32_0 = arith.constant 0 : i32
    %c0_i32_1 = arith.constant 0 : i32
    return %arg0, %c0_i32, %c0_i32_0 : i32, i32, i32
  }
  func.func @transform_1(%arg0: i32) -> (i32, i32, i32) {
    %c0_i32 = arith.constant 0 : i32
    %c0_i32_0 = arith.constant 0 : i32
    %c0_i32_1 = arith.constant 0 : i32
    %c0_i32_2 = arith.constant 0 : i32
    return %c0_i32, %c0_i32_0, %c0_i32_1 : i32, i32, i32
  }
  func.func @transform_2(%arg0: i32) -> (i32, i32, i32) {
    %c0_i32 = arith.constant 0 : i32
    %c0_i32_0 = arith.constant 0 : i32
    %c0_i32_1 = arith.constant 0 : i32
    %c0_i32_2 = arith.constant 0 : i32
    return %c0_i32, %c0_i32_0, %c0_i32_1 : i32, i32, i32
  }
  func.func @transform_3(%arg0: i32) -> (i32, i32, i32) {
    %c0_i32 = arith.constant 0 : i32
    %c0_i32_0 = arith.constant 0 : i32
    %c0_i32_1 = arith.constant 0 : i32
    %c0_i32_2 = arith.constant 0 : i32
    return %c0_i32, %c0_i32_0, %c0_i32_1 : i32, i32, i32
  }
  func.func @transform_4(%arg0: i32) -> (i32, i32, i32) {
    %c0_i32 = arith.constant 0 : i32
    %c0_i32_0 = arith.constant 0 : i32
    %c0_i32_1 = arith.constant 0 : i32
    %c0_i32_2 = arith.constant 0 : i32
    return %c0_i32, %c0_i32_0, %c0_i32_1 : i32, i32, i32
  }
  func.func @transform_5(%arg0: i32) -> (i32, i32, i32) {
    %c0_i32 = arith.constant 0 : i32
    %c0_i32_0 = arith.constant 0 : i32
    %c0_i32_1 = arith.constant 0 : i32
    return %arg0, %c0_i32, %c0_i32_0 : i32, i32, i32
  }
  func.func @transform_6(%arg0: i32) -> (i32, i32, i32) {
    %c0_i32 = arith.constant 0 : i32
    %c0_i32_0 = arith.constant 0 : i32
    %c0_i32_1 = arith.constant 0 : i32
    return %arg0, %c0_i32, %c0_i32_0 : i32, i32, i32
  }
  func.func @transform_7(%arg0: i32) -> (i32, i32, i32, i32) {
    %c0_i32 = arith.constant 0 : i32
    %c0_i32_0 = arith.constant 0 : i32
    %c0_i32_1 = arith.constant 0 : i32
    %c0_i32_2 = arith.constant 0 : i32
    return %arg0, %c0_i32, %c0_i32_0, %c0_i32_1 : i32, i32, i32, i32
  }
  func.func @transform_8(%arg0: i32) -> (i32, i32, i32) {
    %c0_i32 = arith.constant 0 : i32
    %c0_i32_0 = arith.constant 0 : i32
    %c0_i32_1 = arith.constant 0 : i32
    return %arg0, %c0_i32, %c0_i32_0 : i32, i32, i32
  }
  func.func @transform_9(%arg0: i32) -> (i32, i32, i32, i32) {
    %c0_i32 = arith.constant 0 : i32
    %c0_i32_0 = arith.constant 0 : i32
    %c0_i32_1 = arith.constant 0 : i32
    %c0_i32_2 = arith.constant 0 : i32
    return %arg0, %c0_i32, %c0_i32_0, %c0_i32_1 : i32, i32, i32, i32
  }
}

</mosaic_0001>

<llo_original>
// kernel: tpu_custom_call.1
$region0: #{tpu_custom_call.1}
  #allocation0 [shape = 'u32[]', space=smem, size = 0x4, offset = 0x4, fixed_abs, tag = 'smem constant byte address 0x4 - core index']
  #allocation1 [shape = 'u32[72,128]{1,0:T(1,128)}', space=vmem, size = 0x9000, scoped, tag = 'internal scratch']
  %s0 = inlined_call_operand.vmem [shape: f32[2,10,128], index: 0, kind: input, shape index: {}]
  %s1 = inlined_call_operand.vmem [shape: f32[16,8,128], index: 1, kind: input, shape index: {}]
  %s2 = inlined_call_operand.vmem [shape: f32[16,8,128], index: 2, kind: input, shape index: {}]
  %s3 = inlined_call_operand.vmem [shape: f32[16,8,128], index: 3, kind: input, shape index: {}]
  %s4 = inlined_call_operand.vmem [shape: f32[16,128,8], index: 4, kind: input, shape index: {}]
  %s5 = inlined_call_operand.vmem [shape: f32[2,10,4], index: 5, kind: input, shape index: {}]
  %s6 = inlined_call_operand.vmem [shape: f32[2,10,4], index: 6, kind: input, shape index: {}]
  %s7 = inlined_call_operand.vmem [shape: f32[2,1,10,10], index: 7, kind: input, shape index: {}]
  %s8 = inlined_call_operand.vmem [shape: f32[2,10,128], index: 8, kind: output, shape index: {0}]
  %s9 = inlined_call_operand.vmem [shape: f32[2,16,10,10], index: 9, kind: output, shape index: {1}]
  %10 = xla_tuple %s8, %s9
  %s11 = sld [smem:[#allocation0]]
  $region73: #{tpu_custom_call.1} parent=0
    _
  %s13 = ssub.s32 1, %s11
  %s14 = scalar_select 0, %s13, %s11
  loop: start=0, step=1, limit=4
  $region2: #{tpu_custom_call.1} parent=0 // loop_pre_header
    _
  $region3: #{tpu_custom_call.1} parent=0 // loop_header
    %s16 = sphi 0, %s20
    %p17 = scmp.ge.s32.totalorder %s16, 4
    %s26 = sphi 0, %s28
    %s29 = sphi 0, %s26
    %s30 = sphi 0, %s29
    %s46 = sphi 0, %s30
    %s50 = sphi 0, %s50
    %s52 = sphi 0, %s50
    %s53 = sphi 0, %s52
    %s67 = sphi 0, %s53
    %s71 = sphi 0, %s71
    %s73 = sphi 0, %s71
    %s74 = sphi 0, %s73
    %s88 = sphi 0, %s74
    %s92 = sphi 0, %s92
    %s94 = sphi 0, %s92
    %s95 = sphi 0, %s94
    %s109 = sphi 0, %s95
    %s113 = sphi 0, %s113
    %s115 = sphi 0, %s113
    %s116 = sphi 0, %s115
    %s130 = sphi 0, %s116
    %s136 = sphi 0, %s138
    %s139 = sphi 0, %s136
    %s140 = sphi 0, %s139
    %s156 = sphi 0, %s140
    %s162 = sphi 0, %s164
    %s165 = sphi 0, %s162
    %s166 = sphi 0, %s165
    %s182 = sphi 0, %s166
    %s188 = sphi 0, %s190
    %s191 = sphi 0, %s188
    %s192 = sphi 0, %s191
    %s208 = sphi 0, %s192
    %s214 = sphi 0, %s216
    %s217 = sphi 0, %s214
    %s218 = sphi 0, %s217
    %s234 = sphi 0, %s218
    %s240 = sphi 0, %s242
    %s243 = sphi 0, %s240
    %s244 = sphi 0, %s243
    %s260 = sphi 0, %s244
  $region4: #{tpu_custom_call.1} parent=0 // loop_header_branch
    %19 = sbr.rel (%p17) target = $region8
  $region5: #{tpu_custom_call.1} parent=0 // loop_body
    %s21 = ssub.s32 %s16, 1
    %s22 = ssub.s32 %s16, 2
    %s23 = sadd.s32 %s16, 1
    %s24 = ssub.s32 %s16, %s23
    %p25 = scmp.eq.s32.totalorder %s24, 0
    %s27 = sadd.s32 %s26, 1
    %s28 = scalar_select %p25, %s26, %s27
    %p31 = pneg %p25
    %p32 = scmp.eq.s32.totalorder %s16, 1
    %p33 = por %p31, %p32
    %p34 = scmp.ne.s32.totalorder %s26, %s29
    %p35 = scmp.eq.s32.totalorder %s16, 0
    %p36 = por %p34, %p35
    %p37 = scmp.ne.s32.totalorder %s26, %s29
    %p38 = scmp.eq.s32.totalorder %s21, 1
    %p39 = por %p37, %p38
    %p40 = scmp.ne.s32.totalorder %s29, %s30
    %p41 = scmp.eq.s32.totalorder %s21, 0
    %p42 = por %p40, %p41
    %p43 = scmp.ne.s32.totalorder %s29, %s30
    %p44 = scmp.eq.s32.totalorder %s22, 1
    %p45 = por %p43, %p44
    %p47 = scmp.ne.s32.totalorder %s30, %s46
    %p48 = scmp.eq.s32.totalorder %s22, 0
    %p49 = por %p47, %p48
    %s51 = sadd.s32 %s50, 1
    %p54 = scmp.eq.s32.totalorder %s16, 1
    %p55 = scmp.ne.s32.totalorder %s50, %s52
    %p56 = scmp.eq.s32.totalorder %s16, 0
    %p57 = por %p55, %p56
    %p58 = scmp.ne.s32.totalorder %s50, %s52
    %p59 = scmp.eq.s32.totalorder %s21, 1
    %p60 = por %p58, %p59
    %p61 = scmp.ne.s32.totalorder %s52, %s53
    %p62 = scmp.eq.s32.totalorder %s21, 0
    %p63 = por %p61, %p62
    %p64 = scmp.ne.s32.totalorder %s52, %s53
    %p65 = scmp.eq.s32.totalorder %s22, 1
    %p66 = por %p64, %p65
    %p68 = scmp.ne.s32.totalorder %s53, %s67
    %p69 = scmp.eq.s32.totalorder %s22, 0
    %p70 = por %p68, %p69
    %s72 = sadd.s32 %s71, 1
    %p75 = scmp.eq.s32.totalorder %s16, 1
    %p76 = scmp.ne.s32.totalorder %s71, %s73
    %p77 = scmp.eq.s32.totalorder %s16, 0
    %p78 = por %p76, %p77
    %p79 = scmp.ne.s32.totalorder %s71, %s73
    %p80 = scmp.eq.s32.totalorder %s21, 1
    %p81 = por %p79, %p80
    %p82 = scmp.ne.s32.totalorder %s73, %s74
    %p83 = scmp.eq.s32.totalorder %s21, 0
    %p84 = por %p82, %p83
    %p85 = scmp.ne.s32.totalorder %s73, %s74
    %p86 = scmp.eq.s32.totalorder %s22, 1
    %p87 = por %p85, %p86
    %p89 = scmp.ne.s32.totalorder %s74, %s88
    %p90 = scmp.eq.s32.totalorder %s22, 0
    %p91 = por %p89, %p90
    %s93 = sadd.s32 %s92, 1
    %p96 = scmp.eq.s32.totalorder %s16, 1
    %p97 = scmp.ne.s32.totalorder %s92, %s94
    %p98 = scmp.eq.s32.totalorder %s16, 0
    %p99 = por %p97, %p98
    %p100 = scmp.ne.s32.totalorder %s92, %s94
    %p101 = scmp.eq.s32.totalorder %s21, 1
    %p102 = por %p100, %p101
    %p103 = scmp.ne.s32.totalorder %s94, %s95
    %p104 = scmp.eq.s32.totalorder %s21, 0
    %p105 = por %p103, %p104
    %p106 = scmp.ne.s32.totalorder %s94, %s95
    %p107 = scmp.eq.s32.totalorder %s22, 1
    %p108 = por %p106, %p107
    %p110 = scmp.ne.s32.totalorder %s95, %s109
    %p111 = scmp.eq.s32.totalorder %s22, 0
    %p112 = por %p110, %p111
    %s114 = sadd.s32 %s113, 1
    %p117 = scmp.eq.s32.totalorder %s16, 1
    %p118 = scmp.ne.s32.totalorder %s113, %s115
    %p119 = scmp.eq.s32.totalorder %s16, 0
    %p120 = por %p118, %p119
    %p121 = scmp.ne.s32.totalorder %s113, %s115
    %p122 = scmp.eq.s32.totalorder %s21, 1
    %p123 = por %p121, %p122
    %p124 = scmp.ne.s32.totalorder %s115, %s116
    %p125 = scmp.eq.s32.totalorder %s21, 0
    %p126 = por %p124, %p125
    %p127 = scmp.ne.s32.totalorder %s115, %s116
    %p128 = scmp.eq.s32.totalorder %s22, 1
    %p129 = por %p127, %p128
    %p131 = scmp.ne.s32.totalorder %s116, %s130
    %p132 = scmp.eq.s32.totalorder %s22, 0
    %p133 = por %p131, %p132
    %s134 = ssub.s32 %s16, %s23
    %p135 = scmp.eq.s32.totalorder %s134, 0
    %s137 = sadd.s32 %s136, 1
    %s138 = scalar_select %p135, %s136, %s137
    %p141 = pneg %p135
    %p142 = scmp.eq.s32.totalorder %s16, 1
    %p143 = por %p141, %p142
    %p144 = scmp.ne.s32.totalorder %s136, %s139
    %p145 = scmp.eq.s32.totalorder %s16, 0
    %p146 = por %p144, %p145
    %p147 = scmp.ne.s32.totalorder %s136, %s139
    %p148 = scmp.eq.s32.totalorder %s21, 1
    %p149 = por %p147, %p148
    %p150 = scmp.ne.s32.totalorder %s139, %s140
    %p151 = scmp.eq.s32.totalorder %s21, 0
    %p152 = por %p150, %p151
    %p153 = scmp.ne.s32.totalorder %s139, %s140
    %p154 = scmp.eq.s32.totalorder %s22, 1
    %p155 = por %p153, %p154
    %p157 = scmp.ne.s32.totalorder %s140, %s156
    %p158 = scmp.eq.s32.totalorder %s22, 0
    %p159 = por %p157, %p158
    %s160 = ssub.s32 %s16, %s23
    %p161 = scmp.eq.s32.totalorder %s160, 0
    %s163 = sadd.s32 %s162, 1
    %s164 = scalar_select %p161, %s162, %s163
    %p167 = pneg %p161
    %p168 = scmp.eq.s32.totalorder %s16, 1
    %p169 = por %p167, %p168
    %p170 = scmp.ne.s32.totalorder %s162, %s165
    %p171 = scmp.eq.s32.totalorder %s16, 0
    %p172 = por %p170, %p171
    %p173 = scmp.ne.s32.totalorder %s162, %s165
    %p174 = scmp.eq.s32.totalorder %s21, 1
    %p175 = por %p173, %p174
    %p176 = scmp.ne.s32.totalorder %s165, %s166
    %p177 = scmp.eq.s32.totalorder %s21, 0
    %p178 = por %p176, %p177
    %p179 = scmp.ne.s32.totalorder %s165, %s166
    %p180 = scmp.eq.s32.totalorder %s22, 1
    %p181 = por %p179, %p180
    %p183 = scmp.ne.s32.totalorder %s166, %s182
    %p184 = scmp.eq.s32.totalorder %s22, 0
    %p185 = por %p183, %p184
    %s186 = ssub.s32 %s16, %s23
    %p187 = scmp.eq.s32.totalorder %s186, 0
    %s189 = sadd.s32 %s188, 1
    %s190 = scalar_select %p187, %s188, %s189
    %p193 = pneg %p187
    %p194 = scmp.eq.s32.totalorder %s16, 1
    %p195 = por %p193, %p194
    %p196 = scmp.ne.s32.totalorder %s188, %s191
    %p197 = scmp.eq.s32.totalorder %s16, 0
    %p198 = por %p196, %p197
    %p199 = scmp.ne.s32.totalorder %s188, %s191
    %p200 = scmp.eq.s32.totalorder %s21, 1
    %p201 = por %p199, %p200
    %p202 = scmp.ne.s32.totalorder %s191, %s192
    %p203 = scmp.eq.s32.totalorder %s21, 0
    %p204 = por %p202, %p203
    %p205 = scmp.ne.s32.totalorder %s191, %s192
    %p206 = scmp.eq.s32.totalorder %s22, 1
    %p207 = por %p205, %p206
    %p209 = scmp.ne.s32.totalorder %s192, %s208
    %p210 = scmp.eq.s32.totalorder %s22, 0
    %p211 = por %p209, %p210
    %s212 = ssub.s32 %s16, %s23
    %p213 = scmp.eq.s32.totalorder %s212, 0
    %s215 = sadd.s32 %s214, 1
    %s216 = scalar_select %p213, %s214, %s215
    %p219 = pneg %p213
    %p220 = scmp.eq.s32.totalorder %s16, 1
    %p221 = por %p219, %p220
    %p222 = scmp.ne.s32.totalorder %s214, %s217
    %p223 = scmp.eq.s32.totalorder %s16, 0
    %p224 = por %p222, %p223
    %p225 = scmp.ne.s32.totalorder %s214, %s217
    %p226 = scmp.eq.s32.totalorder %s21, 1
    %p227 = por %p225, %p226
    %p228 = scmp.ne.s32.totalorder %s217, %s218
    %p229 = scmp.eq.s32.totalorder %s21, 0
    %p230 = por %p228, %p229
    %p231 = scmp.ne.s32.totalorder %s217, %s218
    %p232 = scmp.eq.s32.totalorder %s22, 1
    %p233 = por %p231, %p232
    %p235 = scmp.ne.s32.totalorder %s218, %s234
    %p236 = scmp.eq.s32.totalorder %s22, 0
    %p237 = por %p235, %p236
    %s238 = ssub.s32 %s16, %s23
    %p239 = scmp.eq.s32.totalorder %s238, 0
    %s241 = sadd.s32 %s240, 1
    %s242 = scalar_select %p239, %s240, %s241
    %p245 = pneg %p239
    %p246 = scmp.eq.s32.totalorder %s16, 1
    %p247 = por %p245, %p246
    %p248 = scmp.ne.s32.totalorder %s240, %s243
    %p249 = scmp.eq.s32.totalorder %s16, 0
    %p250 = por %p248, %p249
    %p251 = scmp.ne.s32.totalorder %s240, %s243
    %p252 = scmp.eq.s32.totalorder %s21, 1
    %p253 = por %p251, %p252
    %p254 = scmp.ne.s32.totalorder %s243, %s244
    %p255 = scmp.eq.s32.totalorder %s21, 0
    %p256 = por %p254, %p255
    %p257 = scmp.ne.s32.totalorder %s243, %s244
    %p258 = scmp.eq.s32.totalorder %s22, 1
    %p259 = por %p257, %p258
    %p261 = scmp.ne.s32.totalorder %s244, %s260
    %p262 = scmp.eq.s32.totalorder %s22, 0
    %p263 = por %p261, %p262
    %p264 = scmp.le.s32.totalorder 1, %s16
    %p265 = scmp.lt.s32.totalorder %s16, 3
    %p266 = pnand %p264, %p265
    %p267 = pneg %p266
    // Predicated region
    $region9: #{tpu_custom_call.1} parent=5 // pred_check
      _
    $region10: #{tpu_custom_call.1} parent=5 // pred_check_branch
      %269 = sbr.rel (%p266) target = $region12
    $region11: #{tpu_custom_call.1} parent=5 // pred_region
      %s270 = ssub.s32 %s16, 1
      // Predicated region
      $region13: #{tpu_custom_call.1} parent=11 // pred_check
        %p271 = pneg %p63
      $region14: #{tpu_custom_call.1} parent=11 // pred_check_branch
        %273 = sbr.rel (%p271) target = $region16
      $region15: #{tpu_custom_call.1} parent=11 // pred_region
        _
      $region16: #{tpu_custom_call.1} parent=11 // pred_fallthru
        _
      // Predicated region
      $region17: #{tpu_custom_call.1} parent=11 // pred_check
        %p274 = pneg %p84
      $region18: #{tpu_custom_call.1} parent=11 // pred_check_branch
        %276 = sbr.rel (%p274) target = $region20
      $region19: #{tpu_custom_call.1} parent=11 // pred_region
        _
      $region20: #{tpu_custom_call.1} parent=11 // pred_fallthru
        _
      // Predicated region
      $region21: #{tpu_custom_call.1} parent=11 // pred_check
        %p277 = pneg %p105
      $region22: #{tpu_custom_call.1} parent=11 // pred_check_branch
        %279 = sbr.rel (%p277) target = $region24
      $region23: #{tpu_custom_call.1} parent=11 // pred_region
        _
      $region24: #{tpu_custom_call.1} parent=11 // pred_fallthru
        _
      // Predicated region
      $region25: #{tpu_custom_call.1} parent=11 // pred_check
        %p280 = pneg %p126
      $region26: #{tpu_custom_call.1} parent=11 // pred_check_branch
        %282 = sbr.rel (%p280) target = $region28
      $region27: #{tpu_custom_call.1} parent=11 // pred_region
        _
      $region28: #{tpu_custom_call.1} parent=11 // pred_fallthru
        _
    $region12: #{tpu_custom_call.1} parent=5 // pred_fallthru
      _
    %p283 = scmp.lt.s32.totalorder %s16, 2
    // Predicated region
    $region29: #{tpu_custom_call.1} parent=5 // pred_check
      %p284 = pneg %p283
    $region30: #{tpu_custom_call.1} parent=5 // pred_check_branch
      %286 = sbr.rel (%p284) target = $region32
    $region31: #{tpu_custom_call.1} parent=5 // pred_region
      // Predicated region
      $region33: #{tpu_custom_call.1} parent=31 // pred_check
        %p287 = pneg %p36
      $region34: #{tpu_custom_call.1} parent=31 // pred_check_branch
        %289 = sbr.rel (%p287) target = $region36
      $region35: #{tpu_custom_call.1} parent=31 // pred_region
        %p290 = scmp.lt.s32.totalorder %s16, 1
        %s291 = scalar_select %p290, %s16, 1
        %s292 = smul.addr %s291, 2
        %s293 = smul.addr %s292, 8
        %s294 = scalar_lea.vmem %s0, %s293
      $region36: #{tpu_custom_call.1} parent=31 // pred_fallthru
        _
      // Predicated region
      $region37: #{tpu_custom_call.1} parent=31 // pred_check
        %p295 = pneg %p146
      $region38: #{tpu_custom_call.1} parent=31 // pred_check_branch
        %297 = sbr.rel (%p295) target = $region40
      $region39: #{tpu_custom_call.1} parent=31 // pred_region
        %p298 = scmp.lt.s32.totalorder %s16, 1
        %s299 = scalar_select %p298, %s16, 1
        %s300 = smul.addr %s299, 2
        %s301 = smul.addr %s300, 8
        %s302 = scalar_lea.vmem %s5, %s301
      $region40: #{tpu_custom_call.1} parent=31 // pred_fallthru
        _
      // Predicated region
      $region41: #{tpu_custom_call.1} parent=31 // pred_check
        %p303 = pneg %p172
      $region42: #{tpu_custom_call.1} parent=31 // pred_check_branch
        %305 = sbr.rel (%p303) target = $region44
      $region43: #{tpu_custom_call.1} parent=31 // pred_region
        %p306 = scmp.lt.s32.totalorder %s16, 1
        %s307 = scalar_select %p306, %s16, 1
        %s308 = smul.addr %s307, 2
        %s309 = smul.addr %s308, 8
        %s310 = scalar_lea.vmem %s6, %s309
      $region44: #{tpu_custom_call.1} parent=31 // pred_fallthru
        _
      // Predicated region
      $region45: #{tpu_custom_call.1} parent=31 // pred_check
        %p311 = pneg %p198
      $region46: #{tpu_custom_call.1} parent=31 // pred_check_branch
        %313 = sbr.rel (%p311) target = $region48
      $region47: #{tpu_custom_call.1} parent=31 // pred_region
        %p314 = scmp.lt.s32.totalorder %s16, 1
        %s315 = scalar_select %p314, %s16, 1
        %s316 = smul.addr %s315, 2
        %s317 = smul.addr %s316, 8
        %s318 = scalar_lea.vmem %s7, %s317
      $region48: #{tpu_custom_call.1} parent=31 // pred_fallthru
        _
    $region32: #{tpu_custom_call.1} parent=5 // pred_fallthru
      _
    %p319 = scmp.le.s32.totalorder 1, %s16
    %p320 = scmp.lt.s32.totalorder %s16, 3
    %p321 = pnand %p319, %p320
    %p322 = pneg %p321
    // Predicated region
    $region49: #{tpu_custom_call.1} parent=5 // pred_check
      _
    $region50: #{tpu_custom_call.1} parent=5 // pred_check_branch
      %324 = sbr.rel (%p321) target = $region52
    $region51: #{tpu_custom_call.1} parent=5 // pred_region
      %s325 = ssub.s32 %s16, 1
      %p326 = scmp.lt.s32.totalorder %s21, 1
      %s327 = scalar_select %p326, %s21, 1
      %s328 = smul.addr %s327, 2
      %s329 = smul.addr %s328, 8
      %s330 = scalar_lea.vmem %s0, %s329
      %p331 = pneg %p42
      %p332 = pneg %p39
      %p333 = pneg %p63
      %p334 = pneg %p60
      %p335 = pneg %p84
      %p336 = pneg %p81
      %p337 = pneg %p105
      %p338 = pneg %p102
      %p339 = pneg %p126
      %p340 = pneg %p123
      %p341 = scmp.lt.s32.totalorder %s21, 1
      %s342 = scalar_select %p341, %s21, 1
      %s343 = smul.addr %s342, 2
      %s344 = smul.addr %s343, 8
      %s345 = scalar_lea.vmem %s5, %s344
      %p346 = pneg %p152
      %p347 = pneg %p149
      %p348 = scmp.lt.s32.totalorder %s21, 1
      %s349 = scalar_select %p348, %s21, 1
      %s350 = smul.addr %s349, 2
      %s351 = smul.addr %s350, 8
      %s352 = scalar_lea.vmem %s6, %s351
      %p353 = pneg %p178
      %p354 = pneg %p175
      %p355 = scmp.lt.s32.totalorder %s21, 1
      %s356 = scalar_select %p355, %s21, 1
      %s357 = smul.addr %s356, 2
      %s358 = smul.addr %s357, 8
      %s359 = scalar_lea.vmem %s7, %s358
      %p360 = pneg %p204
      %p361 = pneg %p201
      %p362 = pneg %p230
      %p363 = pneg %p227
      %p364 = scmp.lt.s32.totalorder %s21, 1
      %s365 = scalar_select %p364, %s21, 1
      %s366 = smul.addr %s365, 2
      %s367 = smul.addr %s366, 8
      %s368 = scalar_lea.vmem %s8, %s367
      %p369 = pneg %p256
      %p370 = pneg %p253
      %p371 = scmp.lt.s32.totalorder %s21, 1
      %s372 = scalar_select %p371, %s21, 1
      %s373 = smul.addr %s372, 32
      %s374 = smul.addr %s373, 8
      %s375 = scalar_lea.vmem %s9, %s374
      %p376 = scmp.lt.s32.totalorder %s21, 1
      %s377 = scalar_select %p376, %s21, 1
      %s378 = smul.addr %s377, 2
      %s379 = smul.addr %s378, 8
      %s380 = scalar_lea.vmem %s0, %s379
      %p381 = scmp.lt.s32.totalorder %s21, 1
      %s382 = scalar_select %p381, %s21, 1
      %s383 = smul.addr %s382, 2
      %s384 = smul.addr %s383, 8
      %s385 = scalar_lea.vmem %s5, %s384
      %p386 = scmp.lt.s32.totalorder %s21, 1
      %s387 = scalar_select %p386, %s21, 1
      %s388 = smul.addr %s387, 2
      %s389 = smul.addr %s388, 8
      %s390 = scalar_lea.vmem %s6, %s389
      %p391 = scmp.lt.s32.totalorder %s21, 1
      %s392 = scalar_select %p391, %s21, 1
      %s393 = smul.addr %s392, 2
      %s394 = smul.addr %s393, 8
      %s395 = scalar_lea.vmem %s7, %s394
      %p396 = scmp.lt.s32.totalorder %s21, 1
      %s397 = scalar_select %p396, %s21, 1
      %s398 = smul.addr %s397, 2
      %s399 = smul.addr %s398, 8
      %s400 = scalar_lea.vmem %s8, %s399
      %p401 = scmp.lt.s32.totalorder %s21, 1
      %s402 = scalar_select %p401, %s21, 1
      %s403 = smul.addr %s402, 32
      %s404 = smul.addr %s403, 8
      %s405 = scalar_lea.vmem %s9, %s404
      %v406 = vld [vmem:[%s380] sm:$0xff]
      %v407 = vld [vmem:[%s380 + $0x8] sm:$0x3]
      %v408 = vld [vmem:[%s1] sm:$0xff]
      %v409 = vld [vmem:[%s1 + $0x8] sm:$0xff]
      %v410 = vld [vmem:[%s1 + $0x10] sm:$0xff]
      %v411 = vld [vmem:[%s1 + $0x18] sm:$0xff]
      %v412 = vld [vmem:[%s1 + $0x20] sm:$0xff]
      %v413 = vld [vmem:[%s1 + $0x28] sm:$0xff]
      %v414 = vld [vmem:[%s1 + $0x30] sm:$0xff]
      %v415 = vld [vmem:[%s1 + $0x38] sm:$0xff]
      %v416 = vld [vmem:[%s1 + $0x40] sm:$0xff]
      %v417 = vld [vmem:[%s1 + $0x48] sm:$0xff]
      %v418 = vld [vmem:[%s1 + $0x50] sm:$0xff]
      %v419 = vld [vmem:[%s1 + $0x58] sm:$0xff]
      %v420 = vld [vmem:[%s1 + $0x60] sm:$0xff]
      %v421 = vld [vmem:[%s1 + $0x68] sm:$0xff]
      %v422 = vld [vmem:[%s1 + $0x70] sm:$0xff]
      %v423 = vld [vmem:[%s1 + $0x78] sm:$0xff]
      %424 = vmatpush.xpose.msra.mxu0 0.0
      %425 = vmatpush.xpose.msra.mxu0 0.0
      %426 = vmatpush.xpose.msra.mxu0 0.0
      %427 = vmatpush.xpose.msra.mxu0 0.0
      %428 = vmatpush.xpose.msra.mxu0 0.0
      %429 = vmatpush.xpose.msra.mxu0 0.0
      %430 = vmatpush.xpose.msra.mxu0 0.0
      %431 = vmatpush.xpose.msra.mxu0 0.0
      %432 = vmatpush.xpose.msra.mxu0 0.0
      %433 = vmatpush.xpose.msra.mxu0 0.0
      %434 = vmatpush.xpose.msra.mxu0 0.0
      %435 = vmatpush.xpose.msra.mxu0 0.0
      %436 = vmatpush.xpose.msra.mxu0 0.0
      %437 = vmatpush.xpose.msra.mxu0 0.0
      %438 = vmatpush.xpose.msra.mxu0 0.0
      %439 = vmatpush.xpose.msra.mxu0 %v408
      %440 = vmatmul.f32.gmra.mxu0 %v406
      %v441 = vpop.f32.mrf.mxu0
      %v442 = vadd.f32 0.0, %v441
      %443 = vmatmul.f32.gmra.mxu0 %v407
      %v444 = vpop.f32.mrf.mxu0
      %v445 = vadd.f32 0.0, %v444
      %446 = vdwg.mxu0
      %447 = vmatpush.xpose.msra.mxu0 0.0
      %448 = vmatpush.xpose.msra.mxu0 0.0
      %449 = vmatpush.xpose.msra.mxu0 0.0
      %450 = vmatpush.xpose.msra.mxu0 0.0
      %451 = vmatpush.xpose.msra.mxu0 0.0
      %452 = vmatpush.xpose.msra.mxu0 0.0
      %453 = vmatpush.xpose.msra.mxu0 0.0
      %454 = vmatpush.xpose.msra.mxu0 0.0
      %455 = vmatpush.xpose.msra.mxu0 0.0
      %456 = vmatpush.xpose.msra.mxu0 0.0
      %457 = vmatpush.xpose.msra.mxu0 0.0
      %458 = vmatpush.xpose.msra.mxu0 0.0
      %459 = vmatpush.xpose.msra.mxu0 0.0
      %460 = vmatpush.xpose.msra.mxu0 0.0
      %461 = vmatpush.xpose.msra.mxu0 0.0
      %462 = vmatpush.xpose.msra.mxu0 %v409
      %463 = vmatmul.f32.gmra.mxu0 %v406
      %v464 = vpop.f32.mrf.mxu0
      %v465 = vadd.f32 0.0, %v464
      %466 = vmatmul.f32.gmra.mxu0 %v407
      %v467 = vpop.f32.mrf.mxu0
      %v468 = vadd.f32 0.0, %v467
      %469 = vdwg.mxu0
      %470 = vmatpush.xpose.msra.mxu0 0.0
      %471 = vmatpush.xpose.msra.mxu0 0.0
      %472 = vmatpush.xpose.msra.mxu0 0.0
      %473 = vmatpush.xpose.msra.mxu0 0.0
      %474 = vmatpush.xpose.msra.mxu0 0.0
      %475 = vmatpush.xpose.msra.mxu0 0.0
      %476 = vmatpush.xpose.msra.mxu0 0.0
      %477 = vmatpush.xpose.msra.mxu0 0.0
      %478 = vmatpush.xpose.msra.mxu0 0.0
      %479 = vmatpush.xpose.msra.mxu0 0.0
      %480 = vmatpush.xpose.msra.mxu0 0.0
      %481 = vmatpush.xpose.msra.mxu0 0.0
      %482 = vmatpush.xpose.msra.mxu0 0.0
      %483 = vmatpush.xpose.msra.mxu0 0.0
      %484 = vmatpush.xpose.msra.mxu0 0.0
      %485 = vmatpush.xpose.msra.mxu0 %v410
      %486 = vmatmul.f32.gmra.mxu0 %v406
      %v487 = vpop.f32.mrf.mxu0
      %v488 = vadd.f32 0.0, %v487
      %489 = vmatmul.f32.gmra.mxu0 %v407
      %v490 = vpop.f32.mrf.mxu0
      %v491 = vadd.f32 0.0, %v490
      %492 = vdwg.mxu0
      %493 = vmatpush.xpose.msra.mxu0 0.0
      %494 = vmatpush.xpose.msra.mxu0 0.0
      %495 = vmatpush.xpose.msra.mxu0 0.0
      %496 = vmatpush.xpose.msra.mxu0 0.0
      %497 = vmatpush.xpose.msra.mxu0 0.0
      %498 = vmatpush.xpose.msra.mxu0 0.0
      %499 = vmatpush.xpose.msra.mxu0 0.0
      %500 = vmatpush.xpose.msra.mxu0 0.0
      %501 = vmatpush.xpose.msra.mxu0 0.0
      %502 = vmatpush.xpose.msra.mxu0 0.0
      %503 = vmatpush.xpose.msra.mxu0 0.0
      %504 = vmatpush.xpose.msra.mxu0 0.0
      %505 = vmatpush.xpose.msra.mxu0 0.0
      %506 = vmatpush.xpose.msra.mxu0 0.0
      %507 = vmatpush.xpose.msra.mxu0 0.0
      %508 = vmatpush.xpose.msra.mxu0 %v411
      %509 = vmatmul.f32.gmra.mxu0 %v406
      %v510 = vpop.f32.mrf.mxu0
      %v511 = vadd.f32 0.0, %v510
      %512 = vmatmul.f32.gmra.mxu0 %v407
      %v513 = vpop.f32.mrf.mxu0
      %v514 = vadd.f32 0.0, %v513
      %515 = vdwg.mxu0
      %516 = vmatpush.xpose.msra.mxu0 0.0
      %517 = vmatpush.xpose.msra.mxu0 0.0
      %518 = vmatpush.xpose.msra.mxu0 0.0
      %519 = vmatpush.xpose.msra.mxu0 0.0
      %520 = vmatpush.xpose.msra.mxu0 0.0
      %521 = vmatpush.xpose.msra.mxu0 0.0
      %522 = vmatpush.xpose.msra.mxu0 0.0
      %523 = vmatpush.xpose.msra.mxu0 0.0
      %524 = vmatpush.xpose.msra.mxu0 0.0
      %525 = vmatpush.xpose.msra.mxu0 0.0
      %526 = vmatpush.xpose.msra.mxu0 0.0
      %527 = vmatpush.xpose.msra.mxu0 0.0
      %528 = vmatpush.xpose.msra.mxu0 0.0
      %529 = vmatpush.xpose.msra.mxu0 0.0
      %530 = vmatpush.xpose.msra.mxu0 0.0
      %531 = vmatpush.xpose.msra.mxu0 %v412
      %532 = vmatmul.f32.gmra.mxu0 %v406
      %v533 = vpop.f32.mrf.mxu0
      %v534 = vadd.f32 0.0, %v533
      %535 = vmatmul.f32.gmra.mxu0 %v407
      %v536 = vpop.f32.mrf.mxu0
      %v537 = vadd.f32 0.0, %v536
      %538 = vdwg.mxu0
      %539 = vmatpush.xpose.msra.mxu0 0.0
      %540 = vmatpush.xpose.msra.mxu0 0.0
      %541 = vmatpush.xpose.msra.mxu0 0.0
      %542 = vmatpush.xpose.msra.mxu0 0.0
      %543 = vmatpush.xpose.msra.mxu0 0.0
      %544 = vmatpush.xpose.msra.mxu0 0.0
      %545 = vmatpush.xpose.msra.mxu0 0.0
      %546 = vmatpush.xpose.msra.mxu0 0.0
      %547 = vmatpush.xpose.msra.mxu0 0.0
      %548 = vmatpush.xpose.msra.mxu0 0.0
      %549 = vmatpush.xpose.msra.mxu0 0.0
      %550 = vmatpush.xpose.msra.mxu0 0.0
      %551 = vmatpush.xpose.msra.mxu0 0.0
      %552 = vmatpush.xpose.msra.mxu0 0.0
      %553 = vmatpush.xpose.msra.mxu0 0.0
      %554 = vmatpush.xpose.msra.mxu0 %v413
      %555 = vmatmul.f32.gmra.mxu0 %v406
      %v556 = vpop.f32.mrf.mxu0
      %v557 = vadd.f32 0.0, %v556
      %558 = vmatmul.f32.gmra.mxu0 %v407
      %v559 = vpop.f32.mrf.mxu0
      %v560 = vadd.f32 0.0, %v559
      %561 = vdwg.mxu0
      %562 = vmatpush.xpose.msra.mxu0 0.0
      %563 = vmatpush.xpose.msra.mxu0 0.0
      %564 = vmatpush.xpose.msra.mxu0 0.0
      %565 = vmatpush.xpose.msra.mxu0 0.0
      %566 = vmatpush.xpose.msra.mxu0 0.0
      %567 = vmatpush.xpose.msra.mxu0 0.0
      %568 = vmatpush.xpose.msra.mxu0 0.0
      %569 = vmatpush.xpose.msra.mxu0 0.0
      %570 = vmatpush.xpose.msra.mxu0 0.0
      %571 = vmatpush.xpose.msra.mxu0 0.0
      %572 = vmatpush.xpose.msra.mxu0 0.0
      %573 = vmatpush.xpose.msra.mxu0 0.0
      %574 = vmatpush.xpose.msra.mxu0 0.0
      %575 = vmatpush.xpose.msra.mxu0 0.0
      %576 = vmatpush.xpose.msra.mxu0 0.0
      %577 = vmatpush.xpose.msra.mxu0 %v414
      %578 = vmatmul.f32.gmra.mxu0 %v406
      %v579 = vpop.f32.mrf.mxu0
      %v580 = vadd.f32 0.0, %v579
      %581 = vmatmul.f32.gmra.mxu0 %v407
      %v582 = vpop.f32.mrf.mxu0
      %v583 = vadd.f32 0.0, %v582
      %584 = vdwg.mxu0
      %585 = vmatpush.xpose.msra.mxu0 0.0
      %586 = vmatpush.xpose.msra.mxu0 0.0
      %587 = vmatpush.xpose.msra.mxu0 0.0
      %588 = vmatpush.xpose.msra.mxu0 0.0
      %589 = vmatpush.xpose.msra.mxu0 0.0
      %590 = vmatpush.xpose.msra.mxu0 0.0
      %591 = vmatpush.xpose.msra.mxu0 0.0
      %592 = vmatpush.xpose.msra.mxu0 0.0
      %593 = vmatpush.xpose.msra.mxu0 0.0
      %594 = vmatpush.xpose.msra.mxu0 0.0
      %595 = vmatpush.xpose.msra.mxu0 0.0
      %596 = vmatpush.xpose.msra.mxu0 0.0
      %597 = vmatpush.xpose.msra.mxu0 0.0
      %598 = vmatpush.xpose.msra.mxu0 0.0
      %599 = vmatpush.xpose.msra.mxu0 0.0
      %600 = vmatpush.xpose.msra.mxu0 %v415
      %601 = vmatmul.f32.gmra.mxu0 %v406
      %v602 = vpop.f32.mrf.mxu0
      %v603 = vadd.f32 0.0, %v602
      %604 = vmatmul.f32.gmra.mxu0 %v407
      %v605 = vpop.f32.mrf.mxu0
      %v606 = vadd.f32 0.0, %v605
      %607 = vdwg.mxu0
      %608 = vmatpush.xpose.msra.mxu0 0.0
      %609 = vmatpush.xpose.msra.mxu0 0.0
      %610 = vmatpush.xpose.msra.mxu0 0.0
      %611 = vmatpush.xpose.msra.mxu0 0.0
      %612 = vmatpush.xpose.msra.mxu0 0.0
      %613 = vmatpush.xpose.msra.mxu0 0.0
      %614 = vmatpush.xpose.msra.mxu0 0.0
      %615 = vmatpush.xpose.msra.mxu0 0.0
      %616 = vmatpush.xpose.msra.mxu0 0.0
      %617 = vmatpush.xpose.msra.mxu0 0.0
      %618 = vmatpush.xpose.msra.mxu0 0.0
      %619 = vmatpush.xpose.msra.mxu0 0.0
      %620 = vmatpush.xpose.msra.mxu0 0.0
      %621 = vmatpush.xpose.msra.mxu0 0.0
      %622 = vmatpush.xpose.msra.mxu0 0.0
      %623 = vmatpush.xpose.msra.mxu0 %v416
      %624 = vmatmul.f32.gmra.mxu0 %v406
      %v625 = vpop.f32.mrf.mxu0
      %v626 = vadd.f32 0.0, %v625
      %627 = vmatmul.f32.gmra.mxu0 %v407
      %v628 = vpop.f32.mrf.mxu0
      %v629 = vadd.f32 0.0, %v628
      %630 = vdwg.mxu0
      %631 = vmatpush.xpose.msra.mxu0 0.0
      %632 = vmatpush.xpose.msra.mxu0 0.0
      %633 = vmatpush.xpose.msra.mxu0 0.0
      %634 = vmatpush.xpose.msra.mxu0 0.0
      %635 = vmatpush.xpose.msra.mxu0 0.0
      %636 = vmatpush.xpose.msra.mxu0 0.0
      %637 = vmatpush.xpose.msra.mxu0 0.0
      %638 = vmatpush.xpose.msra.mxu0 0.0
      %639 = vmatpush.xpose.msra.mxu0 0.0
      %640 = vmatpush.xpose.msra.mxu0 0.0
      %641 = vmatpush.xpose.msra.mxu0 0.0
      %642 = vmatpush.xpose.msra.mxu0 0.0
      %643 = vmatpush.xpose.msra.mxu0 0.0
      %644 = vmatpush.xpose.msra.mxu0 0.0
      %645 = vmatpush.xpose.msra.mxu0 0.0
      %646 = vmatpush.xpose.msra.mxu0 %v417
      %647 = vmatmul.f32.gmra.mxu0 %v406
      %v648 = vpop.f32.mrf.mxu0
      %v649 = vadd.f32 0.0, %v648
      %650 = vmatmul.f32.gmra.mxu0 %v407
      %v651 = vpop.f32.mrf.mxu0
      %v652 = vadd.f32 0.0, %v651
      %653 = vdwg.mxu0
      %654 = vmatpush.xpose.msra.mxu0 0.0
      %655 = vmatpush.xpose.msra.mxu0 0.0
      %656 = vmatpush.xpose.msra.mxu0 0.0
      %657 = vmatpush.xpose.msra.mxu0 0.0
      %658 = vmatpush.xpose.msra.mxu0 0.0
      %659 = vmatpush.xpose.msra.mxu0 0.0
      %660 = vmatpush.xpose.msra.mxu0 0.0
      %661 = vmatpush.xpose.msra.mxu0 0.0
      %662 = vmatpush.xpose.msra.mxu0 0.0
      %663 = vmatpush.xpose.msra.mxu0 0.0
      %664 = vmatpush.xpose.msra.mxu0 0.0
      %665 = vmatpush.xpose.msra.mxu0 0.0
      %666 = vmatpush.xpose.msra.mxu0 0.0
      %667 = vmatpush.xpose.msra.mxu0 0.0
      %668 = vmatpush.xpose.msra.mxu0 0.0
      %669 = vmatpush.xpose.msra.mxu0 %v418
      %670 = vmatmul.f32.gmra.mxu0 %v406
      %v671 = vpop.f32.mrf.mxu0
      %v672 = vadd.f32 0.0, %v671
      %673 = vmatmul.f32.gmra.mxu0 %v407
      %v674 = vpop.f32.mrf.mxu0
      %v675 = vadd.f32 0.0, %v674
      %676 = vdwg.mxu0
      %677 = vmatpush.xpose.msra.mxu0 0.0
      %678 = vmatpush.xpose.msra.mxu0 0.0
      %679 = vmatpush.xpose.msra.mxu0 0.0
      %680 = vmatpush.xpose.msra.mxu0 0.0
      %681 = vmatpush.xpose.msra.mxu0 0.0
      %682 = vmatpush.xpose.msra.mxu0 0.0
      %683 = vmatpush.xpose.msra.mxu0 0.0
      %684 = vmatpush.xpose.msra.mxu0 0.0
      %685 = vmatpush.xpose.msra.mxu0 0.0
      %686 = vmatpush.xpose.msra.mxu0 0.0
      %687 = vmatpush.xpose.msra.mxu0 0.0
      %688 = vmatpush.xpose.msra.mxu0 0.0
      %689 = vmatpush.xpose.msra.mxu0 0.0
      %690 = vmatpush.xpose.msra.mxu0 0.0
      %691 = vmatpush.xpose.msra.mxu0 0.0
      %692 = vmatpush.xpose.msra.mxu0 %v419
      %693 = vmatmul.f32.gmra.mxu0 %v406
      %v694 = vpop.f32.mrf.mxu0
      %v695 = vadd.f32 0.0, %v694
      %696 = vmatmul.f32.gmra.mxu0 %v407
      %v697 = vpop.f32.mrf.mxu0
      %v698 = vadd.f32 0.0, %v697
      %699 = vdwg.mxu0
      %700 = vmatpush.xpose.msra.mxu0 0.0
      %701 = vmatpush.xpose.msra.mxu0 0.0
      %702 = vmatpush.xpose.msra.mxu0 0.0
      %703 = vmatpush.xpose.msra.mxu0 0.0
      %704 = vmatpush.xpose.msra.mxu0 0.0
      %705 = vmatpush.xpose.msra.mxu0 0.0
      %706 = vmatpush.xpose.msra.mxu0 0.0
      %707 = vmatpush.xpose.msra.mxu0 0.0
      %708 = vmatpush.xpose.msra.mxu0 0.0
      %709 = vmatpush.xpose.msra.mxu0 0.0
      %710 = vmatpush.xpose.msra.mxu0 0.0
      %711 = vmatpush.xpose.msra.mxu0 0.0
      %712 = vmatpush.xpose.msra.mxu0 0.0
      %713 = vmatpush.xpose.msra.mxu0 0.0
      %714 = vmatpush.xpose.msra.mxu0 0.0
      %715 = vmatpush.xpose.msra.mxu0 %v420
      %716 = vmatmul.f32.gmra.mxu0 %v406
      %v717 = vpop.f32.mrf.mxu0
      %v718 = vadd.f32 0.0, %v717
      %719 = vmatmul.f32.gmra.mxu0 %v407
      %v720 = vpop.f32.mrf.mxu0
      %v721 = vadd.f32 0.0, %v720
      %722 = vdwg.mxu0
      %723 = vmatpush.xpose.msra.mxu0 0.0
      %724 = vmatpush.xpose.msra.mxu0 0.0
      %725 = vmatpush.xpose.msra.mxu0 0.0
      %726 = vmatpush.xpose.msra.mxu0 0.0
      %727 = vmatpush.xpose.msra.mxu0 0.0
      %728 = vmatpush.xpose.msra.mxu0 0.0
      %729 = vmatpush.xpose.msra.mxu0 0.0
      %730 = vmatpush.xpose.msra.mxu0 0.0
      %731 = vmatpush.xpose.msra.mxu0 0.0
      %732 = vmatpush.xpose.msra.mxu0 0.0
      %733 = vmatpush.xpose.msra.mxu0 0.0
      %734 = vmatpush.xpose.msra.mxu0 0.0
      %735 = vmatpush.xpose.msra.mxu0 0.0
      %736 = vmatpush.xpose.msra.mxu0 0.0
      %737 = vmatpush.xpose.msra.mxu0 0.0
      %738 = vmatpush.xpose.msra.mxu0 %v421
      %739 = vmatmul.f32.gmra.mxu0 %v406
      %v740 = vpop.f32.mrf.mxu0
      %v741 = vadd.f32 0.0, %v740
      %742 = vmatmul.f32.gmra.mxu0 %v407
      %v743 = vpop.f32.mrf.mxu0
      %v744 = vadd.f32 0.0, %v743
      %745 = vdwg.mxu0
      %746 = vmatpush.xpose.msra.mxu0 0.0
      %747 = vmatpush.xpose.msra.mxu0 0.0
      %748 = vmatpush.xpose.msra.mxu0 0.0
      %749 = vmatpush.xpose.msra.mxu0 0.0
      %750 = vmatpush.xpose.msra.mxu0 0.0
      %751 = vmatpush.xpose.msra.mxu0 0.0
      %752 = vmatpush.xpose.msra.mxu0 0.0
      %753 = vmatpush.xpose.msra.mxu0 0.0
      %754 = vmatpush.xpose.msra.mxu0 0.0
      %755 = vmatpush.xpose.msra.mxu0 0.0
      %756 = vmatpush.xpose.msra.mxu0 0.0
      %757 = vmatpush.xpose.msra.mxu0 0.0
      %758 = vmatpush.xpose.msra.mxu0 0.0
      %759 = vmatpush.xpose.msra.mxu0 0.0
      %760 = vmatpush.xpose.msra.mxu0 0.0
      %761 = vmatpush.xpose.msra.mxu0 %v422
      %762 = vmatmul.f32.gmra.mxu0 %v406
      %v763 = vpop.f32.mrf.mxu0
      %v764 = vadd.f32 0.0, %v763
      %765 = vmatmul.f32.gmra.mxu0 %v407
      %v766 = vpop.f32.mrf.mxu0
      %v767 = vadd.f32 0.0, %v766
      %768 = vdwg.mxu0
      %769 = vmatpush.xpose.msra.mxu0 0.0
      %770 = vmatpush.xpose.msra.mxu0 0.0
      %771 = vmatpush.xpose.msra.mxu0 0.0
      %772 = vmatpush.xpose.msra.mxu0 0.0
      %773 = vmatpush.xpose.msra.mxu0 0.0
      %774 = vmatpush.xpose.msra.mxu0 0.0
      %775 = vmatpush.xpose.msra.mxu0 0.0
      %776 = vmatpush.xpose.msra.mxu0 0.0
      %777 = vmatpush.xpose.msra.mxu0 0.0
      %778 = vmatpush.xpose.msra.mxu0 0.0
      %779 = vmatpush.xpose.msra.mxu0 0.0
      %780 = vmatpush.xpose.msra.mxu0 0.0
      %781 = vmatpush.xpose.msra.mxu0 0.0
      %782 = vmatpush.xpose.msra.mxu0 0.0
      %783 = vmatpush.xpose.msra.mxu0 0.0
      %784 = vmatpush.xpose.msra.mxu0 %v423
      %785 = vmatmul.f32.gmra.mxu0 %v406
      %v786 = vpop.f32.mrf.mxu0
      %v787 = vadd.f32 0.0, %v786
      %788 = vmatmul.f32.gmra.mxu0 %v407
      %v789 = vpop.f32.mrf.mxu0
      %v790 = vadd.f32 0.0, %v789
      %791 = vdwg.mxu0
      %v792 = vld [vmem:[%s2] sm:$0xff]
      %v793 = vld [vmem:[%s2 + $0x8] sm:$0xff]
      %v794 = vld [vmem:[%s2 + $0x10] sm:$0xff]
      %v795 = vld [vmem:[%s2 + $0x18] sm:$0xff]
      %v796 = vld [vmem:[%s2 + $0x20] sm:$0xff]
      %v797 = vld [vmem:[%s2 + $0x28] sm:$0xff]
      %v798 = vld [vmem:[%s2 + $0x30] sm:$0xff]
      %v799 = vld [vmem:[%s2 + $0x38] sm:$0xff]
      %v800 = vld [vmem:[%s2 + $0x40] sm:$0xff]
      %v801 = vld [vmem:[%s2 + $0x48] sm:$0xff]
      %v802 = vld [vmem:[%s2 + $0x50] sm:$0xff]
      %v803 = vld [vmem:[%s2 + $0x58] sm:$0xff]
      %v804 = vld [vmem:[%s2 + $0x60] sm:$0xff]
      %v805 = vld [vmem:[%s2 + $0x68] sm:$0xff]
      %v806 = vld [vmem:[%s2 + $0x70] sm:$0xff]
      %v807 = vld [vmem:[%s2 + $0x78] sm:$0xff]
      %808 = vmatpush.xpose.msra.mxu0 0.0
      %809 = vmatpush.xpose.msra.mxu0 0.0
      %810 = vmatpush.xpose.msra.mxu0 0.0
      %811 = vmatpush.xpose.msra.mxu0 0.0
      %812 = vmatpush.xpose.msra.mxu0 0.0
      %813 = vmatpush.xpose.msra.mxu0 0.0
      %814 = vmatpush.xpose.msra.mxu0 0.0
      %815 = vmatpush.xpose.msra.mxu0 0.0
      %816 = vmatpush.xpose.msra.mxu0 0.0
      %817 = vmatpush.xpose.msra.mxu0 0.0
      %818 = vmatpush.xpose.msra.mxu0 0.0
      %819 = vmatpush.xpose.msra.mxu0 0.0
      %820 = vmatpush.xpose.msra.mxu0 0.0
      %821 = vmatpush.xpose.msra.mxu0 0.0
      %822 = vmatpush.xpose.msra.mxu0 0.0
      %823 = vmatpush.xpose.msra.mxu0 %v792
      %824 = vmatmul.f32.gmra.mxu0 %v406
      %v825 = vpop.f32.mrf.mxu0
      %v826 = vadd.f32 0.0, %v825
      %827 = vmatmul.f32.gmra.mxu0 %v407
      %v828 = vpop.f32.mrf.mxu0
      %v829 = vadd.f32 0.0, %v828
      %830 = vdwg.mxu0
      %831 = vmatpush.xpose.msra.mxu0 0.0
      %832 = vmatpush.xpose.msra.mxu0 0.0
      %833 = vmatpush.xpose.msra.mxu0 0.0
      %834 = vmatpush.xpose.msra.mxu0 0.0
      %835 = vmatpush.xpose.msra.mxu0 0.0
      %836 = vmatpush.xpose.msra.mxu0 0.0
      %837 = vmatpush.xpose.msra.mxu0 0.0
      %838 = vmatpush.xpose.msra.mxu0 0.0
      %839 = vmatpush.xpose.msra.mxu0 0.0
      %840 = vmatpush.xpose.msra.mxu0 0.0
      %841 = vmatpush.xpose.msra.mxu0 0.0
      %842 = vmatpush.xpose.msra.mxu0 0.0
      %843 = vmatpush.xpose.msra.mxu0 0.0
      %844 = vmatpush.xpose.msra.mxu0 0.0
      %845 = vmatpush.xpose.msra.mxu0 0.0
      %846 = vmatpush.xpose.msra.mxu0 %v793
      %847 = vmatmul.f32.gmra.mxu0 %v406
      %v848 = vpop.f32.mrf.mxu0
      %v849 = vadd.f32 0.0, %v848
      %850 = vmatmul.f32.gmra.mxu0 %v407
      %v851 = vpop.f32.mrf.mxu0
      %v852 = vadd.f32 0.0, %v851
      %853 = vdwg.mxu0
      %854 = vmatpush.xpose.msra.mxu0 0.0
      %855 = vmatpush.xpose.msra.mxu0 0.0
      %856 = vmatpush.xpose.msra.mxu0 0.0
      %857 = vmatpush.xpose.msra.mxu0 0.0
      %858 = vmatpush.xpose.msra.mxu0 0.0
      %859 = vmatpush.xpose.msra.mxu0 0.0
      %860 = vmatpush.xpose.msra.mxu0 0.0
      %861 = vmatpush.xpose.msra.mxu0 0.0
      %862 = vmatpush.xpose.msra.mxu0 0.0
      %863 = vmatpush.xpose.msra.mxu0 0.0
      %864 = vmatpush.xpose.msra.mxu0 0.0
      %865 = vmatpush.xpose.msra.mxu0 0.0
      %866 = vmatpush.xpose.msra.mxu0 0.0
      %867 = vmatpush.xpose.msra.mxu0 0.0
      %868 = vmatpush.xpose.msra.mxu0 0.0
      %869 = vmatpush.xpose.msra.mxu0 %v794
      %870 = vmatmul.f32.gmra.mxu0 %v406
      %v871 = vpop.f32.mrf.mxu0
      %v872 = vadd.f32 0.0, %v871
      %873 = vmatmul.f32.gmra.mxu0 %v407
      %v874 = vpop.f32.mrf.mxu0
      %v875 = vadd.f32 0.0, %v874
      %876 = vdwg.mxu0
      %877 = vmatpush.xpose.msra.mxu0 0.0
      %878 = vmatpush.xpose.msra.mxu0 0.0
      %879 = vmatpush.xpose.msra.mxu0 0.0
      %880 = vmatpush.xpose.msra.mxu0 0.0
      %881 = vmatpush.xpose.msra.mxu0 0.0
      %882 = vmatpush.xpose.msra.mxu0 0.0
      %883 = vmatpush.xpose.msra.mxu0 0.0
      %884 = vmatpush.xpose.msra.mxu0 0.0
      %885 = vmatpush.xpose.msra.mxu0 0.0
      %886 = vmatpush.xpose.msra.mxu0 0.0
      %887 = vmatpush.xpose.msra.mxu0 0.0
      %888 = vmatpush.xpose.msra.mxu0 0.0
      %889 = vmatpush.xpose.msra.mxu0 0.0
      %890 = vmatpush.xpose.msra.mxu0 0.0
      %891 = vmatpush.xpose.msra.mxu0 0.0
      %892 = vmatpush.xpose.msra.mxu0 %v795
      %893 = vmatmul.f32.gmra.mxu0 %v406
      %v894 = vpop.f32.mrf.mxu0
      %v895 = vadd.f32 0.0, %v894
      %896 = vmatmul.f32.gmra.mxu0 %v407
      %v897 = vpop.f32.mrf.mxu0
      %v898 = vadd.f32 0.0, %v897
      %899 = vdwg.mxu0
      %900 = vmatpush.xpose.msra.mxu0 0.0
      %901 = vmatpush.xpose.msra.mxu0 0.0
      %902 = vmatpush.xpose.msra.mxu0 0.0
      %903 = vmatpush.xpose.msra.mxu0 0.0
      %904 = vmatpush.xpose.msra.mxu0 0.0
      %905 = vmatpush.xpose.msra.mxu0 0.0
      %906 = vmatpush.xpose.msra.mxu0 0.0
      %907 = vmatpush.xpose.msra.mxu0 0.0
      %908 = vmatpush.xpose.msra.mxu0 0.0
      %909 = vmatpush.xpose.msra.mxu0 0.0
      %910 = vmatpush.xpose.msra.mxu0 0.0
      %911 = vmatpush.xpose.msra.mxu0 0.0
      %912 = vmatpush.xpose.msra.mxu0 0.0
      %913 = vmatpush.xpose.msra.mxu0 0.0
      %914 = vmatpush.xpose.msra.mxu0 0.0
      %915 = vmatpush.xpose.msra.mxu0 %v796
      %916 = vmatmul.f32.gmra.mxu0 %v406
      %v917 = vpop.f32.mrf.mxu0
      %v918 = vadd.f32 0.0, %v917
      %919 = vmatmul.f32.gmra.mxu0 %v407
      %v920 = vpop.f32.mrf.mxu0
      %v921 = vadd.f32 0.0, %v920
      %922 = vdwg.mxu0
      %923 = vmatpush.xpose.msra.mxu0 0.0
      %924 = vmatpush.xpose.msra.mxu0 0.0
      %925 = vmatpush.xpose.msra.mxu0 0.0
      %926 = vmatpush.xpose.msra.mxu0 0.0
      %927 = vmatpush.xpose.msra.mxu0 0.0
      %928 = vmatpush.xpose.msra.mxu0 0.0
      %929 = vmatpush.xpose.msra.mxu0 0.0
      %930 = vmatpush.xpose.msra.mxu0 0.0
      %931 = vmatpush.xpose.msra.mxu0 0.0
      %932 = vmatpush.xpose.msra.mxu0 0.0
      %933 = vmatpush.xpose.msra.mxu0 0.0
      %934 = vmatpush.xpose.msra.mxu0 0.0
      %935 = vmatpush.xpose.msra.mxu0 0.0
      %936 = vmatpush.xpose.msra.mxu0 0.0
      %937 = vmatpush.xpose.msra.mxu0 0.0
      %938 = vmatpush.xpose.msra.mxu0 %v797
      %939 = vmatmul.f32.gmra.mxu0 %v406
      %v940 = vpop.f32.mrf.mxu0
      %v941 = vadd.f32 0.0, %v940
      %942 = vmatmul.f32.gmra.mxu0 %v407
      %v943 = vpop.f32.mrf.mxu0
      %v944 = vadd.f32 0.0, %v943
      %945 = vdwg.mxu0
      %946 = vmatpush.xpose.msra.mxu0 0.0
      %947 = vmatpush.xpose.msra.mxu0 0.0
      %948 = vmatpush.xpose.msra.mxu0 0.0
      %949 = vmatpush.xpose.msra.mxu0 0.0
      %950 = vmatpush.xpose.msra.mxu0 0.0
      %951 = vmatpush.xpose.msra.mxu0 0.0
      %952 = vmatpush.xpose.msra.mxu0 0.0
      %953 = vmatpush.xpose.msra.mxu0 0.0
      %954 = vmatpush.xpose.msra.mxu0 0.0
      %955 = vmatpush.xpose.msra.mxu0 0.0
      %956 = vmatpush.xpose.msra.mxu0 0.0
      %957 = vmatpush.xpose.msra.mxu0 0.0
      %958 = vmatpush.xpose.msra.mxu0 0.0
      %959 = vmatpush.xpose.msra.mxu0 0.0
      %960 = vmatpush.xpose.msra.mxu0 0.0
      %961 = vmatpush.xpose.msra.mxu0 %v798
      %962 = vmatmul.f32.gmra.mxu0 %v406
      %v963 = vpop.f32.mrf.mxu0
      %v964 = vadd.f32 0.0, %v963
      %965 = vmatmul.f32.gmra.mxu0 %v407
      %v966 = vpop.f32.mrf.mxu0
      %v967 = vadd.f32 0.0, %v966
      %968 = vdwg.mxu0
      %969 = vmatpush.xpose.msra.mxu0 0.0
      %970 = vmatpush.xpose.msra.mxu0 0.0
      %971 = vmatpush.xpose.msra.mxu0 0.0
      %972 = vmatpush.xpose.msra.mxu0 0.0
      %973 = vmatpush.xpose.msra.mxu0 0.0
      %974 = vmatpush.xpose.msra.mxu0 0.0
      %975 = vmatpush.xpose.msra.mxu0 0.0
      %976 = vmatpush.xpose.msra.mxu0 0.0
      %977 = vmatpush.xpose.msra.mxu0 0.0
      %978 = vmatpush.xpose.msra.mxu0 0.0
      %979 = vmatpush.xpose.msra.mxu0 0.0
      %980 = vmatpush.xpose.msra.mxu0 0.0
      %981 = vmatpush.xpose.msra.mxu0 0.0
      %982 = vmatpush.xpose.msra.mxu0 0.0
      %983 = vmatpush.xpose.msra.mxu0 0.0
      %984 = vmatpush.xpose.msra.mxu0 %v799
      %985 = vmatmul.f32.gmra.mxu0 %v406
      %v986 = vpop.f32.mrf.mxu0
      %v987 = vadd.f32 0.0, %v986
      %988 = vmatmul.f32.gmra.mxu0 %v407
      %v989 = vpop.f32.mrf.mxu0
      %v990 = vadd.f32 0.0, %v989
      %991 = vdwg.mxu0
      %992 = vmatpush.xpose.msra.mxu0 0.0
      %993 = vmatpush.xpose.msra.mxu0 0.0
      %994 = vmatpush.xpose.msra.mxu0 0.0
      %995 = vmatpush.xpose.msra.mxu0 0.0
      %996 = vmatpush.xpose.msra.mxu0 0.0
      %997 = vmatpush.xpose.msra.mxu0 0.0
      %998 = vmatpush.xpose.msra.mxu0 0.0
      %999 = vmatpush.xpose.msra.mxu0 0.0
      %1000 = vmatpush.xpose.msra.mxu0 0.0
      %1001 = vmatpush.xpose.msra.mxu0 0.0
      %1002 = vmatpush.xpose.msra.mxu0 0.0
      %1003 = vmatpush.xpose.msra.mxu0 0.0
      %1004 = vmatpush.xpose.msra.mxu0 0.0
      %1005 = vmatpush.xpose.msra.mxu0 0.0
      %1006 = vmatpush.xpose.msra.mxu0 0.0
      %1007 = vmatpush.xpose.msra.mxu0 %v800
      %1008 = vmatmul.f32.gmra.mxu0 %v406
      %v1009 = vpop.f32.mrf.mxu0
      %v1010 = vadd.f32 0.0, %v1009
      %1011 = vmatmul.f32.gmra.mxu0 %v407
      %v1012 = vpop.f32.mrf.mxu0
      %v1013 = vadd.f32 0.0, %v1012
      %1014 = vdwg.mxu0
      %1015 = vmatpush.xpose.msra.mxu0 0.0
      %1016 = vmatpush.xpose.msra.mxu0 0.0
      %1017 = vmatpush.xpose.msra.mxu0 0.0
      %1018 = vmatpush.xpose.msra.mxu0 0.0
      %1019 = vmatpush.xpose.msra.mxu0 0.0
      %1020 = vmatpush.xpose.msra.mxu0 0.0
      %1021 = vmatpush.xpose.msra.mxu0 0.0
      %1022 = vmatpush.xpose.msra.mxu0 0.0
      %1023 = vmatpush.xpose.msra.mxu0 0.0
      %1024 = vmatpush.xpose.msra.mxu0 0.0
      %1025 = vmatpush.xpose.msra.mxu0 0.0
      %1026 = vmatpush.xpose.msra.mxu0 0.0
      %1027 = vmatpush.xpose.msra.mxu0 0.0
      %1028 = vmatpush.xpose.msra.mxu0 0.0
      %1029 = vmatpush.xpose.msra.mxu0 0.0
      %1030 = vmatpush.xpose.msra.mxu0 %v801
      %1031 = vmatmul.f32.gmra.mxu0 %v406
      %v1032 = vpop.f32.mrf.mxu0
      %v1033 = vadd.f32 0.0, %v1032
      %1034 = vmatmul.f32.gmra.mxu0 %v407
      %v1035 = vpop.f32.mrf.mxu0
      %v1036 = vadd.f32 0.0, %v1035
      %1037 = vdwg.mxu0
      %1038 = vmatpush.xpose.msra.mxu0 0.0
      %1039 = vmatpush.xpose.msra.mxu0 0.0
      %1040 = vmatpush.xpose.msra.mxu0 0.0
      %1041 = vmatpush.xpose.msra.mxu0 0.0
      %1042 = vmatpush.xpose.msra.mxu0 0.0
      %1043 = vmatpush.xpose.msra.mxu0 0.0
      %1044 = vmatpush.xpose.msra.mxu0 0.0
      %1045 = vmatpush.xpose.msra.mxu0 0.0
      %1046 = vmatpush.xpose.msra.mxu0 0.0
      %1047 = vmatpush.xpose.msra.mxu0 0.0
      %1048 = vmatpush.xpose.msra.mxu0 0.0
      %1049 = vmatpush.xpose.msra.mxu0 0.0
      %1050 = vmatpush.xpose.msra.mxu0 0.0
      %1051 = vmatpush.xpose.msra.mxu0 0.0
      %1052 = vmatpush.xpose.msra.mxu0 0.0
      %1053 = vmatpush.xpose.msra.mxu0 %v802
      %1054 = vmatmul.f32.gmra.mxu0 %v406
      %v1055 = vpop.f32.mrf.mxu0
      %v1056 = vadd.f32 0.0, %v1055
      %1057 = vmatmul.f32.gmra.mxu0 %v407
      %v1058 = vpop.f32.mrf.mxu0
      %v1059 = vadd.f32 0.0, %v1058
      %1060 = vdwg.mxu0
      %1061 = vmatpush.xpose.msra.mxu0 0.0
      %1062 = vmatpush.xpose.msra.mxu0 0.0
      %1063 = vmatpush.xpose.msra.mxu0 0.0
      %1064 = vmatpush.xpose.msra.mxu0 0.0
      %1065 = vmatpush.xpose.msra.mxu0 0.0
      %1066 = vmatpush.xpose.msra.mxu0 0.0
      %1067 = vmatpush.xpose.msra.mxu0 0.0
      %1068 = vmatpush.xpose.msra.mxu0 0.0
      %1069 = vmatpush.xpose.msra.mxu0 0.0
      %1070 = vmatpush.xpose.msra.mxu0 0.0
      %1071 = vmatpush.xpose.msra.mxu0 0.0
      %1072 = vmatpush.xpose.msra.mxu0 0.0
      %1073 = vmatpush.xpose.msra.mxu0 0.0
      %1074 = vmatpush.xpose.msra.mxu0 0.0
      %1075 = vmatpush.xpose.msra.mxu0 0.0
      %1076 = vmatpush.xpose.msra.mxu0 %v803
      %1077 = vmatmul.f32.gmra.mxu0 %v406
      %v1078 = vpop.f32.mrf.mxu0
      %v1079 = vadd.f32 0.0, %v1078
      %1080 = vmatmul.f32.gmra.mxu0 %v407
      %v1081 = vpop.f32.mrf.mxu0
      %v1082 = vadd.f32 0.0, %v1081
      %1083 = vdwg.mxu0
      %1084 = vmatpush.xpose.msra.mxu0 0.0
      %1085 = vmatpush.xpose.msra.mxu0 0.0
      %1086 = vmatpush.xpose.msra.mxu0 0.0
      %1087 = vmatpush.xpose.msra.mxu0 0.0
      %1088 = vmatpush.xpose.msra.mxu0 0.0
      %1089 = vmatpush.xpose.msra.mxu0 0.0
      %1090 = vmatpush.xpose.msra.mxu0 0.0
      %1091 = vmatpush.xpose.msra.mxu0 0.0
      %1092 = vmatpush.xpose.msra.mxu0 0.0
      %1093 = vmatpush.xpose.msra.mxu0 0.0
      %1094 = vmatpush.xpose.msra.mxu0 0.0
      %1095 = vmatpush.xpose.msra.mxu0 0.0
      %1096 = vmatpush.xpose.msra.mxu0 0.0
      %1097 = vmatpush.xpose.msra.mxu0 0.0
      %1098 = vmatpush.xpose.msra.mxu0 0.0
      %1099 = vmatpush.xpose.msra.mxu0 %v804
      %1100 = vmatmul.f32.gmra.mxu0 %v406
      %v1101 = vpop.f32.mrf.mxu0
      %v1102 = vadd.f32 0.0, %v1101
      %1103 = vmatmul.f32.gmra.mxu0 %v407
      %v1104 = vpop.f32.mrf.mxu0
      %v1105 = vadd.f32 0.0, %v1104
      %1106 = vdwg.mxu0
      %1107 = vmatpush.xpose.msra.mxu0 0.0
      %1108 = vmatpush.xpose.msra.mxu0 0.0
      %1109 = vmatpush.xpose.msra.mxu0 0.0
      %1110 = vmatpush.xpose.msra.mxu0 0.0
      %1111 = vmatpush.xpose.msra.mxu0 0.0
      %1112 = vmatpush.xpose.msra.mxu0 0.0
      %1113 = vmatpush.xpose.msra.mxu0 0.0
      %1114 = vmatpush.xpose.msra.mxu0 0.0
      %1115 = vmatpush.xpose.msra.mxu0 0.0
      %1116 = vmatpush.xpose.msra.mxu0 0.0
      %1117 = vmatpush.xpose.msra.mxu0 0.0
      %1118 = vmatpush.xpose.msra.mxu0 0.0
      %1119 = vmatpush.xpose.msra.mxu0 0.0
      %1120 = vmatpush.xpose.msra.mxu0 0.0
      %1121 = vmatpush.xpose.msra.mxu0 0.0
      %1122 = vmatpush.xpose.msra.mxu0 %v805
      %1123 = vmatmul.f32.gmra.mxu0 %v406
      %v1124 = vpop.f32.mrf.mxu0
      %v1125 = vadd.f32 0.0, %v1124
      %1126 = vmatmul.f32.gmra.mxu0 %v407
      %v1127 = vpop.f32.mrf.mxu0
      %v1128 = vadd.f32 0.0, %v1127
      %1129 = vdwg.mxu0
      %1130 = vmatpush.xpose.msra.mxu0 0.0
      %1131 = vmatpush.xpose.msra.mxu0 0.0
      %1132 = vmatpush.xpose.msra.mxu0 0.0
      %1133 = vmatpush.xpose.msra.mxu0 0.0
      %1134 = vmatpush.xpose.msra.mxu0 0.0
      %1135 = vmatpush.xpose.msra.mxu0 0.0
      %1136 = vmatpush.xpose.msra.mxu0 0.0
      %1137 = vmatpush.xpose.msra.mxu0 0.0
      %1138 = vmatpush.xpose.msra.mxu0 0.0
      %1139 = vmatpush.xpose.msra.mxu0 0.0
      %1140 = vmatpush.xpose.msra.mxu0 0.0
      %1141 = vmatpush.xpose.msra.mxu0 0.0
      %1142 = vmatpush.xpose.msra.mxu0 0.0
      %1143 = vmatpush.xpose.msra.mxu0 0.0
      %1144 = vmatpush.xpose.msra.mxu0 0.0
      %1145 = vmatpush.xpose.msra.mxu0 %v806
      %1146 = vmatmul.f32.gmra.mxu0 %v406
      %v1147 = vpop.f32.mrf.mxu0
      %v1148 = vadd.f32 0.0, %v1147
      %1149 = vmatmul.f32.gmra.mxu0 %v407
      %v1150 = vpop.f32.mrf.mxu0
      %v1151 = vadd.f32 0.0, %v1150
      %1152 = vdwg.mxu0
      %1153 = vmatpush.xpose.msra.mxu0 0.0
      %1154 = vmatpush.xpose.msra.mxu0 0.0
      %1155 = vmatpush.xpose.msra.mxu0 0.0
      %1156 = vmatpush.xpose.msra.mxu0 0.0
      %1157 = vmatpush.xpose.msra.mxu0 0.0
      %1158 = vmatpush.xpose.msra.mxu0 0.0
      %1159 = vmatpush.xpose.msra.mxu0 0.0
      %1160 = vmatpush.xpose.msra.mxu0 0.0
      %1161 = vmatpush.xpose.msra.mxu0 0.0
      %1162 = vmatpush.xpose.msra.mxu0 0.0
      %1163 = vmatpush.xpose.msra.mxu0 0.0
      %1164 = vmatpush.xpose.msra.mxu0 0.0
      %1165 = vmatpush.xpose.msra.mxu0 0.0
      %1166 = vmatpush.xpose.msra.mxu0 0.0
      %1167 = vmatpush.xpose.msra.mxu0 0.0
      %1168 = vmatpush.xpose.msra.mxu0 %v807
      %1169 = vmatmul.f32.gmra.mxu0 %v406
      %v1170 = vpop.f32.mrf.mxu0
      %v1171 = vadd.f32 0.0, %v1170
      %1172 = vmatmul.f32.gmra.mxu0 %v407
      %v1173 = vpop.f32.mrf.mxu0
      %v1174 = vadd.f32 0.0, %v1173
      %1175 = vdwg.mxu0
      %v1176 = vld [vmem:[%s3] sm:$0xff]
      %v1177 = vld [vmem:[%s3 + $0x8] sm:$0xff]
      %v1178 = vld [vmem:[%s3 + $0x10] sm:$0xff]
      %v1179 = vld [vmem:[%s3 + $0x18] sm:$0xff]
      %v1180 = vld [vmem:[%s3 + $0x20] sm:$0xff]
      %v1181 = vld [vmem:[%s3 + $0x28] sm:$0xff]
      %v1182 = vld [vmem:[%s3 + $0x30] sm:$0xff]
      %v1183 = vld [vmem:[%s3 + $0x38] sm:$0xff]
      %v1184 = vld [vmem:[%s3 + $0x40] sm:$0xff]
      %v1185 = vld [vmem:[%s3 + $0x48] sm:$0xff]
      %v1186 = vld [vmem:[%s3 + $0x50] sm:$0xff]
      %v1187 = vld [vmem:[%s3 + $0x58] sm:$0xff]
      %v1188 = vld [vmem:[%s3 + $0x60] sm:$0xff]
      %v1189 = vld [vmem:[%s3 + $0x68] sm:$0xff]
      %v1190 = vld [vmem:[%s3 + $0x70] sm:$0xff]
      %v1191 = vld [vmem:[%s3 + $0x78] sm:$0xff]
      %1192 = vmatpush.xpose.msra.mxu0 0.0
      %1193 = vmatpush.xpose.msra.mxu0 0.0
      %1194 = vmatpush.xpose.msra.mxu0 0.0
      %1195 = vmatpush.xpose.msra.mxu0 0.0
      %1196 = vmatpush.xpose.msra.mxu0 0.0
      %1197 = vmatpush.xpose.msra.mxu0 0.0
      %1198 = vmatpush.xpose.msra.mxu0 0.0
      %1199 = vmatpush.xpose.msra.mxu0 0.0
      %1200 = vmatpush.xpose.msra.mxu0 0.0
      %1201 = vmatpush.xpose.msra.mxu0 0.0
      %1202 = vmatpush.xpose.msra.mxu0 0.0
      %1203 = vmatpush.xpose.msra.mxu0 0.0
      %1204 = vmatpush.xpose.msra.mxu0 0.0
      %1205 = vmatpush.xpose.msra.mxu0 0.0
      %1206 = vmatpush.xpose.msra.mxu0 0.0
      %1207 = vmatpush.xpose.msra.mxu0 %v1176
      %1208 = vmatmul.f32.gmra.mxu0 %v406
      %v1209 = vpop.f32.mrf.mxu0
      %v1210 = vadd.f32 0.0, %v1209
      %1211 = vmatmul.f32.gmra.mxu0 %v407
      %v1212 = vpop.f32.mrf.mxu0
      %v1213 = vadd.f32 0.0, %v1212
      %1214 = vdwg.mxu0
      %1215 = vmatpush.xpose.msra.mxu0 0.0
      %1216 = vmatpush.xpose.msra.mxu0 0.0
      %1217 = vmatpush.xpose.msra.mxu0 0.0
      %1218 = vmatpush.xpose.msra.mxu0 0.0
      %1219 = vmatpush.xpose.msra.mxu0 0.0
      %1220 = vmatpush.xpose.msra.mxu0 0.0
      %1221 = vmatpush.xpose.msra.mxu0 0.0
      %1222 = vmatpush.xpose.msra.mxu0 0.0
      %1223 = vmatpush.xpose.msra.mxu0 0.0
      %1224 = vmatpush.xpose.msra.mxu0 0.0
      %1225 = vmatpush.xpose.msra.mxu0 0.0
      %1226 = vmatpush.xpose.msra.mxu0 0.0
      %1227 = vmatpush.xpose.msra.mxu0 0.0
      %1228 = vmatpush.xpose.msra.mxu0 0.0
      %1229 = vmatpush.xpose.msra.mxu0 0.0
      %1230 = vmatpush.xpose.msra.mxu0 %v1177
      %1231 = vmatmul.f32.gmra.mxu0 %v406
      %v1232 = vpop.f32.mrf.mxu0
      %v1233 = vadd.f32 0.0, %v1232
      %1234 = vmatmul.f32.gmra.mxu0 %v407
      %v1235 = vpop.f32.mrf.mxu0
      %v1236 = vadd.f32 0.0, %v1235
      %1237 = vdwg.mxu0
      %1238 = vmatpush.xpose.msra.mxu0 0.0
      %1239 = vmatpush.xpose.msra.mxu0 0.0
      %1240 = vmatpush.xpose.msra.mxu0 0.0
      %1241 = vmatpush.xpose.msra.mxu0 0.0
      %1242 = vmatpush.xpose.msra.mxu0 0.0
      %1243 = vmatpush.xpose.msra.mxu0 0.0
      %1244 = vmatpush.xpose.msra.mxu0 0.0
      %1245 = vmatpush.xpose.msra.mxu0 0.0
      %1246 = vmatpush.xpose.msra.mxu0 0.0
      %1247 = vmatpush.xpose.msra.mxu0 0.0
      %1248 = vmatpush.xpose.msra.mxu0 0.0
      %1249 = vmatpush.xpose.msra.mxu0 0.0
      %1250 = vmatpush.xpose.msra.mxu0 0.0
      %1251 = vmatpush.xpose.msra.mxu0 0.0
      %1252 = vmatpush.xpose.msra.mxu0 0.0
      %1253 = vmatpush.xpose.msra.mxu0 %v1178
      %1254 = vmatmul.f32.gmra.mxu0 %v406
      %v1255 = vpop.f32.mrf.mxu0
      %v1256 = vadd.f32 0.0, %v1255
      %1257 = vmatmul.f32.gmra.mxu0 %v407
      %v1258 = vpop.f32.mrf.mxu0
      %v1259 = vadd.f32 0.0, %v1258
      %1260 = vdwg.mxu0
      %1261 = vmatpush.xpose.msra.mxu0 0.0
      %1262 = vmatpush.xpose.msra.mxu0 0.0
      %1263 = vmatpush.xpose.msra.mxu0 0.0
      %1264 = vmatpush.xpose.msra.mxu0 0.0
      %1265 = vmatpush.xpose.msra.mxu0 0.0
      %1266 = vmatpush.xpose.msra.mxu0 0.0
      %1267 = vmatpush.xpose.msra.mxu0 0.0
      %1268 = vmatpush.xpose.msra.mxu0 0.0
      %1269 = vmatpush.xpose.msra.mxu0 0.0
      %1270 = vmatpush.xpose.msra.mxu0 0.0
      %1271 = vmatpush.xpose.msra.mxu0 0.0
      %1272 = vmatpush.xpose.msra.mxu0 0.0
      %1273 = vmatpush.xpose.msra.mxu0 0.0
      %1274 = vmatpush.xpose.msra.mxu0 0.0
      %1275 = vmatpush.xpose.msra.mxu0 0.0
      %1276 = vmatpush.xpose.msra.mxu0 %v1179
      %1277 = vmatmul.f32.gmra.mxu0 %v406
      %v1278 = vpop.f32.mrf.mxu0
      %v1279 = vadd.f32 0.0, %v1278
      %1280 = vmatmul.f32.gmra.mxu0 %v407
      %v1281 = vpop.f32.mrf.mxu0
      %v1282 = vadd.f32 0.0, %v1281
      %1283 = vdwg.mxu0
      %1284 = vmatpush.xpose.msra.mxu0 0.0
      %1285 = vmatpush.xpose.msra.mxu0 0.0
      %1286 = vmatpush.xpose.msra.mxu0 0.0
      %1287 = vmatpush.xpose.msra.mxu0 0.0
      %1288 = vmatpush.xpose.msra.mxu0 0.0
      %1289 = vmatpush.xpose.msra.mxu0 0.0
      %1290 = vmatpush.xpose.msra.mxu0 0.0
      %1291 = vmatpush.xpose.msra.mxu0 0.0
      %1292 = vmatpush.xpose.msra.mxu0 0.0
      %1293 = vmatpush.xpose.msra.mxu0 0.0
      %1294 = vmatpush.xpose.msra.mxu0 0.0
      %1295 = vmatpush.xpose.msra.mxu0 0.0
      %1296 = vmatpush.xpose.msra.mxu0 0.0
      %1297 = vmatpush.xpose.msra.mxu0 0.0
      %1298 = vmatpush.xpose.msra.mxu0 0.0
      %1299 = vmatpush.xpose.msra.mxu0 %v1180
      %1300 = vmatmul.f32.gmra.mxu0 %v406
      %v1301 = vpop.f32.mrf.mxu0
      %v1302 = vadd.f32 0.0, %v1301
      %1303 = vmatmul.f32.gmra.mxu0 %v407
      %v1304 = vpop.f32.mrf.mxu0
      %v1305 = vadd.f32 0.0, %v1304
      %1306 = vdwg.mxu0
      %1307 = vmatpush.xpose.msra.mxu0 0.0
      %1308 = vmatpush.xpose.msra.mxu0 0.0
      %1309 = vmatpush.xpose.msra.mxu0 0.0
      %1310 = vmatpush.xpose.msra.mxu0 0.0
      %1311 = vmatpush.xpose.msra.mxu0 0.0
      %1312 = vmatpush.xpose.msra.mxu0 0.0
      %1313 = vmatpush.xpose.msra.mxu0 0.0
      %1314 = vmatpush.xpose.msra.mxu0 0.0
      %1315 = vmatpush.xpose.msra.mxu0 0.0
      %1316 = vmatpush.xpose.msra.mxu0 0.0
      %1317 = vmatpush.xpose.msra.mxu0 0.0
      %1318 = vmatpush.xpose.msra.mxu0 0.0
      %1319 = vmatpush.xpose.msra.mxu0 0.0
      %1320 = vmatpush.xpose.msra.mxu0 0.0
      %1321 = vmatpush.xpose.msra.mxu0 0.0
      %1322 = vmatpush.xpose.msra.mxu0 %v1181
      %1323 = vmatmul.f32.gmra.mxu0 %v406
      %v1324 = vpop.f32.mrf.mxu0
      %v1325 = vadd.f32 0.0, %v1324
      %1326 = vmatmul.f32.gmra.mxu0 %v407
      %v1327 = vpop.f32.mrf.mxu0
      %v1328 = vadd.f32 0.0, %v1327
      %1329 = vdwg.mxu0
      %1330 = vmatpush.xpose.msra.mxu0 0.0
      %1331 = vmatpush.xpose.msra.mxu0 0.0
      %1332 = vmatpush.xpose.msra.mxu0 0.0
      %1333 = vmatpush.xpose.msra.mxu0 0.0
      %1334 = vmatpush.xpose.msra.mxu0 0.0
      %1335 = vmatpush.xpose.msra.mxu0 0.0
      %1336 = vmatpush.xpose.msra.mxu0 0.0
      %1337 = vmatpush.xpose.msra.mxu0 0.0
      %1338 = vmatpush.xpose.msra.mxu0 0.0
      %1339 = vmatpush.xpose.msra.mxu0 0.0
      %1340 = vmatpush.xpose.msra.mxu0 0.0
      %1341 = vmatpush.xpose.msra.mxu0 0.0
      %1342 = vmatpush.xpose.msra.mxu0 0.0
      %1343 = vmatpush.xpose.msra.mxu0 0.0
      %1344 = vmatpush.xpose.msra.mxu0 0.0
      %1345 = vmatpush.xpose.msra.mxu0 %v1182
      %1346 = vmatmul.f32.gmra.mxu0 %v406
      %v1347 = vpop.f32.mrf.mxu0
      %v1348 = vadd.f32 0.0, %v1347
      %1349 = vmatmul.f32.gmra.mxu0 %v407
      %v1350 = vpop.f32.mrf.mxu0
      %v1351 = vadd.f32 0.0, %v1350
      %1352 = vdwg.mxu0
      %1353 = vmatpush.xpose.msra.mxu0 0.0
      %1354 = vmatpush.xpose.msra.mxu0 0.0
      %1355 = vmatpush.xpose.msra.mxu0 0.0
      %1356 = vmatpush.xpose.msra.mxu0 0.0
      %1357 = vmatpush.xpose.msra.mxu0 0.0
      %1358 = vmatpush.xpose.msra.mxu0 0.0
      %1359 = vmatpush.xpose.msra.mxu0 0.0
      %1360 = vmatpush.xpose.msra.mxu0 0.0
      %1361 = vmatpush.xpose.msra.mxu0 0.0
      %1362 = vmatpush.xpose.msra.mxu0 0.0
      %1363 = vmatpush.xpose.msra.mxu0 0.0
      %1364 = vmatpush.xpose.msra.mxu0 0.0
      %1365 = vmatpush.xpose.msra.mxu0 0.0
      %1366 = vmatpush.xpose.msra.mxu0 0.0
      %1367 = vmatpush.xpose.msra.mxu0 0.0
      %1368 = vmatpush.xpose.msra.mxu0 %v1183
      %1369 = vmatmul.f32.gmra.mxu0 %v406
      %v1370 = vpop.f32.mrf.mxu0
      %v1371 = vadd.f32 0.0, %v1370
      %1372 = vmatmul.f32.gmra.mxu0 %v407
      %v1373 = vpop.f32.mrf.mxu0
      %v1374 = vadd.f32 0.0, %v1373
      %1375 = vdwg.mxu0
      %1376 = vmatpush.xpose.msra.mxu0 0.0
      %1377 = vmatpush.xpose.msra.mxu0 0.0
      %1378 = vmatpush.xpose.msra.mxu0 0.0
      %1379 = vmatpush.xpose.msra.mxu0 0.0
      %1380 = vmatpush.xpose.msra.mxu0 0.0
      %1381 = vmatpush.xpose.msra.mxu0 0.0
      %1382 = vmatpush.xpose.msra.mxu0 0.0
      %1383 = vmatpush.xpose.msra.mxu0 0.0
      %1384 = vmatpush.xpose.msra.mxu0 0.0
      %1385 = vmatpush.xpose.msra.mxu0 0.0
      %1386 = vmatpush.xpose.msra.mxu0 0.0
      %1387 = vmatpush.xpose.msra.mxu0 0.0
      %1388 = vmatpush.xpose.msra.mxu0 0.0
      %1389 = vmatpush.xpose.msra.mxu0 0.0
      %1390 = vmatpush.xpose.msra.mxu0 0.0
      %1391 = vmatpush.xpose.msra.mxu0 %v1184
      %1392 = vmatmul.f32.gmra.mxu0 %v406
      %v1393 = vpop.f32.mrf.mxu0
      %v1394 = vadd.f32 0.0, %v1393
      %1395 = vmatmul.f32.gmra.mxu0 %v407
      %v1396 = vpop.f32.mrf.mxu0
      %v1397 = vadd.f32 0.0, %v1396
      %1398 = vdwg.mxu0
      %1399 = vmatpush.xpose.msra.mxu0 0.0
      %1400 = vmatpush.xpose.msra.mxu0 0.0
      %1401 = vmatpush.xpose.msra.mxu0 0.0
      %1402 = vmatpush.xpose.msra.mxu0 0.0
      %1403 = vmatpush.xpose.msra.mxu0 0.0
      %1404 = vmatpush.xpose.msra.mxu0 0.0
      %1405 = vmatpush.xpose.msra.mxu0 0.0
      %1406 = vmatpush.xpose.msra.mxu0 0.0
      %1407 = vmatpush.xpose.msra.mxu0 0.0
      %1408 = vmatpush.xpose.msra.mxu0 0.0
      %1409 = vmatpush.xpose.msra.mxu0 0.0
      %1410 = vmatpush.xpose.msra.mxu0 0.0
      %1411 = vmatpush.xpose.msra.mxu0 0.0
      %1412 = vmatpush.xpose.msra.mxu0 0.0
      %1413 = vmatpush.xpose.msra.mxu0 0.0
      %1414 = vmatpush.xpose.msra.mxu0 %v1185
      %1415 = vmatmul.f32.gmra.mxu0 %v406
      %v1416 = vpop.f32.mrf.mxu0
      %v1417 = vadd.f32 0.0, %v1416
      %1418 = vmatmul.f32.gmra.mxu0 %v407
      %v1419 = vpop.f32.mrf.mxu0
      %v1420 = vadd.f32 0.0, %v1419
      %1421 = vdwg.mxu0
      %1422 = vmatpush.xpose.msra.mxu0 0.0
      %1423 = vmatpush.xpose.msra.mxu0 0.0
      %1424 = vmatpush.xpose.msra.mxu0 0.0
      %1425 = vmatpush.xpose.msra.mxu0 0.0
      %1426 = vmatpush.xpose.msra.mxu0 0.0
      %1427 = vmatpush.xpose.msra.mxu0 0.0
      %1428 = vmatpush.xpose.msra.mxu0 0.0
      %1429 = vmatpush.xpose.msra.mxu0 0.0
      %1430 = vmatpush.xpose.msra.mxu0 0.0
      %1431 = vmatpush.xpose.msra.mxu0 0.0
      %1432 = vmatpush.xpose.msra.mxu0 0.0
      %1433 = vmatpush.xpose.msra.mxu0 0.0
      %1434 = vmatpush.xpose.msra.mxu0 0.0
      %1435 = vmatpush.xpose.msra.mxu0 0.0
      %1436 = vmatpush.xpose.msra.mxu0 0.0
      %1437 = vmatpush.xpose.msra.mxu0 %v1186
      %1438 = vmatmul.f32.gmra.mxu0 %v406
      %v1439 = vpop.f32.mrf.mxu0
      %v1440 = vadd.f32 0.0, %v1439
      %1441 = vmatmul.f32.gmra.mxu0 %v407
      %v1442 = vpop.f32.mrf.mxu0
      %v1443 = vadd.f32 0.0, %v1442
      %1444 = vdwg.mxu0
      %1445 = vmatpush.xpose.msra.mxu0 0.0
      %1446 = vmatpush.xpose.msra.mxu0 0.0
      %1447 = vmatpush.xpose.msra.mxu0 0.0
      %1448 = vmatpush.xpose.msra.mxu0 0.0
      %1449 = vmatpush.xpose.msra.mxu0 0.0
      %1450 = vmatpush.xpose.msra.mxu0 0.0
      %1451 = vmatpush.xpose.msra.mxu0 0.0
      %1452 = vmatpush.xpose.msra.mxu0 0.0
      %1453 = vmatpush.xpose.msra.mxu0 0.0
      %1454 = vmatpush.xpose.msra.mxu0 0.0
      %1455 = vmatpush.xpose.msra.mxu0 0.0
      %1456 = vmatpush.xpose.msra.mxu0 0.0
      %1457 = vmatpush.xpose.msra.mxu0 0.0
      %1458 = vmatpush.xpose.msra.mxu0 0.0
      %1459 = vmatpush.xpose.msra.mxu0 0.0
      %1460 = vmatpush.xpose.msra.mxu0 %v1187
      %1461 = vmatmul.f32.gmra.mxu0 %v406
      %v1462 = vpop.f32.mrf.mxu0
      %v1463 = vadd.f32 0.0, %v1462
      %1464 = vmatmul.f32.gmra.mxu0 %v407
      %v1465 = vpop.f32.mrf.mxu0
      %v1466 = vadd.f32 0.0, %v1465
      %1467 = vdwg.mxu0
      %1468 = vmatpush.xpose.msra.mxu0 0.0
      %1469 = vmatpush.xpose.msra.mxu0 0.0
      %1470 = vmatpush.xpose.msra.mxu0 0.0
      %1471 = vmatpush.xpose.msra.mxu0 0.0
      %1472 = vmatpush.xpose.msra.mxu0 0.0
      %1473 = vmatpush.xpose.msra.mxu0 0.0
      %1474 = vmatpush.xpose.msra.mxu0 0.0
      %1475 = vmatpush.xpose.msra.mxu0 0.0
      %1476 = vmatpush.xpose.msra.mxu0 0.0
      %1477 = vmatpush.xpose.msra.mxu0 0.0
      %1478 = vmatpush.xpose.msra.mxu0 0.0
      %1479 = vmatpush.xpose.msra.mxu0 0.0
      %1480 = vmatpush.xpose.msra.mxu0 0.0
      %1481 = vmatpush.xpose.msra.mxu0 0.0
      %1482 = vmatpush.xpose.msra.mxu0 0.0
      %1483 = vmatpush.xpose.msra.mxu0 %v1188
      %1484 = vmatmul.f32.gmra.mxu0 %v406
      %v1485 = vpop.f32.mrf.mxu0
      %v1486 = vadd.f32 0.0, %v1485
      %1487 = vmatmul.f32.gmra.mxu0 %v407
      %v1488 = vpop.f32.mrf.mxu0
      %v1489 = vadd.f32 0.0, %v1488
      %1490 = vdwg.mxu0
      %1491 = vmatpush.xpose.msra.mxu0 0.0
      %1492 = vmatpush.xpose.msra.mxu0 0.0
      %1493 = vmatpush.xpose.msra.mxu0 0.0
      %1494 = vmatpush.xpose.msra.mxu0 0.0
      %1495 = vmatpush.xpose.msra.mxu0 0.0
      %1496 = vmatpush.xpose.msra.mxu0 0.0
      %1497 = vmatpush.xpose.msra.mxu0 0.0
      %1498 = vmatpush.xpose.msra.mxu0 0.0
      %1499 = vmatpush.xpose.msra.mxu0 0.0
      %1500 = vmatpush.xpose.msra.mxu0 0.0
      %1501 = vmatpush.xpose.msra.mxu0 0.0
      %1502 = vmatpush.xpose.msra.mxu0 0.0
      %1503 = vmatpush.xpose.msra.mxu0 0.0
      %1504 = vmatpush.xpose.msra.mxu0 0.0
      %1505 = vmatpush.xpose.msra.mxu0 0.0
      %1506 = vmatpush.xpose.msra.mxu0 %v1189
      %1507 = vmatmul.f32.gmra.mxu0 %v406
      %v1508 = vpop.f32.mrf.mxu0
      %v1509 = vadd.f32 0.0, %v1508
      %1510 = vmatmul.f32.gmra.mxu0 %v407
      %v1511 = vpop.f32.mrf.mxu0
      %v1512 = vadd.f32 0.0, %v1511
      %1513 = vdwg.mxu0
      %1514 = vmatpush.xpose.msra.mxu0 0.0
      %1515 = vmatpush.xpose.msra.mxu0 0.0
      %1516 = vmatpush.xpose.msra.mxu0 0.0
      %1517 = vmatpush.xpose.msra.mxu0 0.0
      %1518 = vmatpush.xpose.msra.mxu0 0.0
      %1519 = vmatpush.xpose.msra.mxu0 0.0
      %1520 = vmatpush.xpose.msra.mxu0 0.0
      %1521 = vmatpush.xpose.msra.mxu0 0.0
      %1522 = vmatpush.xpose.msra.mxu0 0.0
      %1523 = vmatpush.xpose.msra.mxu0 0.0
      %1524 = vmatpush.xpose.msra.mxu0 0.0
      %1525 = vmatpush.xpose.msra.mxu0 0.0
      %1526 = vmatpush.xpose.msra.mxu0 0.0
      %1527 = vmatpush.xpose.msra.mxu0 0.0
      %1528 = vmatpush.xpose.msra.mxu0 0.0
      %1529 = vmatpush.xpose.msra.mxu0 %v1190
      %1530 = vmatmul.f32.gmra.mxu0 %v406
      %v1531 = vpop.f32.mrf.mxu0
      %v1532 = vadd.f32 0.0, %v1531
      %1533 = vmatmul.f32.gmra.mxu0 %v407
      %v1534 = vpop.f32.mrf.mxu0
      %v1535 = vadd.f32 0.0, %v1534
      %1536 = vdwg.mxu0
      %1537 = vmatpush.xpose.msra.mxu0 0.0
      %1538 = vmatpush.xpose.msra.mxu0 0.0
      %1539 = vmatpush.xpose.msra.mxu0 0.0
      %1540 = vmatpush.xpose.msra.mxu0 0.0
      %1541 = vmatpush.xpose.msra.mxu0 0.0
      %1542 = vmatpush.xpose.msra.mxu0 0.0
      %1543 = vmatpush.xpose.msra.mxu0 0.0
      %1544 = vmatpush.xpose.msra.mxu0 0.0
      %1545 = vmatpush.xpose.msra.mxu0 0.0
      %1546 = vmatpush.xpose.msra.mxu0 0.0
      %1547 = vmatpush.xpose.msra.mxu0 0.0
      %1548 = vmatpush.xpose.msra.mxu0 0.0
      %1549 = vmatpush.xpose.msra.mxu0 0.0
      %1550 = vmatpush.xpose.msra.mxu0 0.0
      %1551 = vmatpush.xpose.msra.mxu0 0.0
      %1552 = vmatpush.xpose.msra.mxu0 %v1191
      %1553 = vmatmul.f32.gmra.mxu0 %v406
      %v1554 = vpop.f32.mrf.mxu0
      %v1555 = vadd.f32 0.0, %v1554
      %1556 = vmatmul.f32.gmra.mxu0 %v407
      %v1557 = vpop.f32.mrf.mxu0
      %v1558 = vadd.f32 0.0, %v1557
      %1559 = vdwg.mxu0
      %v1560 = vld [vmem:[%s385] sm:$0xff]
      %v1561 = vld [vmem:[%s385 + $0x8] sm:$0x3]
      %v1562 = vld [vmem:[%s390] sm:$0xff]
      %v1563 = vld [vmem:[%s390 + $0x8] sm:$0x3]
      %v1564 = vmul.f32 %v442, %v1560
      %v1565 = vmul.f32 %v445, %v1561
      %v1566 = vmul.f32 %v465, %v1560
      %v1567 = vmul.f32 %v468, %v1561
      %v1568 = vmul.f32 %v488, %v1560
      %v1569 = vmul.f32 %v491, %v1561
      %v1570 = vmul.f32 %v511, %v1560
      %v1571 = vmul.f32 %v514, %v1561
      %v1572 = vmul.f32 %v534, %v1560
      %v1573 = vmul.f32 %v537, %v1561
      %v1574 = vmul.f32 %v557, %v1560
      %v1575 = vmul.f32 %v560, %v1561
      %v1576 = vmul.f32 %v580, %v1560
      %v1577 = vmul.f32 %v583, %v1561
      %v1578 = vmul.f32 %v603, %v1560
      %v1579 = vmul.f32 %v606, %v1561
      %v1580 = vmul.f32 %v626, %v1560
      %v1581 = vmul.f32 %v629, %v1561
      %v1582 = vmul.f32 %v649, %v1560
      %v1583 = vmul.f32 %v652, %v1561
      %v1584 = vmul.f32 %v672, %v1560
      %v1585 = vmul.f32 %v675, %v1561
      %v1586 = vmul.f32 %v695, %v1560
      %v1587 = vmul.f32 %v698, %v1561
      %v1588 = vmul.f32 %v718, %v1560
      %v1589 = vmul.f32 %v721, %v1561
      %v1590 = vmul.f32 %v741, %v1560
      %v1591 = vmul.f32 %v744, %v1561
      %v1592 = vmul.f32 %v764, %v1560
      %v1593 = vmul.f32 %v767, %v1561
      %v1594 = vmul.f32 %v787, %v1560
      %v1595 = vmul.f32 %v790, %v1561
      %1598 = vrot.lane.b32.xlu0 %v1562, 4
      %v1599 = vpop.permute.xlu0 %1598
      %1600 = vrot.lane.b32.xlu0 %v1563, 4
      %v1601 = vpop.permute.xlu0 %1600
      %v1604 = vmul.f32 %v442, %v1599
      %v1605 = vmul.f32 %v445, %v1601
      %v1606 = vmul.f32 %v465, %v1599
      %v1607 = vmul.f32 %v468, %v1601
      %v1608 = vmul.f32 %v488, %v1599
      %v1609 = vmul.f32 %v491, %v1601
      %v1610 = vmul.f32 %v511, %v1599
      %v1611 = vmul.f32 %v514, %v1601
      %v1612 = vmul.f32 %v534, %v1599
      %v1613 = vmul.f32 %v537, %v1601
      %v1614 = vmul.f32 %v557, %v1599
      %v1615 = vmul.f32 %v560, %v1601
      %v1616 = vmul.f32 %v580, %v1599
      %v1617 = vmul.f32 %v583, %v1601
      %v1618 = vmul.f32 %v603, %v1599
      %v1619 = vmul.f32 %v606, %v1601
      %v1620 = vmul.f32 %v626, %v1599
      %v1621 = vmul.f32 %v629, %v1601
      %v1622 = vmul.f32 %v649, %v1599
      %v1623 = vmul.f32 %v652, %v1601
      %v1624 = vmul.f32 %v672, %v1599
      %v1625 = vmul.f32 %v675, %v1601
      %v1626 = vmul.f32 %v695, %v1599
      %v1627 = vmul.f32 %v698, %v1601
      %v1628 = vmul.f32 %v718, %v1599
      %v1629 = vmul.f32 %v721, %v1601
      %v1630 = vmul.f32 %v741, %v1599
      %v1631 = vmul.f32 %v744, %v1601
      %v1632 = vmul.f32 %v764, %v1599
      %v1633 = vmul.f32 %v767, %v1601
      %v1634 = vmul.f32 %v787, %v1599
      %v1635 = vmul.f32 %v790, %v1601
      %1668 = vrot.lane.b32.xlu0 %v1604, 124
      %v1669 = vpop.permute.xlu0 %1668
      %1670 = vrot.lane.b32.xlu0 %v1605, 124
      %v1671 = vpop.permute.xlu0 %1670
      %1672 = vrot.lane.b32.xlu0 %v1606, 124
      %v1673 = vpop.permute.xlu0 %1672
      %1674 = vrot.lane.b32.xlu0 %v1607, 124
      %v1675 = vpop.permute.xlu0 %1674
      %1676 = vrot.lane.b32.xlu0 %v1608, 124
      %v1677 = vpop.permute.xlu0 %1676
      %1678 = vrot.lane.b32.xlu0 %v1609, 124
      %v1679 = vpop.permute.xlu0 %1678
      %1680 = vrot.lane.b32.xlu0 %v1610, 124
      %v1681 = vpop.permute.xlu0 %1680
      %1682 = vrot.lane.b32.xlu0 %v1611, 124
      %v1683 = vpop.permute.xlu0 %1682
      %1684 = vrot.lane.b32.xlu0 %v1612, 124
      %v1685 = vpop.permute.xlu0 %1684
      %1686 = vrot.lane.b32.xlu0 %v1613, 124
      %v1687 = vpop.permute.xlu0 %1686
      %1688 = vrot.lane.b32.xlu0 %v1614, 124
      %v1689 = vpop.permute.xlu0 %1688
      %1690 = vrot.lane.b32.xlu0 %v1615, 124
      %v1691 = vpop.permute.xlu0 %1690
      %1692 = vrot.lane.b32.xlu0 %v1616, 124
      %v1693 = vpop.permute.xlu0 %1692
      %1694 = vrot.lane.b32.xlu0 %v1617, 124
      %v1695 = vpop.permute.xlu0 %1694
      %1696 = vrot.lane.b32.xlu0 %v1618, 124
      %v1697 = vpop.permute.xlu0 %1696
      %1698 = vrot.lane.b32.xlu0 %v1619, 124
      %v1699 = vpop.permute.xlu0 %1698
      %1700 = vrot.lane.b32.xlu0 %v1620, 124
      %v1701 = vpop.permute.xlu0 %1700
      %1702 = vrot.lane.b32.xlu0 %v1621, 124
      %v1703 = vpop.permute.xlu0 %1702
      %1704 = vrot.lane.b32.xlu0 %v1622, 124
      %v1705 = vpop.permute.xlu0 %1704
      %1706 = vrot.lane.b32.xlu0 %v1623, 124
      %v1707 = vpop.permute.xlu0 %1706
      %1708 = vrot.lane.b32.xlu0 %v1624, 124
      %v1709 = vpop.permute.xlu0 %1708
      %1710 = vrot.lane.b32.xlu0 %v1625, 124
      %v1711 = vpop.permute.xlu0 %1710
      %1712 = vrot.lane.b32.xlu0 %v1626, 124
      %v1713 = vpop.permute.xlu0 %1712
      %1714 = vrot.lane.b32.xlu0 %v1627, 124
      %v1715 = vpop.permute.xlu0 %1714
      %1716 = vrot.lane.b32.xlu0 %v1628, 124
      %v1717 = vpop.permute.xlu0 %1716
      %1718 = vrot.lane.b32.xlu0 %v1629, 124
      %v1719 = vpop.permute.xlu0 %1718
      %1720 = vrot.lane.b32.xlu0 %v1630, 124
      %v1721 = vpop.permute.xlu0 %1720
      %1722 = vrot.lane.b32.xlu0 %v1631, 124
      %v1723 = vpop.permute.xlu0 %1722
      %1724 = vrot.lane.b32.xlu0 %v1632, 124
      %v1725 = vpop.permute.xlu0 %1724
      %1726 = vrot.lane.b32.xlu0 %v1633, 124
      %v1727 = vpop.permute.xlu0 %1726
      %1728 = vrot.lane.b32.xlu0 %v1634, 124
      %v1729 = vpop.permute.xlu0 %1728
      %1730 = vrot.lane.b32.xlu0 %v1635, 124
      %v1731 = vpop.permute.xlu0 %1730
      %v1764 = vsub.f32 %v1564, %v1669
      %v1765 = vsub.f32 %v1565, %v1671
      %v1766 = vsub.f32 %v1566, %v1673
      %v1767 = vsub.f32 %v1567, %v1675
      %v1768 = vsub.f32 %v1568, %v1677
      %v1769 = vsub.f32 %v1569, %v1679
      %v1770 = vsub.f32 %v1570, %v1681
      %v1771 = vsub.f32 %v1571, %v1683
      %v1772 = vsub.f32 %v1572, %v1685
      %v1773 = vsub.f32 %v1573, %v1687
      %v1774 = vsub.f32 %v1574, %v1689
      %v1775 = vsub.f32 %v1575, %v1691
      %v1776 = vsub.f32 %v1576, %v1693
      %v1777 = vsub.f32 %v1577, %v1695
      %v1778 = vsub.f32 %v1578, %v1697
      %v1779 = vsub.f32 %v1579, %v1699
      %v1780 = vsub.f32 %v1580, %v1701
      %v1781 = vsub.f32 %v1581, %v1703
      %v1782 = vsub.f32 %v1582, %v1705
      %v1783 = vsub.f32 %v1583, %v1707
      %v1784 = vsub.f32 %v1584, %v1709
      %v1785 = vsub.f32 %v1585, %v1711
      %v1786 = vsub.f32 %v1586, %v1713
      %v1787 = vsub.f32 %v1587, %v1715
      %v1788 = vsub.f32 %v1588, %v1717
      %v1789 = vsub.f32 %v1589, %v1719
      %v1790 = vsub.f32 %v1590, %v1721
      %v1791 = vsub.f32 %v1591, %v1723
      %v1792 = vsub.f32 %v1592, %v1725
      %v1793 = vsub.f32 %v1593, %v1727
      %v1794 = vsub.f32 %v1594, %v1729
      %v1795 = vsub.f32 %v1595, %v1731
      %v1796 = vmul.f32 %v442, %v1562
      %v1797 = vmul.f32 %v445, %v1563
      %v1798 = vmul.f32 %v465, %v1562
      %v1799 = vmul.f32 %v468, %v1563
      %v1800 = vmul.f32 %v488, %v1562
      %v1801 = vmul.f32 %v491, %v1563
      %v1802 = vmul.f32 %v511, %v1562
      %v1803 = vmul.f32 %v514, %v1563
      %v1804 = vmul.f32 %v534, %v1562
      %v1805 = vmul.f32 %v537, %v1563
      %v1806 = vmul.f32 %v557, %v1562
      %v1807 = vmul.f32 %v560, %v1563
      %v1808 = vmul.f32 %v580, %v1562
      %v1809 = vmul.f32 %v583, %v1563
      %v1810 = vmul.f32 %v603, %v1562
      %v1811 = vmul.f32 %v606, %v1563
      %v1812 = vmul.f32 %v626, %v1562
      %v1813 = vmul.f32 %v629, %v1563
      %v1814 = vmul.f32 %v649, %v1562
      %v1815 = vmul.f32 %v652, %v1563
      %v1816 = vmul.f32 %v672, %v1562
      %v1817 = vmul.f32 %v675, %v1563
      %v1818 = vmul.f32 %v695, %v1562
      %v1819 = vmul.f32 %v698, %v1563
      %v1820 = vmul.f32 %v718, %v1562
      %v1821 = vmul.f32 %v721, %v1563
      %v1822 = vmul.f32 %v741, %v1562
      %v1823 = vmul.f32 %v744, %v1563
      %v1824 = vmul.f32 %v764, %v1562
      %v1825 = vmul.f32 %v767, %v1563
      %v1826 = vmul.f32 %v787, %v1562
      %v1827 = vmul.f32 %v790, %v1563
      %1830 = vrot.lane.b32.xlu0 %v1560, 4
      %v1831 = vpop.permute.xlu0 %1830
      %1832 = vrot.lane.b32.xlu0 %v1561, 4
      %v1833 = vpop.permute.xlu0 %1832
      %v1836 = vmul.f32 %v442, %v1831
      %v1837 = vmul.f32 %v445, %v1833
      %v1838 = vmul.f32 %v465, %v1831
      %v1839 = vmul.f32 %v468, %v1833
      %v1840 = vmul.f32 %v488, %v1831
      %v1841 = vmul.f32 %v491, %v1833
      %v1842 = vmul.f32 %v511, %v1831
      %v1843 = vmul.f32 %v514, %v1833
      %v1844 = vmul.f32 %v534, %v1831
      %v1845 = vmul.f32 %v537, %v1833
      %v1846 = vmul.f32 %v557, %v1831
      %v1847 = vmul.f32 %v560, %v1833
      %v1848 = vmul.f32 %v580, %v1831
      %v1849 = vmul.f32 %v583, %v1833
      %v1850 = vmul.f32 %v603, %v1831
      %v1851 = vmul.f32 %v606, %v1833
      %v1852 = vmul.f32 %v626, %v1831
      %v1853 = vmul.f32 %v629, %v1833
      %v1854 = vmul.f32 %v649, %v1831
      %v1855 = vmul.f32 %v652, %v1833
      %v1856 = vmul.f32 %v672, %v1831
      %v1857 = vmul.f32 %v675, %v1833
      %v1858 = vmul.f32 %v695, %v1831
      %v1859 = vmul.f32 %v698, %v1833
      %v1860 = vmul.f32 %v718, %v1831
      %v1861 = vmul.f32 %v721, %v1833
      %v1862 = vmul.f32 %v741, %v1831
      %v1863 = vmul.f32 %v744, %v1833
      %v1864 = vmul.f32 %v764, %v1831
      %v1865 = vmul.f32 %v767, %v1833
      %v1866 = vmul.f32 %v787, %v1831
      %v1867 = vmul.f32 %v790, %v1833
      %1900 = vrot.lane.b32.xlu0 %v1836, 124
      %v1901 = vpop.permute.xlu0 %1900
      %1902 = vrot.lane.b32.xlu0 %v1837, 124
      %v1903 = vpop.permute.xlu0 %1902
      %1904 = vrot.lane.b32.xlu0 %v1838, 124
      %v1905 = vpop.permute.xlu0 %1904
      %1906 = vrot.lane.b32.xlu0 %v1839, 124
      %v1907 = vpop.permute.xlu0 %1906
      %1908 = vrot.lane.b32.xlu0 %v1840, 124
      %v1909 = vpop.permute.xlu0 %1908
      %1910 = vrot.lane.b32.xlu0 %v1841, 124
      %v1911 = vpop.permute.xlu0 %1910
      %1912 = vrot.lane.b32.xlu0 %v1842, 124
      %v1913 = vpop.permute.xlu0 %1912
      %1914 = vrot.lane.b32.xlu0 %v1843, 124
      %v1915 = vpop.permute.xlu0 %1914
      %1916 = vrot.lane.b32.xlu0 %v1844, 124
      %v1917 = vpop.permute.xlu0 %1916
      %1918 = vrot.lane.b32.xlu0 %v1845, 124
      %v1919 = vpop.permute.xlu0 %1918
      %1920 = vrot.lane.b32.xlu0 %v1846, 124
      %v1921 = vpop.permute.xlu0 %1920
      %1922 = vrot.lane.b32.xlu0 %v1847, 124
      %v1923 = vpop.permute.xlu0 %1922
      %1924 = vrot.lane.b32.xlu0 %v1848, 124
      %v1925 = vpop.permute.xlu0 %1924
      %1926 = vrot.lane.b32.xlu0 %v1849, 124
      %v1927 = vpop.permute.xlu0 %1926
      %1928 = vrot.lane.b32.xlu0 %v1850, 124
      %v1929 = vpop.permute.xlu0 %1928
      %1930 = vrot.lane.b32.xlu0 %v1851, 124
      %v1931 = vpop.permute.xlu0 %1930
      %1932 = vrot.lane.b32.xlu0 %v1852, 124
      %v1933 = vpop.permute.xlu0 %1932
      %1934 = vrot.lane.b32.xlu0 %v1853, 124
      %v1935 = vpop.permute.xlu0 %1934
      %1936 = vrot.lane.b32.xlu0 %v1854, 124
      %v1937 = vpop.permute.xlu0 %1936
      %1938 = vrot.lane.b32.xlu0 %v1855, 124
      %v1939 = vpop.permute.xlu0 %1938
      %1940 = vrot.lane.b32.xlu0 %v1856, 124
      %v1941 = vpop.permute.xlu0 %1940
      %1942 = vrot.lane.b32.xlu0 %v1857, 124
      %v1943 = vpop.permute.xlu0 %1942
      %1944 = vrot.lane.b32.xlu0 %v1858, 124
      %v1945 = vpop.permute.xlu0 %1944
      %1946 = vrot.lane.b32.xlu0 %v1859, 124
      %v1947 = vpop.permute.xlu0 %1946
      %1948 = vrot.lane.b32.xlu0 %v1860, 124
      %v1949 = vpop.permute.xlu0 %1948
      %1950 = vrot.lane.b32.xlu0 %v1861, 124
      %v1951 = vpop.permute.xlu0 %1950
      %1952 = vrot.lane.b32.xlu0 %v1862, 124
      %v1953 = vpop.permute.xlu0 %1952
      %1954 = vrot.lane.b32.xlu0 %v1863, 124
      %v1955 = vpop.permute.xlu0 %1954
      %1956 = vrot.lane.b32.xlu0 %v1864, 124
      %v1957 = vpop.permute.xlu0 %1956
      %1958 = vrot.lane.b32.xlu0 %v1865, 124
      %v1959 = vpop.permute.xlu0 %1958
      %1960 = vrot.lane.b32.xlu0 %v1866, 124
      %v1961 = vpop.permute.xlu0 %1960
      %1962 = vrot.lane.b32.xlu0 %v1867, 124
      %v1963 = vpop.permute.xlu0 %1962
      %v1996 = vadd.f32 %v1796, %v1901
      %v1997 = vadd.f32 %v1797, %v1903
      %v1998 = vadd.f32 %v1798, %v1905
      %v1999 = vadd.f32 %v1799, %v1907
      %v2000 = vadd.f32 %v1800, %v1909
      %v2001 = vadd.f32 %v1801, %v1911
      %v2002 = vadd.f32 %v1802, %v1913
      %v2003 = vadd.f32 %v1803, %v1915
      %v2004 = vadd.f32 %v1804, %v1917
      %v2005 = vadd.f32 %v1805, %v1919
      %v2006 = vadd.f32 %v1806, %v1921
      %v2007 = vadd.f32 %v1807, %v1923
      %v2008 = vadd.f32 %v1808, %v1925
      %v2009 = vadd.f32 %v1809, %v1927
      %v2010 = vadd.f32 %v1810, %v1929
      %v2011 = vadd.f32 %v1811, %v1931
      %v2012 = vadd.f32 %v1812, %v1933
      %v2013 = vadd.f32 %v1813, %v1935
      %v2014 = vadd.f32 %v1814, %v1937
      %v2015 = vadd.f32 %v1815, %v1939
      %v2016 = vadd.f32 %v1816, %v1941
      %v2017 = vadd.f32 %v1817, %v1943
      %v2018 = vadd.f32 %v1818, %v1945
      %v2019 = vadd.f32 %v1819, %v1947
      %v2020 = vadd.f32 %v1820, %v1949
      %v2021 = vadd.f32 %v1821, %v1951
      %v2022 = vadd.f32 %v1822, %v1953
      %v2023 = vadd.f32 %v1823, %v1955
      %v2024 = vadd.f32 %v1824, %v1957
      %v2025 = vadd.f32 %v1825, %v1959
      %v2026 = vadd.f32 %v1826, %v1961
      %v2027 = vadd.f32 %v1827, %v1963
      %v2028 = vmul.f32 %v826, %v1560
      %v2029 = vmul.f32 %v829, %v1561
      %v2030 = vmul.f32 %v849, %v1560
      %v2031 = vmul.f32 %v852, %v1561
      %v2032 = vmul.f32 %v872, %v1560
      %v2033 = vmul.f32 %v875, %v1561
      %v2034 = vmul.f32 %v895, %v1560
      %v2035 = vmul.f32 %v898, %v1561
      %v2036 = vmul.f32 %v918, %v1560
      %v2037 = vmul.f32 %v921, %v1561
      %v2038 = vmul.f32 %v941, %v1560
      %v2039 = vmul.f32 %v944, %v1561
      %v2040 = vmul.f32 %v964, %v1560
      %v2041 = vmul.f32 %v967, %v1561
      %v2042 = vmul.f32 %v987, %v1560
      %v2043 = vmul.f32 %v990, %v1561
      %v2044 = vmul.f32 %v1010, %v1560
      %v2045 = vmul.f32 %v1013, %v1561
      %v2046 = vmul.f32 %v1033, %v1560
      %v2047 = vmul.f32 %v1036, %v1561
      %v2048 = vmul.f32 %v1056, %v1560
      %v2049 = vmul.f32 %v1059, %v1561
      %v2050 = vmul.f32 %v1079, %v1560
      %v2051 = vmul.f32 %v1082, %v1561
      %v2052 = vmul.f32 %v1102, %v1560
      %v2053 = vmul.f32 %v1105, %v1561
      %v2054 = vmul.f32 %v1125, %v1560
      %v2055 = vmul.f32 %v1128, %v1561
      %v2056 = vmul.f32 %v1148, %v1560
      %v2057 = vmul.f32 %v1151, %v1561
      %v2058 = vmul.f32 %v1171, %v1560
      %v2059 = vmul.f32 %v1174, %v1561
      %v2060 = vmul.f32 %v826, %v1599
      %v2061 = vmul.f32 %v829, %v1601
      %v2062 = vmul.f32 %v849, %v1599
      %v2063 = vmul.f32 %v852, %v1601
      %v2064 = vmul.f32 %v872, %v1599
      %v2065 = vmul.f32 %v875, %v1601
      %v2066 = vmul.f32 %v895, %v1599
      %v2067 = vmul.f32 %v898, %v1601
      %v2068 = vmul.f32 %v918, %v1599
      %v2069 = vmul.f32 %v921, %v1601
      %v2070 = vmul.f32 %v941, %v1599
      %v2071 = vmul.f32 %v944, %v1601
      %v2072 = vmul.f32 %v964, %v1599
      %v2073 = vmul.f32 %v967, %v1601
      %v2074 = vmul.f32 %v987, %v1599
      %v2075 = vmul.f32 %v990, %v1601
      %v2076 = vmul.f32 %v1010, %v1599
      %v2077 = vmul.f32 %v1013, %v1601
      %v2078 = vmul.f32 %v1033, %v1599
      %v2079 = vmul.f32 %v1036, %v1601
      %v2080 = vmul.f32 %v1056, %v1599
      %v2081 = vmul.f32 %v1059, %v1601
      %v2082 = vmul.f32 %v1079, %v1599
      %v2083 = vmul.f32 %v1082, %v1601
      %v2084 = vmul.f32 %v1102, %v1599
      %v2085 = vmul.f32 %v1105, %v1601
      %v2086 = vmul.f32 %v1125, %v1599
      %v2087 = vmul.f32 %v1128, %v1601
      %v2088 = vmul.f32 %v1148, %v1599
      %v2089 = vmul.f32 %v1151, %v1601
      %v2090 = vmul.f32 %v1171, %v1599
      %v2091 = vmul.f32 %v1174, %v1601
      %2124 = vrot.lane.b32.xlu0 %v2060, 124
      %v2125 = vpop.permute.xlu0 %2124
      %2126 = vrot.lane.b32.xlu0 %v2061, 124
      %v2127 = vpop.permute.xlu0 %2126
      %2128 = vrot.lane.b32.xlu0 %v2062, 124
      %v2129 = vpop.permute.xlu0 %2128
      %2130 = vrot.lane.b32.xlu0 %v2063, 124
      %v2131 = vpop.permute.xlu0 %2130
      %2132 = vrot.lane.b32.xlu0 %v2064, 124
      %v2133 = vpop.permute.xlu0 %2132
      %2134 = vrot.lane.b32.xlu0 %v2065, 124
      %v2135 = vpop.permute.xlu0 %2134
      %2136 = vrot.lane.b32.xlu0 %v2066, 124
      %v2137 = vpop.permute.xlu0 %2136
      %2138 = vrot.lane.b32.xlu0 %v2067, 124
      %v2139 = vpop.permute.xlu0 %2138
      %2140 = vrot.lane.b32.xlu0 %v2068, 124
      %v2141 = vpop.permute.xlu0 %2140
      %2142 = vrot.lane.b32.xlu0 %v2069, 124
      %v2143 = vpop.permute.xlu0 %2142
      %2144 = vrot.lane.b32.xlu0 %v2070, 124
      %v2145 = vpop.permute.xlu0 %2144
      %2146 = vrot.lane.b32.xlu0 %v2071, 124
      %v2147 = vpop.permute.xlu0 %2146
      %2148 = vrot.lane.b32.xlu0 %v2072, 124
      %v2149 = vpop.permute.xlu0 %2148
      %2150 = vrot.lane.b32.xlu0 %v2073, 124
      %v2151 = vpop.permute.xlu0 %2150
      %2152 = vrot.lane.b32.xlu0 %v2074, 124
      %v2153 = vpop.permute.xlu0 %2152
      %2154 = vrot.lane.b32.xlu0 %v2075, 124
      %v2155 = vpop.permute.xlu0 %2154
      %2156 = vrot.lane.b32.xlu0 %v2076, 124
      %v2157 = vpop.permute.xlu0 %2156
      %2158 = vrot.lane.b32.xlu0 %v2077, 124
      %v2159 = vpop.permute.xlu0 %2158
      %2160 = vrot.lane.b32.xlu0 %v2078, 124
      %v2161 = vpop.permute.xlu0 %2160
      %2162 = vrot.lane.b32.xlu0 %v2079, 124
      %v2163 = vpop.permute.xlu0 %2162
      %2164 = vrot.lane.b32.xlu0 %v2080, 124
      %v2165 = vpop.permute.xlu0 %2164
      %2166 = vrot.lane.b32.xlu0 %v2081, 124
      %v2167 = vpop.permute.xlu0 %2166
      %2168 = vrot.lane.b32.xlu0 %v2082, 124
      %v2169 = vpop.permute.xlu0 %2168
      %2170 = vrot.lane.b32.xlu0 %v2083, 124
      %v2171 = vpop.permute.xlu0 %2170
      %2172 = vrot.lane.b32.xlu0 %v2084, 124
      %v2173 = vpop.permute.xlu0 %2172
      %2174 = vrot.lane.b32.xlu0 %v2085, 124
      %v2175 = vpop.permute.xlu0 %2174
      %2176 = vrot.lane.b32.xlu0 %v2086, 124
      %v2177 = vpop.permute.xlu0 %2176
      %2178 = vrot.lane.b32.xlu0 %v2087, 124
      %v2179 = vpop.permute.xlu0 %2178
      %2180 = vrot.lane.b32.xlu0 %v2088, 124
      %v2181 = vpop.permute.xlu0 %2180
      %2182 = vrot.lane.b32.xlu0 %v2089, 124
      %v2183 = vpop.permute.xlu0 %2182
      %2184 = vrot.lane.b32.xlu0 %v2090, 124
      %v2185 = vpop.permute.xlu0 %2184
      %2186 = vrot.lane.b32.xlu0 %v2091, 124
      %v2187 = vpop.permute.xlu0 %2186
      %v2220 = vsub.f32 %v2028, %v2125
      %v2221 = vsub.f32 %v2029, %v2127
      %v2222 = vsub.f32 %v2030, %v2129
      %v2223 = vsub.f32 %v2031, %v2131
      %v2224 = vsub.f32 %v2032, %v2133
      %v2225 = vsub.f32 %v2033, %v2135
      %v2226 = vsub.f32 %v2034, %v2137
      %v2227 = vsub.f32 %v2035, %v2139
      %v2228 = vsub.f32 %v2036, %v2141
      %v2229 = vsub.f32 %v2037, %v2143
      %v2230 = vsub.f32 %v2038, %v2145
      %v2231 = vsub.f32 %v2039, %v2147
      %v2232 = vsub.f32 %v2040, %v2149
      %v2233 = vsub.f32 %v2041, %v2151
      %v2234 = vsub.f32 %v2042, %v2153
      %v2235 = vsub.f32 %v2043, %v2155
      %v2236 = vsub.f32 %v2044, %v2157
      %v2237 = vsub.f32 %v2045, %v2159
      %v2238 = vsub.f32 %v2046, %v2161
      %v2239 = vsub.f32 %v2047, %v2163
      %v2240 = vsub.f32 %v2048, %v2165
      %v2241 = vsub.f32 %v2049, %v2167
      %v2242 = vsub.f32 %v2050, %v2169
      %v2243 = vsub.f32 %v2051, %v2171
      %v2244 = vsub.f32 %v2052, %v2173
      %v2245 = vsub.f32 %v2053, %v2175
      %v2246 = vsub.f32 %v2054, %v2177
      %v2247 = vsub.f32 %v2055, %v2179
      %v2248 = vsub.f32 %v2056, %v2181
      %v2249 = vsub.f32 %v2057, %v2183
      %v2250 = vsub.f32 %v2058, %v2185
      %v2251 = vsub.f32 %v2059, %v2187
      %v2252 = vmul.f32 %v826, %v1562
      %v2253 = vmul.f32 %v829, %v1563
      %v2254 = vmul.f32 %v849, %v1562
      %v2255 = vmul.f32 %v852, %v1563
      %v2256 = vmul.f32 %v872, %v1562
      %v2257 = vmul.f32 %v875, %v1563
      %v2258 = vmul.f32 %v895, %v1562
      %v2259 = vmul.f32 %v898, %v1563
      %v2260 = vmul.f32 %v918, %v1562
      %v2261 = vmul.f32 %v921, %v1563
      %v2262 = vmul.f32 %v941, %v1562
      %v2263 = vmul.f32 %v944, %v1563
      %v2264 = vmul.f32 %v964, %v1562
      %v2265 = vmul.f32 %v967, %v1563
      %v2266 = vmul.f32 %v987, %v1562
      %v2267 = vmul.f32 %v990, %v1563
      %v2268 = vmul.f32 %v1010, %v1562
      %v2269 = vmul.f32 %v1013, %v1563
      %v2270 = vmul.f32 %v1033, %v1562
      %v2271 = vmul.f32 %v1036, %v1563
      %v2272 = vmul.f32 %v1056, %v1562
      %v2273 = vmul.f32 %v1059, %v1563
      %v2274 = vmul.f32 %v1079, %v1562
      %v2275 = vmul.f32 %v1082, %v1563
      %v2276 = vmul.f32 %v1102, %v1562
      %v2277 = vmul.f32 %v1105, %v1563
      %v2278 = vmul.f32 %v1125, %v1562
      %v2279 = vmul.f32 %v1128, %v1563
      %v2280 = vmul.f32 %v1148, %v1562
      %v2281 = vmul.f32 %v1151, %v1563
      %v2282 = vmul.f32 %v1171, %v1562
      %v2283 = vmul.f32 %v1174, %v1563
      %v2284 = vmul.f32 %v826, %v1831
      %v2285 = vmul.f32 %v829, %v1833
      %v2286 = vmul.f32 %v849, %v1831
      %v2287 = vmul.f32 %v852, %v1833
      %v2288 = vmul.f32 %v872, %v1831
      %v2289 = vmul.f32 %v875, %v1833
      %v2290 = vmul.f32 %v895, %v1831
      %v2291 = vmul.f32 %v898, %v1833
      %v2292 = vmul.f32 %v918, %v1831
      %v2293 = vmul.f32 %v921, %v1833
      %v2294 = vmul.f32 %v941, %v1831
      %v2295 = vmul.f32 %v944, %v1833
      %v2296 = vmul.f32 %v964, %v1831
      %v2297 = vmul.f32 %v967, %v1833
      %v2298 = vmul.f32 %v987, %v1831
      %v2299 = vmul.f32 %v990, %v1833
      %v2300 = vmul.f32 %v1010, %v1831
      %v2301 = vmul.f32 %v1013, %v1833
      %v2302 = vmul.f32 %v1033, %v1831
      %v2303 = vmul.f32 %v1036, %v1833
      %v2304 = vmul.f32 %v1056, %v1831
      %v2305 = vmul.f32 %v1059, %v1833
      %v2306 = vmul.f32 %v1079, %v1831
      %v2307 = vmul.f32 %v1082, %v1833
      %v2308 = vmul.f32 %v1102, %v1831
      %v2309 = vmul.f32 %v1105, %v1833
      %v2310 = vmul.f32 %v1125, %v1831
      %v2311 = vmul.f32 %v1128, %v1833
      %v2312 = vmul.f32 %v1148, %v1831
      %v2313 = vmul.f32 %v1151, %v1833
      %v2314 = vmul.f32 %v1171, %v1831
      %v2315 = vmul.f32 %v1174, %v1833
      %2348 = vrot.lane.b32.xlu0 %v2284, 124
      %v2349 = vpop.permute.xlu0 %2348
      %2350 = vrot.lane.b32.xlu0 %v2285, 124
      %v2351 = vpop.permute.xlu0 %2350
      %2352 = vrot.lane.b32.xlu0 %v2286, 124
      %v2353 = vpop.permute.xlu0 %2352
      %2354 = vrot.lane.b32.xlu0 %v2287, 124
      %v2355 = vpop.permute.xlu0 %2354
      %2356 = vrot.lane.b32.xlu0 %v2288, 124
      %v2357 = vpop.permute.xlu0 %2356
      %2358 = vrot.lane.b32.xlu0 %v2289, 124
      %v2359 = vpop.permute.xlu0 %2358
      %2360 = vrot.lane.b32.xlu0 %v2290, 124
      %v2361 = vpop.permute.xlu0 %2360
      %2362 = vrot.lane.b32.xlu0 %v2291, 124
      %v2363 = vpop.permute.xlu0 %2362
      %2364 = vrot.lane.b32.xlu0 %v2292, 124
      %v2365 = vpop.permute.xlu0 %2364
      %2366 = vrot.lane.b32.xlu0 %v2293, 124
      %v2367 = vpop.permute.xlu0 %2366
      %2368 = vrot.lane.b32.xlu0 %v2294, 124
      %v2369 = vpop.permute.xlu0 %2368
      %2370 = vrot.lane.b32.xlu0 %v2295, 124
      %v2371 = vpop.permute.xlu0 %2370
      %2372 = vrot.lane.b32.xlu0 %v2296, 124
      %v2373 = vpop.permute.xlu0 %2372
      %2374 = vrot.lane.b32.xlu0 %v2297, 124
      %v2375 = vpop.permute.xlu0 %2374
      %2376 = vrot.lane.b32.xlu0 %v2298, 124
      %v2377 = vpop.permute.xlu0 %2376
      %2378 = vrot.lane.b32.xlu0 %v2299, 124
      %v2379 = vpop.permute.xlu0 %2378
      %2380 = vrot.lane.b32.xlu0 %v2300, 124
      %v2381 = vpop.permute.xlu0 %2380
      %2382 = vrot.lane.b32.xlu0 %v2301, 124
      %v2383 = vpop.permute.xlu0 %2382
      %2384 = vrot.lane.b32.xlu0 %v2302, 124
      %v2385 = vpop.permute.xlu0 %2384
      %2386 = vrot.lane.b32.xlu0 %v2303, 124
      %v2387 = vpop.permute.xlu0 %2386
      %2388 = vrot.lane.b32.xlu0 %v2304, 124
      %v2389 = vpop.permute.xlu0 %2388
      %2390 = vrot.lane.b32.xlu0 %v2305, 124
      %v2391 = vpop.permute.xlu0 %2390
      %2392 = vrot.lane.b32.xlu0 %v2306, 124
      %v2393 = vpop.permute.xlu0 %2392
      %2394 = vrot.lane.b32.xlu0 %v2307, 124
      %v2395 = vpop.permute.xlu0 %2394
      %2396 = vrot.lane.b32.xlu0 %v2308, 124
      %v2397 = vpop.permute.xlu0 %2396
      %2398 = vrot.lane.b32.xlu0 %v2309, 124
      %v2399 = vpop.permute.xlu0 %2398
      %2400 = vrot.lane.b32.xlu0 %v2310, 124
      %v2401 = vpop.permute.xlu0 %2400
      %2402 = vrot.lane.b32.xlu0 %v2311, 124
      %v2403 = vpop.permute.xlu0 %2402
      %2404 = vrot.lane.b32.xlu0 %v2312, 124
      %v2405 = vpop.permute.xlu0 %2404
      %2406 = vrot.lane.b32.xlu0 %v2313, 124
      %v2407 = vpop.permute.xlu0 %2406
      %2408 = vrot.lane.b32.xlu0 %v2314, 124
      %v2409 = vpop.permute.xlu0 %2408
      %2410 = vrot.lane.b32.xlu0 %v2315, 124
      %v2411 = vpop.permute.xlu0 %2410
      %v2444 = vadd.f32 %v2252, %v2349
      %v2445 = vadd.f32 %v2253, %v2351
      %v2446 = vadd.f32 %v2254, %v2353
      %v2447 = vadd.f32 %v2255, %v2355
      %v2448 = vadd.f32 %v2256, %v2357
      %v2449 = vadd.f32 %v2257, %v2359
      %v2450 = vadd.f32 %v2258, %v2361
      %v2451 = vadd.f32 %v2259, %v2363
      %v2452 = vadd.f32 %v2260, %v2365
      %v2453 = vadd.f32 %v2261, %v2367
      %v2454 = vadd.f32 %v2262, %v2369
      %v2455 = vadd.f32 %v2263, %v2371
      %v2456 = vadd.f32 %v2264, %v2373
      %v2457 = vadd.f32 %v2265, %v2375
      %v2458 = vadd.f32 %v2266, %v2377
      %v2459 = vadd.f32 %v2267, %v2379
      %v2460 = vadd.f32 %v2268, %v2381
      %v2461 = vadd.f32 %v2269, %v2383
      %v2462 = vadd.f32 %v2270, %v2385
      %v2463 = vadd.f32 %v2271, %v2387
      %v2464 = vadd.f32 %v2272, %v2389
      %v2465 = vadd.f32 %v2273, %v2391
      %v2466 = vadd.f32 %v2274, %v2393
      %v2467 = vadd.f32 %v2275, %v2395
      %v2468 = vadd.f32 %v2276, %v2397
      %v2469 = vadd.f32 %v2277, %v2399
      %v2470 = vadd.f32 %v2278, %v2401
      %v2471 = vadd.f32 %v2279, %v2403
      %v2472 = vadd.f32 %v2280, %v2405
      %v2473 = vadd.f32 %v2281, %v2407
      %v2474 = vadd.f32 %v2282, %v2409
      %v2475 = vadd.f32 %v2283, %v2411
      %2508 = vrot.lane.b32.xlu0 %v1996, 4
      %v2509 = vpop.permute.xlu0 %2508
      %2510 = vrot.lane.b32.xlu0 %v1997, 4
      %v2511 = vpop.permute.xlu0 %2510
      %2512 = vrot.lane.b32.xlu0 %v1998, 4
      %v2513 = vpop.permute.xlu0 %2512
      %2514 = vrot.lane.b32.xlu0 %v1999, 4
      %v2515 = vpop.permute.xlu0 %2514
      %2516 = vrot.lane.b32.xlu0 %v2000, 4
      %v2517 = vpop.permute.xlu0 %2516
      %2518 = vrot.lane.b32.xlu0 %v2001, 4
      %v2519 = vpop.permute.xlu0 %2518
      %2520 = vrot.lane.b32.xlu0 %v2002, 4
      %v2521 = vpop.permute.xlu0 %2520
      %2522 = vrot.lane.b32.xlu0 %v2003, 4
      %v2523 = vpop.permute.xlu0 %2522
      %2524 = vrot.lane.b32.xlu0 %v2004, 4
      %v2525 = vpop.permute.xlu0 %2524
      %2526 = vrot.lane.b32.xlu0 %v2005, 4
      %v2527 = vpop.permute.xlu0 %2526
      %2528 = vrot.lane.b32.xlu0 %v2006, 4
      %v2529 = vpop.permute.xlu0 %2528
      %2530 = vrot.lane.b32.xlu0 %v2007, 4
      %v2531 = vpop.permute.xlu0 %2530
      %2532 = vrot.lane.b32.xlu0 %v2008, 4
      %v2533 = vpop.permute.xlu0 %2532
      %2534 = vrot.lane.b32.xlu0 %v2009, 4
      %v2535 = vpop.permute.xlu0 %2534
      %2536 = vrot.lane.b32.xlu0 %v2010, 4
      %v2537 = vpop.permute.xlu0 %2536
      %2538 = vrot.lane.b32.xlu0 %v2011, 4
      %v2539 = vpop.permute.xlu0 %2538
      %2540 = vrot.lane.b32.xlu0 %v2012, 4
      %v2541 = vpop.permute.xlu0 %2540
      %2542 = vrot.lane.b32.xlu0 %v2013, 4
      %v2543 = vpop.permute.xlu0 %2542
      %2544 = vrot.lane.b32.xlu0 %v2014, 4
      %v2545 = vpop.permute.xlu0 %2544
      %2546 = vrot.lane.b32.xlu0 %v2015, 4
      %v2547 = vpop.permute.xlu0 %2546
      %2548 = vrot.lane.b32.xlu0 %v2016, 4
      %v2549 = vpop.permute.xlu0 %2548
      %2550 = vrot.lane.b32.xlu0 %v2017, 4
      %v2551 = vpop.permute.xlu0 %2550
      %2552 = vrot.lane.b32.xlu0 %v2018, 4
      %v2553 = vpop.permute.xlu0 %2552
      %2554 = vrot.lane.b32.xlu0 %v2019, 4
      %v2555 = vpop.permute.xlu0 %2554
      %2556 = vrot.lane.b32.xlu0 %v2020, 4
      %v2557 = vpop.permute.xlu0 %2556
      %2558 = vrot.lane.b32.xlu0 %v2021, 4
      %v2559 = vpop.permute.xlu0 %2558
      %2560 = vrot.lane.b32.xlu0 %v2022, 4
      %v2561 = vpop.permute.xlu0 %2560
      %2562 = vrot.lane.b32.xlu0 %v2023, 4
      %v2563 = vpop.permute.xlu0 %2562
      %2564 = vrot.lane.b32.xlu0 %v2024, 4
      %v2565 = vpop.permute.xlu0 %2564
      %2566 = vrot.lane.b32.xlu0 %v2025, 4
      %v2567 = vpop.permute.xlu0 %2566
      %2568 = vrot.lane.b32.xlu0 %v2026, 4
      %v2569 = vpop.permute.xlu0 %2568
      %2570 = vrot.lane.b32.xlu0 %v2027, 4
      %v2571 = vpop.permute.xlu0 %2570
      %vm2604 = vcmask 31744
      %v2605 = vsel %vm2604, %v1764, %v2509
      %v2606 = vsel %vm2604, %v1765, %v2511
      %v2607 = vsel %vm2604, %v1766, %v2513
      %v2608 = vsel %vm2604, %v1767, %v2515
      %v2609 = vsel %vm2604, %v1768, %v2517
      %v2610 = vsel %vm2604, %v1769, %v2519
      %v2611 = vsel %vm2604, %v1770, %v2521
      %v2612 = vsel %vm2604, %v1771, %v2523
      %v2613 = vsel %vm2604, %v1772, %v2525
      %v2614 = vsel %vm2604, %v1773, %v2527
      %v2615 = vsel %vm2604, %v1774, %v2529
      %v2616 = vsel %vm2604, %v1775, %v2531
      %v2617 = vsel %vm2604, %v1776, %v2533
      %v2618 = vsel %vm2604, %v1777, %v2535
      %v2619 = vsel %vm2604, %v1778, %v2537
      %v2620 = vsel %vm2604, %v1779, %v2539
      %v2621 = vsel %vm2604, %v1780, %v2541
      %v2622 = vsel %vm2604, %v1781, %v2543
      %v2623 = vsel %vm2604, %v1782, %v2545
      %v2624 = vsel %vm2604, %v1783, %v2547
      %v2625 = vsel %vm2604, %v1784, %v2549
      %v2626 = vsel %vm2604, %v1785, %v2551
      %v2627 = vsel %vm2604, %v1786, %v2553
      %v2628 = vsel %vm2604, %v1787, %v2555
      %v2629 = vsel %vm2604, %v1788, %v2557
      %v2630 = vsel %vm2604, %v1789, %v2559
      %v2631 = vsel %vm2604, %v1790, %v2561
      %v2632 = vsel %vm2604, %v1791, %v2563
      %v2633 = vsel %vm2604, %v1792, %v2565
      %v2634 = vsel %vm2604, %v1793, %v2567
      %v2635 = vsel %vm2604, %v1794, %v2569
      %v2636 = vsel %vm2604, %v1795, %v2571
      %2669 = vrot.lane.b32.xlu0 %v2444, 4
      %v2670 = vpop.permute.xlu0 %2669
      %2671 = vrot.lane.b32.xlu0 %v2445, 4
      %v2672 = vpop.permute.xlu0 %2671
      %2673 = vrot.lane.b32.xlu0 %v2446, 4
      %v2674 = vpop.permute.xlu0 %2673
      %2675 = vrot.lane.b32.xlu0 %v2447, 4
      %v2676 = vpop.permute.xlu0 %2675
      %2677 = vrot.lane.b32.xlu0 %v2448, 4
      %v2678 = vpop.permute.xlu0 %2677
      %2679 = vrot.lane.b32.xlu0 %v2449, 4
      %v2680 = vpop.permute.xlu0 %2679
      %2681 = vrot.lane.b32.xlu0 %v2450, 4
      %v2682 = vpop.permute.xlu0 %2681
      %2683 = vrot.lane.b32.xlu0 %v2451, 4
      %v2684 = vpop.permute.xlu0 %2683
      %2685 = vrot.lane.b32.xlu0 %v2452, 4
      %v2686 = vpop.permute.xlu0 %2685
      %2687 = vrot.lane.b32.xlu0 %v2453, 4
      %v2688 = vpop.permute.xlu0 %2687
      %2689 = vrot.lane.b32.xlu0 %v2454, 4
      %v2690 = vpop.permute.xlu0 %2689
      %2691 = vrot.lane.b32.xlu0 %v2455, 4
      %v2692 = vpop.permute.xlu0 %2691
      %2693 = vrot.lane.b32.xlu0 %v2456, 4
      %v2694 = vpop.permute.xlu0 %2693
      %2695 = vrot.lane.b32.xlu0 %v2457, 4
      %v2696 = vpop.permute.xlu0 %2695
      %2697 = vrot.lane.b32.xlu0 %v2458, 4
      %v2698 = vpop.permute.xlu0 %2697
      %2699 = vrot.lane.b32.xlu0 %v2459, 4
      %v2700 = vpop.permute.xlu0 %2699
      %2701 = vrot.lane.b32.xlu0 %v2460, 4
      %v2702 = vpop.permute.xlu0 %2701
      %2703 = vrot.lane.b32.xlu0 %v2461, 4
      %v2704 = vpop.permute.xlu0 %2703
      %2705 = vrot.lane.b32.xlu0 %v2462, 4
      %v2706 = vpop.permute.xlu0 %2705
      %2707 = vrot.lane.b32.xlu0 %v2463, 4
      %v2708 = vpop.permute.xlu0 %2707
      %2709 = vrot.lane.b32.xlu0 %v2464, 4
      %v2710 = vpop.permute.xlu0 %2709
      %2711 = vrot.lane.b32.xlu0 %v2465, 4
      %v2712 = vpop.permute.xlu0 %2711
      %2713 = vrot.lane.b32.xlu0 %v2466, 4
      %v2714 = vpop.permute.xlu0 %2713
      %2715 = vrot.lane.b32.xlu0 %v2467, 4
      %v2716 = vpop.permute.xlu0 %2715
      %2717 = vrot.lane.b32.xlu0 %v2468, 4
      %v2718 = vpop.permute.xlu0 %2717
      %2719 = vrot.lane.b32.xlu0 %v2469, 4
      %v2720 = vpop.permute.xlu0 %2719
      %2721 = vrot.lane.b32.xlu0 %v2470, 4
      %v2722 = vpop.permute.xlu0 %2721
      %2723 = vrot.lane.b32.xlu0 %v2471, 4
      %v2724 = vpop.permute.xlu0 %2723
      %2725 = vrot.lane.b32.xlu0 %v2472, 4
      %v2726 = vpop.permute.xlu0 %2725
      %2727 = vrot.lane.b32.xlu0 %v2473, 4
      %v2728 = vpop.permute.xlu0 %2727
      %2729 = vrot.lane.b32.xlu0 %v2474, 4
      %v2730 = vpop.permute.xlu0 %2729
      %2731 = vrot.lane.b32.xlu0 %v2475, 4
      %v2732 = vpop.permute.xlu0 %2731
      %v2765 = vsel %vm2604, %v2220, %v2670
      %v2766 = vsel %vm2604, %v2221, %v2672
      %v2767 = vsel %vm2604, %v2222, %v2674
      %v2768 = vsel %vm2604, %v2223, %v2676
      %v2769 = vsel %vm2604, %v2224, %v2678
      %v2770 = vsel %vm2604, %v2225, %v2680
      %v2771 = vsel %vm2604, %v2226, %v2682
      %v2772 = vsel %vm2604, %v2227, %v2684
      %v2773 = vsel %vm2604, %v2228, %v2686
      %v2774 = vsel %vm2604, %v2229, %v2688
      %v2775 = vsel %vm2604, %v2230, %v2690
      %v2776 = vsel %vm2604, %v2231, %v2692
      %v2777 = vsel %vm2604, %v2232, %v2694
      %v2778 = vsel %vm2604, %v2233, %v2696
      %v2779 = vsel %vm2604, %v2234, %v2698
      %v2780 = vsel %vm2604, %v2235, %v2700
      %v2781 = vsel %vm2604, %v2236, %v2702
      %v2782 = vsel %vm2604, %v2237, %v2704
      %v2783 = vsel %vm2604, %v2238, %v2706
      %v2784 = vsel %vm2604, %v2239, %v2708
      %v2785 = vsel %vm2604, %v2240, %v2710
      %v2786 = vsel %vm2604, %v2241, %v2712
      %v2787 = vsel %vm2604, %v2242, %v2714
      %v2788 = vsel %vm2604, %v2243, %v2716
      %v2789 = vsel %vm2604, %v2244, %v2718
      %v2790 = vsel %vm2604, %v2245, %v2720
      %v2791 = vsel %vm2604, %v2246, %v2722
      %v2792 = vsel %vm2604, %v2247, %v2724
      %v2793 = vsel %vm2604, %v2248, %v2726
      %v2794 = vsel %vm2604, %v2249, %v2728
      %v2795 = vsel %vm2604, %v2250, %v2730
      %v2796 = vsel %vm2604, %v2251, %v2732
      %v2797 = vmul.f32 %v2605, %v2605
      %v2798 = vmul.f32 %v2606, %v2606
      %v2799 = vmul.f32 %v2607, %v2607
      %v2800 = vmul.f32 %v2608, %v2608
      %v2801 = vmul.f32 %v2609, %v2609
      %v2802 = vmul.f32 %v2610, %v2610
      %v2803 = vmul.f32 %v2611, %v2611
      %v2804 = vmul.f32 %v2612, %v2612
      %v2805 = vmul.f32 %v2613, %v2613
      %v2806 = vmul.f32 %v2614, %v2614
      %v2807 = vmul.f32 %v2615, %v2615
      %v2808 = vmul.f32 %v2616, %v2616
      %v2809 = vmul.f32 %v2617, %v2617
      %v2810 = vmul.f32 %v2618, %v2618
      %v2811 = vmul.f32 %v2619, %v2619
      %v2812 = vmul.f32 %v2620, %v2620
      %v2813 = vmul.f32 %v2621, %v2621
      %v2814 = vmul.f32 %v2622, %v2622
      %v2815 = vmul.f32 %v2623, %v2623
      %v2816 = vmul.f32 %v2624, %v2624
      %v2817 = vmul.f32 %v2625, %v2625
      %v2818 = vmul.f32 %v2626, %v2626
      %v2819 = vmul.f32 %v2627, %v2627
      %v2820 = vmul.f32 %v2628, %v2628
      %v2821 = vmul.f32 %v2629, %v2629
      %v2822 = vmul.f32 %v2630, %v2630
      %v2823 = vmul.f32 %v2631, %v2631
      %v2824 = vmul.f32 %v2632, %v2632
      %v2825 = vmul.f32 %v2633, %v2633
      %v2826 = vmul.f32 %v2634, %v2634
      %v2827 = vmul.f32 %v2635, %v2635
      %v2828 = vmul.f32 %v2636, %v2636
      %vm2829 = vcmask 64512
      %v2830 = vsel %vm2829, %v2797, 0.0
      %2831 = vadd.xlane.f32.xlu0 %v2830
      %v2832 = vpop.xlane.xlu0 %2831
      %vm2833 = vcmask 58368
      %v2834 = vsel %vm2833, %v2798, 0.0
      %2835 = vadd.xlane.f32.xlu0 %v2834
      %v2836 = vpop.xlane.xlu0 %2835
      %v2837 = vsel %vm2829, %v2799, 0.0
      %2838 = vadd.xlane.f32.xlu0 %v2837
      %v2839 = vpop.xlane.xlu0 %2838
      %v2840 = vsel %vm2833, %v2800, 0.0
      %2841 = vadd.xlane.f32.xlu0 %v2840
      %v2842 = vpop.xlane.xlu0 %2841
      %v2843 = vsel %vm2829, %v2801, 0.0
      %2844 = vadd.xlane.f32.xlu0 %v2843
      %v2845 = vpop.xlane.xlu0 %2844
      %v2846 = vsel %vm2833, %v2802, 0.0
      %2847 = vadd.xlane.f32.xlu0 %v2846
      %v2848 = vpop.xlane.xlu0 %2847
      %v2849 = vsel %vm2829, %v2803, 0.0
      %2850 = vadd.xlane.f32.xlu0 %v2849
      %v2851 = vpop.xlane.xlu0 %2850
      %v2852 = vsel %vm2833, %v2804, 0.0
      %2853 = vadd.xlane.f32.xlu0 %v2852
      %v2854 = vpop.xlane.xlu0 %2853
      %v2855 = vsel %vm2829, %v2805, 0.0
      %2856 = vadd.xlane.f32.xlu0 %v2855
      %v2857 = vpop.xlane.xlu0 %2856
      %v2858 = vsel %vm2833, %v2806, 0.0
      %2859 = vadd.xlane.f32.xlu0 %v2858
      %v2860 = vpop.xlane.xlu0 %2859
      %v2861 = vsel %vm2829, %v2807, 0.0
      %2862 = vadd.xlane.f32.xlu0 %v2861
      %v2863 = vpop.xlane.xlu0 %2862
      %v2864 = vsel %vm2833, %v2808, 0.0
      %2865 = vadd.xlane.f32.xlu0 %v2864
      %v2866 = vpop.xlane.xlu0 %2865
      %v2867 = vsel %vm2829, %v2809, 0.0
      %2868 = vadd.xlane.f32.xlu0 %v2867
      %v2869 = vpop.xlane.xlu0 %2868
      %v2870 = vsel %vm2833, %v2810, 0.0
      %2871 = vadd.xlane.f32.xlu0 %v2870
      %v2872 = vpop.xlane.xlu0 %2871
      %v2873 = vsel %vm2829, %v2811, 0.0
      %2874 = vadd.xlane.f32.xlu0 %v2873
      %v2875 = vpop.xlane.xlu0 %2874
      %v2876 = vsel %vm2833, %v2812, 0.0
      %2877 = vadd.xlane.f32.xlu0 %v2876
      %v2878 = vpop.xlane.xlu0 %2877
      %v2879 = vsel %vm2829, %v2813, 0.0
      %2880 = vadd.xlane.f32.xlu0 %v2879
      %v2881 = vpop.xlane.xlu0 %2880
      %v2882 = vsel %vm2833, %v2814, 0.0
      %2883 = vadd.xlane.f32.xlu0 %v2882
      %v2884 = vpop.xlane.xlu0 %2883
      %v2885 = vsel %vm2829, %v2815, 0.0
      %2886 = vadd.xlane.f32.xlu0 %v2885
      %v2887 = vpop.xlane.xlu0 %2886
      %v2888 = vsel %vm2833, %v2816, 0.0
      %2889 = vadd.xlane.f32.xlu0 %v2888
      %v2890 = vpop.xlane.xlu0 %2889
      %v2891 = vsel %vm2829, %v2817, 0.0
      %2892 = vadd.xlane.f32.xlu0 %v2891
      %v2893 = vpop.xlane.xlu0 %2892
      %v2894 = vsel %vm2833, %v2818, 0.0
      %2895 = vadd.xlane.f32.xlu0 %v2894
      %v2896 = vpop.xlane.xlu0 %2895
      %v2897 = vsel %vm2829, %v2819, 0.0
      %2898 = vadd.xlane.f32.xlu0 %v2897
      %v2899 = vpop.xlane.xlu0 %2898
      %v2900 = vsel %vm2833, %v2820, 0.0
      %2901 = vadd.xlane.f32.xlu0 %v2900
      %v2902 = vpop.xlane.xlu0 %2901
      %v2903 = vsel %vm2829, %v2821, 0.0
      %2904 = vadd.xlane.f32.xlu0 %v2903
      %v2905 = vpop.xlane.xlu0 %2904
      %v2906 = vsel %vm2833, %v2822, 0.0
      %2907 = vadd.xlane.f32.xlu0 %v2906
      %v2908 = vpop.xlane.xlu0 %2907
      %v2909 = vsel %vm2829, %v2823, 0.0
      %2910 = vadd.xlane.f32.xlu0 %v2909
      %v2911 = vpop.xlane.xlu0 %2910
      %v2912 = vsel %vm2833, %v2824, 0.0
      %2913 = vadd.xlane.f32.xlu0 %v2912
      %v2914 = vpop.xlane.xlu0 %2913
      %v2915 = vsel %vm2829, %v2825, 0.0
      %2916 = vadd.xlane.f32.xlu0 %v2915
      %v2917 = vpop.xlane.xlu0 %2916
      %v2918 = vsel %vm2833, %v2826, 0.0
      %2919 = vadd.xlane.f32.xlu0 %v2918
      %v2920 = vpop.xlane.xlu0 %2919
      %v2921 = vsel %vm2829, %v2827, 0.0
      %2922 = vadd.xlane.f32.xlu0 %v2921
      %v2923 = vpop.xlane.xlu0 %2922
      %v2924 = vsel %vm2833, %v2828, 0.0
      %2925 = vadd.xlane.f32.xlu0 %v2924
      %v2926 = vpop.xlane.xlu0 %2925
      %v2927 = vrcp.pop 8.0
      %v2928 = vmul.f32 8.0, %v2927
      %v2929 = vsub.f32 1.0, %v2928
      %v2930 = vmul.f32 %v2927, %v2929
      %v2931 = vadd.f32 %v2927, %v2930
      %vm2932 = vweird.f32 %v2927
      %v2933 = vsel %vm2932, %v2927, %v2931
      %v2934 = vmul.f32 %v2832, %v2933
      %v2935 = vmul.f32 %v2836, %v2933
      %v2936 = vmul.f32 %v2839, %v2933
      %v2937 = vmul.f32 %v2842, %v2933
      %v2938 = vmul.f32 %v2845, %v2933
      %v2939 = vmul.f32 %v2848, %v2933
      %v2940 = vmul.f32 %v2851, %v2933
      %v2941 = vmul.f32 %v2854, %v2933
      %v2942 = vmul.f32 %v2857, %v2933
      %v2943 = vmul.f32 %v2860, %v2933
      %v2944 = vmul.f32 %v2863, %v2933
      %v2945 = vmul.f32 %v2866, %v2933
      %v2946 = vmul.f32 %v2869, %v2933
      %v2947 = vmul.f32 %v2872, %v2933
      %v2948 = vmul.f32 %v2875, %v2933
      %v2949 = vmul.f32 %v2878, %v2933
      %v2950 = vmul.f32 %v2881, %v2933
      %v2951 = vmul.f32 %v2884, %v2933
      %v2952 = vmul.f32 %v2887, %v2933
      %v2953 = vmul.f32 %v2890, %v2933
      %v2954 = vmul.f32 %v2893, %v2933
      %v2955 = vmul.f32 %v2896, %v2933
      %v2956 = vmul.f32 %v2899, %v2933
      %v2957 = vmul.f32 %v2902, %v2933
      %v2958 = vmul.f32 %v2905, %v2933
      %v2959 = vmul.f32 %v2908, %v2933
      %v2960 = vmul.f32 %v2911, %v2933
      %v2961 = vmul.f32 %v2914, %v2933
      %v2962 = vmul.f32 %v2917, %v2933
      %v2963 = vmul.f32 %v2920, %v2933
      %v2964 = vmul.f32 %v2923, %v2933
      %v2965 = vmul.f32 %v2926, %v2933
      %v2966 = vadd.f32 %v2934, 1e-06
      %v2967 = vadd.f32 %v2935, 1e-06
      %v2968 = vadd.f32 %v2936, 1e-06
      %v2969 = vadd.f32 %v2937, 1e-06
      %v2970 = vadd.f32 %v2938, 1e-06
      %v2971 = vadd.f32 %v2939, 1e-06
      %v2972 = vadd.f32 %v2940, 1e-06
      %v2973 = vadd.f32 %v2941, 1e-06
      %v2974 = vadd.f32 %v2942, 1e-06
      %v2975 = vadd.f32 %v2943, 1e-06
      %v2976 = vadd.f32 %v2944, 1e-06
      %v2977 = vadd.f32 %v2945, 1e-06
      %v2978 = vadd.f32 %v2946, 1e-06
      %v2979 = vadd.f32 %v2947, 1e-06
      %v2980 = vadd.f32 %v2948, 1e-06
      %v2981 = vadd.f32 %v2949, 1e-06
      %v2982 = vadd.f32 %v2950, 1e-06
      %v2983 = vadd.f32 %v2951, 1e-06
      %v2984 = vadd.f32 %v2952, 1e-06
      %v2985 = vadd.f32 %v2953, 1e-06
      %v2986 = vadd.f32 %v2954, 1e-06
      %v2987 = vadd.f32 %v2955, 1e-06
      %v2988 = vadd.f32 %v2956, 1e-06
      %v2989 = vadd.f32 %v2957, 1e-06
      %v2990 = vadd.f32 %v2958, 1e-06
      %v2991 = vadd.f32 %v2959, 1e-06
      %v2992 = vadd.f32 %v2960, 1e-06
      %v2993 = vadd.f32 %v2961, 1e-06
      %v2994 = vadd.f32 %v2962, 1e-06
      %v2995 = vadd.f32 %v2963, 1e-06
      %v2996 = vadd.f32 %v2964, 1e-06
      %v2997 = vadd.f32 %v2965, 1e-06
      %v2998 = vrsqrt.pop %v2966
      %v2999 = vmul.f32 %v2998, %v2966
      %v3000 = vmul.f32 %v2999, %v2998
      %v3001 = vmul.f32 0.5, %v3000
      %v3002 = vsub.f32 1.5, %v3001
      %v3003 = vmul.f32 %v2998, %v3002
      %vm3004 = vweird.f32 %v2966
      %vm3005 = vweird.f32 %v2998
      %vm3006 = vmor %vm3004, %vm3005
      %v3007 = vsel %vm3006, %v2998, %v3003
      %v3008 = vrsqrt.pop %v2967
      %v3009 = vmul.f32 %v3008, %v2967
      %v3010 = vmul.f32 %v3009, %v3008
      %v3011 = vmul.f32 0.5, %v3010
      %v3012 = vsub.f32 1.5, %v3011
      %v3013 = vmul.f32 %v3008, %v3012
      %vm3014 = vweird.f32 %v2967
      %vm3015 = vweird.f32 %v3008
      %vm3016 = vmor %vm3014, %vm3015
      %v3017 = vsel %vm3016, %v3008, %v3013
      %v3018 = vrsqrt.pop %v2968
      %v3019 = vmul.f32 %v3018, %v2968
      %v3020 = vmul.f32 %v3019, %v3018
      %v3021 = vmul.f32 0.5, %v3020
      %v3022 = vsub.f32 1.5, %v3021
      %v3023 = vmul.f32 %v3018, %v3022
      %vm3024 = vweird.f32 %v2968
      %vm3025 = vweird.f32 %v3018
      %vm3026 = vmor %vm3024, %vm3025
      %v3027 = vsel %vm3026, %v3018, %v3023
      %v3028 = vrsqrt.pop %v2969
      %v3029 = vmul.f32 %v3028, %v2969
      %v3030 = vmul.f32 %v3029, %v3028
      %v3031 = vmul.f32 0.5, %v3030
      %v3032 = vsub.f32 1.5, %v3031
      %v3033 = vmul.f32 %v3028, %v3032
      %vm3034 = vweird.f32 %v2969
      %vm3035 = vweird.f32 %v3028
      %vm3036 = vmor %vm3034, %vm3035
      %v3037 = vsel %vm3036, %v3028, %v3033
      %v3038 = vrsqrt.pop %v2970
      %v3039 = vmul.f32 %v3038, %v2970
      %v3040 = vmul.f32 %v3039, %v3038
      %v3041 = vmul.f32 0.5, %v3040
      %v3042 = vsub.f32 1.5, %v3041
      %v3043 = vmul.f32 %v3038, %v3042
      %vm3044 = vweird.f32 %v2970
      %vm3045 = vweird.f32 %v3038
      %vm3046 = vmor %vm3044, %vm3045
      %v3047 = vsel %vm3046, %v3038, %v3043
      %v3048 = vrsqrt.pop %v2971
      %v3049 = vmul.f32 %v3048, %v2971
      %v3050 = vmul.f32 %v3049, %v3048
      %v3051 = vmul.f32 0.5, %v3050
      %v3052 = vsub.f32 1.5, %v3051
      %v3053 = vmul.f32 %v3048, %v3052
      %vm3054 = vweird.f32 %v2971
      %vm3055 = vweird.f32 %v3048
      %vm3056 = vmor %vm3054, %vm3055
      %v3057 = vsel %vm3056, %v3048, %v3053
      %v3058 = vrsqrt.pop %v2972
      %v3059 = vmul.f32 %v3058, %v2972
      %v3060 = vmul.f32 %v3059, %v3058
      %v3061 = vmul.f32 0.5, %v3060
      %v3062 = vsub.f32 1.5, %v3061
      %v3063 = vmul.f32 %v3058, %v3062
      %vm3064 = vweird.f32 %v2972
      %vm3065 = vweird.f32 %v3058
      %vm3066 = vmor %vm3064, %vm3065
      %v3067 = vsel %vm3066, %v3058, %v3063
      %v3068 = vrsqrt.pop %v2973
      %v3069 = vmul.f32 %v3068, %v2973
      %v3070 = vmul.f32 %v3069, %v3068
      %v3071 = vmul.f32 0.5, %v3070
      %v3072 = vsub.f32 1.5, %v3071
      %v3073 = vmul.f32 %v3068, %v3072
      %vm3074 = vweird.f32 %v2973
      %vm3075 = vweird.f32 %v3068
      %vm3076 = vmor %vm3074, %vm3075
      %v3077 = vsel %vm3076, %v3068, %v3073
      %v3078 = vrsqrt.pop %v2974
      %v3079 = vmul.f32 %v3078, %v2974
      %v3080 = vmul.f32 %v3079, %v3078
      %v3081 = vmul.f32 0.5, %v3080
      %v3082 = vsub.f32 1.5, %v3081
      %v3083 = vmul.f32 %v3078, %v3082
      %vm3084 = vweird.f32 %v2974
      %vm3085 = vweird.f32 %v3078
      %vm3086 = vmor %vm3084, %vm3085
      %v3087 = vsel %vm3086, %v3078, %v3083
      %v3088 = vrsqrt.pop %v2975
      %v3089 = vmul.f32 %v3088, %v2975
      %v3090 = vmul.f32 %v3089, %v3088
      %v3091 = vmul.f32 0.5, %v3090
      %v3092 = vsub.f32 1.5, %v3091
      %v3093 = vmul.f32 %v3088, %v3092
      %vm3094 = vweird.f32 %v2975
      %vm3095 = vweird.f32 %v3088
      %vm3096 = vmor %vm3094, %vm3095
      %v3097 = vsel %vm3096, %v3088, %v3093
      %v3098 = vrsqrt.pop %v2976
      %v3099 = vmul.f32 %v3098, %v2976
      %v3100 = vmul.f32 %v3099, %v3098
      %v3101 = vmul.f32 0.5, %v3100
      %v3102 = vsub.f32 1.5, %v3101
      %v3103 = vmul.f32 %v3098, %v3102
      %vm3104 = vweird.f32 %v2976
      %vm3105 = vweird.f32 %v3098
      %vm3106 = vmor %vm3104, %vm3105
      %v3107 = vsel %vm3106, %v3098, %v3103
      %v3108 = vrsqrt.pop %v2977
      %v3109 = vmul.f32 %v3108, %v2977
      %v3110 = vmul.f32 %v3109, %v3108
      %v3111 = vmul.f32 0.5, %v3110
      %v3112 = vsub.f32 1.5, %v3111
      %v3113 = vmul.f32 %v3108, %v3112
      %vm3114 = vweird.f32 %v2977
      %vm3115 = vweird.f32 %v3108
      %vm3116 = vmor %vm3114, %vm3115
      %v3117 = vsel %vm3116, %v3108, %v3113
      %v3118 = vrsqrt.pop %v2978
      %v3119 = vmul.f32 %v3118, %v2978
      %v3120 = vmul.f32 %v3119, %v3118
      %v3121 = vmul.f32 0.5, %v3120
      %v3122 = vsub.f32 1.5, %v3121
      %v3123 = vmul.f32 %v3118, %v3122
      %vm3124 = vweird.f32 %v2978
      %vm3125 = vweird.f32 %v3118
      %vm3126 = vmor %vm3124, %vm3125
      %v3127 = vsel %vm3126, %v3118, %v3123
      %v3128 = vrsqrt.pop %v2979
      %v3129 = vmul.f32 %v3128, %v2979
      %v3130 = vmul.f32 %v3129, %v3128
      %v3131 = vmul.f32 0.5, %v3130
      %v3132 = vsub.f32 1.5, %v3131
      %v3133 = vmul.f32 %v3128, %v3132
      %vm3134 = vweird.f32 %v2979
      %vm3135 = vweird.f32 %v3128
      %vm3136 = vmor %vm3134, %vm3135
      %v3137 = vsel %vm3136, %v3128, %v3133
      %v3138 = vrsqrt.pop %v2980
      %v3139 = vmul.f32 %v3138, %v2980
      %v3140 = vmul.f32 %v3139, %v3138
      %v3141 = vmul.f32 0.5, %v3140
      %v3142 = vsub.f32 1.5, %v3141
      %v3143 = vmul.f32 %v3138, %v3142
      %vm3144 = vweird.f32 %v2980
      %vm3145 = vweird.f32 %v3138
      %vm3146 = vmor %vm3144, %vm3145
      %v3147 = vsel %vm3146, %v3138, %v3143
      %v3148 = vrsqrt.pop %v2981
      %v3149 = vmul.f32 %v3148, %v2981
      %v3150 = vmul.f32 %v3149, %v3148
      %v3151 = vmul.f32 0.5, %v3150
      %v3152 = vsub.f32 1.5, %v3151
      %v3153 = vmul.f32 %v3148, %v3152
      %vm3154 = vweird.f32 %v2981
      %vm3155 = vweird.f32 %v3148
      %vm3156 = vmor %vm3154, %vm3155
      %v3157 = vsel %vm3156, %v3148, %v3153
      %v3158 = vrsqrt.pop %v2982
      %v3159 = vmul.f32 %v3158, %v2982
      %v3160 = vmul.f32 %v3159, %v3158
      %v3161 = vmul.f32 0.5, %v3160
      %v3162 = vsub.f32 1.5, %v3161
      %v3163 = vmul.f32 %v3158, %v3162
      %vm3164 = vweird.f32 %v2982
      %vm3165 = vweird.f32 %v3158
      %vm3166 = vmor %vm3164, %vm3165
      %v3167 = vsel %vm3166, %v3158, %v3163
      %v3168 = vrsqrt.pop %v2983
      %v3169 = vmul.f32 %v3168, %v2983
      %v3170 = vmul.f32 %v3169, %v3168
      %v3171 = vmul.f32 0.5, %v3170
      %v3172 = vsub.f32 1.5, %v3171
      %v3173 = vmul.f32 %v3168, %v3172
      %vm3174 = vweird.f32 %v2983
      %vm3175 = vweird.f32 %v3168
      %vm3176 = vmor %vm3174, %vm3175
      %v3177 = vsel %vm3176, %v3168, %v3173
      %v3178 = vrsqrt.pop %v2984
      %v3179 = vmul.f32 %v3178, %v2984
      %v3180 = vmul.f32 %v3179, %v3178
      %v3181 = vmul.f32 0.5, %v3180
      %v3182 = vsub.f32 1.5, %v3181
      %v3183 = vmul.f32 %v3178, %v3182
      %vm3184 = vweird.f32 %v2984
      %vm3185 = vweird.f32 %v3178
      %vm3186 = vmor %vm3184, %vm3185
      %v3187 = vsel %vm3186, %v3178, %v3183
      %v3188 = vrsqrt.pop %v2985
      %v3189 = vmul.f32 %v3188, %v2985
      %v3190 = vmul.f32 %v3189, %v3188
      %v3191 = vmul.f32 0.5, %v3190
      %v3192 = vsub.f32 1.5, %v3191
      %v3193 = vmul.f32 %v3188, %v3192
      %vm3194 = vweird.f32 %v2985
      %vm3195 = vweird.f32 %v3188
      %vm3196 = vmor %vm3194, %vm3195
      %v3197 = vsel %vm3196, %v3188, %v3193
      %v3198 = vrsqrt.pop %v2986
      %v3199 = vmul.f32 %v3198, %v2986
      %v3200 = vmul.f32 %v3199, %v3198
      %v3201 = vmul.f32 0.5, %v3200
      %v3202 = vsub.f32 1.5, %v3201
      %v3203 = vmul.f32 %v3198, %v3202
      %vm3204 = vweird.f32 %v2986
      %vm3205 = vweird.f32 %v3198
      %vm3206 = vmor %vm3204, %vm3205
      %v3207 = vsel %vm3206, %v3198, %v3203
      %v3208 = vrsqrt.pop %v2987
      %v3209 = vmul.f32 %v3208, %v2987
      %v3210 = vmul.f32 %v3209, %v3208
      %v3211 = vmul.f32 0.5, %v3210
      %v3212 = vsub.f32 1.5, %v3211
      %v3213 = vmul.f32 %v3208, %v3212
      %vm3214 = vweird.f32 %v2987
      %vm3215 = vweird.f32 %v3208
      %vm3216 = vmor %vm3214, %vm3215
      %v3217 = vsel %vm3216, %v3208, %v3213
      %v3218 = vrsqrt.pop %v2988
      %v3219 = vmul.f32 %v3218, %v2988
      %v3220 = vmul.f32 %v3219, %v3218
      %v3221 = vmul.f32 0.5, %v3220
      %v3222 = vsub.f32 1.5, %v3221
      %v3223 = vmul.f32 %v3218, %v3222
      %vm3224 = vweird.f32 %v2988
      %vm3225 = vweird.f32 %v3218
      %vm3226 = vmor %vm3224, %vm3225
      %v3227 = vsel %vm3226, %v3218, %v3223
      %v3228 = vrsqrt.pop %v2989
      %v3229 = vmul.f32 %v3228, %v2989
      %v3230 = vmul.f32 %v3229, %v3228
      %v3231 = vmul.f32 0.5, %v3230
      %v3232 = vsub.f32 1.5, %v3231
      %v3233 = vmul.f32 %v3228, %v3232
      %vm3234 = vweird.f32 %v2989
      %vm3235 = vweird.f32 %v3228
      %vm3236 = vmor %vm3234, %vm3235
      %v3237 = vsel %vm3236, %v3228, %v3233
      %v3238 = vrsqrt.pop %v2990
      %v3239 = vmul.f32 %v3238, %v2990
      %v3240 = vmul.f32 %v3239, %v3238
      %v3241 = vmul.f32 0.5, %v3240
      %v3242 = vsub.f32 1.5, %v3241
      %v3243 = vmul.f32 %v3238, %v3242
      %vm3244 = vweird.f32 %v2990
      %vm3245 = vweird.f32 %v3238
      %vm3246 = vmor %vm3244, %vm3245
      %v3247 = vsel %vm3246, %v3238, %v3243
      %v3248 = vrsqrt.pop %v2991
      %v3249 = vmul.f32 %v3248, %v2991
      %v3250 = vmul.f32 %v3249, %v3248
      %v3251 = vmul.f32 0.5, %v3250
      %v3252 = vsub.f32 1.5, %v3251
      %v3253 = vmul.f32 %v3248, %v3252
      %vm3254 = vweird.f32 %v2991
      %vm3255 = vweird.f32 %v3248
      %vm3256 = vmor %vm3254, %vm3255
      %v3257 = vsel %vm3256, %v3248, %v3253
      %v3258 = vrsqrt.pop %v2992
      %v3259 = vmul.f32 %v3258, %v2992
      %v3260 = vmul.f32 %v3259, %v3258
      %v3261 = vmul.f32 0.5, %v3260
      %v3262 = vsub.f32 1.5, %v3261
      %v3263 = vmul.f32 %v3258, %v3262
      %vm3264 = vweird.f32 %v2992
      %vm3265 = vweird.f32 %v3258
      %vm3266 = vmor %vm3264, %vm3265
      %v3267 = vsel %vm3266, %v3258, %v3263
      %v3268 = vrsqrt.pop %v2993
      %v3269 = vmul.f32 %v3268, %v2993
      %v3270 = vmul.f32 %v3269, %v3268
      %v3271 = vmul.f32 0.5, %v3270
      %v3272 = vsub.f32 1.5, %v3271
      %v3273 = vmul.f32 %v3268, %v3272
      %vm3274 = vweird.f32 %v2993
      %vm3275 = vweird.f32 %v3268
      %vm3276 = vmor %vm3274, %vm3275
      %v3277 = vsel %vm3276, %v3268, %v3273
      %v3278 = vrsqrt.pop %v2994
      %v3279 = vmul.f32 %v3278, %v2994
      %v3280 = vmul.f32 %v3279, %v3278
      %v3281 = vmul.f32 0.5, %v3280
      %v3282 = vsub.f32 1.5, %v3281
      %v3283 = vmul.f32 %v3278, %v3282
      %vm3284 = vweird.f32 %v2994
      %vm3285 = vweird.f32 %v3278
      %vm3286 = vmor %vm3284, %vm3285
      %v3287 = vsel %vm3286, %v3278, %v3283
      %v3288 = vrsqrt.pop %v2995
      %v3289 = vmul.f32 %v3288, %v2995
      %v3290 = vmul.f32 %v3289, %v3288
      %v3291 = vmul.f32 0.5, %v3290
      %v3292 = vsub.f32 1.5, %v3291
      %v3293 = vmul.f32 %v3288, %v3292
      %vm3294 = vweird.f32 %v2995
      %vm3295 = vweird.f32 %v3288
      %vm3296 = vmor %vm3294, %vm3295
      %v3297 = vsel %vm3296, %v3288, %v3293
      %v3298 = vrsqrt.pop %v2996
      %v3299 = vmul.f32 %v3298, %v2996
      %v3300 = vmul.f32 %v3299, %v3298
      %v3301 = vmul.f32 0.5, %v3300
      %v3302 = vsub.f32 1.5, %v3301
      %v3303 = vmul.f32 %v3298, %v3302
      %vm3304 = vweird.f32 %v2996
      %vm3305 = vweird.f32 %v3298
      %vm3306 = vmor %vm3304, %vm3305
      %v3307 = vsel %vm3306, %v3298, %v3303
      %v3308 = vrsqrt.pop %v2997
      %v3309 = vmul.f32 %v3308, %v2997
      %v3310 = vmul.f32 %v3309, %v3308
      %v3311 = vmul.f32 0.5, %v3310
      %v3312 = vsub.f32 1.5, %v3311
      %v3313 = vmul.f32 %v3308, %v3312
      %vm3314 = vweird.f32 %v2997
      %vm3315 = vweird.f32 %v3308
      %vm3316 = vmor %vm3314, %vm3315
      %v3317 = vsel %vm3316, %v3308, %v3313
      %v3318 = vmul.f32 %v2765, %v2765
      %v3319 = vmul.f32 %v2766, %v2766
      %v3320 = vmul.f32 %v2767, %v2767
      %v3321 = vmul.f32 %v2768, %v2768
      %v3322 = vmul.f32 %v2769, %v2769
      %v3323 = vmul.f32 %v2770, %v2770
      %v3324 = vmul.f32 %v2771, %v2771
      %v3325 = vmul.f32 %v2772, %v2772
      %v3326 = vmul.f32 %v2773, %v2773
      %v3327 = vmul.f32 %v2774, %v2774
      %v3328 = vmul.f32 %v2775, %v2775
      %v3329 = vmul.f32 %v2776, %v2776
      %v3330 = vmul.f32 %v2777, %v2777
      %v3331 = vmul.f32 %v2778, %v2778
      %v3332 = vmul.f32 %v2779, %v2779
      %v3333 = vmul.f32 %v2780, %v2780
      %v3334 = vmul.f32 %v2781, %v2781
      %v3335 = vmul.f32 %v2782, %v2782
      %v3336 = vmul.f32 %v2783, %v2783
      %v3337 = vmul.f32 %v2784, %v2784
      %v3338 = vmul.f32 %v2785, %v2785
      %v3339 = vmul.f32 %v2786, %v2786
      %v3340 = vmul.f32 %v2787, %v2787
      %v3341 = vmul.f32 %v2788, %v2788
      %v3342 = vmul.f32 %v2789, %v2789
      %v3343 = vmul.f32 %v2790, %v2790
      %v3344 = vmul.f32 %v2791, %v2791
      %v3345 = vmul.f32 %v2792, %v2792
      %v3346 = vmul.f32 %v2793, %v2793
      %v3347 = vmul.f32 %v2794, %v2794
      %v3348 = vmul.f32 %v2795, %v2795
      %v3349 = vmul.f32 %v2796, %v2796
      %v3350 = vsel %vm2829, %v3318, 0.0
      %3351 = vadd.xlane.f32.xlu0 %v3350
      %v3352 = vpop.xlane.xlu0 %3351
      %v3353 = vsel %vm2833, %v3319, 0.0
      %3354 = vadd.xlane.f32.xlu0 %v3353
      %v3355 = vpop.xlane.xlu0 %3354
      %v3356 = vsel %vm2829, %v3320, 0.0
      %3357 = vadd.xlane.f32.xlu0 %v3356
      %v3358 = vpop.xlane.xlu0 %3357
      %v3359 = vsel %vm2833, %v3321, 0.0
      %3360 = vadd.xlane.f32.xlu0 %v3359
      %v3361 = vpop.xlane.xlu0 %3360
      %v3362 = vsel %vm2829, %v3322, 0.0
      %3363 = vadd.xlane.f32.xlu0 %v3362
      %v3364 = vpop.xlane.xlu0 %3363
      %v3365 = vsel %vm2833, %v3323, 0.0
      %3366 = vadd.xlane.f32.xlu0 %v3365
      %v3367 = vpop.xlane.xlu0 %3366
      %v3368 = vsel %vm2829, %v3324, 0.0
      %3369 = vadd.xlane.f32.xlu0 %v3368
      %v3370 = vpop.xlane.xlu0 %3369
      %v3371 = vsel %vm2833, %v3325, 0.0
      %3372 = vadd.xlane.f32.xlu0 %v3371
      %v3373 = vpop.xlane.xlu0 %3372
      %v3374 = vsel %vm2829, %v3326, 0.0
      %3375 = vadd.xlane.f32.xlu0 %v3374
      %v3376 = vpop.xlane.xlu0 %3375
      %v3377 = vsel %vm2833, %v3327, 0.0
      %3378 = vadd.xlane.f32.xlu0 %v3377
      %v3379 = vpop.xlane.xlu0 %3378
      %v3380 = vsel %vm2829, %v3328, 0.0
      %3381 = vadd.xlane.f32.xlu0 %v3380
      %v3382 = vpop.xlane.xlu0 %3381
      %v3383 = vsel %vm2833, %v3329, 0.0
      %3384 = vadd.xlane.f32.xlu0 %v3383
      %v3385 = vpop.xlane.xlu0 %3384
      %v3386 = vsel %vm2829, %v3330, 0.0
      %3387 = vadd.xlane.f32.xlu0 %v3386
      %v3388 = vpop.xlane.xlu0 %3387
      %v3389 = vsel %vm2833, %v3331, 0.0
      %3390 = vadd.xlane.f32.xlu0 %v3389
      %v3391 = vpop.xlane.xlu0 %3390
      %v3392 = vsel %vm2829, %v3332, 0.0
      %3393 = vadd.xlane.f32.xlu0 %v3392
      %v3394 = vpop.xlane.xlu0 %3393
      %v3395 = vsel %vm2833, %v3333, 0.0
      %3396 = vadd.xlane.f32.xlu0 %v3395
      %v3397 = vpop.xlane.xlu0 %3396
      %v3398 = vsel %vm2829, %v3334, 0.0
      %3399 = vadd.xlane.f32.xlu0 %v3398
      %v3400 = vpop.xlane.xlu0 %3399
      %v3401 = vsel %vm2833, %v3335, 0.0
      %3402 = vadd.xlane.f32.xlu0 %v3401
      %v3403 = vpop.xlane.xlu0 %3402
      %v3404 = vsel %vm2829, %v3336, 0.0
      %3405 = vadd.xlane.f32.xlu0 %v3404
      %v3406 = vpop.xlane.xlu0 %3405
      %v3407 = vsel %vm2833, %v3337, 0.0
      %3408 = vadd.xlane.f32.xlu0 %v3407
      %v3409 = vpop.xlane.xlu0 %3408
      %v3410 = vsel %vm2829, %v3338, 0.0
      %3411 = vadd.xlane.f32.xlu0 %v3410
      %v3412 = vpop.xlane.xlu0 %3411
      %v3413 = vsel %vm2833, %v3339, 0.0
      %3414 = vadd.xlane.f32.xlu0 %v3413
      %v3415 = vpop.xlane.xlu0 %3414
      %v3416 = vsel %vm2829, %v3340, 0.0
      %3417 = vadd.xlane.f32.xlu0 %v3416
      %v3418 = vpop.xlane.xlu0 %3417
      %v3419 = vsel %vm2833, %v3341, 0.0
      %3420 = vadd.xlane.f32.xlu0 %v3419
      %v3421 = vpop.xlane.xlu0 %3420
      %v3422 = vsel %vm2829, %v3342, 0.0
      %3423 = vadd.xlane.f32.xlu0 %v3422
      %v3424 = vpop.xlane.xlu0 %3423
      %v3425 = vsel %vm2833, %v3343, 0.0
      %3426 = vadd.xlane.f32.xlu0 %v3425
      %v3427 = vpop.xlane.xlu0 %3426
      %v3428 = vsel %vm2829, %v3344, 0.0
      %3429 = vadd.xlane.f32.xlu0 %v3428
      %v3430 = vpop.xlane.xlu0 %3429
      %v3431 = vsel %vm2833, %v3345, 0.0
      %3432 = vadd.xlane.f32.xlu0 %v3431
      %v3433 = vpop.xlane.xlu0 %3432
      %v3434 = vsel %vm2829, %v3346, 0.0
      %3435 = vadd.xlane.f32.xlu0 %v3434
      %v3436 = vpop.xlane.xlu0 %3435
      %v3437 = vsel %vm2833, %v3347, 0.0
      %3438 = vadd.xlane.f32.xlu0 %v3437
      %v3439 = vpop.xlane.xlu0 %3438
      %v3440 = vsel %vm2829, %v3348, 0.0
      %3441 = vadd.xlane.f32.xlu0 %v3440
      %v3442 = vpop.xlane.xlu0 %3441
      %v3443 = vsel %vm2833, %v3349, 0.0
      %3444 = vadd.xlane.f32.xlu0 %v3443
      %v3445 = vpop.xlane.xlu0 %3444
      %v3446 = vmul.f32 %v3352, %v2933
      %v3447 = vmul.f32 %v3355, %v2933
      %v3448 = vmul.f32 %v3358, %v2933
      %v3449 = vmul.f32 %v3361, %v2933
      %v3450 = vmul.f32 %v3364, %v2933
      %v3451 = vmul.f32 %v3367, %v2933
      %v3452 = vmul.f32 %v3370, %v2933
      %v3453 = vmul.f32 %v3373, %v2933
      %v3454 = vmul.f32 %v3376, %v2933
      %v3455 = vmul.f32 %v3379, %v2933
      %v3456 = vmul.f32 %v3382, %v2933
      %v3457 = vmul.f32 %v3385, %v2933
      %v3458 = vmul.f32 %v3388, %v2933
      %v3459 = vmul.f32 %v3391, %v2933
      %v3460 = vmul.f32 %v3394, %v2933
      %v3461 = vmul.f32 %v3397, %v2933
      %v3462 = vmul.f32 %v3400, %v2933
      %v3463 = vmul.f32 %v3403, %v2933
      %v3464 = vmul.f32 %v3406, %v2933
      %v3465 = vmul.f32 %v3409, %v2933
      %v3466 = vmul.f32 %v3412, %v2933
      %v3467 = vmul.f32 %v3415, %v2933
      %v3468 = vmul.f32 %v3418, %v2933
      %v3469 = vmul.f32 %v3421, %v2933
      %v3470 = vmul.f32 %v3424, %v2933
      %v3471 = vmul.f32 %v3427, %v2933
      %v3472 = vmul.f32 %v3430, %v2933
      %v3473 = vmul.f32 %v3433, %v2933
      %v3474 = vmul.f32 %v3436, %v2933
      %v3475 = vmul.f32 %v3439, %v2933
      %v3476 = vmul.f32 %v3442, %v2933
      %v3477 = vmul.f32 %v3445, %v2933
      %v3478 = vadd.f32 %v3446, 1e-06
      %v3479 = vadd.f32 %v3447, 1e-06
      %v3480 = vadd.f32 %v3448, 1e-06
      %v3481 = vadd.f32 %v3449, 1e-06
      %v3482 = vadd.f32 %v3450, 1e-06
      %v3483 = vadd.f32 %v3451, 1e-06
      %v3484 = vadd.f32 %v3452, 1e-06
      %v3485 = vadd.f32 %v3453, 1e-06
      %v3486 = vadd.f32 %v3454, 1e-06
      %v3487 = vadd.f32 %v3455, 1e-06
      %v3488 = vadd.f32 %v3456, 1e-06
      %v3489 = vadd.f32 %v3457, 1e-06
      %v3490 = vadd.f32 %v3458, 1e-06
      %v3491 = vadd.f32 %v3459, 1e-06
      %v3492 = vadd.f32 %v3460, 1e-06
      %v3493 = vadd.f32 %v3461, 1e-06
      %v3494 = vadd.f32 %v3462, 1e-06
      %v3495 = vadd.f32 %v3463, 1e-06
      %v3496 = vadd.f32 %v3464, 1e-06
      %v3497 = vadd.f32 %v3465, 1e-06
      %v3498 = vadd.f32 %v3466, 1e-06
      %v3499 = vadd.f32 %v3467, 1e-06
      %v3500 = vadd.f32 %v3468, 1e-06
      %v3501 = vadd.f32 %v3469, 1e-06
      %v3502 = vadd.f32 %v3470, 1e-06
      %v3503 = vadd.f32 %v3471, 1e-06
      %v3504 = vadd.f32 %v3472, 1e-06
      %v3505 = vadd.f32 %v3473, 1e-06
      %v3506 = vadd.f32 %v3474, 1e-06
      %v3507 = vadd.f32 %v3475, 1e-06
      %v3508 = vadd.f32 %v3476, 1e-06
      %v3509 = vadd.f32 %v3477, 1e-06
      %v3510 = vrsqrt.pop %v3478
      %v3511 = vmul.f32 %v3510, %v3478
      %v3512 = vmul.f32 %v3511, %v3510
      %v3513 = vmul.f32 0.5, %v3512
      %v3514 = vsub.f32 1.5, %v3513
      %v3515 = vmul.f32 %v3510, %v3514
      %vm3516 = vweird.f32 %v3478
      %vm3517 = vweird.f32 %v3510
      %vm3518 = vmor %vm3516, %vm3517
      %v3519 = vsel %vm3518, %v3510, %v3515
      %v3520 = vrsqrt.pop %v3479
      %v3521 = vmul.f32 %v3520, %v3479
      %v3522 = vmul.f32 %v3521, %v3520
      %v3523 = vmul.f32 0.5, %v3522
      %v3524 = vsub.f32 1.5, %v3523
      %v3525 = vmul.f32 %v3520, %v3524
      %vm3526 = vweird.f32 %v3479
      %vm3527 = vweird.f32 %v3520
      %vm3528 = vmor %vm3526, %vm3527
      %v3529 = vsel %vm3528, %v3520, %v3525
      %v3530 = vrsqrt.pop %v3480
      %v3531 = vmul.f32 %v3530, %v3480
      %v3532 = vmul.f32 %v3531, %v3530
      %v3533 = vmul.f32 0.5, %v3532
      %v3534 = vsub.f32 1.5, %v3533
      %v3535 = vmul.f32 %v3530, %v3534
      %vm3536 = vweird.f32 %v3480
      %vm3537 = vweird.f32 %v3530
      %vm3538 = vmor %vm3536, %vm3537
      %v3539 = vsel %vm3538, %v3530, %v3535
      %v3540 = vrsqrt.pop %v3481
      %v3541 = vmul.f32 %v3540, %v3481
      %v3542 = vmul.f32 %v3541, %v3540
      %v3543 = vmul.f32 0.5, %v3542
      %v3544 = vsub.f32 1.5, %v3543
      %v3545 = vmul.f32 %v3540, %v3544
      %vm3546 = vweird.f32 %v3481
      %vm3547 = vweird.f32 %v3540
      %vm3548 = vmor %vm3546, %vm3547
      %v3549 = vsel %vm3548, %v3540, %v3545
      %v3550 = vrsqrt.pop %v3482
      %v3551 = vmul.f32 %v3550, %v3482
      %v3552 = vmul.f32 %v3551, %v3550
      %v3553 = vmul.f32 0.5, %v3552
      %v3554 = vsub.f32 1.5, %v3553
      %v3555 = vmul.f32 %v3550, %v3554
      %vm3556 = vweird.f32 %v3482
      %vm3557 = vweird.f32 %v3550
      %vm3558 = vmor %vm3556, %vm3557
      %v3559 = vsel %vm3558, %v3550, %v3555
      %v3560 = vrsqrt.pop %v3483
      %v3561 = vmul.f32 %v3560, %v3483
      %v3562 = vmul.f32 %v3561, %v3560
      %v3563 = vmul.f32 0.5, %v3562
      %v3564 = vsub.f32 1.5, %v3563
      %v3565 = vmul.f32 %v3560, %v3564
      %vm3566 = vweird.f32 %v3483
      %vm3567 = vweird.f32 %v3560
      %vm3568 = vmor %vm3566, %vm3567
      %v3569 = vsel %vm3568, %v3560, %v3565
      %v3570 = vrsqrt.pop %v3484
      %v3571 = vmul.f32 %v3570, %v3484
      %v3572 = vmul.f32 %v3571, %v3570
      %v3573 = vmul.f32 0.5, %v3572
      %v3574 = vsub.f32 1.5, %v3573
      %v3575 = vmul.f32 %v3570, %v3574
      %vm3576 = vweird.f32 %v3484
      %vm3577 = vweird.f32 %v3570
      %vm3578 = vmor %vm3576, %vm3577
      %v3579 = vsel %vm3578, %v3570, %v3575
      %v3580 = vrsqrt.pop %v3485
      %v3581 = vmul.f32 %v3580, %v3485
      %v3582 = vmul.f32 %v3581, %v3580
      %v3583 = vmul.f32 0.5, %v3582
      %v3584 = vsub.f32 1.5, %v3583
      %v3585 = vmul.f32 %v3580, %v3584
      %vm3586 = vweird.f32 %v3485
      %vm3587 = vweird.f32 %v3580
      %vm3588 = vmor %vm3586, %vm3587
      %v3589 = vsel %vm3588, %v3580, %v3585
      %v3590 = vrsqrt.pop %v3486
      %v3591 = vmul.f32 %v3590, %v3486
      %v3592 = vmul.f32 %v3591, %v3590
      %v3593 = vmul.f32 0.5, %v3592
      %v3594 = vsub.f32 1.5, %v3593
      %v3595 = vmul.f32 %v3590, %v3594
      %vm3596 = vweird.f32 %v3486
      %vm3597 = vweird.f32 %v3590
      %vm3598 = vmor %vm3596, %vm3597
      %v3599 = vsel %vm3598, %v3590, %v3595
      %v3600 = vrsqrt.pop %v3487
      %v3601 = vmul.f32 %v3600, %v3487
      %v3602 = vmul.f32 %v3601, %v3600
      %v3603 = vmul.f32 0.5, %v3602
      %v3604 = vsub.f32 1.5, %v3603
      %v3605 = vmul.f32 %v3600, %v3604
      %vm3606 = vweird.f32 %v3487
      %vm3607 = vweird.f32 %v3600
      %vm3608 = vmor %vm3606, %vm3607
      %v3609 = vsel %vm3608, %v3600, %v3605
      %v3610 = vrsqrt.pop %v3488
      %v3611 = vmul.f32 %v3610, %v3488
      %v3612 = vmul.f32 %v3611, %v3610
      %v3613 = vmul.f32 0.5, %v3612
      %v3614 = vsub.f32 1.5, %v3613
      %v3615 = vmul.f32 %v3610, %v3614
      %vm3616 = vweird.f32 %v3488
      %vm3617 = vweird.f32 %v3610
      %vm3618 = vmor %vm3616, %vm3617
      %v3619 = vsel %vm3618, %v3610, %v3615
      %v3620 = vrsqrt.pop %v3489
      %v3621 = vmul.f32 %v3620, %v3489
      %v3622 = vmul.f32 %v3621, %v3620
      %v3623 = vmul.f32 0.5, %v3622
      %v3624 = vsub.f32 1.5, %v3623
      %v3625 = vmul.f32 %v3620, %v3624
      %vm3626 = vweird.f32 %v3489
      %vm3627 = vweird.f32 %v3620
      %vm3628 = vmor %vm3626, %vm3627
      %v3629 = vsel %vm3628, %v3620, %v3625
      %v3630 = vrsqrt.pop %v3490
      %v3631 = vmul.f32 %v3630, %v3490
      %v3632 = vmul.f32 %v3631, %v3630
      %v3633 = vmul.f32 0.5, %v3632
      %v3634 = vsub.f32 1.5, %v3633
      %v3635 = vmul.f32 %v3630, %v3634
      %vm3636 = vweird.f32 %v3490
      %vm3637 = vweird.f32 %v3630
      %vm3638 = vmor %vm3636, %vm3637
      %v3639 = vsel %vm3638, %v3630, %v3635
      %v3640 = vrsqrt.pop %v3491
      %v3641 = vmul.f32 %v3640, %v3491
      %v3642 = vmul.f32 %v3641, %v3640
      %v3643 = vmul.f32 0.5, %v3642
      %v3644 = vsub.f32 1.5, %v3643
      %v3645 = vmul.f32 %v3640, %v3644
      %vm3646 = vweird.f32 %v3491
      %vm3647 = vweird.f32 %v3640
      %vm3648 = vmor %vm3646, %vm3647
      %v3649 = vsel %vm3648, %v3640, %v3645
      %v3650 = vrsqrt.pop %v3492
      %v3651 = vmul.f32 %v3650, %v3492
      %v3652 = vmul.f32 %v3651, %v3650
      %v3653 = vmul.f32 0.5, %v3652
      %v3654 = vsub.f32 1.5, %v3653
      %v3655 = vmul.f32 %v3650, %v3654
      %vm3656 = vweird.f32 %v3492
      %vm3657 = vweird.f32 %v3650
      %vm3658 = vmor %vm3656, %vm3657
      %v3659 = vsel %vm3658, %v3650, %v3655
      %v3660 = vrsqrt.pop %v3493
      %v3661 = vmul.f32 %v3660, %v3493
      %v3662 = vmul.f32 %v3661, %v3660
      %v3663 = vmul.f32 0.5, %v3662
      %v3664 = vsub.f32 1.5, %v3663
      %v3665 = vmul.f32 %v3660, %v3664
      %vm3666 = vweird.f32 %v3493
      %vm3667 = vweird.f32 %v3660
      %vm3668 = vmor %vm3666, %vm3667
      %v3669 = vsel %vm3668, %v3660, %v3665
      %v3670 = vrsqrt.pop %v3494
      %v3671 = vmul.f32 %v3670, %v3494
      %v3672 = vmul.f32 %v3671, %v3670
      %v3673 = vmul.f32 0.5, %v3672
      %v3674 = vsub.f32 1.5, %v3673
      %v3675 = vmul.f32 %v3670, %v3674
      %vm3676 = vweird.f32 %v3494
      %vm3677 = vweird.f32 %v3670
      %vm3678 = vmor %vm3676, %vm3677
      %v3679 = vsel %vm3678, %v3670, %v3675
      %v3680 = vrsqrt.pop %v3495
      %v3681 = vmul.f32 %v3680, %v3495
      %v3682 = vmul.f32 %v3681, %v3680
      %v3683 = vmul.f32 0.5, %v3682
      %v3684 = vsub.f32 1.5, %v3683
      %v3685 = vmul.f32 %v3680, %v3684
      %vm3686 = vweird.f32 %v3495
      %vm3687 = vweird.f32 %v3680
      %vm3688 = vmor %vm3686, %vm3687
      %v3689 = vsel %vm3688, %v3680, %v3685
      %v3690 = vrsqrt.pop %v3496
      %v3691 = vmul.f32 %v3690, %v3496
      %v3692 = vmul.f32 %v3691, %v3690
      %v3693 = vmul.f32 0.5, %v3692
      %v3694 = vsub.f32 1.5, %v3693
      %v3695 = vmul.f32 %v3690, %v3694
      %vm3696 = vweird.f32 %v3496
      %vm3697 = vweird.f32 %v3690
      %vm3698 = vmor %vm3696, %vm3697
      %v3699 = vsel %vm3698, %v3690, %v3695
      %v3700 = vrsqrt.pop %v3497
      %v3701 = vmul.f32 %v3700, %v3497
      %v3702 = vmul.f32 %v3701, %v3700
      %v3703 = vmul.f32 0.5, %v3702
      %v3704 = vsub.f32 1.5, %v3703
      %v3705 = vmul.f32 %v3700, %v3704
      %vm3706 = vweird.f32 %v3497
      %vm3707 = vweird.f32 %v3700
      %vm3708 = vmor %vm3706, %vm3707
      %v3709 = vsel %vm3708, %v3700, %v3705
      %v3710 = vrsqrt.pop %v3498
      %v3711 = vmul.f32 %v3710, %v3498
      %v3712 = vmul.f32 %v3711, %v3710
      %v3713 = vmul.f32 0.5, %v3712
      %v3714 = vsub.f32 1.5, %v3713
      %v3715 = vmul.f32 %v3710, %v3714
      %vm3716 = vweird.f32 %v3498
      %vm3717 = vweird.f32 %v3710
      %vm3718 = vmor %vm3716, %vm3717
      %v3719 = vsel %vm3718, %v3710, %v3715
      %v3720 = vrsqrt.pop %v3499
      %v3721 = vmul.f32 %v3720, %v3499
      %v3722 = vmul.f32 %v3721, %v3720
      %v3723 = vmul.f32 0.5, %v3722
      %v3724 = vsub.f32 1.5, %v3723
      %v3725 = vmul.f32 %v3720, %v3724
      %vm3726 = vweird.f32 %v3499
      %vm3727 = vweird.f32 %v3720
      %vm3728 = vmor %vm3726, %vm3727
      %v3729 = vsel %vm3728, %v3720, %v3725
      %v3730 = vrsqrt.pop %v3500
      %v3731 = vmul.f32 %v3730, %v3500
      %v3732 = vmul.f32 %v3731, %v3730
      %v3733 = vmul.f32 0.5, %v3732
      %v3734 = vsub.f32 1.5, %v3733
      %v3735 = vmul.f32 %v3730, %v3734
      %vm3736 = vweird.f32 %v3500
      %vm3737 = vweird.f32 %v3730
      %vm3738 = vmor %vm3736, %vm3737
      %v3739 = vsel %vm3738, %v3730, %v3735
      %v3740 = vrsqrt.pop %v3501
      %v3741 = vmul.f32 %v3740, %v3501
      %v3742 = vmul.f32 %v3741, %v3740
      %v3743 = vmul.f32 0.5, %v3742
      %v3744 = vsub.f32 1.5, %v3743
      %v3745 = vmul.f32 %v3740, %v3744
      %vm3746 = vweird.f32 %v3501
      %vm3747 = vweird.f32 %v3740
      %vm3748 = vmor %vm3746, %vm3747
      %v3749 = vsel %vm3748, %v3740, %v3745
      %v3750 = vrsqrt.pop %v3502
      %v3751 = vmul.f32 %v3750, %v3502
      %v3752 = vmul.f32 %v3751, %v3750
      %v3753 = vmul.f32 0.5, %v3752
      %v3754 = vsub.f32 1.5, %v3753
      %v3755 = vmul.f32 %v3750, %v3754
      %vm3756 = vweird.f32 %v3502
      %vm3757 = vweird.f32 %v3750
      %vm3758 = vmor %vm3756, %vm3757
      %v3759 = vsel %vm3758, %v3750, %v3755
      %v3760 = vrsqrt.pop %v3503
      %v3761 = vmul.f32 %v3760, %v3503
      %v3762 = vmul.f32 %v3761, %v3760
      %v3763 = vmul.f32 0.5, %v3762
      %v3764 = vsub.f32 1.5, %v3763
      %v3765 = vmul.f32 %v3760, %v3764
      %vm3766 = vweird.f32 %v3503
      %vm3767 = vweird.f32 %v3760
      %vm3768 = vmor %vm3766, %vm3767
      %v3769 = vsel %vm3768, %v3760, %v3765
      %v3770 = vrsqrt.pop %v3504
      %v3771 = vmul.f32 %v3770, %v3504
      %v3772 = vmul.f32 %v3771, %v3770
      %v3773 = vmul.f32 0.5, %v3772
      %v3774 = vsub.f32 1.5, %v3773
      %v3775 = vmul.f32 %v3770, %v3774
      %vm3776 = vweird.f32 %v3504
      %vm3777 = vweird.f32 %v3770
      %vm3778 = vmor %vm3776, %vm3777
      %v3779 = vsel %vm3778, %v3770, %v3775
      %v3780 = vrsqrt.pop %v3505
      %v3781 = vmul.f32 %v3780, %v3505
      %v3782 = vmul.f32 %v3781, %v3780
      %v3783 = vmul.f32 0.5, %v3782
      %v3784 = vsub.f32 1.5, %v3783
      %v3785 = vmul.f32 %v3780, %v3784
      %vm3786 = vweird.f32 %v3505
      %vm3787 = vweird.f32 %v3780
      %vm3788 = vmor %vm3786, %vm3787
      %v3789 = vsel %vm3788, %v3780, %v3785
      %v3790 = vrsqrt.pop %v3506
      %v3791 = vmul.f32 %v3790, %v3506
      %v3792 = vmul.f32 %v3791, %v3790
      %v3793 = vmul.f32 0.5, %v3792
      %v3794 = vsub.f32 1.5, %v3793
      %v3795 = vmul.f32 %v3790, %v3794
      %vm3796 = vweird.f32 %v3506
      %vm3797 = vweird.f32 %v3790
      %vm3798 = vmor %vm3796, %vm3797
      %v3799 = vsel %vm3798, %v3790, %v3795
      %v3800 = vrsqrt.pop %v3507
      %v3801 = vmul.f32 %v3800, %v3507
      %v3802 = vmul.f32 %v3801, %v3800
      %v3803 = vmul.f32 0.5, %v3802
      %v3804 = vsub.f32 1.5, %v3803
      %v3805 = vmul.f32 %v3800, %v3804
      %vm3806 = vweird.f32 %v3507
      %vm3807 = vweird.f32 %v3800
      %vm3808 = vmor %vm3806, %vm3807
      %v3809 = vsel %vm3808, %v3800, %v3805
      %v3810 = vrsqrt.pop %v3508
      %v3811 = vmul.f32 %v3810, %v3508
      %v3812 = vmul.f32 %v3811, %v3810
      %v3813 = vmul.f32 0.5, %v3812
      %v3814 = vsub.f32 1.5, %v3813
      %v3815 = vmul.f32 %v3810, %v3814
      %vm3816 = vweird.f32 %v3508
      %vm3817 = vweird.f32 %v3810
      %vm3818 = vmor %vm3816, %vm3817
      %v3819 = vsel %vm3818, %v3810, %v3815
      %v3820 = vrsqrt.pop %v3509
      %v3821 = vmul.f32 %v3820, %v3509
      %v3822 = vmul.f32 %v3821, %v3820
      %v3823 = vmul.f32 0.5, %v3822
      %v3824 = vsub.f32 1.5, %v3823
      %v3825 = vmul.f32 %v3820, %v3824
      %vm3826 = vweird.f32 %v3509
      %vm3827 = vweird.f32 %v3820
      %vm3828 = vmor %vm3826, %vm3827
      %v3829 = vsel %vm3828, %v3820, %v3825
      %v3830 = vmul.f32 %v3007, 0.35355338
      %v3831 = vmul.f32 %v3017, 0.35355338
      %v3832 = vmul.f32 %v3027, 0.35355338
      %v3833 = vmul.f32 %v3037, 0.35355338
      %v3834 = vmul.f32 %v3047, 0.35355338
      %v3835 = vmul.f32 %v3057, 0.35355338
      %v3836 = vmul.f32 %v3067, 0.35355338
      %v3837 = vmul.f32 %v3077, 0.35355338
      %v3838 = vmul.f32 %v3087, 0.35355338
      %v3839 = vmul.f32 %v3097, 0.35355338
      %v3840 = vmul.f32 %v3107, 0.35355338
      %v3841 = vmul.f32 %v3117, 0.35355338
      %v3842 = vmul.f32 %v3127, 0.35355338
      %v3843 = vmul.f32 %v3137, 0.35355338
      %v3844 = vmul.f32 %v3147, 0.35355338
      %v3845 = vmul.f32 %v3157, 0.35355338
      %v3846 = vmul.f32 %v3167, 0.35355338
      %v3847 = vmul.f32 %v3177, 0.35355338
      %v3848 = vmul.f32 %v3187, 0.35355338
      %v3849 = vmul.f32 %v3197, 0.35355338
      %v3850 = vmul.f32 %v3207, 0.35355338
      %v3851 = vmul.f32 %v3217, 0.35355338
      %v3852 = vmul.f32 %v3227, 0.35355338
      %v3853 = vmul.f32 %v3237, 0.35355338
      %v3854 = vmul.f32 %v3247, 0.35355338
      %v3855 = vmul.f32 %v3257, 0.35355338
      %v3856 = vmul.f32 %v3267, 0.35355338
      %v3857 = vmul.f32 %v3277, 0.35355338
      %v3858 = vmul.f32 %v3287, 0.35355338
      %v3859 = vmul.f32 %v3297, 0.35355338
      %v3860 = vmul.f32 %v3307, 0.35355338
      %v3861 = vmul.f32 %v3317, 0.35355338
      %v3862 = vmul.f32 %v2605, %v3830
      %v3863 = vmul.f32 %v2606, %v3831
      %v3864 = vmul.f32 %v2607, %v3832
      %v3865 = vmul.f32 %v2608, %v3833
      %v3866 = vmul.f32 %v2609, %v3834
      %v3867 = vmul.f32 %v2610, %v3835
      %v3868 = vmul.f32 %v2611, %v3836
      %v3869 = vmul.f32 %v2612, %v3837
      %v3870 = vmul.f32 %v2613, %v3838
      %v3871 = vmul.f32 %v2614, %v3839
      %v3872 = vmul.f32 %v2615, %v3840
      %v3873 = vmul.f32 %v2616, %v3841
      %v3874 = vmul.f32 %v2617, %v3842
      %v3875 = vmul.f32 %v2618, %v3843
      %v3876 = vmul.f32 %v2619, %v3844
      %v3877 = vmul.f32 %v2620, %v3845
      %v3878 = vmul.f32 %v2621, %v3846
      %v3879 = vmul.f32 %v2622, %v3847
      %v3880 = vmul.f32 %v2623, %v3848
      %v3881 = vmul.f32 %v2624, %v3849
      %v3882 = vmul.f32 %v2625, %v3850
      %v3883 = vmul.f32 %v2626, %v3851
      %v3884 = vmul.f32 %v2627, %v3852
      %v3885 = vmul.f32 %v2628, %v3853
      %v3886 = vmul.f32 %v2629, %v3854
      %v3887 = vmul.f32 %v2630, %v3855
      %v3888 = vmul.f32 %v2631, %v3856
      %v3889 = vmul.f32 %v2632, %v3857
      %v3890 = vmul.f32 %v2633, %v3858
      %v3891 = vmul.f32 %v2634, %v3859
      %v3892 = vmul.f32 %v2635, %v3860
      %v3893 = vmul.f32 %v2636, %v3861
      %v3894 = vmul.f32 %v2765, %v3519
      %v3895 = vmul.f32 %v2766, %v3529
      %v3896 = vmul.f32 %v2767, %v3539
      %v3897 = vmul.f32 %v2768, %v3549
      %v3898 = vmul.f32 %v2769, %v3559
      %v3899 = vmul.f32 %v2770, %v3569
      %v3900 = vmul.f32 %v2771, %v3579
      %v3901 = vmul.f32 %v2772, %v3589
      %v3902 = vmul.f32 %v2773, %v3599
      %v3903 = vmul.f32 %v2774, %v3609
      %v3904 = vmul.f32 %v2775, %v3619
      %v3905 = vmul.f32 %v2776, %v3629
      %v3906 = vmul.f32 %v2777, %v3639
      %v3907 = vmul.f32 %v2778, %v3649
      %v3908 = vmul.f32 %v2779, %v3659
      %v3909 = vmul.f32 %v2780, %v3669
      %v3910 = vmul.f32 %v2781, %v3679
      %v3911 = vmul.f32 %v2782, %v3689
      %v3912 = vmul.f32 %v2783, %v3699
      %v3913 = vmul.f32 %v2784, %v3709
      %v3914 = vmul.f32 %v2785, %v3719
      %v3915 = vmul.f32 %v2786, %v3729
      %v3916 = vmul.f32 %v2787, %v3739
      %v3917 = vmul.f32 %v2788, %v3749
      %v3918 = vmul.f32 %v2789, %v3759
      %v3919 = vmul.f32 %v2790, %v3769
      %v3920 = vmul.f32 %v2791, %v3779
      %v3921 = vmul.f32 %v2792, %v3789
      %v3922 = vmul.f32 %v2793, %v3799
      %v3923 = vmul.f32 %v2794, %v3809
      %v3924 = vmul.f32 %v2795, %v3819
      %v3925 = vmul.f32 %v2796, %v3829
      %v3926 = vld [vmem:[%s395] sm:$0xff]
      %v3927 = vld [vmem:[%s395 + $0x8] sm:$0x3]
      %v3929 = vsel %vm2829, %v3862, 0
      %v3932 = vsel %vm2829, %v3863, 0
      %v3935 = vsel %vm2829, %v3894, 0
      %v3938 = vsel %vm2829, %v3895, 0
      %3940 = vmatpush.xpose.msra.mxu0 0.0
      %3941 = vmatpush.xpose.msra.mxu0 0.0
      %3942 = vmatpush.xpose.msra.mxu0 0.0
      %3943 = vmatpush.xpose.msra.mxu0 0.0
      %3944 = vmatpush.xpose.msra.mxu0 0.0
      %3945 = vmatpush.xpose.msra.mxu0 0.0
      %3946 = vmatpush.xpose.msra.mxu0 0.0
      %3947 = vmatpush.xpose.msra.mxu0 0.0
      %3948 = vmatpush.xpose.msra.mxu0 0.0
      %3949 = vmatpush.xpose.msra.mxu0 0.0
      %3950 = vmatpush.xpose.msra.mxu0 0.0
      %3951 = vmatpush.xpose.msra.mxu0 0.0
      %3952 = vmatpush.xpose.msra.mxu0 0.0
      %3953 = vmatpush.xpose.msra.mxu0 0.0
      %3954 = vmatpush.xpose.msra.mxu0 %v3938
      %3955 = vmatpush.xpose.msra.mxu0 %v3935
      %3956 = vmatmul.f32.gmra.mxu0 %v3929
      %v3957 = vpop.f32.mrf.mxu0
      %v3958 = vadd.f32 %v3926, %v3957
      %3959 = vmatmul.f32.gmra.mxu0 %v3932
      %v3960 = vpop.f32.mrf.mxu0
      %v3961 = vadd.f32 %v3927, %v3960
      %3962 = vdwg.mxu0
      %v3964 = vsel %vm2829, %v3864, 0
      %v3967 = vsel %vm2829, %v3865, 0
      %v3970 = vsel %vm2829, %v3896, 0
      %v3973 = vsel %vm2829, %v3897, 0
      %3975 = vmatpush.xpose.msra.mxu0 0.0
      %3976 = vmatpush.xpose.msra.mxu0 0.0
      %3977 = vmatpush.xpose.msra.mxu0 0.0
      %3978 = vmatpush.xpose.msra.mxu0 0.0
      %3979 = vmatpush.xpose.msra.mxu0 0.0
      %3980 = vmatpush.xpose.msra.mxu0 0.0
      %3981 = vmatpush.xpose.msra.mxu0 0.0
      %3982 = vmatpush.xpose.msra.mxu0 0.0
      %3983 = vmatpush.xpose.msra.mxu0 0.0
      %3984 = vmatpush.xpose.msra.mxu0 0.0
      %3985 = vmatpush.xpose.msra.mxu0 0.0
      %3986 = vmatpush.xpose.msra.mxu0 0.0
      %3987 = vmatpush.xpose.msra.mxu0 0.0
      %3988 = vmatpush.xpose.msra.mxu0 0.0
      %3989 = vmatpush.xpose.msra.mxu0 %v3973
      %3990 = vmatpush.xpose.msra.mxu0 %v3970
      %3991 = vmatmul.f32.gmra.mxu0 %v3964
      %v3992 = vpop.f32.mrf.mxu0
      %v3993 = vadd.f32 %v3926, %v3992
      %3994 = vmatmul.f32.gmra.mxu0 %v3967
      %v3995 = vpop.f32.mrf.mxu0
      %v3996 = vadd.f32 %v3927, %v3995
      %3997 = vdwg.mxu0
      %v3999 = vsel %vm2829, %v3866, 0
      %v4002 = vsel %vm2829, %v3867, 0
      %v4005 = vsel %vm2829, %v3898, 0
      %v4008 = vsel %vm2829, %v3899, 0
      %4010 = vmatpush.xpose.msra.mxu0 0.0
      %4011 = vmatpush.xpose.msra.mxu0 0.0
      %4012 = vmatpush.xpose.msra.mxu0 0.0
      %4013 = vmatpush.xpose.msra.mxu0 0.0
      %4014 = vmatpush.xpose.msra.mxu0 0.0
      %4015 = vmatpush.xpose.msra.mxu0 0.0
      %4016 = vmatpush.xpose.msra.mxu0 0.0
      %4017 = vmatpush.xpose.msra.mxu0 0.0
      %4018 = vmatpush.xpose.msra.mxu0 0.0
      %4019 = vmatpush.xpose.msra.mxu0 0.0
      %4020 = vmatpush.xpose.msra.mxu0 0.0
      %4021 = vmatpush.xpose.msra.mxu0 0.0
      %4022 = vmatpush.xpose.msra.mxu0 0.0
      %4023 = vmatpush.xpose.msra.mxu0 0.0
      %4024 = vmatpush.xpose.msra.mxu0 %v4008
      %4025 = vmatpush.xpose.msra.mxu0 %v4005
      %4026 = vmatmul.f32.gmra.mxu0 %v3999
      %v4027 = vpop.f32.mrf.mxu0
      %v4028 = vadd.f32 %v3926, %v4027
      %4029 = vmatmul.f32.gmra.mxu0 %v4002
      %v4030 = vpop.f32.mrf.mxu0
      %v4031 = vadd.f32 %v3927, %v4030
      %4032 = vdwg.mxu0
      %v4034 = vsel %vm2829, %v3868, 0
      %v4037 = vsel %vm2829, %v3869, 0
      %v4040 = vsel %vm2829, %v3900, 0
      %v4043 = vsel %vm2829, %v3901, 0
      %4045 = vmatpush.xpose.msra.mxu0 0.0
      %4046 = vmatpush.xpose.msra.mxu0 0.0
      %4047 = vmatpush.xpose.msra.mxu0 0.0
      %4048 = vmatpush.xpose.msra.mxu0 0.0
      %4049 = vmatpush.xpose.msra.mxu0 0.0
      %4050 = vmatpush.xpose.msra.mxu0 0.0
      %4051 = vmatpush.xpose.msra.mxu0 0.0
      %4052 = vmatpush.xpose.msra.mxu0 0.0
      %4053 = vmatpush.xpose.msra.mxu0 0.0
      %4054 = vmatpush.xpose.msra.mxu0 0.0
      %4055 = vmatpush.xpose.msra.mxu0 0.0
      %4056 = vmatpush.xpose.msra.mxu0 0.0
      %4057 = vmatpush.xpose.msra.mxu0 0.0
      %4058 = vmatpush.xpose.msra.mxu0 0.0
      %4059 = vmatpush.xpose.msra.mxu0 %v4043
      %4060 = vmatpush.xpose.msra.mxu0 %v4040
      %4061 = vmatmul.f32.gmra.mxu0 %v4034
      %v4062 = vpop.f32.mrf.mxu0
      %v4063 = vadd.f32 %v3926, %v4062
      %4064 = vmatmul.f32.gmra.mxu0 %v4037
      %v4065 = vpop.f32.mrf.mxu0
      %v4066 = vadd.f32 %v3927, %v4065
      %4067 = vdwg.mxu0
      %v4069 = vsel %vm2829, %v3870, 0
      %v4072 = vsel %vm2829, %v3871, 0
      %v4075 = vsel %vm2829, %v3902, 0
      %v4078 = vsel %vm2829, %v3903, 0
      %4080 = vmatpush.xpose.msra.mxu0 0.0
      %4081 = vmatpush.xpose.msra.mxu0 0.0
      %4082 = vmatpush.xpose.msra.mxu0 0.0
      %4083 = vmatpush.xpose.msra.mxu0 0.0
      %4084 = vmatpush.xpose.msra.mxu0 0.0
      %4085 = vmatpush.xpose.msra.mxu0 0.0
      %4086 = vmatpush.xpose.msra.mxu0 0.0
      %4087 = vmatpush.xpose.msra.mxu0 0.0
      %4088 = vmatpush.xpose.msra.mxu0 0.0
      %4089 = vmatpush.xpose.msra.mxu0 0.0
      %4090 = vmatpush.xpose.msra.mxu0 0.0
      %4091 = vmatpush.xpose.msra.mxu0 0.0
      %4092 = vmatpush.xpose.msra.mxu0 0.0
      %4093 = vmatpush.xpose.msra.mxu0 0.0
      %4094 = vmatpush.xpose.msra.mxu0 %v4078
      %4095 = vmatpush.xpose.msra.mxu0 %v4075
      %4096 = vmatmul.f32.gmra.mxu0 %v4069
      %v4097 = vpop.f32.mrf.mxu0
      %v4098 = vadd.f32 %v3926, %v4097
      %4099 = vmatmul.f32.gmra.mxu0 %v4072
      %v4100 = vpop.f32.mrf.mxu0
      %v4101 = vadd.f32 %v3927, %v4100
      %4102 = vdwg.mxu0
      %v4104 = vsel %vm2829, %v3872, 0
      %v4107 = vsel %vm2829, %v3873, 0
      %v4110 = vsel %vm2829, %v3904, 0
      %v4113 = vsel %vm2829, %v3905, 0
      %4115 = vmatpush.xpose.msra.mxu0 0.0
      %4116 = vmatpush.xpose.msra.mxu0 0.0
      %4117 = vmatpush.xpose.msra.mxu0 0.0
      %4118 = vmatpush.xpose.msra.mxu0 0.0
      %4119 = vmatpush.xpose.msra.mxu0 0.0
      %4120 = vmatpush.xpose.msra.mxu0 0.0
      %4121 = vmatpush.xpose.msra.mxu0 0.0
      %4122 = vmatpush.xpose.msra.mxu0 0.0
      %4123 = vmatpush.xpose.msra.mxu0 0.0
      %4124 = vmatpush.xpose.msra.mxu0 0.0
      %4125 = vmatpush.xpose.msra.mxu0 0.0
      %4126 = vmatpush.xpose.msra.mxu0 0.0
      %4127 = vmatpush.xpose.msra.mxu0 0.0
      %4128 = vmatpush.xpose.msra.mxu0 0.0
      %4129 = vmatpush.xpose.msra.mxu0 %v4113
      %4130 = vmatpush.xpose.msra.mxu0 %v4110
      %4131 = vmatmul.f32.gmra.mxu0 %v4104
      %v4132 = vpop.f32.mrf.mxu0
      %v4133 = vadd.f32 %v3926, %v4132
      %4134 = vmatmul.f32.gmra.mxu0 %v4107
      %v4135 = vpop.f32.mrf.mxu0
      %v4136 = vadd.f32 %v3927, %v4135
      %4137 = vdwg.mxu0
      %v4139 = vsel %vm2829, %v3874, 0
      %v4142 = vsel %vm2829, %v3875, 0
      %v4145 = vsel %vm2829, %v3906, 0
      %v4148 = vsel %vm2829, %v3907, 0
      %4150 = vmatpush.xpose.msra.mxu0 0.0
      %4151 = vmatpush.xpose.msra.mxu0 0.0
      %4152 = vmatpush.xpose.msra.mxu0 0.0
      %4153 = vmatpush.xpose.msra.mxu0 0.0
      %4154 = vmatpush.xpose.msra.mxu0 0.0
      %4155 = vmatpush.xpose.msra.mxu0 0.0
      %4156 = vmatpush.xpose.msra.mxu0 0.0
      %4157 = vmatpush.xpose.msra.mxu0 0.0
      %4158 = vmatpush.xpose.msra.mxu0 0.0
      %4159 = vmatpush.xpose.msra.mxu0 0.0
      %4160 = vmatpush.xpose.msra.mxu0 0.0
      %4161 = vmatpush.xpose.msra.mxu0 0.0
      %4162 = vmatpush.xpose.msra.mxu0 0.0
      %4163 = vmatpush.xpose.msra.mxu0 0.0
      %4164 = vmatpush.xpose.msra.mxu0 %v4148
      %4165 = vmatpush.xpose.msra.mxu0 %v4145
      %4166 = vmatmul.f32.gmra.mxu0 %v4139
      %v4167 = vpop.f32.mrf.mxu0
      %v4168 = vadd.f32 %v3926, %v4167
      %4169 = vmatmul.f32.gmra.mxu0 %v4142
      %v4170 = vpop.f32.mrf.mxu0
      %v4171 = vadd.f32 %v3927, %v4170
      %4172 = vdwg.mxu0
      %v4174 = vsel %vm2829, %v3876, 0
      %v4177 = vsel %vm2829, %v3877, 0
      %v4180 = vsel %vm2829, %v3908, 0
      %v4183 = vsel %vm2829, %v3909, 0
      %4185 = vmatpush.xpose.msra.mxu0 0.0
      %4186 = vmatpush.xpose.msra.mxu0 0.0
      %4187 = vmatpush.xpose.msra.mxu0 0.0
      %4188 = vmatpush.xpose.msra.mxu0 0.0
      %4189 = vmatpush.xpose.msra.mxu0 0.0
      %4190 = vmatpush.xpose.msra.mxu0 0.0
      %4191 = vmatpush.xpose.msra.mxu0 0.0
      %4192 = vmatpush.xpose.msra.mxu0 0.0
      %4193 = vmatpush.xpose.msra.mxu0 0.0
      %4194 = vmatpush.xpose.msra.mxu0 0.0
      %4195 = vmatpush.xpose.msra.mxu0 0.0
      %4196 = vmatpush.xpose.msra.mxu0 0.0
      %4197 = vmatpush.xpose.msra.mxu0 0.0
      %4198 = vmatpush.xpose.msra.mxu0 0.0
      %4199 = vmatpush.xpose.msra.mxu0 %v4183
      %4200 = vmatpush.xpose.msra.mxu0 %v4180
      %4201 = vmatmul.f32.gmra.mxu0 %v4174
      %v4202 = vpop.f32.mrf.mxu0
      %v4203 = vadd.f32 %v3926, %v4202
      %4204 = vmatmul.f32.gmra.mxu0 %v4177
      %v4205 = vpop.f32.mrf.mxu0
      %v4206 = vadd.f32 %v3927, %v4205
      %4207 = vdwg.mxu0
      %v4209 = vsel %vm2829, %v3878, 0
      %v4212 = vsel %vm2829, %v3879, 0
      %v4215 = vsel %vm2829, %v3910, 0
      %v4218 = vsel %vm2829, %v3911, 0
      %4220 = vmatpush.xpose.msra.mxu0 0.0
      %4221 = vmatpush.xpose.msra.mxu0 0.0
      %4222 = vmatpush.xpose.msra.mxu0 0.0
      %4223 = vmatpush.xpose.msra.mxu0 0.0
      %4224 = vmatpush.xpose.msra.mxu0 0.0
      %4225 = vmatpush.xpose.msra.mxu0 0.0
      %4226 = vmatpush.xpose.msra.mxu0 0.0
      %4227 = vmatpush.xpose.msra.mxu0 0.0
      %4228 = vmatpush.xpose.msra.mxu0 0.0
      %4229 = vmatpush.xpose.msra.mxu0 0.0
      %4230 = vmatpush.xpose.msra.mxu0 0.0
      %4231 = vmatpush.xpose.msra.mxu0 0.0
      %4232 = vmatpush.xpose.msra.mxu0 0.0
      %4233 = vmatpush.xpose.msra.mxu0 0.0
      %4234 = vmatpush.xpose.msra.mxu0 %v4218
      %4235 = vmatpush.xpose.msra.mxu0 %v4215
      %4236 = vmatmul.f32.gmra.mxu0 %v4209
      %v4237 = vpop.f32.mrf.mxu0
      %v4238 = vadd.f32 %v3926, %v4237
      %4239 = vmatmul.f32.gmra.mxu0 %v4212
      %v4240 = vpop.f32.mrf.mxu0
      %v4241 = vadd.f32 %v3927, %v4240
      %4242 = vdwg.mxu0
      %v4244 = vsel %vm2829, %v3880, 0
      %v4247 = vsel %vm2829, %v3881, 0
      %v4250 = vsel %vm2829, %v3912, 0
      %v4253 = vsel %vm2829, %v3913, 0
      %4255 = vmatpush.xpose.msra.mxu0 0.0
      %4256 = vmatpush.xpose.msra.mxu0 0.0
      %4257 = vmatpush.xpose.msra.mxu0 0.0
      %4258 = vmatpush.xpose.msra.mxu0 0.0
      %4259 = vmatpush.xpose.msra.mxu0 0.0
      %4260 = vmatpush.xpose.msra.mxu0 0.0
      %4261 = vmatpush.xpose.msra.mxu0 0.0
      %4262 = vmatpush.xpose.msra.mxu0 0.0
      %4263 = vmatpush.xpose.msra.mxu0 0.0
      %4264 = vmatpush.xpose.msra.mxu0 0.0
      %4265 = vmatpush.xpose.msra.mxu0 0.0
      %4266 = vmatpush.xpose.msra.mxu0 0.0
      %4267 = vmatpush.xpose.msra.mxu0 0.0
      %4268 = vmatpush.xpose.msra.mxu0 0.0
      %4269 = vmatpush.xpose.msra.mxu0 %v4253
      %4270 = vmatpush.xpose.msra.mxu0 %v4250
      %4271 = vmatmul.f32.gmra.mxu0 %v4244
      %v4272 = vpop.f32.mrf.mxu0
      %v4273 = vadd.f32 %v3926, %v4272
      %4274 = vmatmul.f32.gmra.mxu0 %v4247
      %v4275 = vpop.f32.mrf.mxu0
      %v4276 = vadd.f32 %v3927, %v4275
      %4277 = vdwg.mxu0
      %v4279 = vsel %vm2829, %v3882, 0
      %v4282 = vsel %vm2829, %v3883, 0
      %v4285 = vsel %vm2829, %v3914, 0
      %v4288 = vsel %vm2829, %v3915, 0
      %4290 = vmatpush.xpose.msra.mxu0 0.0
      %4291 = vmatpush.xpose.msra.mxu0 0.0
      %4292 = vmatpush.xpose.msra.mxu0 0.0
      %4293 = vmatpush.xpose.msra.mxu0 0.0
      %4294 = vmatpush.xpose.msra.mxu0 0.0
      %4295 = vmatpush.xpose.msra.mxu0 0.0
      %4296 = vmatpush.xpose.msra.mxu0 0.0
      %4297 = vmatpush.xpose.msra.mxu0 0.0
      %4298 = vmatpush.xpose.msra.mxu0 0.0
      %4299 = vmatpush.xpose.msra.mxu0 0.0
      %4300 = vmatpush.xpose.msra.mxu0 0.0
      %4301 = vmatpush.xpose.msra.mxu0 0.0
      %4302 = vmatpush.xpose.msra.mxu0 0.0
      %4303 = vmatpush.xpose.msra.mxu0 0.0
      %4304 = vmatpush.xpose.msra.mxu0 %v4288
      %4305 = vmatpush.xpose.msra.mxu0 %v4285
      %4306 = vmatmul.f32.gmra.mxu0 %v4279
      %v4307 = vpop.f32.mrf.mxu0
      %v4308 = vadd.f32 %v3926, %v4307
      %4309 = vmatmul.f32.gmra.mxu0 %v4282
      %v4310 = vpop.f32.mrf.mxu0
      %v4311 = vadd.f32 %v3927, %v4310
      %4312 = vdwg.mxu0
      %v4314 = vsel %vm2829, %v3884, 0
      %v4317 = vsel %vm2829, %v3885, 0
      %v4320 = vsel %vm2829, %v3916, 0
      %v4323 = vsel %vm2829, %v3917, 0
      %4325 = vmatpush.xpose.msra.mxu0 0.0
      %4326 = vmatpush.xpose.msra.mxu0 0.0
      %4327 = vmatpush.xpose.msra.mxu0 0.0
      %4328 = vmatpush.xpose.msra.mxu0 0.0
      %4329 = vmatpush.xpose.msra.mxu0 0.0
      %4330 = vmatpush.xpose.msra.mxu0 0.0
      %4331 = vmatpush.xpose.msra.mxu0 0.0
      %4332 = vmatpush.xpose.msra.mxu0 0.0
      %4333 = vmatpush.xpose.msra.mxu0 0.0
      %4334 = vmatpush.xpose.msra.mxu0 0.0
      %4335 = vmatpush.xpose.msra.mxu0 0.0
      %4336 = vmatpush.xpose.msra.mxu0 0.0
      %4337 = vmatpush.xpose.msra.mxu0 0.0
      %4338 = vmatpush.xpose.msra.mxu0 0.0
      %4339 = vmatpush.xpose.msra.mxu0 %v4323
      %4340 = vmatpush.xpose.msra.mxu0 %v4320
      %4341 = vmatmul.f32.gmra.mxu0 %v4314
      %v4342 = vpop.f32.mrf.mxu0
      %v4343 = vadd.f32 %v3926, %v4342
      %4344 = vmatmul.f32.gmra.mxu0 %v4317
      %v4345 = vpop.f32.mrf.mxu0
      %v4346 = vadd.f32 %v3927, %v4345
      %4347 = vdwg.mxu0
      %v4349 = vsel %vm2829, %v3886, 0
      %v4352 = vsel %vm2829, %v3887, 0
      %v4355 = vsel %vm2829, %v3918, 0
      %v4358 = vsel %vm2829, %v3919, 0
      %4360 = vmatpush.xpose.msra.mxu0 0.0
      %4361 = vmatpush.xpose.msra.mxu0 0.0
      %4362 = vmatpush.xpose.msra.mxu0 0.0
      %4363 = vmatpush.xpose.msra.mxu0 0.0
      %4364 = vmatpush.xpose.msra.mxu0 0.0
      %4365 = vmatpush.xpose.msra.mxu0 0.0
      %4366 = vmatpush.xpose.msra.mxu0 0.0
      %4367 = vmatpush.xpose.msra.mxu0 0.0
      %4368 = vmatpush.xpose.msra.mxu0 0.0
      %4369 = vmatpush.xpose.msra.mxu0 0.0
      %4370 = vmatpush.xpose.msra.mxu0 0.0
      %4371 = vmatpush.xpose.msra.mxu0 0.0
      %4372 = vmatpush.xpose.msra.mxu0 0.0
      %4373 = vmatpush.xpose.msra.mxu0 0.0
      %4374 = vmatpush.xpose.msra.mxu0 %v4358
      %4375 = vmatpush.xpose.msra.mxu0 %v4355
      %4376 = vmatmul.f32.gmra.mxu0 %v4349
      %v4377 = vpop.f32.mrf.mxu0
      %v4378 = vadd.f32 %v3926, %v4377
      %4379 = vmatmul.f32.gmra.mxu0 %v4352
      %v4380 = vpop.f32.mrf.mxu0
      %v4381 = vadd.f32 %v3927, %v4380
      %4382 = vdwg.mxu0
      %v4384 = vsel %vm2829, %v3888, 0
      %v4387 = vsel %vm2829, %v3889, 0
      %v4390 = vsel %vm2829, %v3920, 0
      %v4393 = vsel %vm2829, %v3921, 0
      %4395 = vmatpush.xpose.msra.mxu0 0.0
      %4396 = vmatpush.xpose.msra.mxu0 0.0
      %4397 = vmatpush.xpose.msra.mxu0 0.0
      %4398 = vmatpush.xpose.msra.mxu0 0.0
      %4399 = vmatpush.xpose.msra.mxu0 0.0
      %4400 = vmatpush.xpose.msra.mxu0 0.0
      %4401 = vmatpush.xpose.msra.mxu0 0.0
      %4402 = vmatpush.xpose.msra.mxu0 0.0
      %4403 = vmatpush.xpose.msra.mxu0 0.0
      %4404 = vmatpush.xpose.msra.mxu0 0.0
      %4405 = vmatpush.xpose.msra.mxu0 0.0
      %4406 = vmatpush.xpose.msra.mxu0 0.0
      %4407 = vmatpush.xpose.msra.mxu0 0.0
      %4408 = vmatpush.xpose.msra.mxu0 0.0
      %4409 = vmatpush.xpose.msra.mxu0 %v4393
      %4410 = vmatpush.xpose.msra.mxu0 %v4390
      %4411 = vmatmul.f32.gmra.mxu0 %v4384
      %v4412 = vpop.f32.mrf.mxu0
      %v4413 = vadd.f32 %v3926, %v4412
      %4414 = vmatmul.f32.gmra.mxu0 %v4387
      %v4415 = vpop.f32.mrf.mxu0
      %v4416 = vadd.f32 %v3927, %v4415
      %4417 = vdwg.mxu0
      %v4419 = vsel %vm2829, %v3890, 0
      %v4422 = vsel %vm2829, %v3891, 0
      %v4425 = vsel %vm2829, %v3922, 0
      %v4428 = vsel %vm2829, %v3923, 0
      %4430 = vmatpush.xpose.msra.mxu0 0.0
      %4431 = vmatpush.xpose.msra.mxu0 0.0
      %4432 = vmatpush.xpose.msra.mxu0 0.0
      %4433 = vmatpush.xpose.msra.mxu0 0.0
      %4434 = vmatpush.xpose.msra.mxu0 0.0
      %4435 = vmatpush.xpose.msra.mxu0 0.0
      %4436 = vmatpush.xpose.msra.mxu0 0.0
      %4437 = vmatpush.xpose.msra.mxu0 0.0
      %4438 = vmatpush.xpose.msra.mxu0 0.0
      %4439 = vmatpush.xpose.msra.mxu0 0.0
      %4440 = vmatpush.xpose.msra.mxu0 0.0
      %4441 = vmatpush.xpose.msra.mxu0 0.0
      %4442 = vmatpush.xpose.msra.mxu0 0.0
      %4443 = vmatpush.xpose.msra.mxu0 0.0
      %4444 = vmatpush.xpose.msra.mxu0 %v4428
      %4445 = vmatpush.xpose.msra.mxu0 %v4425
      %4446 = vmatmul.f32.gmra.mxu0 %v4419
      %v4447 = vpop.f32.mrf.mxu0
      %v4448 = vadd.f32 %v3926, %v4447
      %4449 = vmatmul.f32.gmra.mxu0 %v4422
      %v4450 = vpop.f32.mrf.mxu0
      %v4451 = vadd.f32 %v3927, %v4450
      %4452 = vdwg.mxu0
      %v4454 = vsel %vm2829, %v3892, 0
      %v4457 = vsel %vm2829, %v3893, 0
      %v4460 = vsel %vm2829, %v3924, 0
      %v4463 = vsel %vm2829, %v3925, 0
      %4465 = vmatpush.xpose.msra.mxu0 0.0
      %4466 = vmatpush.xpose.msra.mxu0 0.0
      %4467 = vmatpush.xpose.msra.mxu0 0.0
      %4468 = vmatpush.xpose.msra.mxu0 0.0
      %4469 = vmatpush.xpose.msra.mxu0 0.0
      %4470 = vmatpush.xpose.msra.mxu0 0.0
      %4471 = vmatpush.xpose.msra.mxu0 0.0
      %4472 = vmatpush.xpose.msra.mxu0 0.0
      %4473 = vmatpush.xpose.msra.mxu0 0.0
      %4474 = vmatpush.xpose.msra.mxu0 0.0
      %4475 = vmatpush.xpose.msra.mxu0 0.0
      %4476 = vmatpush.xpose.msra.mxu0 0.0
      %4477 = vmatpush.xpose.msra.mxu0 0.0
      %4478 = vmatpush.xpose.msra.mxu0 0.0
      %4479 = vmatpush.xpose.msra.mxu0 %v4463
      %4480 = vmatpush.xpose.msra.mxu0 %v4460
      %4481 = vmatmul.f32.gmra.mxu0 %v4454
      %v4482 = vpop.f32.mrf.mxu0
      %v4483 = vadd.f32 %v3926, %v4482
      %4484 = vmatmul.f32.gmra.mxu0 %v4457
      %v4485 = vpop.f32.mrf.mxu0
      %v4486 = vadd.f32 %v3927, %v4485
      %4487 = vdwg.mxu0
      %vm4488 = vcmask 80896
      %v4489 = vsel %vm4488, %v3958, -inf
      %4490 = vmax.xlane.f32.xlu0 %v4489
      %v4491 = vpop.xlane.xlu0 %4490
      %vm4492 = vcmask 74752
      %v4493 = vsel %vm4492, %v3961, -inf
      %4494 = vmax.xlane.f32.xlu0 %v4493
      %v4495 = vpop.xlane.xlu0 %4494
      %v4496 = vsel %vm4488, %v3993, -inf
      %4497 = vmax.xlane.f32.xlu0 %v4496
      %v4498 = vpop.xlane.xlu0 %4497
      %v4499 = vsel %vm4492, %v3996, -inf
      %4500 = vmax.xlane.f32.xlu0 %v4499
      %v4501 = vpop.xlane.xlu0 %4500
      %v4502 = vsel %vm4488, %v4028, -inf
      %4503 = vmax.xlane.f32.xlu0 %v4502
      %v4504 = vpop.xlane.xlu0 %4503
      %v4505 = vsel %vm4492, %v4031, -inf
      %4506 = vmax.xlane.f32.xlu0 %v4505
      %v4507 = vpop.xlane.xlu0 %4506
      %v4508 = vsel %vm4488, %v4063, -inf
      %4509 = vmax.xlane.f32.xlu0 %v4508
      %v4510 = vpop.xlane.xlu0 %4509
      %v4511 = vsel %vm4492, %v4066, -inf
      %4512 = vmax.xlane.f32.xlu0 %v4511
      %v4513 = vpop.xlane.xlu0 %4512
      %v4514 = vsel %vm4488, %v4098, -inf
      %4515 = vmax.xlane.f32.xlu0 %v4514
      %v4516 = vpop.xlane.xlu0 %4515
      %v4517 = vsel %vm4492, %v4101, -inf
      %4518 = vmax.xlane.f32.xlu0 %v4517
      %v4519 = vpop.xlane.xlu0 %4518
      %v4520 = vsel %vm4488, %v4133, -inf
      %4521 = vmax.xlane.f32.xlu0 %v4520
      %v4522 = vpop.xlane.xlu0 %4521
      %v4523 = vsel %vm4492, %v4136, -inf
      %4524 = vmax.xlane.f32.xlu0 %v4523
      %v4525 = vpop.xlane.xlu0 %4524
      %v4526 = vsel %vm4488, %v4168, -inf
      %4527 = vmax.xlane.f32.xlu0 %v4526
      %v4528 = vpop.xlane.xlu0 %4527
      %v4529 = vsel %vm4492, %v4171, -inf
      %4530 = vmax.xlane.f32.xlu0 %v4529
      %v4531 = vpop.xlane.xlu0 %4530
      %v4532 = vsel %vm4488, %v4203, -inf
      %4533 = vmax.xlane.f32.xlu0 %v4532
      %v4534 = vpop.xlane.xlu0 %4533
      %v4535 = vsel %vm4492, %v4206, -inf
      %4536 = vmax.xlane.f32.xlu0 %v4535
      %v4537 = vpop.xlane.xlu0 %4536
      %v4538 = vsel %vm4488, %v4238, -inf
      %4539 = vmax.xlane.f32.xlu0 %v4538
      %v4540 = vpop.xlane.xlu0 %4539
      %v4541 = vsel %vm4492, %v4241, -inf
      %4542 = vmax.xlane.f32.xlu0 %v4541
      %v4543 = vpop.xlane.xlu0 %4542
      %v4544 = vsel %vm4488, %v4273, -inf
      %4545 = vmax.xlane.f32.xlu0 %v4544
      %v4546 = vpop.xlane.xlu0 %4545
      %v4547 = vsel %vm4492, %v4276, -inf
      %4548 = vmax.xlane.f32.xlu0 %v4547
      %v4549 = vpop.xlane.xlu0 %4548
      %v4550 = vsel %vm4488, %v4308, -inf
      %4551 = vmax.xlane.f32.xlu0 %v4550
      %v4552 = vpop.xlane.xlu0 %4551
      %v4553 = vsel %vm4492, %v4311, -inf
      %4554 = vmax.xlane.f32.xlu0 %v4553
      %v4555 = vpop.xlane.xlu0 %4554
      %v4556 = vsel %vm4488, %v4343, -inf
      %4557 = vmax.xlane.f32.xlu0 %v4556
      %v4558 = vpop.xlane.xlu0 %4557
      %v4559 = vsel %vm4492, %v4346, -inf
      %4560 = vmax.xlane.f32.xlu0 %v4559
      %v4561 = vpop.xlane.xlu0 %4560
      %v4562 = vsel %vm4488, %v4378, -inf
      %4563 = vmax.xlane.f32.xlu0 %v4562
      %v4564 = vpop.xlane.xlu0 %4563
      %v4565 = vsel %vm4492, %v4381, -inf
      %4566 = vmax.xlane.f32.xlu0 %v4565
      %v4567 = vpop.xlane.xlu0 %4566
      %v4568 = vsel %vm4488, %v4413, -inf
      %4569 = vmax.xlane.f32.xlu0 %v4568
      %v4570 = vpop.xlane.xlu0 %4569
      %v4571 = vsel %vm4492, %v4416, -inf
      %4572 = vmax.xlane.f32.xlu0 %v4571
      %v4573 = vpop.xlane.xlu0 %4572
      %v4574 = vsel %vm4488, %v4448, -inf
      %4575 = vmax.xlane.f32.xlu0 %v4574
      %v4576 = vpop.xlane.xlu0 %4575
      %v4577 = vsel %vm4492, %v4451, -inf
      %4578 = vmax.xlane.f32.xlu0 %v4577
      %v4579 = vpop.xlane.xlu0 %4578
      %v4580 = vsel %vm4488, %v4483, -inf
      %4581 = vmax.xlane.f32.xlu0 %v4580
      %v4582 = vpop.xlane.xlu0 %4581
      %v4583 = vsel %vm4492, %v4486, -inf
      %4584 = vmax.xlane.f32.xlu0 %v4583
      %v4585 = vpop.xlane.xlu0 %4584
      %v4586 = vsub.f32 %v3958, %v4491
      %v4587 = vsub.f32 %v3961, %v4495
      %v4588 = vsub.f32 %v3993, %v4498
      %v4589 = vsub.f32 %v3996, %v4501
      %v4590 = vsub.f32 %v4028, %v4504
      %v4591 = vsub.f32 %v4031, %v4507
      %v4592 = vsub.f32 %v4063, %v4510
      %v4593 = vsub.f32 %v4066, %v4513
      %v4594 = vsub.f32 %v4098, %v4516
      %v4595 = vsub.f32 %v4101, %v4519
      %v4596 = vsub.f32 %v4133, %v4522
      %v4597 = vsub.f32 %v4136, %v4525
      %v4598 = vsub.f32 %v4168, %v4528
      %v4599 = vsub.f32 %v4171, %v4531
      %v4600 = vsub.f32 %v4203, %v4534
      %v4601 = vsub.f32 %v4206, %v4537
      %v4602 = vsub.f32 %v4238, %v4540
      %v4603 = vsub.f32 %v4241, %v4543
      %v4604 = vsub.f32 %v4273, %v4546
      %v4605 = vsub.f32 %v4276, %v4549
      %v4606 = vsub.f32 %v4308, %v4552
      %v4607 = vsub.f32 %v4311, %v4555
      %v4608 = vsub.f32 %v4343, %v4558
      %v4609 = vsub.f32 %v4346, %v4561
      %v4610 = vsub.f32 %v4378, %v4564
      %v4611 = vsub.f32 %v4381, %v4567
      %v4612 = vsub.f32 %v4413, %v4570
      %v4613 = vsub.f32 %v4416, %v4573
      %v4614 = vsub.f32 %v4448, %v4576
      %v4615 = vsub.f32 %v4451, %v4579
      %v4616 = vsub.f32 %v4483, %v4582
      %v4617 = vsub.f32 %v4486, %v4585
      %v4618 = vmul.f32 %v4586, 1.442695
      %v4619 = vpow.pop %v4618
      %v4620 = vmul.f32 %v4587, 1.442695
      %v4621 = vpow.pop %v4620
      %v4622 = vmul.f32 %v4588, 1.442695
      %v4623 = vpow.pop %v4622
      %v4624 = vmul.f32 %v4589, 1.442695
      %v4625 = vpow.pop %v4624
      %v4626 = vmul.f32 %v4590, 1.442695
      %v4627 = vpow.pop %v4626
      %v4628 = vmul.f32 %v4591, 1.442695
      %v4629 = vpow.pop %v4628
      %v4630 = vmul.f32 %v4592, 1.442695
      %v4631 = vpow.pop %v4630
      %v4632 = vmul.f32 %v4593, 1.442695
      %v4633 = vpow.pop %v4632
      %v4634 = vmul.f32 %v4594, 1.442695
      %v4635 = vpow.pop %v4634
      %v4636 = vmul.f32 %v4595, 1.442695
      %v4637 = vpow.pop %v4636
      %v4638 = vmul.f32 %v4596, 1.442695
      %v4639 = vpow.pop %v4638
      %v4640 = vmul.f32 %v4597, 1.442695
      %v4641 = vpow.pop %v4640
      %v4642 = vmul.f32 %v4598, 1.442695
      %v4643 = vpow.pop %v4642
      %v4644 = vmul.f32 %v4599, 1.442695
      %v4645 = vpow.pop %v4644
      %v4646 = vmul.f32 %v4600, 1.442695
      %v4647 = vpow.pop %v4646
      %v4648 = vmul.f32 %v4601, 1.442695
      %v4649 = vpow.pop %v4648
      %v4650 = vmul.f32 %v4602, 1.442695
      %v4651 = vpow.pop %v4650
      %v4652 = vmul.f32 %v4603, 1.442695
      %v4653 = vpow.pop %v4652
      %v4654 = vmul.f32 %v4604, 1.442695
      %v4655 = vpow.pop %v4654
      %v4656 = vmul.f32 %v4605, 1.442695
      %v4657 = vpow.pop %v4656
      %v4658 = vmul.f32 %v4606, 1.442695
      %v4659 = vpow.pop %v4658
      %v4660 = vmul.f32 %v4607, 1.442695
      %v4661 = vpow.pop %v4660
      %v4662 = vmul.f32 %v4608, 1.442695
      %v4663 = vpow.pop %v4662
      %v4664 = vmul.f32 %v4609, 1.442695
      %v4665 = vpow.pop %v4664
      %v4666 = vmul.f32 %v4610, 1.442695
      %v4667 = vpow.pop %v4666
      %v4668 = vmul.f32 %v4611, 1.442695
      %v4669 = vpow.pop %v4668
      %v4670 = vmul.f32 %v4612, 1.442695
      %v4671 = vpow.pop %v4670
      %v4672 = vmul.f32 %v4613, 1.442695
      %v4673 = vpow.pop %v4672
      %v4674 = vmul.f32 %v4614, 1.442695
      %v4675 = vpow.pop %v4674
      %v4676 = vmul.f32 %v4615, 1.442695
      %v4677 = vpow.pop %v4676
      %v4678 = vmul.f32 %v4616, 1.442695
      %v4679 = vpow.pop %v4678
      %v4680 = vmul.f32 %v4617, 1.442695
      %v4681 = vpow.pop %v4680
      %v4682 = vsel %vm4488, %v4619, 0.0
      %4683 = vadd.xlane.f32.xlu0 %v4682
      %v4684 = vpop.xlane.xlu0 %4683
      %v4685 = vsel %vm4492, %v4621, 0.0
      %4686 = vadd.xlane.f32.xlu0 %v4685
      %v4687 = vpop.xlane.xlu0 %4686
      %v4688 = vsel %vm4488, %v4623, 0.0
      %4689 = vadd.xlane.f32.xlu0 %v4688
      %v4690 = vpop.xlane.xlu0 %4689
      %v4691 = vsel %vm4492, %v4625, 0.0
      %4692 = vadd.xlane.f32.xlu0 %v4691
      %v4693 = vpop.xlane.xlu0 %4692
      %v4694 = vsel %vm4488, %v4627, 0.0
      %4695 = vadd.xlane.f32.xlu0 %v4694
      %v4696 = vpop.xlane.xlu0 %4695
      %v4697 = vsel %vm4492, %v4629, 0.0
      %4698 = vadd.xlane.f32.xlu0 %v4697
      %v4699 = vpop.xlane.xlu0 %4698
      %v4700 = vsel %vm4488, %v4631, 0.0
      %4701 = vadd.xlane.f32.xlu0 %v4700
      %v4702 = vpop.xlane.xlu0 %4701
      %v4703 = vsel %vm4492, %v4633, 0.0
      %4704 = vadd.xlane.f32.xlu0 %v4703
      %v4705 = vpop.xlane.xlu0 %4704
      %v4706 = vsel %vm4488, %v4635, 0.0
      %4707 = vadd.xlane.f32.xlu0 %v4706
      %v4708 = vpop.xlane.xlu0 %4707
      %v4709 = vsel %vm4492, %v4637, 0.0
      %4710 = vadd.xlane.f32.xlu0 %v4709
      %v4711 = vpop.xlane.xlu0 %4710
      %v4712 = vsel %vm4488, %v4639, 0.0
      %4713 = vadd.xlane.f32.xlu0 %v4712
      %v4714 = vpop.xlane.xlu0 %4713
      %v4715 = vsel %vm4492, %v4641, 0.0
      %4716 = vadd.xlane.f32.xlu0 %v4715
      %v4717 = vpop.xlane.xlu0 %4716
      %v4718 = vsel %vm4488, %v4643, 0.0
      %4719 = vadd.xlane.f32.xlu0 %v4718
      %v4720 = vpop.xlane.xlu0 %4719
      %v4721 = vsel %vm4492, %v4645, 0.0
      %4722 = vadd.xlane.f32.xlu0 %v4721
      %v4723 = vpop.xlane.xlu0 %4722
      %v4724 = vsel %vm4488, %v4647, 0.0
      %4725 = vadd.xlane.f32.xlu0 %v4724
      %v4726 = vpop.xlane.xlu0 %4725
      %v4727 = vsel %vm4492, %v4649, 0.0
      %4728 = vadd.xlane.f32.xlu0 %v4727
      %v4729 = vpop.xlane.xlu0 %4728
      %v4730 = vsel %vm4488, %v4651, 0.0
      %4731 = vadd.xlane.f32.xlu0 %v4730
      %v4732 = vpop.xlane.xlu0 %4731
      %v4733 = vsel %vm4492, %v4653, 0.0
      %4734 = vadd.xlane.f32.xlu0 %v4733
      %v4735 = vpop.xlane.xlu0 %4734
      %v4736 = vsel %vm4488, %v4655, 0.0
      %4737 = vadd.xlane.f32.xlu0 %v4736
      %v4738 = vpop.xlane.xlu0 %4737
      %v4739 = vsel %vm4492, %v4657, 0.0
      %4740 = vadd.xlane.f32.xlu0 %v4739
      %v4741 = vpop.xlane.xlu0 %4740
      %v4742 = vsel %vm4488, %v4659, 0.0
      %4743 = vadd.xlane.f32.xlu0 %v4742
      %v4744 = vpop.xlane.xlu0 %4743
      %v4745 = vsel %vm4492, %v4661, 0.0
      %4746 = vadd.xlane.f32.xlu0 %v4745
      %v4747 = vpop.xlane.xlu0 %4746
      %v4748 = vsel %vm4488, %v4663, 0.0
      %4749 = vadd.xlane.f32.xlu0 %v4748
      %v4750 = vpop.xlane.xlu0 %4749
      %v4751 = vsel %vm4492, %v4665, 0.0
      %4752 = vadd.xlane.f32.xlu0 %v4751
      %v4753 = vpop.xlane.xlu0 %4752
      %v4754 = vsel %vm4488, %v4667, 0.0
      %4755 = vadd.xlane.f32.xlu0 %v4754
      %v4756 = vpop.xlane.xlu0 %4755
      %v4757 = vsel %vm4492, %v4669, 0.0
      %4758 = vadd.xlane.f32.xlu0 %v4757
      %v4759 = vpop.xlane.xlu0 %4758
      %v4760 = vsel %vm4488, %v4671, 0.0
      %4761 = vadd.xlane.f32.xlu0 %v4760
      %v4762 = vpop.xlane.xlu0 %4761
      %v4763 = vsel %vm4492, %v4673, 0.0
      %4764 = vadd.xlane.f32.xlu0 %v4763
      %v4765 = vpop.xlane.xlu0 %4764
      %v4766 = vsel %vm4488, %v4675, 0.0
      %4767 = vadd.xlane.f32.xlu0 %v4766
      %v4768 = vpop.xlane.xlu0 %4767
      %v4769 = vsel %vm4492, %v4677, 0.0
      %4770 = vadd.xlane.f32.xlu0 %v4769
      %v4771 = vpop.xlane.xlu0 %4770
      %v4772 = vsel %vm4488, %v4679, 0.0
      %4773 = vadd.xlane.f32.xlu0 %v4772
      %v4774 = vpop.xlane.xlu0 %4773
      %v4775 = vsel %vm4492, %v4681, 0.0
      %4776 = vadd.xlane.f32.xlu0 %v4775
      %v4777 = vpop.xlane.xlu0 %4776
      %v4778 = vrcp.pop %v4684
      %v4779 = vmul.f32 %v4684, %v4778
      %v4780 = vsub.f32 1.0, %v4779
      %v4781 = vmul.f32 %v4778, %v4780
      %v4782 = vadd.f32 %v4778, %v4781
      %vm4783 = vweird.f32 %v4684
      %vm4784 = vweird.f32 %v4778
      %vm4785 = vmor %vm4783, %vm4784
      %v4786 = vsel %vm4785, %v4778, %v4782
      %v4787 = vand.u32 2147483647, %v4684
      %vm4788 = vcmp.eq.f32.partialorder %v4787, 8.507059e+37
      %v4789 = vand.u32 %v4684, 2147483648
      %v4790 = vor.u32 1.1754944e-38, %v4789
      %v4791 = vsel %vm4788, %v4790, %v4786
      %v4792 = vrcp.pop %v4687
      %v4793 = vmul.f32 %v4687, %v4792
      %v4794 = vsub.f32 1.0, %v4793
      %v4795 = vmul.f32 %v4792, %v4794
      %v4796 = vadd.f32 %v4792, %v4795
      %vm4797 = vweird.f32 %v4687
      %vm4798 = vweird.f32 %v4792
      %vm4799 = vmor %vm4797, %vm4798
      %v4800 = vsel %vm4799, %v4792, %v4796
      %v4801 = vand.u32 2147483647, %v4687
      %vm4802 = vcmp.eq.f32.partialorder %v4801, 8.507059e+37
      %v4803 = vand.u32 %v4687, 2147483648
      %v4804 = vor.u32 1.1754944e-38, %v4803
      %v4805 = vsel %vm4802, %v4804, %v4800
      %v4806 = vrcp.pop %v4690
      %v4807 = vmul.f32 %v4690, %v4806
      %v4808 = vsub.f32 1.0, %v4807
      %v4809 = vmul.f32 %v4806, %v4808
      %v4810 = vadd.f32 %v4806, %v4809
      %vm4811 = vweird.f32 %v4690
      %vm4812 = vweird.f32 %v4806
      %vm4813 = vmor %vm4811, %vm4812
      %v4814 = vsel %vm4813, %v4806, %v4810
      %v4815 = vand.u32 2147483647, %v4690
      %vm4816 = vcmp.eq.f32.partialorder %v4815, 8.507059e+37
      %v4817 = vand.u32 %v4690, 2147483648
      %v4818 = vor.u32 1.1754944e-38, %v4817
      %v4819 = vsel %vm4816, %v4818, %v4814
      %v4820 = vrcp.pop %v4693
      %v4821 = vmul.f32 %v4693, %v4820
      %v4822 = vsub.f32 1.0, %v4821
      %v4823 = vmul.f32 %v4820, %v4822
      %v4824 = vadd.f32 %v4820, %v4823
      %vm4825 = vweird.f32 %v4693
      %vm4826 = vweird.f32 %v4820
      %vm4827 = vmor %vm4825, %vm4826
      %v4828 = vsel %vm4827, %v4820, %v4824
      %v4829 = vand.u32 2147483647, %v4693
      %vm4830 = vcmp.eq.f32.partialorder %v4829, 8.507059e+37
      %v4831 = vand.u32 %v4693, 2147483648
      %v4832 = vor.u32 1.1754944e-38, %v4831
      %v4833 = vsel %vm4830, %v4832, %v4828
      %v4834 = vrcp.pop %v4696
      %v4835 = vmul.f32 %v4696, %v4834
      %v4836 = vsub.f32 1.0, %v4835
      %v4837 = vmul.f32 %v4834, %v4836
      %v4838 = vadd.f32 %v4834, %v4837
      %vm4839 = vweird.f32 %v4696
      %vm4840 = vweird.f32 %v4834
      %vm4841 = vmor %vm4839, %vm4840
      %v4842 = vsel %vm4841, %v4834, %v4838
      %v4843 = vand.u32 2147483647, %v4696
      %vm4844 = vcmp.eq.f32.partialorder %v4843, 8.507059e+37
      %v4845 = vand.u32 %v4696, 2147483648
      %v4846 = vor.u32 1.1754944e-38, %v4845
      %v4847 = vsel %vm4844, %v4846, %v4842
      %v4848 = vrcp.pop %v4699
      %v4849 = vmul.f32 %v4699, %v4848
      %v4850 = vsub.f32 1.0, %v4849
      %v4851 = vmul.f32 %v4848, %v4850
      %v4852 = vadd.f32 %v4848, %v4851
      %vm4853 = vweird.f32 %v4699
      %vm4854 = vweird.f32 %v4848
      %vm4855 = vmor %vm4853, %vm4854
      %v4856 = vsel %vm4855, %v4848, %v4852
      %v4857 = vand.u32 2147483647, %v4699
      %vm4858 = vcmp.eq.f32.partialorder %v4857, 8.507059e+37
      %v4859 = vand.u32 %v4699, 2147483648
      %v4860 = vor.u32 1.1754944e-38, %v4859
      %v4861 = vsel %vm4858, %v4860, %v4856
      %v4862 = vrcp.pop %v4702
      %v4863 = vmul.f32 %v4702, %v4862
      %v4864 = vsub.f32 1.0, %v4863
      %v4865 = vmul.f32 %v4862, %v4864
      %v4866 = vadd.f32 %v4862, %v4865
      %vm4867 = vweird.f32 %v4702
      %vm4868 = vweird.f32 %v4862
      %vm4869 = vmor %vm4867, %vm4868
      %v4870 = vsel %vm4869, %v4862, %v4866
      %v4871 = vand.u32 2147483647, %v4702
      %vm4872 = vcmp.eq.f32.partialorder %v4871, 8.507059e+37
      %v4873 = vand.u32 %v4702, 2147483648
      %v4874 = vor.u32 1.1754944e-38, %v4873
      %v4875 = vsel %vm4872, %v4874, %v4870
      %v4876 = vrcp.pop %v4705
      %v4877 = vmul.f32 %v4705, %v4876
      %v4878 = vsub.f32 1.0, %v4877
      %v4879 = vmul.f32 %v4876, %v4878
      %v4880 = vadd.f32 %v4876, %v4879
      %vm4881 = vweird.f32 %v4705
      %vm4882 = vweird.f32 %v4876
      %vm4883 = vmor %vm4881, %vm4882
      %v4884 = vsel %vm4883, %v4876, %v4880
      %v4885 = vand.u32 2147483647, %v4705
      %vm4886 = vcmp.eq.f32.partialorder %v4885, 8.507059e+37
      %v4887 = vand.u32 %v4705, 2147483648
      %v4888 = vor.u32 1.1754944e-38, %v4887
      %v4889 = vsel %vm4886, %v4888, %v4884
      %v4890 = vrcp.pop %v4708
      %v4891 = vmul.f32 %v4708, %v4890
      %v4892 = vsub.f32 1.0, %v4891
      %v4893 = vmul.f32 %v4890, %v4892
      %v4894 = vadd.f32 %v4890, %v4893
      %vm4895 = vweird.f32 %v4708
      %vm4896 = vweird.f32 %v4890
      %vm4897 = vmor %vm4895, %vm4896
      %v4898 = vsel %vm4897, %v4890, %v4894
      %v4899 = vand.u32 2147483647, %v4708
      %vm4900 = vcmp.eq.f32.partialorder %v4899, 8.507059e+37
      %v4901 = vand.u32 %v4708, 2147483648
      %v4902 = vor.u32 1.1754944e-38, %v4901
      %v4903 = vsel %vm4900, %v4902, %v4898
      %v4904 = vrcp.pop %v4711
      %v4905 = vmul.f32 %v4711, %v4904
      %v4906 = vsub.f32 1.0, %v4905
      %v4907 = vmul.f32 %v4904, %v4906
      %v4908 = vadd.f32 %v4904, %v4907
      %vm4909 = vweird.f32 %v4711
      %vm4910 = vweird.f32 %v4904
      %vm4911 = vmor %vm4909, %vm4910
      %v4912 = vsel %vm4911, %v4904, %v4908
      %v4913 = vand.u32 2147483647, %v4711
      %vm4914 = vcmp.eq.f32.partialorder %v4913, 8.507059e+37
      %v4915 = vand.u32 %v4711, 2147483648
      %v4916 = vor.u32 1.1754944e-38, %v4915
      %v4917 = vsel %vm4914, %v4916, %v4912
      %v4918 = vrcp.pop %v4714
      %v4919 = vmul.f32 %v4714, %v4918
      %v4920 = vsub.f32 1.0, %v4919
      %v4921 = vmul.f32 %v4918, %v4920
      %v4922 = vadd.f32 %v4918, %v4921
      %vm4923 = vweird.f32 %v4714
      %vm4924 = vweird.f32 %v4918
      %vm4925 = vmor %vm4923, %vm4924
      %v4926 = vsel %vm4925, %v4918, %v4922
      %v4927 = vand.u32 2147483647, %v4714
      %vm4928 = vcmp.eq.f32.partialorder %v4927, 8.507059e+37
      %v4929 = vand.u32 %v4714, 2147483648
      %v4930 = vor.u32 1.1754944e-38, %v4929
      %v4931 = vsel %vm4928, %v4930, %v4926
      %v4932 = vrcp.pop %v4717
      %v4933 = vmul.f32 %v4717, %v4932
      %v4934 = vsub.f32 1.0, %v4933
      %v4935 = vmul.f32 %v4932, %v4934
      %v4936 = vadd.f32 %v4932, %v4935
      %vm4937 = vweird.f32 %v4717
      %vm4938 = vweird.f32 %v4932
      %vm4939 = vmor %vm4937, %vm4938
      %v4940 = vsel %vm4939, %v4932, %v4936
      %v4941 = vand.u32 2147483647, %v4717
      %vm4942 = vcmp.eq.f32.partialorder %v4941, 8.507059e+37
      %v4943 = vand.u32 %v4717, 2147483648
      %v4944 = vor.u32 1.1754944e-38, %v4943
      %v4945 = vsel %vm4942, %v4944, %v4940
      %v4946 = vrcp.pop %v4720
      %v4947 = vmul.f32 %v4720, %v4946
      %v4948 = vsub.f32 1.0, %v4947
      %v4949 = vmul.f32 %v4946, %v4948
      %v4950 = vadd.f32 %v4946, %v4949
      %vm4951 = vweird.f32 %v4720
      %vm4952 = vweird.f32 %v4946
      %vm4953 = vmor %vm4951, %vm4952
      %v4954 = vsel %vm4953, %v4946, %v4950
      %v4955 = vand.u32 2147483647, %v4720
      %vm4956 = vcmp.eq.f32.partialorder %v4955, 8.507059e+37
      %v4957 = vand.u32 %v4720, 2147483648
      %v4958 = vor.u32 1.1754944e-38, %v4957
      %v4959 = vsel %vm4956, %v4958, %v4954
      %v4960 = vrcp.pop %v4723
      %v4961 = vmul.f32 %v4723, %v4960
      %v4962 = vsub.f32 1.0, %v4961
      %v4963 = vmul.f32 %v4960, %v4962
      %v4964 = vadd.f32 %v4960, %v4963
      %vm4965 = vweird.f32 %v4723
      %vm4966 = vweird.f32 %v4960
      %vm4967 = vmor %vm4965, %vm4966
      %v4968 = vsel %vm4967, %v4960, %v4964
      %v4969 = vand.u32 2147483647, %v4723
      %vm4970 = vcmp.eq.f32.partialorder %v4969, 8.507059e+37
      %v4971 = vand.u32 %v4723, 2147483648
      %v4972 = vor.u32 1.1754944e-38, %v4971
      %v4973 = vsel %vm4970, %v4972, %v4968
      %v4974 = vrcp.pop %v4726
      %v4975 = vmul.f32 %v4726, %v4974
      %v4976 = vsub.f32 1.0, %v4975
      %v4977 = vmul.f32 %v4974, %v4976
      %v4978 = vadd.f32 %v4974, %v4977
      %vm4979 = vweird.f32 %v4726
      %vm4980 = vweird.f32 %v4974
      %vm4981 = vmor %vm4979, %vm4980
      %v4982 = vsel %vm4981, %v4974, %v4978
      %v4983 = vand.u32 2147483647, %v4726
      %vm4984 = vcmp.eq.f32.partialorder %v4983, 8.507059e+37
      %v4985 = vand.u32 %v4726, 2147483648
      %v4986 = vor.u32 1.1754944e-38, %v4985
      %v4987 = vsel %vm4984, %v4986, %v4982
      %v4988 = vrcp.pop %v4729
      %v4989 = vmul.f32 %v4729, %v4988
      %v4990 = vsub.f32 1.0, %v4989
      %v4991 = vmul.f32 %v4988, %v4990
      %v4992 = vadd.f32 %v4988, %v4991
      %vm4993 = vweird.f32 %v4729
      %vm4994 = vweird.f32 %v4988
      %vm4995 = vmor %vm4993, %vm4994
      %v4996 = vsel %vm4995, %v4988, %v4992
      %v4997 = vand.u32 2147483647, %v4729
      %vm4998 = vcmp.eq.f32.partialorder %v4997, 8.507059e+37
      %v4999 = vand.u32 %v4729, 2147483648
      %v5000 = vor.u32 1.1754944e-38, %v4999
      %v5001 = vsel %vm4998, %v5000, %v4996
      %v5002 = vrcp.pop %v4732
      %v5003 = vmul.f32 %v4732, %v5002
      %v5004 = vsub.f32 1.0, %v5003
      %v5005 = vmul.f32 %v5002, %v5004
      %v5006 = vadd.f32 %v5002, %v5005
      %vm5007 = vweird.f32 %v4732
      %vm5008 = vweird.f32 %v5002
      %vm5009 = vmor %vm5007, %vm5008
      %v5010 = vsel %vm5009, %v5002, %v5006
      %v5011 = vand.u32 2147483647, %v4732
      %vm5012 = vcmp.eq.f32.partialorder %v5011, 8.507059e+37
      %v5013 = vand.u32 %v4732, 2147483648
      %v5014 = vor.u32 1.1754944e-38, %v5013
      %v5015 = vsel %vm5012, %v5014, %v5010
      %v5016 = vrcp.pop %v4735
      %v5017 = vmul.f32 %v4735, %v5016
      %v5018 = vsub.f32 1.0, %v5017
      %v5019 = vmul.f32 %v5016, %v5018
      %v5020 = vadd.f32 %v5016, %v5019
      %vm5021 = vweird.f32 %v4735
      %vm5022 = vweird.f32 %v5016
      %vm5023 = vmor %vm5021, %vm5022
      %v5024 = vsel %vm5023, %v5016, %v5020
      %v5025 = vand.u32 2147483647, %v4735
      %vm5026 = vcmp.eq.f32.partialorder %v5025, 8.507059e+37
      %v5027 = vand.u32 %v4735, 2147483648
      %v5028 = vor.u32 1.1754944e-38, %v5027
      %v5029 = vsel %vm5026, %v5028, %v5024
      %v5030 = vrcp.pop %v4738
      %v5031 = vmul.f32 %v4738, %v5030
      %v5032 = vsub.f32 1.0, %v5031
      %v5033 = vmul.f32 %v5030, %v5032
      %v5034 = vadd.f32 %v5030, %v5033
      %vm5035 = vweird.f32 %v4738
      %vm5036 = vweird.f32 %v5030
      %vm5037 = vmor %vm5035, %vm5036
      %v5038 = vsel %vm5037, %v5030, %v5034
      %v5039 = vand.u32 2147483647, %v4738
      %vm5040 = vcmp.eq.f32.partialorder %v5039, 8.507059e+37
      %v5041 = vand.u32 %v4738, 2147483648
      %v5042 = vor.u32 1.1754944e-38, %v5041
      %v5043 = vsel %vm5040, %v5042, %v5038
      %v5044 = vrcp.pop %v4741
      %v5045 = vmul.f32 %v4741, %v5044
      %v5046 = vsub.f32 1.0, %v5045
      %v5047 = vmul.f32 %v5044, %v5046
      %v5048 = vadd.f32 %v5044, %v5047
      %vm5049 = vweird.f32 %v4741
      %vm5050 = vweird.f32 %v5044
      %vm5051 = vmor %vm5049, %vm5050
      %v5052 = vsel %vm5051, %v5044, %v5048
      %v5053 = vand.u32 2147483647, %v4741
      %vm5054 = vcmp.eq.f32.partialorder %v5053, 8.507059e+37
      %v5055 = vand.u32 %v4741, 2147483648
      %v5056 = vor.u32 1.1754944e-38, %v5055
      %v5057 = vsel %vm5054, %v5056, %v5052
      %v5058 = vrcp.pop %v4744
      %v5059 = vmul.f32 %v4744, %v5058
      %v5060 = vsub.f32 1.0, %v5059
      %v5061 = vmul.f32 %v5058, %v5060
      %v5062 = vadd.f32 %v5058, %v5061
      %vm5063 = vweird.f32 %v4744
      %vm5064 = vweird.f32 %v5058
      %vm5065 = vmor %vm5063, %vm5064
      %v5066 = vsel %vm5065, %v5058, %v5062
      %v5067 = vand.u32 2147483647, %v4744
      %vm5068 = vcmp.eq.f32.partialorder %v5067, 8.507059e+37
      %v5069 = vand.u32 %v4744, 2147483648
      %v5070 = vor.u32 1.1754944e-38, %v5069
      %v5071 = vsel %vm5068, %v5070, %v5066
      %v5072 = vrcp.pop %v4747
      %v5073 = vmul.f32 %v4747, %v5072
      %v5074 = vsub.f32 1.0, %v5073
      %v5075 = vmul.f32 %v5072, %v5074
      %v5076 = vadd.f32 %v5072, %v5075
      %vm5077 = vweird.f32 %v4747
      %vm5078 = vweird.f32 %v5072
      %vm5079 = vmor %vm5077, %vm5078
      %v5080 = vsel %vm5079, %v5072, %v5076
      %v5081 = vand.u32 2147483647, %v4747
      %vm5082 = vcmp.eq.f32.partialorder %v5081, 8.507059e+37
      %v5083 = vand.u32 %v4747, 2147483648
      %v5084 = vor.u32 1.1754944e-38, %v5083
      %v5085 = vsel %vm5082, %v5084, %v5080
      %v5086 = vrcp.pop %v4750
      %v5087 = vmul.f32 %v4750, %v5086
      %v5088 = vsub.f32 1.0, %v5087
      %v5089 = vmul.f32 %v5086, %v5088
      %v5090 = vadd.f32 %v5086, %v5089
      %vm5091 = vweird.f32 %v4750
      %vm5092 = vweird.f32 %v5086
      %vm5093 = vmor %vm5091, %vm5092
      %v5094 = vsel %vm5093, %v5086, %v5090
      %v5095 = vand.u32 2147483647, %v4750
      %vm5096 = vcmp.eq.f32.partialorder %v5095, 8.507059e+37
      %v5097 = vand.u32 %v4750, 2147483648
      %v5098 = vor.u32 1.1754944e-38, %v5097
      %v5099 = vsel %vm5096, %v5098, %v5094
      %v5100 = vrcp.pop %v4753
      %v5101 = vmul.f32 %v4753, %v5100
      %v5102 = vsub.f32 1.0, %v5101
      %v5103 = vmul.f32 %v5100, %v5102
      %v5104 = vadd.f32 %v5100, %v5103
      %vm5105 = vweird.f32 %v4753
      %vm5106 = vweird.f32 %v5100
      %vm5107 = vmor %vm5105, %vm5106
      %v5108 = vsel %vm5107, %v5100, %v5104
      %v5109 = vand.u32 2147483647, %v4753
      %vm5110 = vcmp.eq.f32.partialorder %v5109, 8.507059e+37
      %v5111 = vand.u32 %v4753, 2147483648
      %v5112 = vor.u32 1.1754944e-38, %v5111
      %v5113 = vsel %vm5110, %v5112, %v5108
      %v5114 = vrcp.pop %v4756
      %v5115 = vmul.f32 %v4756, %v5114
      %v5116 = vsub.f32 1.0, %v5115
      %v5117 = vmul.f32 %v5114, %v5116
      %v5118 = vadd.f32 %v5114, %v5117
      %vm5119 = vweird.f32 %v4756
      %vm5120 = vweird.f32 %v5114
      %vm5121 = vmor %vm5119, %vm5120
      %v5122 = vsel %vm5121, %v5114, %v5118
      %v5123 = vand.u32 2147483647, %v4756
      %vm5124 = vcmp.eq.f32.partialorder %v5123, 8.507059e+37
      %v5125 = vand.u32 %v4756, 2147483648
      %v5126 = vor.u32 1.1754944e-38, %v5125
      %v5127 = vsel %vm5124, %v5126, %v5122
      %v5128 = vrcp.pop %v4759
      %v5129 = vmul.f32 %v4759, %v5128
      %v5130 = vsub.f32 1.0, %v5129
      %v5131 = vmul.f32 %v5128, %v5130
      %v5132 = vadd.f32 %v5128, %v5131
      %vm5133 = vweird.f32 %v4759
      %vm5134 = vweird.f32 %v5128
      %vm5135 = vmor %vm5133, %vm5134
      %v5136 = vsel %vm5135, %v5128, %v5132
      %v5137 = vand.u32 2147483647, %v4759
      %vm5138 = vcmp.eq.f32.partialorder %v5137, 8.507059e+37
      %v5139 = vand.u32 %v4759, 2147483648
      %v5140 = vor.u32 1.1754944e-38, %v5139
      %v5141 = vsel %vm5138, %v5140, %v5136
      %v5142 = vrcp.pop %v4762
      %v5143 = vmul.f32 %v4762, %v5142
      %v5144 = vsub.f32 1.0, %v5143
      %v5145 = vmul.f32 %v5142, %v5144
      %v5146 = vadd.f32 %v5142, %v5145
      %vm5147 = vweird.f32 %v4762
      %vm5148 = vweird.f32 %v5142
      %vm5149 = vmor %vm5147, %vm5148
      %v5150 = vsel %vm5149, %v5142, %v5146
      %v5151 = vand.u32 2147483647, %v4762
      %vm5152 = vcmp.eq.f32.partialorder %v5151, 8.507059e+37
      %v5153 = vand.u32 %v4762, 2147483648
      %v5154 = vor.u32 1.1754944e-38, %v5153
      %v5155 = vsel %vm5152, %v5154, %v5150
      %v5156 = vrcp.pop %v4765
      %v5157 = vmul.f32 %v4765, %v5156
      %v5158 = vsub.f32 1.0, %v5157
      %v5159 = vmul.f32 %v5156, %v5158
      %v5160 = vadd.f32 %v5156, %v5159
      %vm5161 = vweird.f32 %v4765
      %vm5162 = vweird.f32 %v5156
      %vm5163 = vmor %vm5161, %vm5162
      %v5164 = vsel %vm5163, %v5156, %v5160
      %v5165 = vand.u32 2147483647, %v4765
      %vm5166 = vcmp.eq.f32.partialorder %v5165, 8.507059e+37
      %v5167 = vand.u32 %v4765, 2147483648
      %v5168 = vor.u32 1.1754944e-38, %v5167
      %v5169 = vsel %vm5166, %v5168, %v5164
      %v5170 = vrcp.pop %v4768
      %v5171 = vmul.f32 %v4768, %v5170
      %v5172 = vsub.f32 1.0, %v5171
      %v5173 = vmul.f32 %v5170, %v5172
      %v5174 = vadd.f32 %v5170, %v5173
      %vm5175 = vweird.f32 %v4768
      %vm5176 = vweird.f32 %v5170
      %vm5177 = vmor %vm5175, %vm5176
      %v5178 = vsel %vm5177, %v5170, %v5174
      %v5179 = vand.u32 2147483647, %v4768
      %vm5180 = vcmp.eq.f32.partialorder %v5179, 8.507059e+37
      %v5181 = vand.u32 %v4768, 2147483648
      %v5182 = vor.u32 1.1754944e-38, %v5181
      %v5183 = vsel %vm5180, %v5182, %v5178
      %v5184 = vrcp.pop %v4771
      %v5185 = vmul.f32 %v4771, %v5184
      %v5186 = vsub.f32 1.0, %v5185
      %v5187 = vmul.f32 %v5184, %v5186
      %v5188 = vadd.f32 %v5184, %v5187
      %vm5189 = vweird.f32 %v4771
      %vm5190 = vweird.f32 %v5184
      %vm5191 = vmor %vm5189, %vm5190
      %v5192 = vsel %vm5191, %v5184, %v5188
      %v5193 = vand.u32 2147483647, %v4771
      %vm5194 = vcmp.eq.f32.partialorder %v5193, 8.507059e+37
      %v5195 = vand.u32 %v4771, 2147483648
      %v5196 = vor.u32 1.1754944e-38, %v5195
      %v5197 = vsel %vm5194, %v5196, %v5192
      %v5198 = vrcp.pop %v4774
      %v5199 = vmul.f32 %v4774, %v5198
      %v5200 = vsub.f32 1.0, %v5199
      %v5201 = vmul.f32 %v5198, %v5200
      %v5202 = vadd.f32 %v5198, %v5201
      %vm5203 = vweird.f32 %v4774
      %vm5204 = vweird.f32 %v5198
      %vm5205 = vmor %vm5203, %vm5204
      %v5206 = vsel %vm5205, %v5198, %v5202
      %v5207 = vand.u32 2147483647, %v4774
      %vm5208 = vcmp.eq.f32.partialorder %v5207, 8.507059e+37
      %v5209 = vand.u32 %v4774, 2147483648
      %v5210 = vor.u32 1.1754944e-38, %v5209
      %v5211 = vsel %vm5208, %v5210, %v5206
      %v5212 = vrcp.pop %v4777
      %v5213 = vmul.f32 %v4777, %v5212
      %v5214 = vsub.f32 1.0, %v5213
      %v5215 = vmul.f32 %v5212, %v5214
      %v5216 = vadd.f32 %v5212, %v5215
      %vm5217 = vweird.f32 %v4777
      %vm5218 = vweird.f32 %v5212
      %vm5219 = vmor %vm5217, %vm5218
      %v5220 = vsel %vm5219, %v5212, %v5216
      %v5221 = vand.u32 2147483647, %v4777
      %vm5222 = vcmp.eq.f32.partialorder %v5221, 8.507059e+37
      %v5223 = vand.u32 %v4777, 2147483648
      %v5224 = vor.u32 1.1754944e-38, %v5223
      %v5225 = vsel %vm5222, %v5224, %v5220
      %v5226 = vmul.f32 %v4619, %v4791
      %v5227 = vmul.f32 %v4621, %v4805
      %v5228 = vmul.f32 %v4623, %v4819
      %v5229 = vmul.f32 %v4625, %v4833
      %v5230 = vmul.f32 %v4627, %v4847
      %v5231 = vmul.f32 %v4629, %v4861
      %v5232 = vmul.f32 %v4631, %v4875
      %v5233 = vmul.f32 %v4633, %v4889
      %v5234 = vmul.f32 %v4635, %v4903
      %v5235 = vmul.f32 %v4637, %v4917
      %v5236 = vmul.f32 %v4639, %v4931
      %v5237 = vmul.f32 %v4641, %v4945
      %v5238 = vmul.f32 %v4643, %v4959
      %v5239 = vmul.f32 %v4645, %v4973
      %v5240 = vmul.f32 %v4647, %v4987
      %v5241 = vmul.f32 %v4649, %v5001
      %v5242 = vmul.f32 %v4651, %v5015
      %v5243 = vmul.f32 %v4653, %v5029
      %v5244 = vmul.f32 %v4655, %v5043
      %v5245 = vmul.f32 %v4657, %v5057
      %v5246 = vmul.f32 %v4659, %v5071
      %v5247 = vmul.f32 %v4661, %v5085
      %v5248 = vmul.f32 %v4663, %v5099
      %v5249 = vmul.f32 %v4665, %v5113
      %v5250 = vmul.f32 %v4667, %v5127
      %v5251 = vmul.f32 %v4669, %v5141
      %v5252 = vmul.f32 %v4671, %v5155
      %v5253 = vmul.f32 %v4673, %v5169
      %v5254 = vmul.f32 %v4675, %v5183
      %v5255 = vmul.f32 %v4677, %v5197
      %v5256 = vmul.f32 %v4679, %v5211
      %v5257 = vmul.f32 %v4681, %v5225
      %5258 = vst.msk [vmem:[%s405] sm:$0xff] %vm4488, %v5226
      %5259 = vst.msk [vmem:[%s405 + $0x8] sm:$0x3] %vm4492, %v5227
      %5260 = vst.msk [vmem:[%s405 + $0x10] sm:$0xff] %vm4488, %v5228
      %5261 = vst.msk [vmem:[%s405 + $0x18] sm:$0x3] %vm4492, %v5229
      %5262 = vst.msk [vmem:[%s405 + $0x20] sm:$0xff] %vm4488, %v5230
      %5263 = vst.msk [vmem:[%s405 + $0x28] sm:$0x3] %vm4492, %v5231
      %5264 = vst.msk [vmem:[%s405 + $0x30] sm:$0xff] %vm4488, %v5232
      %5265 = vst.msk [vmem:[%s405 + $0x38] sm:$0x3] %vm4492, %v5233
      %5266 = vst.msk [vmem:[%s405 + $0x40] sm:$0xff] %vm4488, %v5234
      %5267 = vst.msk [vmem:[%s405 + $0x48] sm:$0x3] %vm4492, %v5235
      %5268 = vst.msk [vmem:[%s405 + $0x50] sm:$0xff] %vm4488, %v5236
      %5269 = vst.msk [vmem:[%s405 + $0x58] sm:$0x3] %vm4492, %v5237
      %5270 = vst.msk [vmem:[%s405 + $0x60] sm:$0xff] %vm4488, %v5238
      %5271 = vst.msk [vmem:[%s405 + $0x68] sm:$0x3] %vm4492, %v5239
      %5272 = vst.msk [vmem:[%s405 + $0x70] sm:$0xff] %vm4488, %v5240
      %5273 = vst.msk [vmem:[%s405 + $0x78] sm:$0x3] %vm4492, %v5241
      %5274 = vst.msk [vmem:[%s405 + $0x80] sm:$0xff] %vm4488, %v5242
      %5275 = vst.msk [vmem:[%s405 + $0x88] sm:$0x3] %vm4492, %v5243
      %5276 = vst.msk [vmem:[%s405 + $0x90] sm:$0xff] %vm4488, %v5244
      %5277 = vst.msk [vmem:[%s405 + $0x98] sm:$0x3] %vm4492, %v5245
      %5278 = vst.msk [vmem:[%s405 + $0xa0] sm:$0xff] %vm4488, %v5246
      %5279 = vst.msk [vmem:[%s405 + $0xa8] sm:$0x3] %vm4492, %v5247
      %5280 = vst.msk [vmem:[%s405 + $0xb0] sm:$0xff] %vm4488, %v5248
      %5281 = vst.msk [vmem:[%s405 + $0xb8] sm:$0x3] %vm4492, %v5249
      %5282 = vst.msk [vmem:[%s405 + $0xc0] sm:$0xff] %vm4488, %v5250
      %5283 = vst.msk [vmem:[%s405 + $0xc8] sm:$0x3] %vm4492, %v5251
      %5284 = vst.msk [vmem:[%s405 + $0xd0] sm:$0xff] %vm4488, %v5252
      %5285 = vst.msk [vmem:[%s405 + $0xd8] sm:$0x3] %vm4492, %v5253
      %5286 = vst.msk [vmem:[%s405 + $0xe0] sm:$0xff] %vm4488, %v5254
      %5287 = vst.msk [vmem:[%s405 + $0xe8] sm:$0x3] %vm4492, %v5255
      %5288 = vst.msk [vmem:[%s405 + $0xf0] sm:$0xff] %vm4488, %v5256
      %5289 = vst.msk [vmem:[%s405 + $0xf8] sm:$0x3] %vm4492, %v5257
      %v5291 = vsel %vm4488, %v5226, 0
      %v5294 = vsel %vm4488, %v5227, 0
      %vm5296 = vcmask 1041408
      %v5298 = vsel %vm5296, %v1213, 0
      %5300 = vmatpush.msra.mxu0 0.0
      %5301 = vmatpush.msra.mxu0 0.0
      %5302 = vmatpush.msra.mxu0 0.0
      %5303 = vmatpush.msra.mxu0 0.0
      %5304 = vmatpush.msra.mxu0 0.0
      %5305 = vmatpush.msra.mxu0 0.0
      %5306 = vmatpush.msra.mxu0 0.0
      %5307 = vmatpush.msra.mxu0 0.0
      %5308 = vmatpush.msra.mxu0 0.0
      %5309 = vmatpush.msra.mxu0 0.0
      %5310 = vmatpush.msra.mxu0 0.0
      %5311 = vmatpush.msra.mxu0 0.0
      %5312 = vmatpush.msra.mxu0 0.0
      %5313 = vmatpush.msra.mxu0 0.0
      %5314 = vmatpush.msra.mxu0 %v5298
      %5315 = vmatpush.msra.mxu0 %v1210
      %5316 = vmatmul.f32.gmra.mxu0 %v5291
      %v5317 = vpop.f32.mrf.mxu0
      %v5318 = vadd.f32 0.0, %v5317
      %5319 = vmatmul.f32.gmra.mxu0 %v5294
      %v5320 = vpop.f32.mrf.mxu0
      %v5321 = vadd.f32 0.0, %v5320
      %5322 = vdwg.mxu0
      %v5324 = vsel %vm4488, %v5228, 0
      %v5327 = vsel %vm4488, %v5229, 0
      %v5330 = vsel %vm5296, %v1236, 0
      %5332 = vmatpush.msra.mxu0 0.0
      %5333 = vmatpush.msra.mxu0 0.0
      %5334 = vmatpush.msra.mxu0 0.0
      %5335 = vmatpush.msra.mxu0 0.0
      %5336 = vmatpush.msra.mxu0 0.0
      %5337 = vmatpush.msra.mxu0 0.0
      %5338 = vmatpush.msra.mxu0 0.0
      %5339 = vmatpush.msra.mxu0 0.0
      %5340 = vmatpush.msra.mxu0 0.0
      %5341 = vmatpush.msra.mxu0 0.0
      %5342 = vmatpush.msra.mxu0 0.0
      %5343 = vmatpush.msra.mxu0 0.0
      %5344 = vmatpush.msra.mxu0 0.0
      %5345 = vmatpush.msra.mxu0 0.0
      %5346 = vmatpush.msra.mxu0 %v5330
      %5347 = vmatpush.msra.mxu0 %v1233
      %5348 = vmatmul.f32.gmra.mxu0 %v5324
      %v5349 = vpop.f32.mrf.mxu0
      %v5350 = vadd.f32 0.0, %v5349
      %5351 = vmatmul.f32.gmra.mxu0 %v5327
      %v5352 = vpop.f32.mrf.mxu0
      %v5353 = vadd.f32 0.0, %v5352
      %5354 = vdwg.mxu0
      %v5356 = vsel %vm4488, %v5230, 0
      %v5359 = vsel %vm4488, %v5231, 0
      %v5362 = vsel %vm5296, %v1259, 0
      %5364 = vmatpush.msra.mxu0 0.0
      %5365 = vmatpush.msra.mxu0 0.0
      %5366 = vmatpush.msra.mxu0 0.0
      %5367 = vmatpush.msra.mxu0 0.0
      %5368 = vmatpush.msra.mxu0 0.0
      %5369 = vmatpush.msra.mxu0 0.0
      %5370 = vmatpush.msra.mxu0 0.0
      %5371 = vmatpush.msra.mxu0 0.0
      %5372 = vmatpush.msra.mxu0 0.0
      %5373 = vmatpush.msra.mxu0 0.0
      %5374 = vmatpush.msra.mxu0 0.0
      %5375 = vmatpush.msra.mxu0 0.0
      %5376 = vmatpush.msra.mxu0 0.0
      %5377 = vmatpush.msra.mxu0 0.0
      %5378 = vmatpush.msra.mxu0 %v5362
      %5379 = vmatpush.msra.mxu0 %v1256
      %5380 = vmatmul.f32.gmra.mxu0 %v5356
      %v5381 = vpop.f32.mrf.mxu0
      %v5382 = vadd.f32 0.0, %v5381
      %5383 = vmatmul.f32.gmra.mxu0 %v5359
      %v5384 = vpop.f32.mrf.mxu0
      %v5385 = vadd.f32 0.0, %v5384
      %5386 = vdwg.mxu0
      %v5388 = vsel %vm4488, %v5232, 0
      %v5391 = vsel %vm4488, %v5233, 0
      %v5394 = vsel %vm5296, %v1282, 0
      %5396 = vmatpush.msra.mxu0 0.0
      %5397 = vmatpush.msra.mxu0 0.0
      %5398 = vmatpush.msra.mxu0 0.0
      %5399 = vmatpush.msra.mxu0 0.0
      %5400 = vmatpush.msra.mxu0 0.0
      %5401 = vmatpush.msra.mxu0 0.0
      %5402 = vmatpush.msra.mxu0 0.0
      %5403 = vmatpush.msra.mxu0 0.0
      %5404 = vmatpush.msra.mxu0 0.0
      %5405 = vmatpush.msra.mxu0 0.0
      %5406 = vmatpush.msra.mxu0 0.0
      %5407 = vmatpush.msra.mxu0 0.0
      %5408 = vmatpush.msra.mxu0 0.0
      %5409 = vmatpush.msra.mxu0 0.0
      %5410 = vmatpush.msra.mxu0 %v5394
      %5411 = vmatpush.msra.mxu0 %v1279
      %5412 = vmatmul.f32.gmra.mxu0 %v5388
      %v5413 = vpop.f32.mrf.mxu0
      %v5414 = vadd.f32 0.0, %v5413
      %5415 = vmatmul.f32.gmra.mxu0 %v5391
      %v5416 = vpop.f32.mrf.mxu0
      %v5417 = vadd.f32 0.0, %v5416
      %5418 = vdwg.mxu0
      %v5420 = vsel %vm4488, %v5234, 0
      %v5423 = vsel %vm4488, %v5235, 0
      %v5426 = vsel %vm5296, %v1305, 0
      %5428 = vmatpush.msra.mxu0 0.0
      %5429 = vmatpush.msra.mxu0 0.0
      %5430 = vmatpush.msra.mxu0 0.0
      %5431 = vmatpush.msra.mxu0 0.0
      %5432 = vmatpush.msra.mxu0 0.0
      %5433 = vmatpush.msra.mxu0 0.0
      %5434 = vmatpush.msra.mxu0 0.0
      %5435 = vmatpush.msra.mxu0 0.0
      %5436 = vmatpush.msra.mxu0 0.0
      %5437 = vmatpush.msra.mxu0 0.0
      %5438 = vmatpush.msra.mxu0 0.0
      %5439 = vmatpush.msra.mxu0 0.0
      %5440 = vmatpush.msra.mxu0 0.0
      %5441 = vmatpush.msra.mxu0 0.0
      %5442 = vmatpush.msra.mxu0 %v5426
      %5443 = vmatpush.msra.mxu0 %v1302
      %5444 = vmatmul.f32.gmra.mxu0 %v5420
      %v5445 = vpop.f32.mrf.mxu0
      %v5446 = vadd.f32 0.0, %v5445
      %5447 = vmatmul.f32.gmra.mxu0 %v5423
      %v5448 = vpop.f32.mrf.mxu0
      %v5449 = vadd.f32 0.0, %v5448
      %5450 = vdwg.mxu0
      %v5452 = vsel %vm4488, %v5236, 0
      %v5455 = vsel %vm4488, %v5237, 0
      %v5458 = vsel %vm5296, %v1328, 0
      %5460 = vmatpush.msra.mxu0 0.0
      %5461 = vmatpush.msra.mxu0 0.0
      %5462 = vmatpush.msra.mxu0 0.0
      %5463 = vmatpush.msra.mxu0 0.0
      %5464 = vmatpush.msra.mxu0 0.0
      %5465 = vmatpush.msra.mxu0 0.0
      %5466 = vmatpush.msra.mxu0 0.0
      %5467 = vmatpush.msra.mxu0 0.0
      %5468 = vmatpush.msra.mxu0 0.0
      %5469 = vmatpush.msra.mxu0 0.0
      %5470 = vmatpush.msra.mxu0 0.0
      %5471 = vmatpush.msra.mxu0 0.0
      %5472 = vmatpush.msra.mxu0 0.0
      %5473 = vmatpush.msra.mxu0 0.0
      %5474 = vmatpush.msra.mxu0 %v5458
      %5475 = vmatpush.msra.mxu0 %v1325
      %5476 = vmatmul.f32.gmra.mxu0 %v5452
      %v5477 = vpop.f32.mrf.mxu0
      %v5478 = vadd.f32 0.0, %v5477
      %5479 = vmatmul.f32.gmra.mxu0 %v5455
      %v5480 = vpop.f32.mrf.mxu0
      %v5481 = vadd.f32 0.0, %v5480
      %5482 = vdwg.mxu0
      %v5484 = vsel %vm4488, %v5238, 0
      %v5487 = vsel %vm4488, %v5239, 0
      %v5490 = vsel %vm5296, %v1351, 0
      %5492 = vmatpush.msra.mxu0 0.0
      %5493 = vmatpush.msra.mxu0 0.0
      %5494 = vmatpush.msra.mxu0 0.0
      %5495 = vmatpush.msra.mxu0 0.0
      %5496 = vmatpush.msra.mxu0 0.0
      %5497 = vmatpush.msra.mxu0 0.0
      %5498 = vmatpush.msra.mxu0 0.0
      %5499 = vmatpush.msra.mxu0 0.0
      %5500 = vmatpush.msra.mxu0 0.0
      %5501 = vmatpush.msra.mxu0 0.0
      %5502 = vmatpush.msra.mxu0 0.0
      %5503 = vmatpush.msra.mxu0 0.0
      %5504 = vmatpush.msra.mxu0 0.0
      %5505 = vmatpush.msra.mxu0 0.0
      %5506 = vmatpush.msra.mxu0 %v5490
      %5507 = vmatpush.msra.mxu0 %v1348
      %5508 = vmatmul.f32.gmra.mxu0 %v5484
      %v5509 = vpop.f32.mrf.mxu0
      %v5510 = vadd.f32 0.0, %v5509
      %5511 = vmatmul.f32.gmra.mxu0 %v5487
      %v5512 = vpop.f32.mrf.mxu0
      %v5513 = vadd.f32 0.0, %v5512
      %5514 = vdwg.mxu0
      %v5516 = vsel %vm4488, %v5240, 0
      %v5519 = vsel %vm4488, %v5241, 0
      %v5522 = vsel %vm5296, %v1374, 0
      %5524 = vmatpush.msra.mxu0 0.0
      %5525 = vmatpush.msra.mxu0 0.0
      %5526 = vmatpush.msra.mxu0 0.0
      %5527 = vmatpush.msra.mxu0 0.0
      %5528 = vmatpush.msra.mxu0 0.0
      %5529 = vmatpush.msra.mxu0 0.0
      %5530 = vmatpush.msra.mxu0 0.0
      %5531 = vmatpush.msra.mxu0 0.0
      %5532 = vmatpush.msra.mxu0 0.0
      %5533 = vmatpush.msra.mxu0 0.0
      %5534 = vmatpush.msra.mxu0 0.0
      %5535 = vmatpush.msra.mxu0 0.0
      %5536 = vmatpush.msra.mxu0 0.0
      %5537 = vmatpush.msra.mxu0 0.0
      %5538 = vmatpush.msra.mxu0 %v5522
      %5539 = vmatpush.msra.mxu0 %v1371
      %5540 = vmatmul.f32.gmra.mxu0 %v5516
      %v5541 = vpop.f32.mrf.mxu0
      %v5542 = vadd.f32 0.0, %v5541
      %5543 = vmatmul.f32.gmra.mxu0 %v5519
      %v5544 = vpop.f32.mrf.mxu0
      %v5545 = vadd.f32 0.0, %v5544
      %5546 = vdwg.mxu0
      %v5548 = vsel %vm4488, %v5242, 0
      %v5551 = vsel %vm4488, %v5243, 0
      %v5554 = vsel %vm5296, %v1397, 0
      %5556 = vmatpush.msra.mxu0 0.0
      %5557 = vmatpush.msra.mxu0 0.0
      %5558 = vmatpush.msra.mxu0 0.0
      %5559 = vmatpush.msra.mxu0 0.0
      %5560 = vmatpush.msra.mxu0 0.0
      %5561 = vmatpush.msra.mxu0 0.0
      %5562 = vmatpush.msra.mxu0 0.0
      %5563 = vmatpush.msra.mxu0 0.0
      %5564 = vmatpush.msra.mxu0 0.0
      %5565 = vmatpush.msra.mxu0 0.0
      %5566 = vmatpush.msra.mxu0 0.0
      %5567 = vmatpush.msra.mxu0 0.0
      %5568 = vmatpush.msra.mxu0 0.0
      %5569 = vmatpush.msra.mxu0 0.0
      %5570 = vmatpush.msra.mxu0 %v5554
      %5571 = vmatpush.msra.mxu0 %v1394
      %5572 = vmatmul.f32.gmra.mxu0 %v5548
      %v5573 = vpop.f32.mrf.mxu0
      %v5574 = vadd.f32 0.0, %v5573
      %5575 = vmatmul.f32.gmra.mxu0 %v5551
      %v5576 = vpop.f32.mrf.mxu0
      %v5577 = vadd.f32 0.0, %v5576
      %5578 = vdwg.mxu0
      %v5580 = vsel %vm4488, %v5244, 0
      %v5583 = vsel %vm4488, %v5245, 0
      %v5586 = vsel %vm5296, %v1420, 0
      %5588 = vmatpush.msra.mxu0 0.0
      %5589 = vmatpush.msra.mxu0 0.0
      %5590 = vmatpush.msra.mxu0 0.0
      %5591 = vmatpush.msra.mxu0 0.0
      %5592 = vmatpush.msra.mxu0 0.0
      %5593 = vmatpush.msra.mxu0 0.0
      %5594 = vmatpush.msra.mxu0 0.0
      %5595 = vmatpush.msra.mxu0 0.0
      %5596 = vmatpush.msra.mxu0 0.0
      %5597 = vmatpush.msra.mxu0 0.0
      %5598 = vmatpush.msra.mxu0 0.0
      %5599 = vmatpush.msra.mxu0 0.0
      %5600 = vmatpush.msra.mxu0 0.0
      %5601 = vmatpush.msra.mxu0 0.0
      %5602 = vmatpush.msra.mxu0 %v5586
      %5603 = vmatpush.msra.mxu0 %v1417
      %5604 = vmatmul.f32.gmra.mxu0 %v5580
      %v5605 = vpop.f32.mrf.mxu0
      %v5606 = vadd.f32 0.0, %v5605
      %5607 = vmatmul.f32.gmra.mxu0 %v5583
      %v5608 = vpop.f32.mrf.mxu0
      %v5609 = vadd.f32 0.0, %v5608
      %5610 = vdwg.mxu0
      %v5612 = vsel %vm4488, %v5246, 0
      %v5615 = vsel %vm4488, %v5247, 0
      %v5618 = vsel %vm5296, %v1443, 0
      %5620 = vmatpush.msra.mxu0 0.0
      %5621 = vmatpush.msra.mxu0 0.0
      %5622 = vmatpush.msra.mxu0 0.0
      %5623 = vmatpush.msra.mxu0 0.0
      %5624 = vmatpush.msra.mxu0 0.0
      %5625 = vmatpush.msra.mxu0 0.0
      %5626 = vmatpush.msra.mxu0 0.0
      %5627 = vmatpush.msra.mxu0 0.0
      %5628 = vmatpush.msra.mxu0 0.0
      %5629 = vmatpush.msra.mxu0 0.0
      %5630 = vmatpush.msra.mxu0 0.0
      %5631 = vmatpush.msra.mxu0 0.0
      %5632 = vmatpush.msra.mxu0 0.0
      %5633 = vmatpush.msra.mxu0 0.0
      %5634 = vmatpush.msra.mxu0 %v5618
      %5635 = vmatpush.msra.mxu0 %v1440
      %5636 = vmatmul.f32.gmra.mxu0 %v5612
      %v5637 = vpop.f32.mrf.mxu0
      %v5638 = vadd.f32 0.0, %v5637
      %5639 = vmatmul.f32.gmra.mxu0 %v5615
      %v5640 = vpop.f32.mrf.mxu0
      %v5641 = vadd.f32 0.0, %v5640
      %5642 = vdwg.mxu0
      %v5644 = vsel %vm4488, %v5248, 0
      %v5647 = vsel %vm4488, %v5249, 0
      %v5650 = vsel %vm5296, %v1466, 0
      %5652 = vmatpush.msra.mxu0 0.0
      %5653 = vmatpush.msra.mxu0 0.0
      %5654 = vmatpush.msra.mxu0 0.0
      %5655 = vmatpush.msra.mxu0 0.0
      %5656 = vmatpush.msra.mxu0 0.0
      %5657 = vmatpush.msra.mxu0 0.0
      %5658 = vmatpush.msra.mxu0 0.0
      %5659 = vmatpush.msra.mxu0 0.0
      %5660 = vmatpush.msra.mxu0 0.0
      %5661 = vmatpush.msra.mxu0 0.0
      %5662 = vmatpush.msra.mxu0 0.0
      %5663 = vmatpush.msra.mxu0 0.0
      %5664 = vmatpush.msra.mxu0 0.0
      %5665 = vmatpush.msra.mxu0 0.0
      %5666 = vmatpush.msra.mxu0 %v5650
      %5667 = vmatpush.msra.mxu0 %v1463
      %5668 = vmatmul.f32.gmra.mxu0 %v5644
      %v5669 = vpop.f32.mrf.mxu0
      %v5670 = vadd.f32 0.0, %v5669
      %5671 = vmatmul.f32.gmra.mxu0 %v5647
      %v5672 = vpop.f32.mrf.mxu0
      %v5673 = vadd.f32 0.0, %v5672
      %5674 = vdwg.mxu0
      %v5676 = vsel %vm4488, %v5250, 0
      %v5679 = vsel %vm4488, %v5251, 0
      %v5682 = vsel %vm5296, %v1489, 0
      %5684 = vmatpush.msra.mxu0 0.0
      %5685 = vmatpush.msra.mxu0 0.0
      %5686 = vmatpush.msra.mxu0 0.0
      %5687 = vmatpush.msra.mxu0 0.0
      %5688 = vmatpush.msra.mxu0 0.0
      %5689 = vmatpush.msra.mxu0 0.0
      %5690 = vmatpush.msra.mxu0 0.0
      %5691 = vmatpush.msra.mxu0 0.0
      %5692 = vmatpush.msra.mxu0 0.0
      %5693 = vmatpush.msra.mxu0 0.0
      %5694 = vmatpush.msra.mxu0 0.0
      %5695 = vmatpush.msra.mxu0 0.0
      %5696 = vmatpush.msra.mxu0 0.0
      %5697 = vmatpush.msra.mxu0 0.0
      %5698 = vmatpush.msra.mxu0 %v5682
      %5699 = vmatpush.msra.mxu0 %v1486
      %5700 = vmatmul.f32.gmra.mxu0 %v5676
      %v5701 = vpop.f32.mrf.mxu0
      %v5702 = vadd.f32 0.0, %v5701
      %5703 = vmatmul.f32.gmra.mxu0 %v5679
      %v5704 = vpop.f32.mrf.mxu0
      %v5705 = vadd.f32 0.0, %v5704
      %5706 = vdwg.mxu0
      %v5708 = vsel %vm4488, %v5252, 0
      %v5711 = vsel %vm4488, %v5253, 0
      %v5714 = vsel %vm5296, %v1512, 0
      %5716 = vmatpush.msra.mxu0 0.0
      %5717 = vmatpush.msra.mxu0 0.0
      %5718 = vmatpush.msra.mxu0 0.0
      %5719 = vmatpush.msra.mxu0 0.0
      %5720 = vmatpush.msra.mxu0 0.0
      %5721 = vmatpush.msra.mxu0 0.0
      %5722 = vmatpush.msra.mxu0 0.0
      %5723 = vmatpush.msra.mxu0 0.0
      %5724 = vmatpush.msra.mxu0 0.0
      %5725 = vmatpush.msra.mxu0 0.0
      %5726 = vmatpush.msra.mxu0 0.0
      %5727 = vmatpush.msra.mxu0 0.0
      %5728 = vmatpush.msra.mxu0 0.0
      %5729 = vmatpush.msra.mxu0 0.0
      %5730 = vmatpush.msra.mxu0 %v5714
      %5731 = vmatpush.msra.mxu0 %v1509
      %5732 = vmatmul.f32.gmra.mxu0 %v5708
      %v5733 = vpop.f32.mrf.mxu0
      %v5734 = vadd.f32 0.0, %v5733
      %5735 = vmatmul.f32.gmra.mxu0 %v5711
      %v5736 = vpop.f32.mrf.mxu0
      %v5737 = vadd.f32 0.0, %v5736
      %5738 = vdwg.mxu0
      %v5740 = vsel %vm4488, %v5254, 0
      %v5743 = vsel %vm4488, %v5255, 0
      %v5746 = vsel %vm5296, %v1535, 0
      %5748 = vmatpush.msra.mxu0 0.0
      %5749 = vmatpush.msra.mxu0 0.0
      %5750 = vmatpush.msra.mxu0 0.0
      %5751 = vmatpush.msra.mxu0 0.0
      %5752 = vmatpush.msra.mxu0 0.0
      %5753 = vmatpush.msra.mxu0 0.0
      %5754 = vmatpush.msra.mxu0 0.0
      %5755 = vmatpush.msra.mxu0 0.0
      %5756 = vmatpush.msra.mxu0 0.0
      %5757 = vmatpush.msra.mxu0 0.0
      %5758 = vmatpush.msra.mxu0 0.0
      %5759 = vmatpush.msra.mxu0 0.0
      %5760 = vmatpush.msra.mxu0 0.0
      %5761 = vmatpush.msra.mxu0 0.0
      %5762 = vmatpush.msra.mxu0 %v5746
      %5763 = vmatpush.msra.mxu0 %v1532
      %5764 = vmatmul.f32.gmra.mxu0 %v5740
      %v5765 = vpop.f32.mrf.mxu0
      %v5766 = vadd.f32 0.0, %v5765
      %5767 = vmatmul.f32.gmra.mxu0 %v5743
      %v5768 = vpop.f32.mrf.mxu0
      %v5769 = vadd.f32 0.0, %v5768
      %5770 = vdwg.mxu0
      %v5772 = vsel %vm4488, %v5256, 0
      %v5775 = vsel %vm4488, %v5257, 0
      %v5778 = vsel %vm5296, %v1558, 0
      %5780 = vmatpush.msra.mxu0 0.0
      %5781 = vmatpush.msra.mxu0 0.0
      %5782 = vmatpush.msra.mxu0 0.0
      %5783 = vmatpush.msra.mxu0 0.0
      %5784 = vmatpush.msra.mxu0 0.0
      %5785 = vmatpush.msra.mxu0 0.0
      %5786 = vmatpush.msra.mxu0 0.0
      %5787 = vmatpush.msra.mxu0 0.0
      %5788 = vmatpush.msra.mxu0 0.0
      %5789 = vmatpush.msra.mxu0 0.0
      %5790 = vmatpush.msra.mxu0 0.0
      %5791 = vmatpush.msra.mxu0 0.0
      %5792 = vmatpush.msra.mxu0 0.0
      %5793 = vmatpush.msra.mxu0 0.0
      %5794 = vmatpush.msra.mxu0 %v5778
      %5795 = vmatpush.msra.mxu0 %v1555
      %5796 = vmatmul.f32.gmra.mxu0 %v5772
      %v5797 = vpop.f32.mrf.mxu0
      %v5798 = vadd.f32 0.0, %v5797
      %5799 = vmatmul.f32.gmra.mxu0 %v5775
      %v5800 = vpop.f32.mrf.mxu0
      %v5801 = vadd.f32 0.0, %v5800
      %5802 = vdwg.mxu0
      %v5803 = vld [vmem:[%s4] sm:$0xff]
      %v5804 = vld [vmem:[%s4 + $0x8] sm:$0xff]
      %v5805 = vld [vmem:[%s4 + $0x10] sm:$0xff]
      %v5806 = vld [vmem:[%s4 + $0x18] sm:$0xff]
      %v5807 = vld [vmem:[%s4 + $0x20] sm:$0xff]
      %v5808 = vld [vmem:[%s4 + $0x28] sm:$0xff]
      %v5809 = vld [vmem:[%s4 + $0x30] sm:$0xff]
      %v5810 = vld [vmem:[%s4 + $0x38] sm:$0xff]
      %v5811 = vld [vmem:[%s4 + $0x40] sm:$0xff]
      %v5812 = vld [vmem:[%s4 + $0x48] sm:$0xff]
      %v5813 = vld [vmem:[%s4 + $0x50] sm:$0xff]
      %v5814 = vld [vmem:[%s4 + $0x58] sm:$0xff]
      %v5815 = vld [vmem:[%s4 + $0x60] sm:$0xff]
      %v5816 = vld [vmem:[%s4 + $0x68] sm:$0xff]
      %v5817 = vld [vmem:[%s4 + $0x70] sm:$0xff]
      %v5818 = vld [vmem:[%s4 + $0x78] sm:$0xff]
      %v5819 = vld [vmem:[%s4 + $0x80] sm:$0xff]
      %v5820 = vld [vmem:[%s4 + $0x88] sm:$0xff]
      %v5821 = vld [vmem:[%s4 + $0x90] sm:$0xff]
      %v5822 = vld [vmem:[%s4 + $0x98] sm:$0xff]
      %v5823 = vld [vmem:[%s4 + $0xa0] sm:$0xff]
      %v5824 = vld [vmem:[%s4 + $0xa8] sm:$0xff]
      %v5825 = vld [vmem:[%s4 + $0xb0] sm:$0xff]
      %v5826 = vld [vmem:[%s4 + $0xb8] sm:$0xff]
      %v5827 = vld [vmem:[%s4 + $0xc0] sm:$0xff]
      %v5828 = vld [vmem:[%s4 + $0xc8] sm:$0xff]
      %v5829 = vld [vmem:[%s4 + $0xd0] sm:$0xff]
      %v5830 = vld [vmem:[%s4 + $0xd8] sm:$0xff]
      %v5831 = vld [vmem:[%s4 + $0xe0] sm:$0xff]
      %v5832 = vld [vmem:[%s4 + $0xe8] sm:$0xff]
      %v5833 = vld [vmem:[%s4 + $0xf0] sm:$0xff]
      %v5834 = vld [vmem:[%s4 + $0xf8] sm:$0xff]
      %v5835 = vld [vmem:[%s4 + $0x100] sm:$0xff]
      %v5836 = vld [vmem:[%s4 + $0x108] sm:$0xff]
      %v5837 = vld [vmem:[%s4 + $0x110] sm:$0xff]
      %v5838 = vld [vmem:[%s4 + $0x118] sm:$0xff]
      %v5839 = vld [vmem:[%s4 + $0x120] sm:$0xff]
      %v5840 = vld [vmem:[%s4 + $0x128] sm:$0xff]
      %v5841 = vld [vmem:[%s4 + $0x130] sm:$0xff]
      %v5842 = vld [vmem:[%s4 + $0x138] sm:$0xff]
      %v5843 = vld [vmem:[%s4 + $0x140] sm:$0xff]
      %v5844 = vld [vmem:[%s4 + $0x148] sm:$0xff]
      %v5845 = vld [vmem:[%s4 + $0x150] sm:$0xff]
      %v5846 = vld [vmem:[%s4 + $0x158] sm:$0xff]
      %v5847 = vld [vmem:[%s4 + $0x160] sm:$0xff]
      %v5848 = vld [vmem:[%s4 + $0x168] sm:$0xff]
      %v5849 = vld [vmem:[%s4 + $0x170] sm:$0xff]
      %v5850 = vld [vmem:[%s4 + $0x178] sm:$0xff]
      %v5851 = vld [vmem:[%s4 + $0x180] sm:$0xff]
      %v5852 = vld [vmem:[%s4 + $0x188] sm:$0xff]
      %v5853 = vld [vmem:[%s4 + $0x190] sm:$0xff]
      %v5854 = vld [vmem:[%s4 + $0x198] sm:$0xff]
      %v5855 = vld [vmem:[%s4 + $0x1a0] sm:$0xff]
      %v5856 = vld [vmem:[%s4 + $0x1a8] sm:$0xff]
      %v5857 = vld [vmem:[%s4 + $0x1b0] sm:$0xff]
      %v5858 = vld [vmem:[%s4 + $0x1b8] sm:$0xff]
      %v5859 = vld [vmem:[%s4 + $0x1c0] sm:$0xff]
      %v5860 = vld [vmem:[%s4 + $0x1c8] sm:$0xff]
      %v5861 = vld [vmem:[%s4 + $0x1d0] sm:$0xff]
      %v5862 = vld [vmem:[%s4 + $0x1d8] sm:$0xff]
      %v5863 = vld [vmem:[%s4 + $0x1e0] sm:$0xff]
      %v5864 = vld [vmem:[%s4 + $0x1e8] sm:$0xff]
      %v5865 = vld [vmem:[%s4 + $0x1f0] sm:$0xff]
      %v5866 = vld [vmem:[%s4 + $0x1f8] sm:$0xff]
      %v5867 = vld [vmem:[%s4 + $0x200] sm:$0xff]
      %v5868 = vld [vmem:[%s4 + $0x208] sm:$0xff]
      %v5869 = vld [vmem:[%s4 + $0x210] sm:$0xff]
      %v5870 = vld [vmem:[%s4 + $0x218] sm:$0xff]
      %v5871 = vld [vmem:[%s4 + $0x220] sm:$0xff]
      %v5872 = vld [vmem:[%s4 + $0x228] sm:$0xff]
      %v5873 = vld [vmem:[%s4 + $0x230] sm:$0xff]
      %v5874 = vld [vmem:[%s4 + $0x238] sm:$0xff]
      %v5875 = vld [vmem:[%s4 + $0x240] sm:$0xff]
      %v5876 = vld [vmem:[%s4 + $0x248] sm:$0xff]
      %v5877 = vld [vmem:[%s4 + $0x250] sm:$0xff]
      %v5878 = vld [vmem:[%s4 + $0x258] sm:$0xff]
      %v5879 = vld [vmem:[%s4 + $0x260] sm:$0xff]
      %v5880 = vld [vmem:[%s4 + $0x268] sm:$0xff]
      %v5881 = vld [vmem:[%s4 + $0x270] sm:$0xff]
      %v5882 = vld [vmem:[%s4 + $0x278] sm:$0xff]
      %v5883 = vld [vmem:[%s4 + $0x280] sm:$0xff]
      %v5884 = vld [vmem:[%s4 + $0x288] sm:$0xff]
      %v5885 = vld [vmem:[%s4 + $0x290] sm:$0xff]
      %v5886 = vld [vmem:[%s4 + $0x298] sm:$0xff]
      %v5887 = vld [vmem:[%s4 + $0x2a0] sm:$0xff]
      %v5888 = vld [vmem:[%s4 + $0x2a8] sm:$0xff]
      %v5889 = vld [vmem:[%s4 + $0x2b0] sm:$0xff]
      %v5890 = vld [vmem:[%s4 + $0x2b8] sm:$0xff]
      %v5891 = vld [vmem:[%s4 + $0x2c0] sm:$0xff]
      %v5892 = vld [vmem:[%s4 + $0x2c8] sm:$0xff]
      %v5893 = vld [vmem:[%s4 + $0x2d0] sm:$0xff]
      %v5894 = vld [vmem:[%s4 + $0x2d8] sm:$0xff]
      %v5895 = vld [vmem:[%s4 + $0x2e0] sm:$0xff]
      %v5896 = vld [vmem:[%s4 + $0x2e8] sm:$0xff]
      %v5897 = vld [vmem:[%s4 + $0x2f0] sm:$0xff]
      %v5898 = vld [vmem:[%s4 + $0x2f8] sm:$0xff]
      %v5899 = vld [vmem:[%s4 + $0x300] sm:$0xff]
      %v5900 = vld [vmem:[%s4 + $0x308] sm:$0xff]
      %v5901 = vld [vmem:[%s4 + $0x310] sm:$0xff]
      %v5902 = vld [vmem:[%s4 + $0x318] sm:$0xff]
      %v5903 = vld [vmem:[%s4 + $0x320] sm:$0xff]
      %v5904 = vld [vmem:[%s4 + $0x328] sm:$0xff]
      %v5905 = vld [vmem:[%s4 + $0x330] sm:$0xff]
      %v5906 = vld [vmem:[%s4 + $0x338] sm:$0xff]
      %v5907 = vld [vmem:[%s4 + $0x340] sm:$0xff]
      %v5908 = vld [vmem:[%s4 + $0x348] sm:$0xff]
      %v5909 = vld [vmem:[%s4 + $0x350] sm:$0xff]
      %v5910 = vld [vmem:[%s4 + $0x358] sm:$0xff]
      %v5911 = vld [vmem:[%s4 + $0x360] sm:$0xff]
      %v5912 = vld [vmem:[%s4 + $0x368] sm:$0xff]
      %v5913 = vld [vmem:[%s4 + $0x370] sm:$0xff]
      %v5914 = vld [vmem:[%s4 + $0x378] sm:$0xff]
      %v5915 = vld [vmem:[%s4 + $0x380] sm:$0xff]
      %v5916 = vld [vmem:[%s4 + $0x388] sm:$0xff]
      %v5917 = vld [vmem:[%s4 + $0x390] sm:$0xff]
      %v5918 = vld [vmem:[%s4 + $0x398] sm:$0xff]
      %v5919 = vld [vmem:[%s4 + $0x3a0] sm:$0xff]
      %v5920 = vld [vmem:[%s4 + $0x3a8] sm:$0xff]
      %v5921 = vld [vmem:[%s4 + $0x3b0] sm:$0xff]
      %v5922 = vld [vmem:[%s4 + $0x3b8] sm:$0xff]
      %v5923 = vld [vmem:[%s4 + $0x3c0] sm:$0xff]
      %v5924 = vld [vmem:[%s4 + $0x3c8] sm:$0xff]
      %v5925 = vld [vmem:[%s4 + $0x3d0] sm:$0xff]
      %v5926 = vld [vmem:[%s4 + $0x3d8] sm:$0xff]
      %v5927 = vld [vmem:[%s4 + $0x3e0] sm:$0xff]
      %v5928 = vld [vmem:[%s4 + $0x3e8] sm:$0xff]
      %v5929 = vld [vmem:[%s4 + $0x3f0] sm:$0xff]
      %v5930 = vld [vmem:[%s4 + $0x3f8] sm:$0xff]
      %v5931 = vld [vmem:[%s4 + $0x400] sm:$0xff]
      %v5932 = vld [vmem:[%s4 + $0x408] sm:$0xff]
      %v5933 = vld [vmem:[%s4 + $0x410] sm:$0xff]
      %v5934 = vld [vmem:[%s4 + $0x418] sm:$0xff]
      %v5935 = vld [vmem:[%s4 + $0x420] sm:$0xff]
      %v5936 = vld [vmem:[%s4 + $0x428] sm:$0xff]
      %v5937 = vld [vmem:[%s4 + $0x430] sm:$0xff]
      %v5938 = vld [vmem:[%s4 + $0x438] sm:$0xff]
      %v5939 = vld [vmem:[%s4 + $0x440] sm:$0xff]
      %v5940 = vld [vmem:[%s4 + $0x448] sm:$0xff]
      %v5941 = vld [vmem:[%s4 + $0x450] sm:$0xff]
      %v5942 = vld [vmem:[%s4 + $0x458] sm:$0xff]
      %v5943 = vld [vmem:[%s4 + $0x460] sm:$0xff]
      %v5944 = vld [vmem:[%s4 + $0x468] sm:$0xff]
      %v5945 = vld [vmem:[%s4 + $0x470] sm:$0xff]
      %v5946 = vld [vmem:[%s4 + $0x478] sm:$0xff]
      %v5947 = vld [vmem:[%s4 + $0x480] sm:$0xff]
      %v5948 = vld [vmem:[%s4 + $0x488] sm:$0xff]
      %v5949 = vld [vmem:[%s4 + $0x490] sm:$0xff]
      %v5950 = vld [vmem:[%s4 + $0x498] sm:$0xff]
      %v5951 = vld [vmem:[%s4 + $0x4a0] sm:$0xff]
      %v5952 = vld [vmem:[%s4 + $0x4a8] sm:$0xff]
      %v5953 = vld [vmem:[%s4 + $0x4b0] sm:$0xff]
      %v5954 = vld [vmem:[%s4 + $0x4b8] sm:$0xff]
      %v5955 = vld [vmem:[%s4 + $0x4c0] sm:$0xff]
      %v5956 = vld [vmem:[%s4 + $0x4c8] sm:$0xff]
      %v5957 = vld [vmem:[%s4 + $0x4d0] sm:$0xff]
      %v5958 = vld [vmem:[%s4 + $0x4d8] sm:$0xff]
      %v5959 = vld [vmem:[%s4 + $0x4e0] sm:$0xff]
      %v5960 = vld [vmem:[%s4 + $0x4e8] sm:$0xff]
      %v5961 = vld [vmem:[%s4 + $0x4f0] sm:$0xff]
      %v5962 = vld [vmem:[%s4 + $0x4f8] sm:$0xff]
      %v5963 = vld [vmem:[%s4 + $0x500] sm:$0xff]
      %v5964 = vld [vmem:[%s4 + $0x508] sm:$0xff]
      %v5965 = vld [vmem:[%s4 + $0x510] sm:$0xff]
      %v5966 = vld [vmem:[%s4 + $0x518] sm:$0xff]
      %v5967 = vld [vmem:[%s4 + $0x520] sm:$0xff]
      %v5968 = vld [vmem:[%s4 + $0x528] sm:$0xff]
      %v5969 = vld [vmem:[%s4 + $0x530] sm:$0xff]
      %v5970 = vld [vmem:[%s4 + $0x538] sm:$0xff]
      %v5971 = vld [vmem:[%s4 + $0x540] sm:$0xff]
      %v5972 = vld [vmem:[%s4 + $0x548] sm:$0xff]
      %v5973 = vld [vmem:[%s4 + $0x550] sm:$0xff]
      %v5974 = vld [vmem:[%s4 + $0x558] sm:$0xff]
      %v5975 = vld [vmem:[%s4 + $0x560] sm:$0xff]
      %v5976 = vld [vmem:[%s4 + $0x568] sm:$0xff]
      %v5977 = vld [vmem:[%s4 + $0x570] sm:$0xff]
      %v5978 = vld [vmem:[%s4 + $0x578] sm:$0xff]
      %v5979 = vld [vmem:[%s4 + $0x580] sm:$0xff]
      %v5980 = vld [vmem:[%s4 + $0x588] sm:$0xff]
      %v5981 = vld [vmem:[%s4 + $0x590] sm:$0xff]
      %v5982 = vld [vmem:[%s4 + $0x598] sm:$0xff]
      %v5983 = vld [vmem:[%s4 + $0x5a0] sm:$0xff]
      %v5984 = vld [vmem:[%s4 + $0x5a8] sm:$0xff]
      %v5985 = vld [vmem:[%s4 + $0x5b0] sm:$0xff]
      %v5986 = vld [vmem:[%s4 + $0x5b8] sm:$0xff]
      %v5987 = vld [vmem:[%s4 + $0x5c0] sm:$0xff]
      %v5988 = vld [vmem:[%s4 + $0x5c8] sm:$0xff]
      %v5989 = vld [vmem:[%s4 + $0x5d0] sm:$0xff]
      %v5990 = vld [vmem:[%s4 + $0x5d8] sm:$0xff]
      %v5991 = vld [vmem:[%s4 + $0x5e0] sm:$0xff]
      %v5992 = vld [vmem:[%s4 + $0x5e8] sm:$0xff]
      %v5993 = vld [vmem:[%s4 + $0x5f0] sm:$0xff]
      %v5994 = vld [vmem:[%s4 + $0x5f8] sm:$0xff]
      %v5995 = vld [vmem:[%s4 + $0x600] sm:$0xff]
      %v5996 = vld [vmem:[%s4 + $0x608] sm:$0xff]
      %v5997 = vld [vmem:[%s4 + $0x610] sm:$0xff]
      %v5998 = vld [vmem:[%s4 + $0x618] sm:$0xff]
      %v5999 = vld [vmem:[%s4 + $0x620] sm:$0xff]
      %v6000 = vld [vmem:[%s4 + $0x628] sm:$0xff]
      %v6001 = vld [vmem:[%s4 + $0x630] sm:$0xff]
      %v6002 = vld [vmem:[%s4 + $0x638] sm:$0xff]
      %v6003 = vld [vmem:[%s4 + $0x640] sm:$0xff]
      %v6004 = vld [vmem:[%s4 + $0x648] sm:$0xff]
      %v6005 = vld [vmem:[%s4 + $0x650] sm:$0xff]
      %v6006 = vld [vmem:[%s4 + $0x658] sm:$0xff]
      %v6007 = vld [vmem:[%s4 + $0x660] sm:$0xff]
      %v6008 = vld [vmem:[%s4 + $0x668] sm:$0xff]
      %v6009 = vld [vmem:[%s4 + $0x670] sm:$0xff]
      %v6010 = vld [vmem:[%s4 + $0x678] sm:$0xff]
      %v6011 = vld [vmem:[%s4 + $0x680] sm:$0xff]
      %v6012 = vld [vmem:[%s4 + $0x688] sm:$0xff]
      %v6013 = vld [vmem:[%s4 + $0x690] sm:$0xff]
      %v6014 = vld [vmem:[%s4 + $0x698] sm:$0xff]
      %v6015 = vld [vmem:[%s4 + $0x6a0] sm:$0xff]
      %v6016 = vld [vmem:[%s4 + $0x6a8] sm:$0xff]
      %v6017 = vld [vmem:[%s4 + $0x6b0] sm:$0xff]
      %v6018 = vld [vmem:[%s4 + $0x6b8] sm:$0xff]
      %v6019 = vld [vmem:[%s4 + $0x6c0] sm:$0xff]
      %v6020 = vld [vmem:[%s4 + $0x6c8] sm:$0xff]
      %v6021 = vld [vmem:[%s4 + $0x6d0] sm:$0xff]
      %v6022 = vld [vmem:[%s4 + $0x6d8] sm:$0xff]
      %v6023 = vld [vmem:[%s4 + $0x6e0] sm:$0xff]
      %v6024 = vld [vmem:[%s4 + $0x6e8] sm:$0xff]
      %v6025 = vld [vmem:[%s4 + $0x6f0] sm:$0xff]
      %v6026 = vld [vmem:[%s4 + $0x6f8] sm:$0xff]
      %v6027 = vld [vmem:[%s4 + $0x700] sm:$0xff]
      %v6028 = vld [vmem:[%s4 + $0x708] sm:$0xff]
      %v6029 = vld [vmem:[%s4 + $0x710] sm:$0xff]
      %v6030 = vld [vmem:[%s4 + $0x718] sm:$0xff]
      %v6031 = vld [vmem:[%s4 + $0x720] sm:$0xff]
      %v6032 = vld [vmem:[%s4 + $0x728] sm:$0xff]
      %v6033 = vld [vmem:[%s4 + $0x730] sm:$0xff]
      %v6034 = vld [vmem:[%s4 + $0x738] sm:$0xff]
      %v6035 = vld [vmem:[%s4 + $0x740] sm:$0xff]
      %v6036 = vld [vmem:[%s4 + $0x748] sm:$0xff]
      %v6037 = vld [vmem:[%s4 + $0x750] sm:$0xff]
      %v6038 = vld [vmem:[%s4 + $0x758] sm:$0xff]
      %v6039 = vld [vmem:[%s4 + $0x760] sm:$0xff]
      %v6040 = vld [vmem:[%s4 + $0x768] sm:$0xff]
      %v6041 = vld [vmem:[%s4 + $0x770] sm:$0xff]
      %v6042 = vld [vmem:[%s4 + $0x778] sm:$0xff]
      %v6043 = vld [vmem:[%s4 + $0x780] sm:$0xff]
      %v6044 = vld [vmem:[%s4 + $0x788] sm:$0xff]
      %v6045 = vld [vmem:[%s4 + $0x790] sm:$0xff]
      %v6046 = vld [vmem:[%s4 + $0x798] sm:$0xff]
      %v6047 = vld [vmem:[%s4 + $0x7a0] sm:$0xff]
      %v6048 = vld [vmem:[%s4 + $0x7a8] sm:$0xff]
      %v6049 = vld [vmem:[%s4 + $0x7b0] sm:$0xff]
      %v6050 = vld [vmem:[%s4 + $0x7b8] sm:$0xff]
      %v6051 = vld [vmem:[%s4 + $0x7c0] sm:$0xff]
      %v6052 = vld [vmem:[%s4 + $0x7c8] sm:$0xff]
      %v6053 = vld [vmem:[%s4 + $0x7d0] sm:$0xff]
      %v6054 = vld [vmem:[%s4 + $0x7d8] sm:$0xff]
      %v6055 = vld [vmem:[%s4 + $0x7e0] sm:$0xff]
      %v6056 = vld [vmem:[%s4 + $0x7e8] sm:$0xff]
      %v6057 = vld [vmem:[%s4 + $0x7f0] sm:$0xff]
      %v6058 = vld [vmem:[%s4 + $0x7f8] sm:$0xff]
      %v6060 = vsel %vm2829, %v5318, 0
      %v6063 = vsel %vm2829, %v5321, 0
      %v6066 = vsel %vm2829, %v5803, 0
      %v6069 = vsel %vm2829, %v5804, 0
      %v6072 = vsel %vm2829, %v5805, 0
      %v6075 = vsel %vm2829, %v5806, 0
      %v6078 = vsel %vm2829, %v5807, 0
      %v6081 = vsel %vm2829, %v5808, 0
      %v6084 = vsel %vm2829, %v5809, 0
      %v6087 = vsel %vm2829, %v5810, 0
      %v6090 = vsel %vm2829, %v5811, 0
      %v6093 = vsel %vm2829, %v5812, 0
      %v6096 = vsel %vm2829, %v5813, 0
      %v6099 = vsel %vm2829, %v5814, 0
      %v6102 = vsel %vm2829, %v5815, 0
      %v6105 = vsel %vm2829, %v5816, 0
      %v6108 = vsel %vm2829, %v5817, 0
      %v6111 = vsel %vm2829, %v5818, 0
      %6113 = vmatpush.xpose.msra.mxu0 %v6111
      %6114 = vmatpush.xpose.msra.mxu0 %v6108
      %6115 = vmatpush.xpose.msra.mxu0 %v6105
      %6116 = vmatpush.xpose.msra.mxu0 %v6102
      %6117 = vmatpush.xpose.msra.mxu0 %v6099
      %6118 = vmatpush.xpose.msra.mxu0 %v6096
      %6119 = vmatpush.xpose.msra.mxu0 %v6093
      %6120 = vmatpush.xpose.msra.mxu0 %v6090
      %6121 = vmatpush.xpose.msra.mxu0 %v6087
      %6122 = vmatpush.xpose.msra.mxu0 %v6084
      %6123 = vmatpush.xpose.msra.mxu0 %v6081
      %6124 = vmatpush.xpose.msra.mxu0 %v6078
      %6125 = vmatpush.xpose.msra.mxu0 %v6075
      %6126 = vmatpush.xpose.msra.mxu0 %v6072
      %6127 = vmatpush.xpose.msra.mxu0 %v6069
      %6128 = vmatpush.xpose.msra.mxu0 %v6066
      %6129 = vmatmul.f32.gmra.mxu0 %v6060
      %v6130 = vpop.f32.mrf.mxu0
      %v6131 = vadd.f32 0.0, %v6130
      %6132 = vmatmul.f32.gmra.mxu0 %v6063
      %v6133 = vpop.f32.mrf.mxu0
      %v6134 = vadd.f32 0.0, %v6133
      %6135 = vdwg.mxu0
      %v6137 = vsel %vm2829, %v5350, 0
      %v6140 = vsel %vm2829, %v5353, 0
      %v6143 = vsel %vm2829, %v5819, 0
      %v6146 = vsel %vm2829, %v5820, 0
      %v6149 = vsel %vm2829, %v5821, 0
      %v6152 = vsel %vm2829, %v5822, 0
      %v6155 = vsel %vm2829, %v5823, 0
      %v6158 = vsel %vm2829, %v5824, 0
      %v6161 = vsel %vm2829, %v5825, 0
      %v6164 = vsel %vm2829, %v5826, 0
      %v6167 = vsel %vm2829, %v5827, 0
      %v6170 = vsel %vm2829, %v5828, 0
      %v6173 = vsel %vm2829, %v5829, 0
      %v6176 = vsel %vm2829, %v5830, 0
      %v6179 = vsel %vm2829, %v5831, 0
      %v6182 = vsel %vm2829, %v5832, 0
      %v6185 = vsel %vm2829, %v5833, 0
      %v6188 = vsel %vm2829, %v5834, 0
      %6190 = vmatpush.xpose.msra.mxu0 %v6188
      %6191 = vmatpush.xpose.msra.mxu0 %v6185
      %6192 = vmatpush.xpose.msra.mxu0 %v6182
      %6193 = vmatpush.xpose.msra.mxu0 %v6179
      %6194 = vmatpush.xpose.msra.mxu0 %v6176
      %6195 = vmatpush.xpose.msra.mxu0 %v6173
      %6196 = vmatpush.xpose.msra.mxu0 %v6170
      %6197 = vmatpush.xpose.msra.mxu0 %v6167
      %6198 = vmatpush.xpose.msra.mxu0 %v6164
      %6199 = vmatpush.xpose.msra.mxu0 %v6161
      %6200 = vmatpush.xpose.msra.mxu0 %v6158
      %6201 = vmatpush.xpose.msra.mxu0 %v6155
      %6202 = vmatpush.xpose.msra.mxu0 %v6152
      %6203 = vmatpush.xpose.msra.mxu0 %v6149
      %6204 = vmatpush.xpose.msra.mxu0 %v6146
      %6205 = vmatpush.xpose.msra.mxu0 %v6143
      %6206 = vmatmul.f32.gmra.mxu0 %v6137
      %v6207 = vpop.f32.mrf.mxu0
      %v6208 = vadd.f32 0.0, %v6207
      %6209 = vmatmul.f32.gmra.mxu0 %v6140
      %v6210 = vpop.f32.mrf.mxu0
      %v6211 = vadd.f32 0.0, %v6210
      %6212 = vdwg.mxu0
      %v6214 = vsel %vm2829, %v5382, 0
      %v6217 = vsel %vm2829, %v5385, 0
      %v6220 = vsel %vm2829, %v5835, 0
      %v6223 = vsel %vm2829, %v5836, 0
      %v6226 = vsel %vm2829, %v5837, 0
      %v6229 = vsel %vm2829, %v5838, 0
      %v6232 = vsel %vm2829, %v5839, 0
      %v6235 = vsel %vm2829, %v5840, 0
      %v6238 = vsel %vm2829, %v5841, 0
      %v6241 = vsel %vm2829, %v5842, 0
      %v6244 = vsel %vm2829, %v5843, 0
      %v6247 = vsel %vm2829, %v5844, 0
      %v6250 = vsel %vm2829, %v5845, 0
      %v6253 = vsel %vm2829, %v5846, 0
      %v6256 = vsel %vm2829, %v5847, 0
      %v6259 = vsel %vm2829, %v5848, 0
      %v6262 = vsel %vm2829, %v5849, 0
      %v6265 = vsel %vm2829, %v5850, 0
      %6267 = vmatpush.xpose.msra.mxu0 %v6265
      %6268 = vmatpush.xpose.msra.mxu0 %v6262
      %6269 = vmatpush.xpose.msra.mxu0 %v6259
      %6270 = vmatpush.xpose.msra.mxu0 %v6256
      %6271 = vmatpush.xpose.msra.mxu0 %v6253
      %6272 = vmatpush.xpose.msra.mxu0 %v6250
      %6273 = vmatpush.xpose.msra.mxu0 %v6247
      %6274 = vmatpush.xpose.msra.mxu0 %v6244
      %6275 = vmatpush.xpose.msra.mxu0 %v6241
      %6276 = vmatpush.xpose.msra.mxu0 %v6238
      %6277 = vmatpush.xpose.msra.mxu0 %v6235
      %6278 = vmatpush.xpose.msra.mxu0 %v6232
      %6279 = vmatpush.xpose.msra.mxu0 %v6229
      %6280 = vmatpush.xpose.msra.mxu0 %v6226
      %6281 = vmatpush.xpose.msra.mxu0 %v6223
      %6282 = vmatpush.xpose.msra.mxu0 %v6220
      %6283 = vmatmul.f32.gmra.mxu0 %v6214
      %v6284 = vpop.f32.mrf.mxu0
      %v6285 = vadd.f32 0.0, %v6284
      %6286 = vmatmul.f32.gmra.mxu0 %v6217
      %v6287 = vpop.f32.mrf.mxu0
      %v6288 = vadd.f32 0.0, %v6287
      %6289 = vdwg.mxu0
      %v6291 = vsel %vm2829, %v5414, 0
      %v6294 = vsel %vm2829, %v5417, 0
      %v6297 = vsel %vm2829, %v5851, 0
      %v6300 = vsel %vm2829, %v5852, 0
      %v6303 = vsel %vm2829, %v5853, 0
      %v6306 = vsel %vm2829, %v5854, 0
      %v6309 = vsel %vm2829, %v5855, 0
      %v6312 = vsel %vm2829, %v5856, 0
      %v6315 = vsel %vm2829, %v5857, 0
      %v6318 = vsel %vm2829, %v5858, 0
      %v6321 = vsel %vm2829, %v5859, 0
      %v6324 = vsel %vm2829, %v5860, 0
      %v6327 = vsel %vm2829, %v5861, 0
      %v6330 = vsel %vm2829, %v5862, 0
      %v6333 = vsel %vm2829, %v5863, 0
      %v6336 = vsel %vm2829, %v5864, 0
      %v6339 = vsel %vm2829, %v5865, 0
      %v6342 = vsel %vm2829, %v5866, 0
      %6344 = vmatpush.xpose.msra.mxu0 %v6342
      %6345 = vmatpush.xpose.msra.mxu0 %v6339
      %6346 = vmatpush.xpose.msra.mxu0 %v6336
      %6347 = vmatpush.xpose.msra.mxu0 %v6333
      %6348 = vmatpush.xpose.msra.mxu0 %v6330
      %6349 = vmatpush.xpose.msra.mxu0 %v6327
      %6350 = vmatpush.xpose.msra.mxu0 %v6324
      %6351 = vmatpush.xpose.msra.mxu0 %v6321
      %6352 = vmatpush.xpose.msra.mxu0 %v6318
      %6353 = vmatpush.xpose.msra.mxu0 %v6315
      %6354 = vmatpush.xpose.msra.mxu0 %v6312
      %6355 = vmatpush.xpose.msra.mxu0 %v6309
      %6356 = vmatpush.xpose.msra.mxu0 %v6306
      %6357 = vmatpush.xpose.msra.mxu0 %v6303
      %6358 = vmatpush.xpose.msra.mxu0 %v6300
      %6359 = vmatpush.xpose.msra.mxu0 %v6297
      %6360 = vmatmul.f32.gmra.mxu0 %v6291
      %v6361 = vpop.f32.mrf.mxu0
      %v6362 = vadd.f32 0.0, %v6361
      %6363 = vmatmul.f32.gmra.mxu0 %v6294
      %v6364 = vpop.f32.mrf.mxu0
      %v6365 = vadd.f32 0.0, %v6364
      %6366 = vdwg.mxu0
      %v6368 = vsel %vm2829, %v5446, 0
      %v6371 = vsel %vm2829, %v5449, 0
      %v6374 = vsel %vm2829, %v5867, 0
      %v6377 = vsel %vm2829, %v5868, 0
      %v6380 = vsel %vm2829, %v5869, 0
      %v6383 = vsel %vm2829, %v5870, 0
      %v6386 = vsel %vm2829, %v5871, 0
      %v6389 = vsel %vm2829, %v5872, 0
      %v6392 = vsel %vm2829, %v5873, 0
      %v6395 = vsel %vm2829, %v5874, 0
      %v6398 = vsel %vm2829, %v5875, 0
      %v6401 = vsel %vm2829, %v5876, 0
      %v6404 = vsel %vm2829, %v5877, 0
      %v6407 = vsel %vm2829, %v5878, 0
      %v6410 = vsel %vm2829, %v5879, 0
      %v6413 = vsel %vm2829, %v5880, 0
      %v6416 = vsel %vm2829, %v5881, 0
      %v6419 = vsel %vm2829, %v5882, 0
      %6421 = vmatpush.xpose.msra.mxu0 %v6419
      %6422 = vmatpush.xpose.msra.mxu0 %v6416
      %6423 = vmatpush.xpose.msra.mxu0 %v6413
      %6424 = vmatpush.xpose.msra.mxu0 %v6410
      %6425 = vmatpush.xpose.msra.mxu0 %v6407
      %6426 = vmatpush.xpose.msra.mxu0 %v6404
      %6427 = vmatpush.xpose.msra.mxu0 %v6401
      %6428 = vmatpush.xpose.msra.mxu0 %v6398
      %6429 = vmatpush.xpose.msra.mxu0 %v6395
      %6430 = vmatpush.xpose.msra.mxu0 %v6392
      %6431 = vmatpush.xpose.msra.mxu0 %v6389
      %6432 = vmatpush.xpose.msra.mxu0 %v6386
      %6433 = vmatpush.xpose.msra.mxu0 %v6383
      %6434 = vmatpush.xpose.msra.mxu0 %v6380
      %6435 = vmatpush.xpose.msra.mxu0 %v6377
      %6436 = vmatpush.xpose.msra.mxu0 %v6374
      %6437 = vmatmul.f32.gmra.mxu0 %v6368
      %v6438 = vpop.f32.mrf.mxu0
      %v6439 = vadd.f32 0.0, %v6438
      %6440 = vmatmul.f32.gmra.mxu0 %v6371
      %v6441 = vpop.f32.mrf.mxu0
      %v6442 = vadd.f32 0.0, %v6441
      %6443 = vdwg.mxu0
      %v6445 = vsel %vm2829, %v5478, 0
      %v6448 = vsel %vm2829, %v5481, 0
      %v6451 = vsel %vm2829, %v5883, 0
      %v6454 = vsel %vm2829, %v5884, 0
      %v6457 = vsel %vm2829, %v5885, 0
      %v6460 = vsel %vm2829, %v5886, 0
      %v6463 = vsel %vm2829, %v5887, 0
      %v6466 = vsel %vm2829, %v5888, 0
      %v6469 = vsel %vm2829, %v5889, 0
      %v6472 = vsel %vm2829, %v5890, 0
      %v6475 = vsel %vm2829, %v5891, 0
      %v6478 = vsel %vm2829, %v5892, 0
      %v6481 = vsel %vm2829, %v5893, 0
      %v6484 = vsel %vm2829, %v5894, 0
      %v6487 = vsel %vm2829, %v5895, 0
      %v6490 = vsel %vm2829, %v5896, 0
      %v6493 = vsel %vm2829, %v5897, 0
      %v6496 = vsel %vm2829, %v5898, 0
      %6498 = vmatpush.xpose.msra.mxu0 %v6496
      %6499 = vmatpush.xpose.msra.mxu0 %v6493
      %6500 = vmatpush.xpose.msra.mxu0 %v6490
      %6501 = vmatpush.xpose.msra.mxu0 %v6487
      %6502 = vmatpush.xpose.msra.mxu0 %v6484
      %6503 = vmatpush.xpose.msra.mxu0 %v6481
      %6504 = vmatpush.xpose.msra.mxu0 %v6478
      %6505 = vmatpush.xpose.msra.mxu0 %v6475
      %6506 = vmatpush.xpose.msra.mxu0 %v6472
      %6507 = vmatpush.xpose.msra.mxu0 %v6469
      %6508 = vmatpush.xpose.msra.mxu0 %v6466
      %6509 = vmatpush.xpose.msra.mxu0 %v6463
      %6510 = vmatpush.xpose.msra.mxu0 %v6460
      %6511 = vmatpush.xpose.msra.mxu0 %v6457
      %6512 = vmatpush.xpose.msra.mxu0 %v6454
      %6513 = vmatpush.xpose.msra.mxu0 %v6451
      %6514 = vmatmul.f32.gmra.mxu0 %v6445
      %v6515 = vpop.f32.mrf.mxu0
      %v6516 = vadd.f32 0.0, %v6515
      %6517 = vmatmul.f32.gmra.mxu0 %v6448
      %v6518 = vpop.f32.mrf.mxu0
      %v6519 = vadd.f32 0.0, %v6518
      %6520 = vdwg.mxu0
      %v6522 = vsel %vm2829, %v5510, 0
      %v6525 = vsel %vm2829, %v5513, 0
      %v6528 = vsel %vm2829, %v5899, 0
      %v6531 = vsel %vm2829, %v5900, 0
      %v6534 = vsel %vm2829, %v5901, 0
      %v6537 = vsel %vm2829, %v5902, 0
      %v6540 = vsel %vm2829, %v5903, 0
      %v6543 = vsel %vm2829, %v5904, 0
      %v6546 = vsel %vm2829, %v5905, 0
      %v6549 = vsel %vm2829, %v5906, 0
      %v6552 = vsel %vm2829, %v5907, 0
      %v6555 = vsel %vm2829, %v5908, 0
      %v6558 = vsel %vm2829, %v5909, 0
      %v6561 = vsel %vm2829, %v5910, 0
      %v6564 = vsel %vm2829, %v5911, 0
      %v6567 = vsel %vm2829, %v5912, 0
      %v6570 = vsel %vm2829, %v5913, 0
      %v6573 = vsel %vm2829, %v5914, 0
      %6575 = vmatpush.xpose.msra.mxu0 %v6573
      %6576 = vmatpush.xpose.msra.mxu0 %v6570
      %6577 = vmatpush.xpose.msra.mxu0 %v6567
      %6578 = vmatpush.xpose.msra.mxu0 %v6564
      %6579 = vmatpush.xpose.msra.mxu0 %v6561
      %6580 = vmatpush.xpose.msra.mxu0 %v6558
      %6581 = vmatpush.xpose.msra.mxu0 %v6555
      %6582 = vmatpush.xpose.msra.mxu0 %v6552
      %6583 = vmatpush.xpose.msra.mxu0 %v6549
      %6584 = vmatpush.xpose.msra.mxu0 %v6546
      %6585 = vmatpush.xpose.msra.mxu0 %v6543
      %6586 = vmatpush.xpose.msra.mxu0 %v6540
      %6587 = vmatpush.xpose.msra.mxu0 %v6537
      %6588 = vmatpush.xpose.msra.mxu0 %v6534
      %6589 = vmatpush.xpose.msra.mxu0 %v6531
      %6590 = vmatpush.xpose.msra.mxu0 %v6528
      %6591 = vmatmul.f32.gmra.mxu0 %v6522
      %v6592 = vpop.f32.mrf.mxu0
      %v6593 = vadd.f32 0.0, %v6592
      %6594 = vmatmul.f32.gmra.mxu0 %v6525
      %v6595 = vpop.f32.mrf.mxu0
      %v6596 = vadd.f32 0.0, %v6595
      %6597 = vdwg.mxu0
      %v6599 = vsel %vm2829, %v5542, 0
      %v6602 = vsel %vm2829, %v5545, 0
      %v6605 = vsel %vm2829, %v5915, 0
      %v6608 = vsel %vm2829, %v5916, 0
      %v6611 = vsel %vm2829, %v5917, 0
      %v6614 = vsel %vm2829, %v5918, 0
      %v6617 = vsel %vm2829, %v5919, 0
      %v6620 = vsel %vm2829, %v5920, 0
      %v6623 = vsel %vm2829, %v5921, 0
      %v6626 = vsel %vm2829, %v5922, 0
      %v6629 = vsel %vm2829, %v5923, 0
      %v6632 = vsel %vm2829, %v5924, 0
      %v6635 = vsel %vm2829, %v5925, 0
      %v6638 = vsel %vm2829, %v5926, 0
      %v6641 = vsel %vm2829, %v5927, 0
      %v6644 = vsel %vm2829, %v5928, 0
      %v6647 = vsel %vm2829, %v5929, 0
      %v6650 = vsel %vm2829, %v5930, 0
      %6652 = vmatpush.xpose.msra.mxu0 %v6650
      %6653 = vmatpush.xpose.msra.mxu0 %v6647
      %6654 = vmatpush.xpose.msra.mxu0 %v6644
      %6655 = vmatpush.xpose.msra.mxu0 %v6641
      %6656 = vmatpush.xpose.msra.mxu0 %v6638
      %6657 = vmatpush.xpose.msra.mxu0 %v6635
      %6658 = vmatpush.xpose.msra.mxu0 %v6632
      %6659 = vmatpush.xpose.msra.mxu0 %v6629
      %6660 = vmatpush.xpose.msra.mxu0 %v6626
      %6661 = vmatpush.xpose.msra.mxu0 %v6623
      %6662 = vmatpush.xpose.msra.mxu0 %v6620
      %6663 = vmatpush.xpose.msra.mxu0 %v6617
      %6664 = vmatpush.xpose.msra.mxu0 %v6614
      %6665 = vmatpush.xpose.msra.mxu0 %v6611
      %6666 = vmatpush.xpose.msra.mxu0 %v6608
      %6667 = vmatpush.xpose.msra.mxu0 %v6605
      %6668 = vmatmul.f32.gmra.mxu0 %v6599
      %v6669 = vpop.f32.mrf.mxu0
      %v6670 = vadd.f32 0.0, %v6669
      %6671 = vmatmul.f32.gmra.mxu0 %v6602
      %v6672 = vpop.f32.mrf.mxu0
      %v6673 = vadd.f32 0.0, %v6672
      %6674 = vdwg.mxu0
      %v6676 = vsel %vm2829, %v5574, 0
      %v6679 = vsel %vm2829, %v5577, 0
      %v6682 = vsel %vm2829, %v5931, 0
      %v6685 = vsel %vm2829, %v5932, 0
      %v6688 = vsel %vm2829, %v5933, 0
      %v6691 = vsel %vm2829, %v5934, 0
      %v6694 = vsel %vm2829, %v5935, 0
      %v6697 = vsel %vm2829, %v5936, 0
      %v6700 = vsel %vm2829, %v5937, 0
      %v6703 = vsel %vm2829, %v5938, 0
      %v6706 = vsel %vm2829, %v5939, 0
      %v6709 = vsel %vm2829, %v5940, 0
      %v6712 = vsel %vm2829, %v5941, 0
      %v6715 = vsel %vm2829, %v5942, 0
      %v6718 = vsel %vm2829, %v5943, 0
      %v6721 = vsel %vm2829, %v5944, 0
      %v6724 = vsel %vm2829, %v5945, 0
      %v6727 = vsel %vm2829, %v5946, 0
      %6729 = vmatpush.xpose.msra.mxu0 %v6727
      %6730 = vmatpush.xpose.msra.mxu0 %v6724
      %6731 = vmatpush.xpose.msra.mxu0 %v6721
      %6732 = vmatpush.xpose.msra.mxu0 %v6718
      %6733 = vmatpush.xpose.msra.mxu0 %v6715
      %6734 = vmatpush.xpose.msra.mxu0 %v6712
      %6735 = vmatpush.xpose.msra.mxu0 %v6709
      %6736 = vmatpush.xpose.msra.mxu0 %v6706
      %6737 = vmatpush.xpose.msra.mxu0 %v6703
      %6738 = vmatpush.xpose.msra.mxu0 %v6700
      %6739 = vmatpush.xpose.msra.mxu0 %v6697
      %6740 = vmatpush.xpose.msra.mxu0 %v6694
      %6741 = vmatpush.xpose.msra.mxu0 %v6691
      %6742 = vmatpush.xpose.msra.mxu0 %v6688
      %6743 = vmatpush.xpose.msra.mxu0 %v6685
      %6744 = vmatpush.xpose.msra.mxu0 %v6682
      %6745 = vmatmul.f32.gmra.mxu0 %v6676
      %v6746 = vpop.f32.mrf.mxu0
      %v6747 = vadd.f32 0.0, %v6746
      %6748 = vmatmul.f32.gmra.mxu0 %v6679
      %v6749 = vpop.f32.mrf.mxu0
      %v6750 = vadd.f32 0.0, %v6749
      %6751 = vdwg.mxu0
      %v6753 = vsel %vm2829, %v5606, 0
      %v6756 = vsel %vm2829, %v5609, 0
      %v6759 = vsel %vm2829, %v5947, 0
      %v6762 = vsel %vm2829, %v5948, 0
      %v6765 = vsel %vm2829, %v5949, 0
      %v6768 = vsel %vm2829, %v5950, 0
      %v6771 = vsel %vm2829, %v5951, 0
      %v6774 = vsel %vm2829, %v5952, 0
      %v6777 = vsel %vm2829, %v5953, 0
      %v6780 = vsel %vm2829, %v5954, 0
      %v6783 = vsel %vm2829, %v5955, 0
      %v6786 = vsel %vm2829, %v5956, 0
      %v6789 = vsel %vm2829, %v5957, 0
      %v6792 = vsel %vm2829, %v5958, 0
      %v6795 = vsel %vm2829, %v5959, 0
      %v6798 = vsel %vm2829, %v5960, 0
      %v6801 = vsel %vm2829, %v5961, 0
      %v6804 = vsel %vm2829, %v5962, 0
      %6806 = vmatpush.xpose.msra.mxu0 %v6804
      %6807 = vmatpush.xpose.msra.mxu0 %v6801
      %6808 = vmatpush.xpose.msra.mxu0 %v6798
      %6809 = vmatpush.xpose.msra.mxu0 %v6795
      %6810 = vmatpush.xpose.msra.mxu0 %v6792
      %6811 = vmatpush.xpose.msra.mxu0 %v6789
      %6812 = vmatpush.xpose.msra.mxu0 %v6786
      %6813 = vmatpush.xpose.msra.mxu0 %v6783
      %6814 = vmatpush.xpose.msra.mxu0 %v6780
      %6815 = vmatpush.xpose.msra.mxu0 %v6777
      %6816 = vmatpush.xpose.msra.mxu0 %v6774
      %6817 = vmatpush.xpose.msra.mxu0 %v6771
      %6818 = vmatpush.xpose.msra.mxu0 %v6768
      %6819 = vmatpush.xpose.msra.mxu0 %v6765
      %6820 = vmatpush.xpose.msra.mxu0 %v6762
      %6821 = vmatpush.xpose.msra.mxu0 %v6759
      %6822 = vmatmul.f32.gmra.mxu0 %v6753
      %v6823 = vpop.f32.mrf.mxu0
      %v6824 = vadd.f32 0.0, %v6823
      %6825 = vmatmul.f32.gmra.mxu0 %v6756
      %v6826 = vpop.f32.mrf.mxu0
      %v6827 = vadd.f32 0.0, %v6826
      %6828 = vdwg.mxu0
      %v6830 = vsel %vm2829, %v5638, 0
      %v6833 = vsel %vm2829, %v5641, 0
      %v6836 = vsel %vm2829, %v5963, 0
      %v6839 = vsel %vm2829, %v5964, 0
      %v6842 = vsel %vm2829, %v5965, 0
      %v6845 = vsel %vm2829, %v5966, 0
      %v6848 = vsel %vm2829, %v5967, 0
      %v6851 = vsel %vm2829, %v5968, 0
      %v6854 = vsel %vm2829, %v5969, 0
      %v6857 = vsel %vm2829, %v5970, 0
      %v6860 = vsel %vm2829, %v5971, 0
      %v6863 = vsel %vm2829, %v5972, 0
      %v6866 = vsel %vm2829, %v5973, 0
      %v6869 = vsel %vm2829, %v5974, 0
      %v6872 = vsel %vm2829, %v5975, 0
      %v6875 = vsel %vm2829, %v5976, 0
      %v6878 = vsel %vm2829, %v5977, 0
      %v6881 = vsel %vm2829, %v5978, 0
      %6883 = vmatpush.xpose.msra.mxu0 %v6881
      %6884 = vmatpush.xpose.msra.mxu0 %v6878
      %6885 = vmatpush.xpose.msra.mxu0 %v6875
      %6886 = vmatpush.xpose.msra.mxu0 %v6872
      %6887 = vmatpush.xpose.msra.mxu0 %v6869
      %6888 = vmatpush.xpose.msra.mxu0 %v6866
      %6889 = vmatpush.xpose.msra.mxu0 %v6863
      %6890 = vmatpush.xpose.msra.mxu0 %v6860
      %6891 = vmatpush.xpose.msra.mxu0 %v6857
      %6892 = vmatpush.xpose.msra.mxu0 %v6854
      %6893 = vmatpush.xpose.msra.mxu0 %v6851
      %6894 = vmatpush.xpose.msra.mxu0 %v6848
      %6895 = vmatpush.xpose.msra.mxu0 %v6845
      %6896 = vmatpush.xpose.msra.mxu0 %v6842
      %6897 = vmatpush.xpose.msra.mxu0 %v6839
      %6898 = vmatpush.xpose.msra.mxu0 %v6836
      %6899 = vmatmul.f32.gmra.mxu0 %v6830
      %v6900 = vpop.f32.mrf.mxu0
      %v6901 = vadd.f32 0.0, %v6900
      %6902 = vmatmul.f32.gmra.mxu0 %v6833
      %v6903 = vpop.f32.mrf.mxu0
      %v6904 = vadd.f32 0.0, %v6903
      %6905 = vdwg.mxu0
      %v6907 = vsel %vm2829, %v5670, 0
      %v6910 = vsel %vm2829, %v5673, 0
      %v6913 = vsel %vm2829, %v5979, 0
      %v6916 = vsel %vm2829, %v5980, 0
      %v6919 = vsel %vm2829, %v5981, 0
      %v6922 = vsel %vm2829, %v5982, 0
      %v6925 = vsel %vm2829, %v5983, 0
      %v6928 = vsel %vm2829, %v5984, 0
      %v6931 = vsel %vm2829, %v5985, 0
      %v6934 = vsel %vm2829, %v5986, 0
      %v6937 = vsel %vm2829, %v5987, 0
      %v6940 = vsel %vm2829, %v5988, 0
      %v6943 = vsel %vm2829, %v5989, 0
      %v6946 = vsel %vm2829, %v5990, 0
      %v6949 = vsel %vm2829, %v5991, 0
      %v6952 = vsel %vm2829, %v5992, 0
      %v6955 = vsel %vm2829, %v5993, 0
      %v6958 = vsel %vm2829, %v5994, 0
      %6960 = vmatpush.xpose.msra.mxu0 %v6958
      %6961 = vmatpush.xpose.msra.mxu0 %v6955
      %6962 = vmatpush.xpose.msra.mxu0 %v6952
      %6963 = vmatpush.xpose.msra.mxu0 %v6949
      %6964 = vmatpush.xpose.msra.mxu0 %v6946
      %6965 = vmatpush.xpose.msra.mxu0 %v6943
      %6966 = vmatpush.xpose.msra.mxu0 %v6940
      %6967 = vmatpush.xpose.msra.mxu0 %v6937
      %6968 = vmatpush.xpose.msra.mxu0 %v6934
      %6969 = vmatpush.xpose.msra.mxu0 %v6931
      %6970 = vmatpush.xpose.msra.mxu0 %v6928
      %6971 = vmatpush.xpose.msra.mxu0 %v6925
      %6972 = vmatpush.xpose.msra.mxu0 %v6922
      %6973 = vmatpush.xpose.msra.mxu0 %v6919
      %6974 = vmatpush.xpose.msra.mxu0 %v6916
      %6975 = vmatpush.xpose.msra.mxu0 %v6913
      %6976 = vmatmul.f32.gmra.mxu0 %v6907
      %v6977 = vpop.f32.mrf.mxu0
      %v6978 = vadd.f32 0.0, %v6977
      %6979 = vmatmul.f32.gmra.mxu0 %v6910
      %v6980 = vpop.f32.mrf.mxu0
      %v6981 = vadd.f32 0.0, %v6980
      %6982 = vdwg.mxu0
      %v6984 = vsel %vm2829, %v5702, 0
      %v6987 = vsel %vm2829, %v5705, 0
      %v6990 = vsel %vm2829, %v5995, 0
      %v6993 = vsel %vm2829, %v5996, 0
      %v6996 = vsel %vm2829, %v5997, 0
      %v6999 = vsel %vm2829, %v5998, 0
      %v7002 = vsel %vm2829, %v5999, 0
      %v7005 = vsel %vm2829, %v6000, 0
      %v7008 = vsel %vm2829, %v6001, 0
      %v7011 = vsel %vm2829, %v6002, 0
      %v7014 = vsel %vm2829, %v6003, 0
      %v7017 = vsel %vm2829, %v6004, 0
      %v7020 = vsel %vm2829, %v6005, 0
      %v7023 = vsel %vm2829, %v6006, 0
      %v7026 = vsel %vm2829, %v6007, 0
      %v7029 = vsel %vm2829, %v6008, 0
      %v7032 = vsel %vm2829, %v6009, 0
      %v7035 = vsel %vm2829, %v6010, 0
      %7037 = vmatpush.xpose.msra.mxu0 %v7035
      %7038 = vmatpush.xpose.msra.mxu0 %v7032
      %7039 = vmatpush.xpose.msra.mxu0 %v7029
      %7040 = vmatpush.xpose.msra.mxu0 %v7026
      %7041 = vmatpush.xpose.msra.mxu0 %v7023
      %7042 = vmatpush.xpose.msra.mxu0 %v7020
      %7043 = vmatpush.xpose.msra.mxu0 %v7017
      %7044 = vmatpush.xpose.msra.mxu0 %v7014
      %7045 = vmatpush.xpose.msra.mxu0 %v7011
      %7046 = vmatpush.xpose.msra.mxu0 %v7008
      %7047 = vmatpush.xpose.msra.mxu0 %v7005
      %7048 = vmatpush.xpose.msra.mxu0 %v7002
      %7049 = vmatpush.xpose.msra.mxu0 %v6999
      %7050 = vmatpush.xpose.msra.mxu0 %v6996
      %7051 = vmatpush.xpose.msra.mxu0 %v6993
      %7052 = vmatpush.xpose.msra.mxu0 %v6990
      %7053 = vmatmul.f32.gmra.mxu0 %v6984
      %v7054 = vpop.f32.mrf.mxu0
      %v7055 = vadd.f32 0.0, %v7054
      %7056 = vmatmul.f32.gmra.mxu0 %v6987
      %v7057 = vpop.f32.mrf.mxu0
      %v7058 = vadd.f32 0.0, %v7057
      %7059 = vdwg.mxu0
      %v7061 = vsel %vm2829, %v5734, 0
      %v7064 = vsel %vm2829, %v5737, 0
      %v7067 = vsel %vm2829, %v6011, 0
      %v7070 = vsel %vm2829, %v6012, 0
      %v7073 = vsel %vm2829, %v6013, 0
      %v7076 = vsel %vm2829, %v6014, 0
      %v7079 = vsel %vm2829, %v6015, 0
      %v7082 = vsel %vm2829, %v6016, 0
      %v7085 = vsel %vm2829, %v6017, 0
      %v7088 = vsel %vm2829, %v6018, 0
      %v7091 = vsel %vm2829, %v6019, 0
      %v7094 = vsel %vm2829, %v6020, 0
      %v7097 = vsel %vm2829, %v6021, 0
      %v7100 = vsel %vm2829, %v6022, 0
      %v7103 = vsel %vm2829, %v6023, 0
      %v7106 = vsel %vm2829, %v6024, 0
      %v7109 = vsel %vm2829, %v6025, 0
      %v7112 = vsel %vm2829, %v6026, 0
      %7114 = vmatpush.xpose.msra.mxu0 %v7112
      %7115 = vmatpush.xpose.msra.mxu0 %v7109
      %7116 = vmatpush.xpose.msra.mxu0 %v7106
      %7117 = vmatpush.xpose.msra.mxu0 %v7103
      %7118 = vmatpush.xpose.msra.mxu0 %v7100
      %7119 = vmatpush.xpose.msra.mxu0 %v7097
      %7120 = vmatpush.xpose.msra.mxu0 %v7094
      %7121 = vmatpush.xpose.msra.mxu0 %v7091
      %7122 = vmatpush.xpose.msra.mxu0 %v7088
      %7123 = vmatpush.xpose.msra.mxu0 %v7085
      %7124 = vmatpush.xpose.msra.mxu0 %v7082
      %7125 = vmatpush.xpose.msra.mxu0 %v7079
      %7126 = vmatpush.xpose.msra.mxu0 %v7076
      %7127 = vmatpush.xpose.msra.mxu0 %v7073
      %7128 = vmatpush.xpose.msra.mxu0 %v7070
      %7129 = vmatpush.xpose.msra.mxu0 %v7067
      %7130 = vmatmul.f32.gmra.mxu0 %v7061
      %v7131 = vpop.f32.mrf.mxu0
      %v7132 = vadd.f32 0.0, %v7131
      %7133 = vmatmul.f32.gmra.mxu0 %v7064
      %v7134 = vpop.f32.mrf.mxu0
      %v7135 = vadd.f32 0.0, %v7134
      %7136 = vdwg.mxu0
      %v7138 = vsel %vm2829, %v5766, 0
      %v7141 = vsel %vm2829, %v5769, 0
      %v7144 = vsel %vm2829, %v6027, 0
      %v7147 = vsel %vm2829, %v6028, 0
      %v7150 = vsel %vm2829, %v6029, 0
      %v7153 = vsel %vm2829, %v6030, 0
      %v7156 = vsel %vm2829, %v6031, 0
      %v7159 = vsel %vm2829, %v6032, 0
      %v7162 = vsel %vm2829, %v6033, 0
      %v7165 = vsel %vm2829, %v6034, 0
      %v7168 = vsel %vm2829, %v6035, 0
      %v7171 = vsel %vm2829, %v6036, 0
      %v7174 = vsel %vm2829, %v6037, 0
      %v7177 = vsel %vm2829, %v6038, 0
      %v7180 = vsel %vm2829, %v6039, 0
      %v7183 = vsel %vm2829, %v6040, 0
      %v7186 = vsel %vm2829, %v6041, 0
      %v7189 = vsel %vm2829, %v6042, 0
      %7191 = vmatpush.xpose.msra.mxu0 %v7189
      %7192 = vmatpush.xpose.msra.mxu0 %v7186
      %7193 = vmatpush.xpose.msra.mxu0 %v7183
      %7194 = vmatpush.xpose.msra.mxu0 %v7180
      %7195 = vmatpush.xpose.msra.mxu0 %v7177
      %7196 = vmatpush.xpose.msra.mxu0 %v7174
      %7197 = vmatpush.xpose.msra.mxu0 %v7171
      %7198 = vmatpush.xpose.msra.mxu0 %v7168
      %7199 = vmatpush.xpose.msra.mxu0 %v7165
      %7200 = vmatpush.xpose.msra.mxu0 %v7162
      %7201 = vmatpush.xpose.msra.mxu0 %v7159
      %7202 = vmatpush.xpose.msra.mxu0 %v7156
      %7203 = vmatpush.xpose.msra.mxu0 %v7153
      %7204 = vmatpush.xpose.msra.mxu0 %v7150
      %7205 = vmatpush.xpose.msra.mxu0 %v7147
      %7206 = vmatpush.xpose.msra.mxu0 %v7144
      %7207 = vmatmul.f32.gmra.mxu0 %v7138
      %v7208 = vpop.f32.mrf.mxu0
      %v7209 = vadd.f32 0.0, %v7208
      %7210 = vmatmul.f32.gmra.mxu0 %v7141
      %v7211 = vpop.f32.mrf.mxu0
      %v7212 = vadd.f32 0.0, %v7211
      %7213 = vdwg.mxu0
      %v7215 = vsel %vm2829, %v5798, 0
      %v7218 = vsel %vm2829, %v5801, 0
      %v7221 = vsel %vm2829, %v6043, 0
      %v7224 = vsel %vm2829, %v6044, 0
      %v7227 = vsel %vm2829, %v6045, 0
      %v7230 = vsel %vm2829, %v6046, 0
      %v7233 = vsel %vm2829, %v6047, 0
      %v7236 = vsel %vm2829, %v6048, 0
      %v7239 = vsel %vm2829, %v6049, 0
      %v7242 = vsel %vm2829, %v6050, 0
      %v7245 = vsel %vm2829, %v6051, 0
      %v7248 = vsel %vm2829, %v6052, 0
      %v7251 = vsel %vm2829, %v6053, 0
      %v7254 = vsel %vm2829, %v6054, 0
      %v7257 = vsel %vm2829, %v6055, 0
      %v7260 = vsel %vm2829, %v6056, 0
      %v7263 = vsel %vm2829, %v6057, 0
      %v7266 = vsel %vm2829, %v6058, 0
      %7268 = vmatpush.xpose.msra.mxu0 %v7266
      %7269 = vmatpush.xpose.msra.mxu0 %v7263
      %7270 = vmatpush.xpose.msra.mxu0 %v7260
      %7271 = vmatpush.xpose.msra.mxu0 %v7257
      %7272 = vmatpush.xpose.msra.mxu0 %v7254
      %7273 = vmatpush.xpose.msra.mxu0 %v7251
      %7274 = vmatpush.xpose.msra.mxu0 %v7248
      %7275 = vmatpush.xpose.msra.mxu0 %v7245
      %7276 = vmatpush.xpose.msra.mxu0 %v7242
      %7277 = vmatpush.xpose.msra.mxu0 %v7239
      %7278 = vmatpush.xpose.msra.mxu0 %v7236
      %7279 = vmatpush.xpose.msra.mxu0 %v7233
      %7280 = vmatpush.xpose.msra.mxu0 %v7230
      %7281 = vmatpush.xpose.msra.mxu0 %v7227
      %7282 = vmatpush.xpose.msra.mxu0 %v7224
      %7283 = vmatpush.xpose.msra.mxu0 %v7221
      %7284 = vmatmul.f32.gmra.mxu0 %v7215
      %v7285 = vpop.f32.mrf.mxu0
      %v7286 = vadd.f32 0.0, %v7285
      %7287 = vmatmul.f32.gmra.mxu0 %v7218
      %v7288 = vpop.f32.mrf.mxu0
      %v7289 = vadd.f32 0.0, %v7288
      %7290 = vdwg.mxu0
      %v7291 = vadd.f32 %v6131, %v6208
      %v7292 = vadd.f32 %v7291, %v6285
      %v7293 = vadd.f32 %v7292, %v6362
      %v7294 = vadd.f32 %v7293, %v6439
      %v7295 = vadd.f32 %v7294, %v6516
      %v7296 = vadd.f32 %v7295, %v6593
      %v7297 = vadd.f32 %v7296, %v6670
      %v7298 = vadd.f32 %v7297, %v6747
      %v7299 = vadd.f32 %v7298, %v6824
      %v7300 = vadd.f32 %v7299, %v6901
      %v7301 = vadd.f32 %v7300, %v6978
      %v7302 = vadd.f32 %v7301, %v7055
      %v7303 = vadd.f32 %v7302, %v7132
      %v7304 = vadd.f32 %v7303, %v7209
      %v7305 = vadd.f32 %v7304, %v7286
      %v7306 = vsel %vm5296, %v6134, 0.0
      %v7307 = vsel %vm5296, %v6211, 0.0
      %v7308 = vadd.f32 %v7306, %v7307
      %v7309 = vsel %vm5296, %v6288, 0.0
      %v7310 = vadd.f32 %v7308, %v7309
      %v7311 = vsel %vm5296, %v6365, 0.0
      %v7312 = vadd.f32 %v7310, %v7311
      %v7313 = vsel %vm5296, %v6442, 0.0
      %v7314 = vadd.f32 %v7312, %v7313
      %v7315 = vsel %vm5296, %v6519, 0.0
      %v7316 = vadd.f32 %v7314, %v7315
      %v7317 = vsel %vm5296, %v6596, 0.0
      %v7318 = vadd.f32 %v7316, %v7317
      %v7319 = vsel %vm5296, %v6673, 0.0
      %v7320 = vadd.f32 %v7318, %v7319
      %v7321 = vsel %vm5296, %v6750, 0.0
      %v7322 = vadd.f32 %v7320, %v7321
      %v7323 = vsel %vm5296, %v6827, 0.0
      %v7324 = vadd.f32 %v7322, %v7323
      %v7325 = vsel %vm5296, %v6904, 0.0
      %v7326 = vadd.f32 %v7324, %v7325
      %v7327 = vsel %vm5296, %v6981, 0.0
      %v7328 = vadd.f32 %v7326, %v7327
      %v7329 = vsel %vm5296, %v7058, 0.0
      %v7330 = vadd.f32 %v7328, %v7329
      %v7331 = vsel %vm5296, %v7135, 0.0
      %v7332 = vadd.f32 %v7330, %v7331
      %v7333 = vsel %vm5296, %v7212, 0.0
      %v7334 = vadd.f32 %v7332, %v7333
      %v7335 = vsel %vm5296, %v7289, 0.0
      %v7336 = vadd.f32 %v7334, %v7335
      %7337 = vst [vmem:[%s400] sm:$0xff] %v7305
      %7338 = vst [vmem:[%s400 + $0x8] sm:$0x3] %v7336
      %p7339 = scmp.lt.s32.totalorder %s21, 1
      %s7340 = scalar_select %p7339, %s21, 1
      %s7341 = smul.addr %s7340, 2
      %s7342 = smul.addr %s7341, 8
      %s7343 = scalar_lea.vmem %s8, %s7342
      %p7344 = scmp.lt.s32.totalorder %s21, 1
      %s7345 = scalar_select %p7344, %s21, 1
      %s7346 = smul.addr %s7345, 32
      %s7347 = smul.addr %s7346, 8
      %s7348 = scalar_lea.vmem %s9, %s7347
      // Predicated region
      $region53: #{tpu_custom_call.1} parent=51 // pred_check
        %p7349 = pneg %p227
      $region54: #{tpu_custom_call.1} parent=51 // pred_check_branch
        %7351 = sbr.rel (%p7349) target = $region56
      $region55: #{tpu_custom_call.1} parent=51 // pred_region
        _
      $region56: #{tpu_custom_call.1} parent=51 // pred_fallthru
        _
      // Predicated region
      $region57: #{tpu_custom_call.1} parent=51 // pred_check
        %p7352 = pneg %p253
      $region58: #{tpu_custom_call.1} parent=51 // pred_check_branch
        %7354 = sbr.rel (%p7352) target = $region60
      $region59: #{tpu_custom_call.1} parent=51 // pred_region
        _
      $region60: #{tpu_custom_call.1} parent=51 // pred_fallthru
        _
    $region52: #{tpu_custom_call.1} parent=5 // pred_fallthru
      _
    %p7355 = scmp.le.s32.totalorder 2, %s16
    // Predicated region
    $region61: #{tpu_custom_call.1} parent=5 // pred_check
      %p7356 = pneg %p7355
    $region62: #{tpu_custom_call.1} parent=5 // pred_check_branch
      %7358 = sbr.rel (%p7356) target = $region64
    $region63: #{tpu_custom_call.1} parent=5 // pred_region
      %s7359 = ssub.s32 %s16, 2
      // Predicated region
      $region65: #{tpu_custom_call.1} parent=63 // pred_check
        %p7360 = pneg %p233
      $region66: #{tpu_custom_call.1} parent=63 // pred_check_branch
        %7362 = sbr.rel (%p7360) target = $region68
      $region67: #{tpu_custom_call.1} parent=63 // pred_region
        %p7363 = scmp.lt.s32.totalorder %s22, 1
        %s7364 = scalar_select %p7363, %s22, 1
        %s7365 = smul.addr %s7364, 2
        %s7366 = smul.addr %s7365, 8
        %s7367 = scalar_lea.vmem %s8, %s7366
      $region68: #{tpu_custom_call.1} parent=63 // pred_fallthru
        _
      // Predicated region
      $region69: #{tpu_custom_call.1} parent=63 // pred_check
        %p7368 = pneg %p259
      $region70: #{tpu_custom_call.1} parent=63 // pred_check_branch
        %7370 = sbr.rel (%p7368) target = $region72
      $region71: #{tpu_custom_call.1} parent=63 // pred_region
        %p7371 = scmp.lt.s32.totalorder %s22, 1
        %s7372 = scalar_select %p7371, %s22, 1
        %s7373 = smul.addr %s7372, 32
        %s7374 = smul.addr %s7373, 8
        %s7375 = scalar_lea.vmem %s9, %s7374
      $region72: #{tpu_custom_call.1} parent=63 // pred_fallthru
        _
    $region64: #{tpu_custom_call.1} parent=5 // pred_fallthru
      _
  $region6: #{tpu_custom_call.1} parent=0 // loop_footer
    %s20 = sadd.s32 1, %s16
  $region7: #{tpu_custom_call.1} parent=0 // loop_footer_branch
    %15 = sbr.rel target = $region3
  $region8: #{tpu_custom_call.1} parent=0 // loop_exit
    _

</llo_original>
